<compile_context>
chip_gen: v5e
topology: v5e:2x2
jax: 0.10.0
libtpu: 0.0.40
codegen_flags: <defaults>
</compile_context>

<pallas_src>
import functools

import jax
import jax.numpy as jnp
from jax.experimental import pallas as pl
from jax.experimental.pallas import tpu as pltpu


_SLOPE = 0.01  # nn.LeakyReLU / F.leaky_relu default negative_slope

# Stride-2 tap index -> (parity, offset) into the parity-split layer-1 buffer.
#   rows: even-parity planes hold half-res row i at row i (rows 0..7),
#         odd-parity planes hold i at row i+1 (rows 1..8), row 0 = zero pad.
#   cols: w-parity 0 data at cols 0..7, w-parity 1 data at cols 8..15,
#         col 7 = zero pad standing in for the padded index -1.
_ROW = ((1, 0), (0, 0), (1, 1))   # dh -> (h-parity, row offset)
_COL = ((1, 7), (0, 0), (1, 8))   # dw -> (w-parity, col offset)


def _leaky(x):
    return jnp.where(x >= 0.0, x, _SLOPE * x)


def _fused_kernel(x1_ref, w1_ref, b1_ref,
                  w2_ref, b2_ref, s2_ref, t2_ref,
                  w3_ref, b3_ref, s3_ref, t3_ref,
                  w4_ref, b4_ref,
                  o_ref,
                  a1p_ref, a2_ref, a3_ref, *, group):
    f32 = jnp.float32
    bf16 = jnp.bfloat16
    g = group

    # Conv zero-padding for layer 2: only the pad row/col of the odd-parity
    # layer-1 planes is ever read without being written, so only those are
    # zero-filled (every grid step, so each megacore partition is
    # self-contained).  a2/a3 spill regions (H rows 8..9 and the short tail of
    # the shifted dw blocks) are intentionally left uninitialized: they are
    # only read for out-of-range output rows that the wrapper discards.
    a1p_ref[2, :, 0:1, :, :] = jnp.zeros((g, 1, 16, 64), f32)  # hp=1: row -1
    a1p_ref[3, :, 0:1, :, :] = jnp.zeros((g, 1, 16, 64), f32)
    a1p_ref[1, :, :, 7:8, :] = jnp.zeros((g, 9, 1, 64), f32)   # wp=1: col -1
    a1p_ref[3, :, :, 7:8, :] = jnp.zeros((g, 9, 1, 64), f32)

    # ---- down1: Conv(6,64,3,s2,p1) + LeakyReLU (is_bn=False) -------------
    # One MXU matmul: 9 taps folded into K (padded 54 -> 64), batch and all
    # 16x16 output positions folded into M = g*256.
    y1 = jnp.dot(x1_ref[...], w1_ref[...], preferred_element_type=f32)
    y1 = _leaky(y1 + b1_ref[...])                    # (g*256, 64) f32
    y1 = y1.reshape(g, 4, 64, 64)                    # rows: (n, parity, i*8+j)
    for p in range(4):
        hp, wp = p // 2, p % 2
        blk = y1[:, p, :, :].reshape(g, 8, 8, 64)
        # Row offset hp is on an outer (untiled) axis; col offset 8*wp is
        # tile-aligned, so every store is a clean (g,8,8,64) block.
        a1p_ref[p, :, hp:hp + 8, 8 * wp:8 * wp + 8, :] = blk

    # ---- down2: Conv(64,128,3,s2,p1) + LeakyReLU + BN (eval, folded) -----
    # TODO(synk): BatchNorm uses eval-mode running statistics folded into a
    # per-channel affine; PyTorch's default train() mode would use batch stats.
    acc = None
    for dh in range(3):
        hpar, hs = _ROW[dh]
        for dw in range(3):
            wpar, ws = _COL[dw]
            p = hpar * 2 + wpar
            t = dh * 3 + dw
            lhs = a1p_ref[p, :, hs:hs + 8, ws:ws + 8, :]     # (g,8,8,64) f32
            lhs = lhs.astype(bf16).reshape(g * 64, 64)
            d = jnp.dot(lhs, w2_ref[t * 64:(t + 1) * 64, :],
                        preferred_element_type=f32)
            acc = d if acc is None else acc + d
    y2 = _leaky(acc + b2_ref[...]) * s2_ref[...] + t2_ref[...]
    y2 = y2.reshape(g, 8, 8, 128)                    # (n, h, w, c) f32
    # Width-im2col store (cast to bf16 once): fold the next conv's 3 dw taps
    # into the lane/K dimension so its reads are tile-aligned bf16 loads.
    for dw in range(3):
        a2_ref[:, 0:8, 0:8 - dw, dw * 128:(dw + 1) * 128] = (
            y2[:, :, dw:8, :].astype(bf16))

    # ---- conv1: Conv(128,256,3,s1,p0) + LeakyReLU + BN + dropout(id) -----
    # TODO(synk): F.dropout2d defaults to training=True (stochastic channel
    # drop); implemented here as inference-mode identity.
    acc = None
    for dh in range(3):
        lhs = a2_ref[:, dh:dh + 8, :, :].reshape(g * 64, 384)  # bf16, aligned
        d = jnp.dot(lhs, w3_ref[dh * 384:(dh + 1) * 384, :],
                    preferred_element_type=f32)
        acc = d if acc is None else acc + d
    y3 = _leaky(acc + b3_ref[...]) * s3_ref[...] + t3_ref[...]
    y3 = y3.reshape(g, 8, 8, 256)
    for dw in range(3):
        a3_ref[:, 0:8, 0:8 - dw, dw * 256:(dw + 1) * 256] = (
            y3[:, :, dw:8, :].astype(bf16))

    # ---- last: Conv(256,1,3,s1,p0) + sigmoid (Cout zero-padded to 128) ---
    acc = None
    for dh in range(3):
        lhs = a3_ref[:, dh:dh + 8, :, :].reshape(g * 64, 768)  # bf16, aligned
        d = jnp.dot(lhs, w4_ref[dh * 768:(dh + 1) * 768, :],
                    preferred_element_type=f32)
        acc = d if acc is None else acc + d
    o_ref[...] = jax.nn.sigmoid(acc + b4_ref[...]).reshape(g, 64, 128)


def _full_spec(shape):
    nd = len(shape)
    return pl.BlockSpec(tuple(shape), lambda b: (0,) * nd)


def _pick_group(n):
    # Split the batch across two "parallel" grid steps (both TensorCores on
    # v7x, plus DMA/compute overlap) only when each half still folds >= 4
    # batch elements into the layer-2..4 matmul M.
    if n % 2 == 0 and n >= 8:
        return n // 2
    return n


def _fused_pallas(args, n_batch, group):
    n_groups = n_batch // group
    kernel = functools.partial(_fused_kernel, group=group)
    in_specs = [pl.BlockSpec((group * 256, 64), lambda b: (b, 0))]
    in_specs += [_full_spec(a.shape) for a in args[1:]]
    flops = 2 * n_batch * (256 * 64 * 64 + 64 * 576 * 128
                           + 64 * 1152 * 256 + 64 * 2304 * 128)
    return pl.pallas_call(
        kernel,
        out_shape=jax.ShapeDtypeStruct((n_batch, 64, 128), jnp.float32),
        grid=(n_groups,),
        in_specs=in_specs,
        out_specs=pl.BlockSpec((group, 64, 128), lambda b: (b, 0, 0)),
        scratch_shapes=[
            pltpu.VMEM((4, group, 9, 16, 64), jnp.float32),      # parity L1 out
            pltpu.VMEM((group, 10, 8, 3 * 128), jnp.bfloat16),   # L2 width-im2col
            pltpu.VMEM((group, 10, 8, 3 * 256), jnp.bfloat16),   # L3 width-im2col
        ],
        compiler_params=pltpu.CompilerParams(
            dimension_semantics=("parallel",),
            vmem_limit_bytes=32 * 1024 * 1024),
        cost_estimate=pl.CostEstimate(
            flops=flops,
            transcendentals=n_batch * 64 * 128,
            bytes_accessed=3 * 1024 * 1024),
    )(*args)


def _wmat(w_oihw):
    """OIHW conv weight -> (KH*KW*Cin, Cout) with (dh, dw, cin)-ordered rows."""
    cout, cin, kh, kw = w_oihw.shape
    return jnp.transpose(w_oihw, (2, 3, 1, 0)).reshape(kh * kw * cin, cout)


def discriminator_forward(params, anno, img):
    """anno, img: (N, 3, 32, 32) NCHW, like the PyTorch module."""
    n, _, h, w = anno.shape
    assert h == 32 and w == 32, "kernel is specialized for 32x32 inputs"
    group = _pick_group(n)

    x = jnp.concatenate([anno, img], axis=1)                  # (N, 6, 32, 32)
    x = jnp.transpose(x, (0, 2, 3, 1)).astype(jnp.float32)    # NHWC
    xp = jnp.pad(x, ((0, 0), (1, 1), (1, 1), (0, 0)))         # (N, 34, 34, 6)

    # Layer-1 im2col with taps folded into K (9*6 = 54, padded to 64).  Rows
    # are parity-ordered (n, h%2, w%2, h//2, w//2) so the kernel can feed the
    # stride-2 layer 2 from a parity-split VMEM buffer with unit-stride reads.
    taps = [xp[:, dh:dh + 32:2, dw:dw + 32:2, :]
            for dh in range(3) for dw in range(3)]            # 9 x (N,16,16,6)
    x1 = jnp.stack(taps, axis=3).reshape(n, 16, 16, 54)
    x1 = x1.reshape(n, 8, 2, 8, 2, 54).transpose(0, 2, 4, 1, 3, 5)
    x1 = x1.reshape(n * 256, 54)
    x1 = jnp.pad(x1, ((0, 0), (0, 10))).astype(jnp.bfloat16)  # K 54 -> 64

    f32 = jnp.float32
    w1 = jnp.pad(_wmat(params["d1_w"]), ((0, 10), (0, 0))).astype(jnp.bfloat16)
    b1 = params["d1_b"].reshape(1, -1).astype(f32)
    w2 = _wmat(params["d2_w"]).astype(jnp.bfloat16)
    b2 = params["d2_b"].reshape(1, -1).astype(f32)
    s2 = params["bn2_scale"].reshape(1, -1).astype(f32)
    t2 = params["bn2_shift"].reshape(1, -1).astype(f32)
    w3 = _wmat(params["c1_w"]).astype(jnp.bfloat16)
    b3 = params["c1_b"].reshape(1, -1).astype(f32)
    s3 = params["bn3_scale"].reshape(1, -1).astype(f32)
    t3 = params["bn3_shift"].reshape(1, -1).astype(f32)
    # Last conv: pad Cout 1 -> 128 so MXU result / stores stay lane-dense
    # (narrow N does not change MXU time, so this padding is free).
    w4 = jnp.pad(_wmat(params["last_w"]), ((0, 0), (0, 127))).astype(jnp.bfloat16)
    b4 = jnp.pad(params["last_b"].reshape(1, 1), ((0, 0), (0, 127))).astype(f32)

    o = _fused_pallas(
        [x1, w1, b1, w2, b2, s2, t2, w3, b3, s3, t3, w4, b4],
        n_batch=n, group=group)
    o = o.reshape(n, 8, 8, 128)[:, :4, :4, 0:1]               # valid 4x4, ch 0
    return jnp.transpose(o, (0, 3, 1, 2))                     # (N, 1, 4, 4)


def init_params(key):
    """Deterministic synthetic parameters matching the module's shapes."""
    def conv_init(k, cout, cin, ksz):
        kw_, kb_ = jax.random.split(k)
        fan_in = cin * ksz * ksz
        w = jax.random.normal(kw_, (cout, cin, ksz, ksz), jnp.float32) / jnp.sqrt(fan_in)
        b = 0.01 * jax.random.normal(kb_, (cout,), jnp.float32)
        return w, b

    def bn_init(k, c):
        kg, kb = jax.random.split(k)
        gamma = 1.0 + 0.1 * jax.random.normal(kg, (c,), jnp.float32)
        beta = 0.1 * jax.random.normal(kb, (c,), jnp.float32)
        running_mean = jnp.zeros((c,), jnp.float32)
        running_var = jnp.ones((c,), jnp.float32)
        eps = 1e-5
        scale = gamma / jnp.sqrt(running_var + eps)
        shift = beta - running_mean * scale
        return scale, shift

    k1, k2, k3, k4, k5, k6 = jax.random.split(key, 6)
    p = {}
    p["d1_w"], p["d1_b"] = conv_init(k1, 64, 6, 3)        # down1.conv (no BN)
    p["d2_w"], p["d2_b"] = conv_init(k2, 128, 64, 3)      # down2.conv
    p["bn2_scale"], p["bn2_shift"] = bn_init(k3, 128)     # down2.bn
    p["c1_w"], p["c1_b"] = conv_init(k4, 256, 128, 3)     # conv1
    p["bn3_scale"], p["bn3_shift"] = bn_init(k5, 256)     # bn
    p["last_w"], p["last_b"] = conv_init(k6, 1, 256, 3)   # last
    return p


def reference_forward(params, anno, img):
    """Pure-JAX f32 reference (same eval-mode BN fold / identity dropout)."""
    def conv(x, w_oihw, b, stride, padding):
        w_hwio = jnp.transpose(w_oihw, (2, 3, 1, 0))
        y = jax.lax.conv_general_dilated(
            x, w_hwio, window_strides=(stride, stride),
            padding=[(padding, padding), (padding, padding)],
            dimension_numbers=("NHWC", "HWIO", "NHWC"),
            precision=jax.lax.Precision.HIGHEST)
        return y + b.reshape(1, 1, 1, -1)

    x = jnp.concatenate([anno, img], axis=1)
    x = jnp.transpose(x, (0, 2, 3, 1)).astype(jnp.float32)
    x = _leaky(conv(x, params["d1_w"], params["d1_b"], 2, 1))
    x = _leaky(conv(x, params["d2_w"], params["d2_b"], 2, 1))
    x = x * params["bn2_scale"].reshape(1, 1, 1, -1) + params["bn2_shift"].reshape(1, 1, 1, -1)
    x = _leaky(conv(x, params["c1_w"], params["c1_b"], 1, 0))
    x = x * params["bn3_scale"].reshape(1, 1, 1, -1) + params["bn3_shift"].reshape(1, 1, 1, -1)
    x = jax.nn.sigmoid(conv(x, params["last_w"], params["last_b"], 1, 0))
    return jnp.transpose(x, (0, 3, 1, 2))


if __name__ == "__main__":
    key = jax.random.PRNGKey(0)
    kp, ka, ki = jax.random.split(key, 3)
    params = init_params(kp)
    anno = jax.random.normal(ka, (2, 3, 32, 32), jnp.float32)
    img = jax.random.normal(ki, (2, 3, 32, 32), jnp.float32)

    fwd = jax.jit(discriminator_forward)
    out = jax.block_until_ready(fwd(params, anno, img))

    assert out.shape == (2, 1, 4, 4), out.shape
    assert bool(jnp.all(jnp.isfinite(out)))
    assert bool(jnp.all((out >= 0.0) & (out <= 1.0)))   # sigmoid output range

    ref = reference_forward(params, anno, img)
    err = float(jnp.max(jnp.abs(out - ref)))
    assert err < 5e-2, f"mismatch vs pure-JAX reference: max abs err = {err}"

    print("KERNEL_OK")
</pallas_src>

<mosaic_0001>
module attributes {stable_mosaic.version = 11 : i64} {
  func.func @_fused_kernel(%arg0: i32, %arg1: memref<512x64xbf16, #tpu.memory_space<vmem>>, %arg2: memref<64x64xbf16, #tpu.memory_space<vmem>>, %arg3: memref<1x64xf32, #tpu.memory_space<vmem>>, %arg4: memref<576x128xbf16, #tpu.memory_space<vmem>>, %arg5: memref<1x128xf32, #tpu.memory_space<vmem>>, %arg6: memref<1x128xf32, #tpu.memory_space<vmem>>, %arg7: memref<1x128xf32, #tpu.memory_space<vmem>>, %arg8: memref<1152x256xbf16, #tpu.memory_space<vmem>>, %arg9: memref<1x256xf32, #tpu.memory_space<vmem>>, %arg10: memref<1x256xf32, #tpu.memory_space<vmem>>, %arg11: memref<1x256xf32, #tpu.memory_space<vmem>>, %arg12: memref<2304x128xbf16, #tpu.memory_space<vmem>>, %arg13: memref<1x128xf32, #tpu.memory_space<vmem>>, %arg14: memref<2x64x128xf32, #tpu.memory_space<vmem>>, %arg15: memref<4x2x9x16x64xf32, #tpu.memory_space<vmem>>, %arg16: memref<2x10x8x384xbf16, #tpu.memory_space<vmem>>, %arg17: memref<2x10x8x768xbf16, #tpu.memory_space<vmem>>) attributes {dimension_semantics = [#tpu.dimension_semantics<parallel>], iteration_bounds = array<i64: 1>, scalar_prefetch = 0 : i64, scratch_operands = 3 : i64, tpu.core_type = #tpu.core_type<tc>, window_params = [{transform_indices = @transform_0, window_bounds = array<i64: 512, 64>}, {pipeline_mode = #tpu.pipeline_mode<synchronous>, transform_indices = @transform_1, window_bounds = array<i64: 64, 64>}, {pipeline_mode = #tpu.pipeline_mode<synchronous>, transform_indices = @transform_2, window_bounds = array<i64: 1, 64>}, {pipeline_mode = #tpu.pipeline_mode<synchronous>, transform_indices = @transform_3, window_bounds = array<i64: 576, 128>}, {pipeline_mode = #tpu.pipeline_mode<synchronous>, transform_indices = @transform_4, window_bounds = array<i64: 1, 128>}, {pipeline_mode = #tpu.pipeline_mode<synchronous>, transform_indices = @transform_5, window_bounds = array<i64: 1, 128>}, {pipeline_mode = #tpu.pipeline_mode<synchronous>, transform_indices = @transform_6, window_bounds = array<i64: 1, 128>}, {pipeline_mode = #tpu.pipeline_mode<synchronous>, transform_indices = @transform_7, window_bounds = array<i64: 1152, 256>}, {pipeline_mode = #tpu.pipeline_mode<synchronous>, transform_indices = @transform_8, window_bounds = array<i64: 1, 256>}, {pipeline_mode = #tpu.pipeline_mode<synchronous>, transform_indices = @transform_9, window_bounds = array<i64: 1, 256>}, {pipeline_mode = #tpu.pipeline_mode<synchronous>, transform_indices = @transform_10, window_bounds = array<i64: 1, 256>}, {pipeline_mode = #tpu.pipeline_mode<synchronous>, transform_indices = @transform_11, window_bounds = array<i64: 2304, 128>}, {pipeline_mode = #tpu.pipeline_mode<synchronous>, transform_indices = @transform_12, window_bounds = array<i64: 1, 128>}, {transform_indices = @transform_13, window_bounds = array<i64: 2, 64, 128>}]} {
    %cst = arith.constant 0.000000e+00 : f32
    %0 = vector.broadcast %cst : f32 to vector<2x1x16x64xf32>
    %c2 = arith.constant 2 : index
    %c0 = arith.constant 0 : index
    %c0_0 = arith.constant 0 : index
    %c0_1 = arith.constant 0 : index
    %c0_2 = arith.constant 0 : index
    %1 = vector.load %arg15[%c2, %c0, %c0_0, %c0_1, %c0_2] : memref<4x2x9x16x64xf32, #tpu.memory_space<vmem>>, vector<1x2x1x16x64xf32>
    %2 = vector.shape_cast %1 : vector<1x2x1x16x64xf32> to vector<2x1x16x64xf32>
    %3 = vector.shape_cast %0 : vector<2x1x16x64xf32> to vector<1x2x1x16x64xf32>
    tpu.vector_store %arg15[%c2, %c0, %c0_0, %c0_1, %c0_2], %3 {strides = array<i32>} : memref<4x2x9x16x64xf32, #tpu.memory_space<vmem>>, vector<1x2x1x16x64xf32>,
    %cst_3 = arith.constant 0.000000e+00 : f32
    %4 = vector.broadcast %cst_3 : f32 to vector<2x1x16x64xf32>
    %c3 = arith.constant 3 : index
    %c0_4 = arith.constant 0 : index
    %c0_5 = arith.constant 0 : index
    %c0_6 = arith.constant 0 : index
    %c0_7 = arith.constant 0 : index
    %5 = vector.load %arg15[%c3, %c0_4, %c0_5, %c0_6, %c0_7] : memref<4x2x9x16x64xf32, #tpu.memory_space<vmem>>, vector<1x2x1x16x64xf32>
    %6 = vector.shape_cast %5 : vector<1x2x1x16x64xf32> to vector<2x1x16x64xf32>
    %7 = vector.shape_cast %4 : vector<2x1x16x64xf32> to vector<1x2x1x16x64xf32>
    tpu.vector_store %arg15[%c3, %c0_4, %c0_5, %c0_6, %c0_7], %7 {strides = array<i32>} : memref<4x2x9x16x64xf32, #tpu.memory_space<vmem>>, vector<1x2x1x16x64xf32>,
    %cst_8 = arith.constant 0.000000e+00 : f32
    %8 = vector.broadcast %cst_8 : f32 to vector<2x9x1x64xf32>
    %c1 = arith.constant 1 : index
    %c0_9 = arith.constant 0 : index
    %c0_10 = arith.constant 0 : index
    %c7 = arith.constant 7 : index
    %c0_11 = arith.constant 0 : index
    %9 = vector.load %arg15[%c1, %c0_9, %c0_10, %c7, %c0_11] : memref<4x2x9x16x64xf32, #tpu.memory_space<vmem>>, vector<1x2x9x1x64xf32>
    %10 = vector.shape_cast %9 : vector<1x2x9x1x64xf32> to vector<2x9x1x64xf32>
    %11 = vector.shape_cast %8 : vector<2x9x1x64xf32> to vector<1x2x9x1x64xf32>
    tpu.vector_store %arg15[%c1, %c0_9, %c0_10, %c7, %c0_11], %11 {strides = array<i32>} : memref<4x2x9x16x64xf32, #tpu.memory_space<vmem>>, vector<1x2x9x1x64xf32>,
    %cst_12 = arith.constant 0.000000e+00 : f32
    %12 = vector.broadcast %cst_12 : f32 to vector<2x9x1x64xf32>
    %c3_13 = arith.constant 3 : index
    %c0_14 = arith.constant 0 : index
    %c0_15 = arith.constant 0 : index
    %c7_16 = arith.constant 7 : index
    %c0_17 = arith.constant 0 : index
    %13 = vector.load %arg15[%c3_13, %c0_14, %c0_15, %c7_16, %c0_17] : memref<4x2x9x16x64xf32, #tpu.memory_space<vmem>>, vector<1x2x9x1x64xf32>
    %14 = vector.shape_cast %13 : vector<1x2x9x1x64xf32> to vector<2x9x1x64xf32>
    %15 = vector.shape_cast %12 : vector<2x9x1x64xf32> to vector<1x2x9x1x64xf32>
    tpu.vector_store %arg15[%c3_13, %c0_14, %c0_15, %c7_16, %c0_17], %15 {strides = array<i32>} : memref<4x2x9x16x64xf32, #tpu.memory_space<vmem>>, vector<1x2x9x1x64xf32>,
    %c0_18 = arith.constant 0 : index
    %c0_19 = arith.constant 0 : index
    %16 = vector.load %arg1[%c0_18, %c0_19] : memref<512x64xbf16, #tpu.memory_space<vmem>>, vector<512x64xbf16>
    %c0_20 = arith.constant 0 : index
    %c0_21 = arith.constant 0 : index
    %17 = vector.load %arg2[%c0_20, %c0_21] : memref<64x64xbf16, #tpu.memory_space<vmem>>, vector<64x64xbf16>
    %cst_22 = arith.constant dense<0.000000e+00> : vector<512x64xf32>
    %18 = tpu.matmul %16, %17, %cst_22 {dimension_numbers = #tpu.dot_dimension_numbers<[1], [0], [0], [1], [0, 0, 1, 1], [], []>} : vector<512x64xbf16>, vector<64x64xbf16>, vector<512x64xf32> -> vector<512x64xf32>
    %c0_23 = arith.constant 0 : index
    %c0_24 = arith.constant 0 : index
    %19 = vector.load %arg3[%c0_23, %c0_24] : memref<1x64xf32, #tpu.memory_space<vmem>>, vector<1x64xf32>
    %20 = vector.broadcast %19 : vector<1x64xf32> to vector<512x64xf32>
    %21 = arith.addf %18, %20 : vector<512x64xf32>
    %cst_25 = arith.constant 0.000000e+00 : f32
    %22 = vector.broadcast %cst_25 : f32 to vector<512x64xf32>
    %23 = arith.cmpf oge, %21, %22 : vector<512x64xf32>
    %cst_26 = arith.constant 0.00999999977 : f32
    %24 = vector.broadcast %cst_26 : f32 to vector<512x64xf32>
    %25 = arith.mulf %24, %21 : vector<512x64xf32>
    %26 = arith.select %23, %21, %25 : vector<512x64xi1>, vector<512x64xf32>
    %27 = vector.shape_cast %26 : vector<512x64xf32> to vector<2x4x64x64xf32>
    %28 = vector.extract_strided_slice %27 {offsets = [0, 0, 0, 0], sizes = [2, 1, 64, 64], strides = [1, 1, 1, 1]} : vector<2x4x64x64xf32> to vector<2x1x64x64xf32>
    %29 = vector.shape_cast %28 : vector<2x1x64x64xf32> to vector<2x64x64xf32>
    %30 = vector.shape_cast %29 : vector<2x64x64xf32> to vector<2x8x8x64xf32>
    %c0_27 = arith.constant 0 : index
    %c0_28 = arith.constant 0 : index
    %c0_29 = arith.constant 0 : index
    %c0_30 = arith.constant 0 : index
    %c0_31 = arith.constant 0 : index
    %31 = vector.load %arg15[%c0_27, %c0_28, %c0_29, %c0_30, %c0_31] : memref<4x2x9x16x64xf32, #tpu.memory_space<vmem>>, vector<1x2x8x8x64xf32>
    %32 = vector.shape_cast %31 : vector<1x2x8x8x64xf32> to vector<2x8x8x64xf32>
    %33 = vector.shape_cast %30 : vector<2x8x8x64xf32> to vector<1x2x8x8x64xf32>
    tpu.vector_store %arg15[%c0_27, %c0_28, %c0_29, %c0_30, %c0_31], %33 {strides = array<i32>} : memref<4x2x9x16x64xf32, #tpu.memory_space<vmem>>, vector<1x2x8x8x64xf32>,
    %34 = vector.extract_strided_slice %27 {offsets = [0, 1, 0, 0], sizes = [2, 1, 64, 64], strides = [1, 1, 1, 1]} : vector<2x4x64x64xf32> to vector<2x1x64x64xf32>
    %35 = vector.shape_cast %34 : vector<2x1x64x64xf32> to vector<2x64x64xf32>
    %36 = vector.shape_cast %35 : vector<2x64x64xf32> to vector<2x8x8x64xf32>
    %c1_32 = arith.constant 1 : index
    %c0_33 = arith.constant 0 : index
    %c0_34 = arith.constant 0 : index
    %c8 = arith.constant 8 : index
    %c0_35 = arith.constant 0 : index
    %37 = vector.load %arg15[%c1_32, %c0_33, %c0_34, %c8, %c0_35] : memref<4x2x9x16x64xf32, #tpu.memory_space<vmem>>, vector<1x2x8x8x64xf32>
    %38 = vector.shape_cast %37 : vector<1x2x8x8x64xf32> to vector<2x8x8x64xf32>
    %39 = vector.shape_cast %36 : vector<2x8x8x64xf32> to vector<1x2x8x8x64xf32>
    tpu.vector_store %arg15[%c1_32, %c0_33, %c0_34, %c8, %c0_35], %39 {strides = array<i32>} : memref<4x2x9x16x64xf32, #tpu.memory_space<vmem>>, vector<1x2x8x8x64xf32>,
    %40 = vector.extract_strided_slice %27 {offsets = [0, 2, 0, 0], sizes = [2, 1, 64, 64], strides = [1, 1, 1, 1]} : vector<2x4x64x64xf32> to vector<2x1x64x64xf32>
    %41 = vector.shape_cast %40 : vector<2x1x64x64xf32> to vector<2x64x64xf32>
    %42 = vector.shape_cast %41 : vector<2x64x64xf32> to vector<2x8x8x64xf32>
    %c2_36 = arith.constant 2 : index
    %c0_37 = arith.constant 0 : index
    %c1_38 = arith.constant 1 : index
    %c0_39 = arith.constant 0 : index
    %c0_40 = arith.constant 0 : index
    %43 = vector.load %arg15[%c2_36, %c0_37, %c1_38, %c0_39, %c0_40] : memref<4x2x9x16x64xf32, #tpu.memory_space<vmem>>, vector<1x2x8x8x64xf32>
    %44 = vector.shape_cast %43 : vector<1x2x8x8x64xf32> to vector<2x8x8x64xf32>
    %45 = vector.shape_cast %42 : vector<2x8x8x64xf32> to vector<1x2x8x8x64xf32>
    tpu.vector_store %arg15[%c2_36, %c0_37, %c1_38, %c0_39, %c0_40], %45 {strides = array<i32>} : memref<4x2x9x16x64xf32, #tpu.memory_space<vmem>>, vector<1x2x8x8x64xf32>,
    %46 = vector.extract_strided_slice %27 {offsets = [0, 3, 0, 0], sizes = [2, 1, 64, 64], strides = [1, 1, 1, 1]} : vector<2x4x64x64xf32> to vector<2x1x64x64xf32>
    %47 = vector.shape_cast %46 : vector<2x1x64x64xf32> to vector<2x64x64xf32>
    %48 = vector.shape_cast %47 : vector<2x64x64xf32> to vector<2x8x8x64xf32>
    %c3_41 = arith.constant 3 : index
    %c0_42 = arith.constant 0 : index
    %c1_43 = arith.constant 1 : index
    %c8_44 = arith.constant 8 : index
    %c0_45 = arith.constant 0 : index
    %49 = vector.load %arg15[%c3_41, %c0_42, %c1_43, %c8_44, %c0_45] : memref<4x2x9x16x64xf32, #tpu.memory_space<vmem>>, vector<1x2x8x8x64xf32>
    %50 = vector.shape_cast %49 : vector<1x2x8x8x64xf32> to vector<2x8x8x64xf32>
    %51 = vector.shape_cast %48 : vector<2x8x8x64xf32> to vector<1x2x8x8x64xf32>
    tpu.vector_store %arg15[%c3_41, %c0_42, %c1_43, %c8_44, %c0_45], %51 {strides = array<i32>} : memref<4x2x9x16x64xf32, #tpu.memory_space<vmem>>, vector<1x2x8x8x64xf32>,
    %c3_46 = arith.constant 3 : index
    %c0_47 = arith.constant 0 : index
    %c0_48 = arith.constant 0 : index
    %c7_49 = arith.constant 7 : index
    %c0_50 = arith.constant 0 : index
    %52 = vector.load %arg15[%c3_46, %c0_47, %c0_48, %c7_49, %c0_50] : memref<4x2x9x16x64xf32, #tpu.memory_space<vmem>>, vector<1x2x8x8x64xf32>
    %53 = vector.shape_cast %52 : vector<1x2x8x8x64xf32> to vector<2x8x8x64xf32>
    %54 = arith.truncf %53 : vector<2x8x8x64xf32> to vector<2x8x8x64xbf16>
    %55 = vector.shape_cast %54 : vector<2x8x8x64xbf16> to vector<128x64xbf16>
    %c0_51 = arith.constant 0 : index
    %c0_52 = arith.constant 0 : index
    %56 = vector.load %arg4[%c0_51, %c0_52] : memref<576x128xbf16, #tpu.memory_space<vmem>>, vector<64x128xbf16>
    %cst_53 = arith.constant dense<0.000000e+00> : vector<128x128xf32>
    %57 = tpu.matmul %55, %56, %cst_53 {dimension_numbers = #tpu.dot_dimension_numbers<[1], [0], [0], [1], [0, 0, 1, 1], [], []>} : vector<128x64xbf16>, vector<64x128xbf16>, vector<128x128xf32> -> vector<128x128xf32>
    %c2_54 = arith.constant 2 : index
    %c0_55 = arith.constant 0 : index
    %c0_56 = arith.constant 0 : index
    %c0_57 = arith.constant 0 : index
    %c0_58 = arith.constant 0 : index
    %58 = vector.load %arg15[%c2_54, %c0_55, %c0_56, %c0_57, %c0_58] : memref<4x2x9x16x64xf32, #tpu.memory_space<vmem>>, vector<1x2x8x8x64xf32>
    %59 = vector.shape_cast %58 : vector<1x2x8x8x64xf32> to vector<2x8x8x64xf32>
    %60 = arith.truncf %59 : vector<2x8x8x64xf32> to vector<2x8x8x64xbf16>
    %61 = vector.shape_cast %60 : vector<2x8x8x64xbf16> to vector<128x64xbf16>
    %c64 = arith.constant 64 : index
    %c0_59 = arith.constant 0 : index
    %62 = vector.load %arg4[%c64, %c0_59] : memref<576x128xbf16, #tpu.memory_space<vmem>>, vector<64x128xbf16>
    %cst_60 = arith.constant dense<0.000000e+00> : vector<128x128xf32>
    %63 = tpu.matmul %61, %62, %cst_60 {dimension_numbers = #tpu.dot_dimension_numbers<[1], [0], [0], [1], [0, 0, 1, 1], [], []>} : vector<128x64xbf16>, vector<64x128xbf16>, vector<128x128xf32> -> vector<128x128xf32>
    %64 = arith.addf %57, %63 : vector<128x128xf32>
    %c3_61 = arith.constant 3 : index
    %c0_62 = arith.constant 0 : index
    %c0_63 = arith.constant 0 : index
    %c8_64 = arith.constant 8 : index
    %c0_65 = arith.constant 0 : index
    %65 = vector.load %arg15[%c3_61, %c0_62, %c0_63, %c8_64, %c0_65] : memref<4x2x9x16x64xf32, #tpu.memory_space<vmem>>, vector<1x2x8x8x64xf32>
    %66 = vector.shape_cast %65 : vector<1x2x8x8x64xf32> to vector<2x8x8x64xf32>
    %67 = arith.truncf %66 : vector<2x8x8x64xf32> to vector<2x8x8x64xbf16>
    %68 = vector.shape_cast %67 : vector<2x8x8x64xbf16> to vector<128x64xbf16>
    %c128 = arith.constant 128 : index
    %c0_66 = arith.constant 0 : index
    %69 = vector.load %arg4[%c128, %c0_66] : memref<576x128xbf16, #tpu.memory_space<vmem>>, vector<64x128xbf16>
    %cst_67 = arith.constant dense<0.000000e+00> : vector<128x128xf32>
    %70 = tpu.matmul %68, %69, %cst_67 {dimension_numbers = #tpu.dot_dimension_numbers<[1], [0], [0], [1], [0, 0, 1, 1], [], []>} : vector<128x64xbf16>, vector<64x128xbf16>, vector<128x128xf32> -> vector<128x128xf32>
    %71 = arith.addf %64, %70 : vector<128x128xf32>
    %c1_68 = arith.constant 1 : index
    %c0_69 = arith.constant 0 : index
    %c0_70 = arith.constant 0 : index
    %c7_71 = arith.constant 7 : index
    %c0_72 = arith.constant 0 : index
    %72 = vector.load %arg15[%c1_68, %c0_69, %c0_70, %c7_71, %c0_72] : memref<4x2x9x16x64xf32, #tpu.memory_space<vmem>>, vector<1x2x8x8x64xf32>
    %73 = vector.shape_cast %72 : vector<1x2x8x8x64xf32> to vector<2x8x8x64xf32>
    %74 = arith.truncf %73 : vector<2x8x8x64xf32> to vector<2x8x8x64xbf16>
    %75 = vector.shape_cast %74 : vector<2x8x8x64xbf16> to vector<128x64xbf16>
    %c192 = arith.constant 192 : index
    %c0_73 = arith.constant 0 : index
    %76 = vector.load %arg4[%c192, %c0_73] : memref<576x128xbf16, #tpu.memory_space<vmem>>, vector<64x128xbf16>
    %cst_74 = arith.constant dense<0.000000e+00> : vector<128x128xf32>
    %77 = tpu.matmul %75, %76, %cst_74 {dimension_numbers = #tpu.dot_dimension_numbers<[1], [0], [0], [1], [0, 0, 1, 1], [], []>} : vector<128x64xbf16>, vector<64x128xbf16>, vector<128x128xf32> -> vector<128x128xf32>
    %78 = arith.addf %71, %77 : vector<128x128xf32>
    %c0_75 = arith.constant 0 : index
    %c0_76 = arith.constant 0 : index
    %c0_77 = arith.constant 0 : index
    %c0_78 = arith.constant 0 : index
    %c0_79 = arith.constant 0 : index
    %79 = vector.load %arg15[%c0_75, %c0_76, %c0_77, %c0_78, %c0_79] : memref<4x2x9x16x64xf32, #tpu.memory_space<vmem>>, vector<1x2x8x8x64xf32>
    %80 = vector.shape_cast %79 : vector<1x2x8x8x64xf32> to vector<2x8x8x64xf32>
    %81 = arith.truncf %80 : vector<2x8x8x64xf32> to vector<2x8x8x64xbf16>
    %82 = vector.shape_cast %81 : vector<2x8x8x64xbf16> to vector<128x64xbf16>
    %c256 = arith.constant 256 : index
    %c0_80 = arith.constant 0 : index
    %83 = vector.load %arg4[%c256, %c0_80] : memref<576x128xbf16, #tpu.memory_space<vmem>>, vector<64x128xbf16>
    %cst_81 = arith.constant dense<0.000000e+00> : vector<128x128xf32>
    %84 = tpu.matmul %82, %83, %cst_81 {dimension_numbers = #tpu.dot_dimension_numbers<[1], [0], [0], [1], [0, 0, 1, 1], [], []>} : vector<128x64xbf16>, vector<64x128xbf16>, vector<128x128xf32> -> vector<128x128xf32>
    %85 = arith.addf %78, %84 : vector<128x128xf32>
    %c1_82 = arith.constant 1 : index
    %c0_83 = arith.constant 0 : index
    %c0_84 = arith.constant 0 : index
    %c8_85 = arith.constant 8 : index
    %c0_86 = arith.constant 0 : index
    %86 = vector.load %arg15[%c1_82, %c0_83, %c0_84, %c8_85, %c0_86] : memref<4x2x9x16x64xf32, #tpu.memory_space<vmem>>, vector<1x2x8x8x64xf32>
    %87 = vector.shape_cast %86 : vector<1x2x8x8x64xf32> to vector<2x8x8x64xf32>
    %88 = arith.truncf %87 : vector<2x8x8x64xf32> to vector<2x8x8x64xbf16>
    %89 = vector.shape_cast %88 : vector<2x8x8x64xbf16> to vector<128x64xbf16>
    %c320 = arith.constant 320 : index
    %c0_87 = arith.constant 0 : index
    %90 = vector.load %arg4[%c320, %c0_87] : memref<576x128xbf16, #tpu.memory_space<vmem>>, vector<64x128xbf16>
    %cst_88 = arith.constant dense<0.000000e+00> : vector<128x128xf32>
    %91 = tpu.matmul %89, %90, %cst_88 {dimension_numbers = #tpu.dot_dimension_numbers<[1], [0], [0], [1], [0, 0, 1, 1], [], []>} : vector<128x64xbf16>, vector<64x128xbf16>, vector<128x128xf32> -> vector<128x128xf32>
    %92 = arith.addf %85, %91 : vector<128x128xf32>
    %c3_89 = arith.constant 3 : index
    %c0_90 = arith.constant 0 : index
    %c1_91 = arith.constant 1 : index
    %c7_92 = arith.constant 7 : index
    %c0_93 = arith.constant 0 : index
    %93 = vector.load %arg15[%c3_89, %c0_90, %c1_91, %c7_92, %c0_93] : memref<4x2x9x16x64xf32, #tpu.memory_space<vmem>>, vector<1x2x8x8x64xf32>
    %94 = vector.shape_cast %93 : vector<1x2x8x8x64xf32> to vector<2x8x8x64xf32>
    %95 = arith.truncf %94 : vector<2x8x8x64xf32> to vector<2x8x8x64xbf16>
    %96 = vector.shape_cast %95 : vector<2x8x8x64xbf16> to vector<128x64xbf16>
    %c384 = arith.constant 384 : index
    %c0_94 = arith.constant 0 : index
    %97 = vector.load %arg4[%c384, %c0_94] : memref<576x128xbf16, #tpu.memory_space<vmem>>, vector<64x128xbf16>
    %cst_95 = arith.constant dense<0.000000e+00> : vector<128x128xf32>
    %98 = tpu.matmul %96, %97, %cst_95 {dimension_numbers = #tpu.dot_dimension_numbers<[1], [0], [0], [1], [0, 0, 1, 1], [], []>} : vector<128x64xbf16>, vector<64x128xbf16>, vector<128x128xf32> -> vector<128x128xf32>
    %99 = arith.addf %92, %98 : vector<128x128xf32>
    %c2_96 = arith.constant 2 : index
    %c0_97 = arith.constant 0 : index
    %c1_98 = arith.constant 1 : index
    %c0_99 = arith.constant 0 : index
    %c0_100 = arith.constant 0 : index
    %100 = vector.load %arg15[%c2_96, %c0_97, %c1_98, %c0_99, %c0_100] : memref<4x2x9x16x64xf32, #tpu.memory_space<vmem>>, vector<1x2x8x8x64xf32>
    %101 = vector.shape_cast %100 : vector<1x2x8x8x64xf32> to vector<2x8x8x64xf32>
    %102 = arith.truncf %101 : vector<2x8x8x64xf32> to vector<2x8x8x64xbf16>
    %103 = vector.shape_cast %102 : vector<2x8x8x64xbf16> to vector<128x64xbf16>
    %c448 = arith.constant 448 : index
    %c0_101 = arith.constant 0 : index
    %104 = vector.load %arg4[%c448, %c0_101] : memref<576x128xbf16, #tpu.memory_space<vmem>>, vector<64x128xbf16>
    %cst_102 = arith.constant dense<0.000000e+00> : vector<128x128xf32>
    %105 = tpu.matmul %103, %104, %cst_102 {dimension_numbers = #tpu.dot_dimension_numbers<[1], [0], [0], [1], [0, 0, 1, 1], [], []>} : vector<128x64xbf16>, vector<64x128xbf16>, vector<128x128xf32> -> vector<128x128xf32>
    %106 = arith.addf %99, %105 : vector<128x128xf32>
    %c3_103 = arith.constant 3 : index
    %c0_104 = arith.constant 0 : index
    %c1_105 = arith.constant 1 : index
    %c8_106 = arith.constant 8 : index
    %c0_107 = arith.constant 0 : index
    %107 = vector.load %arg15[%c3_103, %c0_104, %c1_105, %c8_106, %c0_107] : memref<4x2x9x16x64xf32, #tpu.memory_space<vmem>>, vector<1x2x8x8x64xf32>
    %108 = vector.shape_cast %107 : vector<1x2x8x8x64xf32> to vector<2x8x8x64xf32>
    %109 = arith.truncf %108 : vector<2x8x8x64xf32> to vector<2x8x8x64xbf16>
    %110 = vector.shape_cast %109 : vector<2x8x8x64xbf16> to vector<128x64xbf16>
    %c512 = arith.constant 512 : index
    %c0_108 = arith.constant 0 : index
    %111 = vector.load %arg4[%c512, %c0_108] : memref<576x128xbf16, #tpu.memory_space<vmem>>, vector<64x128xbf16>
    %cst_109 = arith.constant dense<0.000000e+00> : vector<128x128xf32>
    %112 = tpu.matmul %110, %111, %cst_109 {dimension_numbers = #tpu.dot_dimension_numbers<[1], [0], [0], [1], [0, 0, 1, 1], [], []>} : vector<128x64xbf16>, vector<64x128xbf16>, vector<128x128xf32> -> vector<128x128xf32>
    %113 = arith.addf %106, %112 : vector<128x128xf32>
    %c0_110 = arith.constant 0 : index
    %c0_111 = arith.constant 0 : index
    %114 = vector.load %arg5[%c0_110, %c0_111] : memref<1x128xf32, #tpu.memory_space<vmem>>, vector<1x128xf32>
    %115 = vector.broadcast %114 : vector<1x128xf32> to vector<128x128xf32>
    %116 = arith.addf %113, %115 : vector<128x128xf32>
    %cst_112 = arith.constant 0.000000e+00 : f32
    %117 = vector.broadcast %cst_112 : f32 to vector<128x128xf32>
    %118 = arith.cmpf oge, %116, %117 : vector<128x128xf32>
    %cst_113 = arith.constant 0.00999999977 : f32
    %119 = vector.broadcast %cst_113 : f32 to vector<128x128xf32>
    %120 = arith.mulf %119, %116 : vector<128x128xf32>
    %121 = arith.select %118, %116, %120 : vector<128x128xi1>, vector<128x128xf32>
    %c0_114 = arith.constant 0 : index
    %c0_115 = arith.constant 0 : index
    %122 = vector.load %arg6[%c0_114, %c0_115] : memref<1x128xf32, #tpu.memory_space<vmem>>, vector<1x128xf32>
    %123 = vector.broadcast %122 : vector<1x128xf32> to vector<128x128xf32>
    %124 = arith.mulf %121, %123 : vector<128x128xf32>
    %c0_116 = arith.constant 0 : index
    %c0_117 = arith.constant 0 : index
    %125 = vector.load %arg7[%c0_116, %c0_117] : memref<1x128xf32, #tpu.memory_space<vmem>>, vector<1x128xf32>
    %126 = vector.broadcast %125 : vector<1x128xf32> to vector<128x128xf32>
    %127 = arith.addf %124, %126 : vector<128x128xf32>
    %128 = vector.shape_cast %127 : vector<128x128xf32> to vector<2x8x8x128xf32>
    %129 = arith.truncf %128 : vector<2x8x8x128xf32> to vector<2x8x8x128xbf16>
    %c0_118 = arith.constant 0 : index
    %c0_119 = arith.constant 0 : index
    %c0_120 = arith.constant 0 : index
    %c0_121 = arith.constant 0 : index
    %130 = vector.load %arg16[%c0_118, %c0_119, %c0_120, %c0_121] : memref<2x10x8x384xbf16, #tpu.memory_space<vmem>>, vector<2x8x8x128xbf16>
    tpu.vector_store %arg16[%c0_118, %c0_119, %c0_120, %c0_121], %129 {strides = array<i32>} : memref<2x10x8x384xbf16, #tpu.memory_space<vmem>>, vector<2x8x8x128xbf16>,
    %131 = vector.extract_strided_slice %128 {offsets = [0, 0, 1, 0], sizes = [2, 8, 7, 128], strides = [1, 1, 1, 1]} : vector<2x8x8x128xf32> to vector<2x8x7x128xf32>
    %132 = arith.truncf %131 : vector<2x8x7x128xf32> to vector<2x8x7x128xbf16>
    %c0_122 = arith.constant 0 : index
    %c0_123 = arith.constant 0 : index
    %c0_124 = arith.constant 0 : index
    %c128_125 = arith.constant 128 : index
    %133 = vector.load %arg16[%c0_122, %c0_123, %c0_124, %c128_125] : memref<2x10x8x384xbf16, #tpu.memory_space<vmem>>, vector<2x8x7x128xbf16>
    tpu.vector_store %arg16[%c0_122, %c0_123, %c0_124, %c128_125], %132 {strides = array<i32>} : memref<2x10x8x384xbf16, #tpu.memory_space<vmem>>, vector<2x8x7x128xbf16>,
    %134 = vector.extract_strided_slice %128 {offsets = [0, 0, 2, 0], sizes = [2, 8, 6, 128], strides = [1, 1, 1, 1]} : vector<2x8x8x128xf32> to vector<2x8x6x128xf32>
    %135 = arith.truncf %134 : vector<2x8x6x128xf32> to vector<2x8x6x128xbf16>
    %c0_126 = arith.constant 0 : index
    %c0_127 = arith.constant 0 : index
    %c0_128 = arith.constant 0 : index
    %c256_129 = arith.constant 256 : index
    %136 = vector.load %arg16[%c0_126, %c0_127, %c0_128, %c256_129] : memref<2x10x8x384xbf16, #tpu.memory_space<vmem>>, vector<2x8x6x128xbf16>
    tpu.vector_store %arg16[%c0_126, %c0_127, %c0_128, %c256_129], %135 {strides = array<i32>} : memref<2x10x8x384xbf16, #tpu.memory_space<vmem>>, vector<2x8x6x128xbf16>,
    %c0_130 = arith.constant 0 : index
    %c0_131 = arith.constant 0 : index
    %c0_132 = arith.constant 0 : index
    %c0_133 = arith.constant 0 : index
    %137 = vector.load %arg16[%c0_130, %c0_131, %c0_132, %c0_133] : memref<2x10x8x384xbf16, #tpu.memory_space<vmem>>, vector<2x8x8x384xbf16>
    %138 = vector.shape_cast %137 : vector<2x8x8x384xbf16> to vector<128x384xbf16>
    %c0_134 = arith.constant 0 : index
    %c0_135 = arith.constant 0 : index
    %139 = vector.load %arg8[%c0_134, %c0_135] : memref<1152x256xbf16, #tpu.memory_space<vmem>>, vector<384x256xbf16>
    %cst_136 = arith.constant dense<0.000000e+00> : vector<128x256xf32>
    %140 = tpu.matmul %138, %139, %cst_136 {dimension_numbers = #tpu.dot_dimension_numbers<[1], [0], [0], [1], [0, 0, 1, 1], [], []>} : vector<128x384xbf16>, vector<384x256xbf16>, vector<128x256xf32> -> vector<128x256xf32>
    %c0_137 = arith.constant 0 : index
    %c1_138 = arith.constant 1 : index
    %c0_139 = arith.constant 0 : index
    %c0_140 = arith.constant 0 : index
    %141 = vector.load %arg16[%c0_137, %c1_138, %c0_139, %c0_140] : memref<2x10x8x384xbf16, #tpu.memory_space<vmem>>, vector<2x8x8x384xbf16>
    %142 = vector.shape_cast %141 : vector<2x8x8x384xbf16> to vector<128x384xbf16>
    %c384_141 = arith.constant 384 : index
    %c0_142 = arith.constant 0 : index
    %143 = vector.load %arg8[%c384_141, %c0_142] : memref<1152x256xbf16, #tpu.memory_space<vmem>>, vector<384x256xbf16>
    %cst_143 = arith.constant dense<0.000000e+00> : vector<128x256xf32>
    %144 = tpu.matmul %142, %143, %cst_143 {dimension_numbers = #tpu.dot_dimension_numbers<[1], [0], [0], [1], [0, 0, 1, 1], [], []>} : vector<128x384xbf16>, vector<384x256xbf16>, vector<128x256xf32> -> vector<128x256xf32>
    %145 = arith.addf %140, %144 : vector<128x256xf32>
    %c0_144 = arith.constant 0 : index
    %c2_145 = arith.constant 2 : index
    %c0_146 = arith.constant 0 : index
    %c0_147 = arith.constant 0 : index
    %146 = vector.load %arg16[%c0_144, %c2_145, %c0_146, %c0_147] : memref<2x10x8x384xbf16, #tpu.memory_space<vmem>>, vector<2x8x8x384xbf16>
    %147 = vector.shape_cast %146 : vector<2x8x8x384xbf16> to vector<128x384xbf16>
    %c768 = arith.constant 768 : index
    %c0_148 = arith.constant 0 : index
    %148 = vector.load %arg8[%c768, %c0_148] : memref<1152x256xbf16, #tpu.memory_space<vmem>>, vector<384x256xbf16>
    %cst_149 = arith.constant dense<0.000000e+00> : vector<128x256xf32>
    %149 = tpu.matmul %147, %148, %cst_149 {dimension_numbers = #tpu.dot_dimension_numbers<[1], [0], [0], [1], [0, 0, 1, 1], [], []>} : vector<128x384xbf16>, vector<384x256xbf16>, vector<128x256xf32> -> vector<128x256xf32>
    %150 = arith.addf %145, %149 : vector<128x256xf32>
    %c0_150 = arith.constant 0 : index
    %c0_151 = arith.constant 0 : index
    %151 = vector.load %arg9[%c0_150, %c0_151] : memref<1x256xf32, #tpu.memory_space<vmem>>, vector<1x256xf32>
    %152 = vector.broadcast %151 : vector<1x256xf32> to vector<128x256xf32>
    %153 = arith.addf %150, %152 : vector<128x256xf32>
    %cst_152 = arith.constant 0.000000e+00 : f32
    %154 = vector.broadcast %cst_152 : f32 to vector<128x256xf32>
    %155 = arith.cmpf oge, %153, %154 : vector<128x256xf32>
    %cst_153 = arith.constant 0.00999999977 : f32
    %156 = vector.broadcast %cst_153 : f32 to vector<128x256xf32>
    %157 = arith.mulf %156, %153 : vector<128x256xf32>
    %158 = arith.select %155, %153, %157 : vector<128x256xi1>, vector<128x256xf32>
    %c0_154 = arith.constant 0 : index
    %c0_155 = arith.constant 0 : index
    %159 = vector.load %arg10[%c0_154, %c0_155] : memref<1x256xf32, #tpu.memory_space<vmem>>, vector<1x256xf32>
    %160 = vector.broadcast %159 : vector<1x256xf32> to vector<128x256xf32>
    %161 = arith.mulf %158, %160 : vector<128x256xf32>
    %c0_156 = arith.constant 0 : index
    %c0_157 = arith.constant 0 : index
    %162 = vector.load %arg11[%c0_156, %c0_157] : memref<1x256xf32, #tpu.memory_space<vmem>>, vector<1x256xf32>
    %163 = vector.broadcast %162 : vector<1x256xf32> to vector<128x256xf32>
    %164 = arith.addf %161, %163 : vector<128x256xf32>
    %165 = vector.shape_cast %164 : vector<128x256xf32> to vector<2x8x8x256xf32>
    %166 = arith.truncf %165 : vector<2x8x8x256xf32> to vector<2x8x8x256xbf16>
    %c0_158 = arith.constant 0 : index
    %c0_159 = arith.constant 0 : index
    %c0_160 = arith.constant 0 : index
    %c0_161 = arith.constant 0 : index
    %167 = vector.load %arg17[%c0_158, %c0_159, %c0_160, %c0_161] : memref<2x10x8x768xbf16, #tpu.memory_space<vmem>>, vector<2x8x8x256xbf16>
    tpu.vector_store %arg17[%c0_158, %c0_159, %c0_160, %c0_161], %166 {strides = array<i32>} : memref<2x10x8x768xbf16, #tpu.memory_space<vmem>>, vector<2x8x8x256xbf16>,
    %168 = vector.extract_strided_slice %165 {offsets = [0, 0, 1, 0], sizes = [2, 8, 7, 256], strides = [1, 1, 1, 1]} : vector<2x8x8x256xf32> to vector<2x8x7x256xf32>
    %169 = arith.truncf %168 : vector<2x8x7x256xf32> to vector<2x8x7x256xbf16>
    %c0_162 = arith.constant 0 : index
    %c0_163 = arith.constant 0 : index
    %c0_164 = arith.constant 0 : index
    %c256_165 = arith.constant 256 : index
    %170 = vector.load %arg17[%c0_162, %c0_163, %c0_164, %c256_165] : memref<2x10x8x768xbf16, #tpu.memory_space<vmem>>, vector<2x8x7x256xbf16>
    tpu.vector_store %arg17[%c0_162, %c0_163, %c0_164, %c256_165], %169 {strides = array<i32>} : memref<2x10x8x768xbf16, #tpu.memory_space<vmem>>, vector<2x8x7x256xbf16>,
    %171 = vector.extract_strided_slice %165 {offsets = [0, 0, 2, 0], sizes = [2, 8, 6, 256], strides = [1, 1, 1, 1]} : vector<2x8x8x256xf32> to vector<2x8x6x256xf32>
    %172 = arith.truncf %171 : vector<2x8x6x256xf32> to vector<2x8x6x256xbf16>
    %c0_166 = arith.constant 0 : index
    %c0_167 = arith.constant 0 : index
    %c0_168 = arith.constant 0 : index
    %c512_169 = arith.constant 512 : index
    %173 = vector.load %arg17[%c0_166, %c0_167, %c0_168, %c512_169] : memref<2x10x8x768xbf16, #tpu.memory_space<vmem>>, vector<2x8x6x256xbf16>
    tpu.vector_store %arg17[%c0_166, %c0_167, %c0_168, %c512_169], %172 {strides = array<i32>} : memref<2x10x8x768xbf16, #tpu.memory_space<vmem>>, vector<2x8x6x256xbf16>,
    %c0_170 = arith.constant 0 : index
    %c0_171 = arith.constant 0 : index
    %c0_172 = arith.constant 0 : index
    %c0_173 = arith.constant 0 : index
    %174 = vector.load %arg17[%c0_170, %c0_171, %c0_172, %c0_173] : memref<2x10x8x768xbf16, #tpu.memory_space<vmem>>, vector<2x8x8x768xbf16>
    %175 = vector.shape_cast %174 : vector<2x8x8x768xbf16> to vector<128x768xbf16>
    %c0_174 = arith.constant 0 : index
    %c0_175 = arith.constant 0 : index
    %176 = vector.load %arg12[%c0_174, %c0_175] : memref<2304x128xbf16, #tpu.memory_space<vmem>>, vector<768x128xbf16>
    %cst_176 = arith.constant dense<0.000000e+00> : vector<128x128xf32>
    %177 = tpu.matmul %175, %176, %cst_176 {dimension_numbers = #tpu.dot_dimension_numbers<[1], [0], [0], [1], [0, 0, 1, 1], [], []>} : vector<128x768xbf16>, vector<768x128xbf16>, vector<128x128xf32> -> vector<128x128xf32>
    %c0_177 = arith.constant 0 : index
    %c1_178 = arith.constant 1 : index
    %c0_179 = arith.constant 0 : index
    %c0_180 = arith.constant 0 : index
    %178 = vector.load %arg17[%c0_177, %c1_178, %c0_179, %c0_180] : memref<2x10x8x768xbf16, #tpu.memory_space<vmem>>, vector<2x8x8x768xbf16>
    %179 = vector.shape_cast %178 : vector<2x8x8x768xbf16> to vector<128x768xbf16>
    %c768_181 = arith.constant 768 : index
    %c0_182 = arith.constant 0 : index
    %180 = vector.load %arg12[%c768_181, %c0_182] : memref<2304x128xbf16, #tpu.memory_space<vmem>>, vector<768x128xbf16>
    %cst_183 = arith.constant dense<0.000000e+00> : vector<128x128xf32>
    %181 = tpu.matmul %179, %180, %cst_183 {dimension_numbers = #tpu.dot_dimension_numbers<[1], [0], [0], [1], [0, 0, 1, 1], [], []>} : vector<128x768xbf16>, vector<768x128xbf16>, vector<128x128xf32> -> vector<128x128xf32>
    %182 = arith.addf %177, %181 : vector<128x128xf32>
    %c0_184 = arith.constant 0 : index
    %c2_185 = arith.constant 2 : index
    %c0_186 = arith.constant 0 : index
    %c0_187 = arith.constant 0 : index
    %183 = vector.load %arg17[%c0_184, %c2_185, %c0_186, %c0_187] : memref<2x10x8x768xbf16, #tpu.memory_space<vmem>>, vector<2x8x8x768xbf16>
    %184 = vector.shape_cast %183 : vector<2x8x8x768xbf16> to vector<128x768xbf16>
    %c1536 = arith.constant 1536 : index
    %c0_188 = arith.constant 0 : index
    %185 = vector.load %arg12[%c1536, %c0_188] : memref<2304x128xbf16, #tpu.memory_space<vmem>>, vector<768x128xbf16>
    %cst_189 = arith.constant dense<0.000000e+00> : vector<128x128xf32>
    %186 = tpu.matmul %184, %185, %cst_189 {dimension_numbers = #tpu.dot_dimension_numbers<[1], [0], [0], [1], [0, 0, 1, 1], [], []>} : vector<128x768xbf16>, vector<768x128xbf16>, vector<128x128xf32> -> vector<128x128xf32>
    %187 = arith.addf %182, %186 : vector<128x128xf32>
    %c0_190 = arith.constant 0 : index
    %c0_191 = arith.constant 0 : index
    %188 = vector.load %arg13[%c0_190, %c0_191] : memref<1x128xf32, #tpu.memory_space<vmem>>, vector<1x128xf32>
    %189 = vector.broadcast %188 : vector<1x128xf32> to vector<128x128xf32>
    %190 = arith.addf %187, %189 : vector<128x128xf32>
    %191 = arith.negf %190 : vector<128x128xf32>
    %192 = math.exp %191 : vector<128x128xf32>
    %cst_192 = arith.constant 1.000000e+00 : f32
    %193 = vector.broadcast %cst_192 : f32 to vector<128x128xf32>
    %194 = arith.addf %193, %192 : vector<128x128xf32>
    %195 = arith.divf %193, %194 : vector<128x128xf32>
    %196 = vector.shape_cast %195 : vector<128x128xf32> to vector<2x64x128xf32>
    %c0_193 = arith.constant 0 : index
    %c0_194 = arith.constant 0 : index
    %c0_195 = arith.constant 0 : index
    %197 = vector.load %arg14[%c0_193, %c0_194, %c0_195] : memref<2x64x128xf32, #tpu.memory_space<vmem>>, vector<2x64x128xf32>
    tpu.vector_store %arg14[%c0_193, %c0_194, %c0_195], %196 {strides = array<i32>} : memref<2x64x128xf32, #tpu.memory_space<vmem>>, vector<2x64x128xf32>,
    return
  }
  func.func @transform_0(%arg0: i32) -> (i32, i32) {
    %c0_i32 = arith.constant 0 : i32
    %c0_i32_0 = arith.constant 0 : i32
    return %arg0, %c0_i32 : i32, i32
  }
  func.func @transform_1(%arg0: i32) -> (i32, i32) {
    %c0_i32 = arith.constant 0 : i32
    %c0_i32_0 = arith.constant 0 : i32
    %c0_i32_1 = arith.constant 0 : i32
    return %c0_i32, %c0_i32_0 : i32, i32
  }
  func.func @transform_2(%arg0: i32) -> (i32, i32) {
    %c0_i32 = arith.constant 0 : i32
    %c0_i32_0 = arith.constant 0 : i32
    %c0_i32_1 = arith.constant 0 : i32
    return %c0_i32, %c0_i32_0 : i32, i32
  }
  func.func @transform_3(%arg0: i32) -> (i32, i32) {
    %c0_i32 = arith.constant 0 : i32
    %c0_i32_0 = arith.constant 0 : i32
    %c0_i32_1 = arith.constant 0 : i32
    return %c0_i32, %c0_i32_0 : i32, i32
  }
  func.func @transform_4(%arg0: i32) -> (i32, i32) {
    %c0_i32 = arith.constant 0 : i32
    %c0_i32_0 = arith.constant 0 : i32
    %c0_i32_1 = arith.constant 0 : i32
    return %c0_i32, %c0_i32_0 : i32, i32
  }
  func.func @transform_5(%arg0: i32) -> (i32, i32) {
    %c0_i32 = arith.constant 0 : i32
    %c0_i32_0 = arith.constant 0 : i32
    %c0_i32_1 = arith.constant 0 : i32
    return %c0_i32, %c0_i32_0 : i32, i32
  }
  func.func @transform_6(%arg0: i32) -> (i32, i32) {
    %c0_i32 = arith.constant 0 : i32
    %c0_i32_0 = arith.constant 0 : i32
    %c0_i32_1 = arith.constant 0 : i32
    return %c0_i32, %c0_i32_0 : i32, i32
  }
  func.func @transform_7(%arg0: i32) -> (i32, i32) {
    %c0_i32 = arith.constant 0 : i32
    %c0_i32_0 = arith.constant 0 : i32
    %c0_i32_1 = arith.constant 0 : i32
    return %c0_i32, %c0_i32_0 : i32, i32
  }
  func.func @transform_8(%arg0: i32) -> (i32, i32) {
    %c0_i32 = arith.constant 0 : i32
    %c0_i32_0 = arith.constant 0 : i32
    %c0_i32_1 = arith.constant 0 : i32
    return %c0_i32, %c0_i32_0 : i32, i32
  }
  func.func @transform_9(%arg0: i32) -> (i32, i32) {
    %c0_i32 = arith.constant 0 : i32
    %c0_i32_0 = arith.constant 0 : i32
    %c0_i32_1 = arith.constant 0 : i32
    return %c0_i32, %c0_i32_0 : i32, i32
  }
  func.func @transform_10(%arg0: i32) -> (i32, i32) {
    %c0_i32 = arith.constant 0 : i32
    %c0_i32_0 = arith.constant 0 : i32
    %c0_i32_1 = arith.constant 0 : i32
    return %c0_i32, %c0_i32_0 : i32, i32
  }
  func.func @transform_11(%arg0: i32) -> (i32, i32) {
    %c0_i32 = arith.constant 0 : i32
    %c0_i32_0 = arith.constant 0 : i32
    %c0_i32_1 = arith.constant 0 : i32
    return %c0_i32, %c0_i32_0 : i32, i32
  }
  func.func @transform_12(%arg0: i32) -> (i32, i32) {
    %c0_i32 = arith.constant 0 : i32
    %c0_i32_0 = arith.constant 0 : i32
    %c0_i32_1 = arith.constant 0 : i32
    return %c0_i32, %c0_i32_0 : i32, i32
  }
  func.func @transform_13(%arg0: i32) -> (i32, i32, i32) {
    %c0_i32 = arith.constant 0 : i32
    %c0_i32_0 = arith.constant 0 : i32
    %c0_i32_1 = arith.constant 0 : i32
    return %arg0, %c0_i32, %c0_i32_0 : i32, i32, i32
  }
}

</mosaic_0001>

<llo_original>
// kernel: discriminator_forward.1
$region0: #{discriminator_forward.1}
  #allocation0 [shape = 'u32[]', space=smem, size = 0x4, offset = 0x4, fixed_abs, tag = 'smem constant byte address 0x4 - core index']
  #allocation1 [shape = 'u32[72,128]{1,0:T(1,128)}', space=vmem, size = 0x9000, scoped, tag = 'internal scratch']
  #allocation2 [shape = 'f32[4,2,9,16,64]{4,3,2,1,0:T(8,128)}', space=vmem, size = 0x90000, scoped, tag = 'scratch operand']
  #allocation3 [shape = 'bf16[2,10,8,384]{3,2,1,0:T(8,128)(2,1)}', space=vmem, size = 0x1e000, scoped, tag = 'scratch operand']
  #allocation4 [shape = 'bf16[2,10,8,768]{3,2,1,0:T(8,128)(2,1)}', space=vmem, size = 0x3c000, scoped, tag = 'scratch operand']
  %s0 = inlined_call_operand.vmem [shape: bf16[512,64], index: 0, kind: input, shape index: {}]
  %s1 = inlined_call_operand.vmem [shape: bf16[64,64], index: 1, kind: input, shape index: {}]
  %s2 = inlined_call_operand.vmem [shape: f32[1,64], index: 2, kind: input, shape index: {}]
  %s3 = inlined_call_operand.vmem [shape: bf16[576,128], index: 3, kind: input, shape index: {}]
  %s4 = inlined_call_operand.vmem [shape: f32[1,128], index: 4, kind: input, shape index: {}]
  %s5 = inlined_call_operand.vmem [shape: f32[1,128], index: 5, kind: input, shape index: {}]
  %s6 = inlined_call_operand.vmem [shape: f32[1,128], index: 6, kind: input, shape index: {}]
  %s7 = inlined_call_operand.vmem [shape: bf16[1152,256], index: 7, kind: input, shape index: {}]
  %s8 = inlined_call_operand.vmem [shape: f32[1,256], index: 8, kind: input, shape index: {}]
  %s9 = inlined_call_operand.vmem [shape: f32[1,256], index: 9, kind: input, shape index: {}]
  %s10 = inlined_call_operand.vmem [shape: f32[1,256], index: 10, kind: input, shape index: {}]
  %s11 = inlined_call_operand.vmem [shape: bf16[2304,128], index: 11, kind: input, shape index: {}]
  %s12 = inlined_call_operand.vmem [shape: f32[1,128], index: 12, kind: input, shape index: {}]
  %s13 = inlined_call_operand.vmem [shape: f32[2,64,128], index: 13, kind: output, shape index: {}]
  %s14 = sld [smem:[#allocation0]]
  $region62: #{discriminator_forward.1} parent=0
    _
  %s16 = ssub.s32 1, %s14
  %s17 = scalar_select 0, %s16, %s14
  // Predicated region
  $region2: #{discriminator_forward.1} parent=0 // pred_check
    _
  $region3: #{discriminator_forward.1} parent=0 // pred_check_branch
    %19 = sbr.rel (0) target = $region5
  $region4: #{discriminator_forward.1} parent=0 // pred_region
    _
  $region5: #{discriminator_forward.1} parent=0 // pred_fallthru
    _
  // Predicated region
  $region6: #{discriminator_forward.1} parent=0 // pred_check
    _
  $region7: #{discriminator_forward.1} parent=0 // pred_check_branch
    %21 = sbr.rel (0) target = $region9
  $region8: #{discriminator_forward.1} parent=0 // pred_region
    _
  $region9: #{discriminator_forward.1} parent=0 // pred_fallthru
    _
  // Predicated region
  $region10: #{discriminator_forward.1} parent=0 // pred_check
    _
  $region11: #{discriminator_forward.1} parent=0 // pred_check_branch
    %23 = sbr.rel (0) target = $region13
  $region12: #{discriminator_forward.1} parent=0 // pred_region
    _
  $region13: #{discriminator_forward.1} parent=0 // pred_fallthru
    _
  // Predicated region
  $region14: #{discriminator_forward.1} parent=0 // pred_check
    _
  $region15: #{discriminator_forward.1} parent=0 // pred_check_branch
    %25 = sbr.rel (0) target = $region17
  $region16: #{discriminator_forward.1} parent=0 // pred_region
    _
  $region17: #{discriminator_forward.1} parent=0 // pred_fallthru
    _
  // Predicated region
  $region18: #{discriminator_forward.1} parent=0 // pred_check
    _
  $region19: #{discriminator_forward.1} parent=0 // pred_check_branch
    %27 = sbr.rel (0) target = $region21
  $region20: #{discriminator_forward.1} parent=0 // pred_region
    _
  $region21: #{discriminator_forward.1} parent=0 // pred_fallthru
    _
  // Predicated region
  $region22: #{discriminator_forward.1} parent=0 // pred_check
    _
  $region23: #{discriminator_forward.1} parent=0 // pred_check_branch
    %29 = sbr.rel (0) target = $region25
  $region24: #{discriminator_forward.1} parent=0 // pred_region
    _
  $region25: #{discriminator_forward.1} parent=0 // pred_fallthru
    _
  // Predicated region
  $region26: #{discriminator_forward.1} parent=0 // pred_check
    _
  $region27: #{discriminator_forward.1} parent=0 // pred_check_branch
    %31 = sbr.rel (0) target = $region29
  $region28: #{discriminator_forward.1} parent=0 // pred_region
    _
  $region29: #{discriminator_forward.1} parent=0 // pred_fallthru
    _
  // Predicated region
  $region30: #{discriminator_forward.1} parent=0 // pred_check
    _
  $region31: #{discriminator_forward.1} parent=0 // pred_check_branch
    %33 = sbr.rel (0) target = $region33
  $region32: #{discriminator_forward.1} parent=0 // pred_region
    _
  $region33: #{discriminator_forward.1} parent=0 // pred_fallthru
    _
  // Predicated region
  $region34: #{discriminator_forward.1} parent=0 // pred_check
    _
  $region35: #{discriminator_forward.1} parent=0 // pred_check_branch
    %35 = sbr.rel (0) target = $region37
  $region36: #{discriminator_forward.1} parent=0 // pred_region
    _
  $region37: #{discriminator_forward.1} parent=0 // pred_fallthru
    _
  // Predicated region
  $region38: #{discriminator_forward.1} parent=0 // pred_check
    _
  $region39: #{discriminator_forward.1} parent=0 // pred_check_branch
    %37 = sbr.rel (0) target = $region41
  $region40: #{discriminator_forward.1} parent=0 // pred_region
    _
  $region41: #{discriminator_forward.1} parent=0 // pred_fallthru
    _
  // Predicated region
  $region42: #{discriminator_forward.1} parent=0 // pred_check
    _
  $region43: #{discriminator_forward.1} parent=0 // pred_check_branch
    %39 = sbr.rel (0) target = $region45
  $region44: #{discriminator_forward.1} parent=0 // pred_region
    _
  $region45: #{discriminator_forward.1} parent=0 // pred_fallthru
    _
  // Predicated region
  $region46: #{discriminator_forward.1} parent=0 // pred_check
    _
  $region47: #{discriminator_forward.1} parent=0 // pred_check_branch
    %41 = sbr.rel (0) target = $region49
  $region48: #{discriminator_forward.1} parent=0 // pred_region
    _
  $region49: #{discriminator_forward.1} parent=0 // pred_fallthru
    _
  // Predicated region
  $region50: #{discriminator_forward.1} parent=0 // pred_check
    _
  $region51: #{discriminator_forward.1} parent=0 // pred_check_branch
    %43 = sbr.rel (0) target = $region53
  $region52: #{discriminator_forward.1} parent=0 // pred_region
    _
  $region53: #{discriminator_forward.1} parent=0 // pred_fallthru
    _
  %s45 = scalar_lea.vmem [#allocation2], 576
  %vm46 = vcmask 523264
  %47 = vst.msk [vmem:[%s45] sm:$0xff] %vm46, 0.0
  %48 = vst.msk [vmem:[%s45 + $0x8] sm:$0xff] %vm46, 0.0
  %49 = vst.msk [vmem:[%s45 + $0x90] sm:$0xff] %vm46, 0.0
  %50 = vst.msk [vmem:[%s45 + $0x98] sm:$0xff] %vm46, 0.0
  %s51 = scalar_lea.vmem [#allocation2], 864
  %52 = vst.msk [vmem:[%s51] sm:$0xff] %vm46, 0.0
  %53 = vst.msk [vmem:[%s51 + $0x8] sm:$0xff] %vm46, 0.0
  %54 = vst.msk [vmem:[%s51 + $0x90] sm:$0xff] %vm46, 0.0
  %55 = vst.msk [vmem:[%s51 + $0x98] sm:$0xff] %vm46, 0.0
  %s56 = scalar_lea.vmem [#allocation2], 288
  %vm57 = vcmask 516096
  %58 = vst.msk [vmem:[%s56 + $0x7] sm:$0x1] %vm57, 0.0
  %59 = vst.msk [vmem:[%s56 + $0x17] sm:$0x1] %vm57, 0.0
  %60 = vst.msk [vmem:[%s56 + $0x27] sm:$0x1] %vm57, 0.0
  %61 = vst.msk [vmem:[%s56 + $0x37] sm:$0x1] %vm57, 0.0
  %62 = vst.msk [vmem:[%s56 + $0x47] sm:$0x1] %vm57, 0.0
  %63 = vst.msk [vmem:[%s56 + $0x57] sm:$0x1] %vm57, 0.0
  %64 = vst.msk [vmem:[%s56 + $0x67] sm:$0x1] %vm57, 0.0
  %65 = vst.msk [vmem:[%s56 + $0x77] sm:$0x1] %vm57, 0.0
  %66 = vst.msk [vmem:[%s56 + $0x87] sm:$0x1] %vm57, 0.0
  %67 = vst.msk [vmem:[%s56 + $0x97] sm:$0x1] %vm57, 0.0
  %68 = vst.msk [vmem:[%s56 + $0xa7] sm:$0x1] %vm57, 0.0
  %69 = vst.msk [vmem:[%s56 + $0xb7] sm:$0x1] %vm57, 0.0
  %70 = vst.msk [vmem:[%s56 + $0xc7] sm:$0x1] %vm57, 0.0
  %71 = vst.msk [vmem:[%s56 + $0xd7] sm:$0x1] %vm57, 0.0
  %72 = vst.msk [vmem:[%s56 + $0xe7] sm:$0x1] %vm57, 0.0
  %73 = vst.msk [vmem:[%s56 + $0xf7] sm:$0x1] %vm57, 0.0
  %74 = vst.msk [vmem:[%s56 + $0x107] sm:$0x1] %vm57, 0.0
  %75 = vst.msk [vmem:[%s56 + $0x117] sm:$0x1] %vm57, 0.0
  %76 = vst.msk [vmem:[%s51 + $0x7] sm:$0x1] %vm57, 0.0
  %77 = vst.msk [vmem:[%s51 + $0x17] sm:$0x1] %vm57, 0.0
  %78 = vst.msk [vmem:[%s51 + $0x27] sm:$0x1] %vm57, 0.0
  %79 = vst.msk [vmem:[%s51 + $0x37] sm:$0x1] %vm57, 0.0
  %80 = vst.msk [vmem:[%s51 + $0x47] sm:$0x1] %vm57, 0.0
  %81 = vst.msk [vmem:[%s51 + $0x57] sm:$0x1] %vm57, 0.0
  %82 = vst.msk [vmem:[%s51 + $0x67] sm:$0x1] %vm57, 0.0
  %83 = vst.msk [vmem:[%s51 + $0x77] sm:$0x1] %vm57, 0.0
  %84 = vst.msk [vmem:[%s51 + $0x87] sm:$0x1] %vm57, 0.0
  %85 = vst.msk [vmem:[%s51 + $0x97] sm:$0x1] %vm57, 0.0
  %86 = vst.msk [vmem:[%s51 + $0xa7] sm:$0x1] %vm57, 0.0
  %87 = vst.msk [vmem:[%s51 + $0xb7] sm:$0x1] %vm57, 0.0
  %88 = vst.msk [vmem:[%s51 + $0xc7] sm:$0x1] %vm57, 0.0
  %89 = vst.msk [vmem:[%s51 + $0xd7] sm:$0x1] %vm57, 0.0
  %90 = vst.msk [vmem:[%s51 + $0xe7] sm:$0x1] %vm57, 0.0
  %91 = vst.msk [vmem:[%s51 + $0xf7] sm:$0x1] %vm57, 0.0
  %92 = vst.msk [vmem:[%s51 + $0x107] sm:$0x1] %vm57, 0.0
  %93 = vst.msk [vmem:[%s51 + $0x117] sm:$0x1] %vm57, 0.0
  %v94 = vld [vmem:[%s0] sm:$0xf]
  %v95 = vld [vmem:[%s0 + $0x4] sm:$0xf]
  %v96 = vld [vmem:[%s0 + $0x8] sm:$0xf]
  %v97 = vld [vmem:[%s0 + $0xc] sm:$0xf]
  %v98 = vld [vmem:[%s0 + $0x10] sm:$0xf]
  %v99 = vld [vmem:[%s0 + $0x14] sm:$0xf]
  %v100 = vld [vmem:[%s0 + $0x18] sm:$0xf]
  %v101 = vld [vmem:[%s0 + $0x1c] sm:$0xf]
  %v102 = vld [vmem:[%s0 + $0x20] sm:$0xf]
  %v103 = vld [vmem:[%s0 + $0x24] sm:$0xf]
  %v104 = vld [vmem:[%s0 + $0x28] sm:$0xf]
  %v105 = vld [vmem:[%s0 + $0x2c] sm:$0xf]
  %v106 = vld [vmem:[%s0 + $0x30] sm:$0xf]
  %v107 = vld [vmem:[%s0 + $0x34] sm:$0xf]
  %v108 = vld [vmem:[%s0 + $0x38] sm:$0xf]
  %v109 = vld [vmem:[%s0 + $0x3c] sm:$0xf]
  %v110 = vld [vmem:[%s0 + $0x40] sm:$0xf]
  %v111 = vld [vmem:[%s0 + $0x44] sm:$0xf]
  %v112 = vld [vmem:[%s0 + $0x48] sm:$0xf]
  %v113 = vld [vmem:[%s0 + $0x4c] sm:$0xf]
  %v114 = vld [vmem:[%s0 + $0x50] sm:$0xf]
  %v115 = vld [vmem:[%s0 + $0x54] sm:$0xf]
  %v116 = vld [vmem:[%s0 + $0x58] sm:$0xf]
  %v117 = vld [vmem:[%s0 + $0x5c] sm:$0xf]
  %v118 = vld [vmem:[%s0 + $0x60] sm:$0xf]
  %v119 = vld [vmem:[%s0 + $0x64] sm:$0xf]
  %v120 = vld [vmem:[%s0 + $0x68] sm:$0xf]
  %v121 = vld [vmem:[%s0 + $0x6c] sm:$0xf]
  %v122 = vld [vmem:[%s0 + $0x70] sm:$0xf]
  %v123 = vld [vmem:[%s0 + $0x74] sm:$0xf]
  %v124 = vld [vmem:[%s0 + $0x78] sm:$0xf]
  %v125 = vld [vmem:[%s0 + $0x7c] sm:$0xf]
  %v126 = vld [vmem:[%s0 + $0x80] sm:$0xf]
  %v127 = vld [vmem:[%s0 + $0x84] sm:$0xf]
  %v128 = vld [vmem:[%s0 + $0x88] sm:$0xf]
  %v129 = vld [vmem:[%s0 + $0x8c] sm:$0xf]
  %v130 = vld [vmem:[%s0 + $0x90] sm:$0xf]
  %v131 = vld [vmem:[%s0 + $0x94] sm:$0xf]
  %v132 = vld [vmem:[%s0 + $0x98] sm:$0xf]
  %v133 = vld [vmem:[%s0 + $0x9c] sm:$0xf]
  %v134 = vld [vmem:[%s0 + $0xa0] sm:$0xf]
  %v135 = vld [vmem:[%s0 + $0xa4] sm:$0xf]
  %v136 = vld [vmem:[%s0 + $0xa8] sm:$0xf]
  %v137 = vld [vmem:[%s0 + $0xac] sm:$0xf]
  %v138 = vld [vmem:[%s0 + $0xb0] sm:$0xf]
  %v139 = vld [vmem:[%s0 + $0xb4] sm:$0xf]
  %v140 = vld [vmem:[%s0 + $0xb8] sm:$0xf]
  %v141 = vld [vmem:[%s0 + $0xbc] sm:$0xf]
  %v142 = vld [vmem:[%s0 + $0xc0] sm:$0xf]
  %v143 = vld [vmem:[%s0 + $0xc4] sm:$0xf]
  %v144 = vld [vmem:[%s0 + $0xc8] sm:$0xf]
  %v145 = vld [vmem:[%s0 + $0xcc] sm:$0xf]
  %v146 = vld [vmem:[%s0 + $0xd0] sm:$0xf]
  %v147 = vld [vmem:[%s0 + $0xd4] sm:$0xf]
  %v148 = vld [vmem:[%s0 + $0xd8] sm:$0xf]
  %v149 = vld [vmem:[%s0 + $0xdc] sm:$0xf]
  %v150 = vld [vmem:[%s0 + $0xe0] sm:$0xf]
  %v151 = vld [vmem:[%s0 + $0xe4] sm:$0xf]
  %v152 = vld [vmem:[%s0 + $0xe8] sm:$0xf]
  %v153 = vld [vmem:[%s0 + $0xec] sm:$0xf]
  %v154 = vld [vmem:[%s0 + $0xf0] sm:$0xf]
  %v155 = vld [vmem:[%s0 + $0xf4] sm:$0xf]
  %v156 = vld [vmem:[%s0 + $0xf8] sm:$0xf]
  %v157 = vld [vmem:[%s0 + $0xfc] sm:$0xf]
  %v158 = vld [vmem:[%s1] sm:$0xf]
  %v159 = vld [vmem:[%s1 + $0x4] sm:$0xf]
  %v160 = vld [vmem:[%s1 + $0x8] sm:$0xf]
  %v161 = vld [vmem:[%s1 + $0xc] sm:$0xf]
  %v162 = vld [vmem:[%s1 + $0x10] sm:$0xf]
  %v163 = vld [vmem:[%s1 + $0x14] sm:$0xf]
  %v164 = vld [vmem:[%s1 + $0x18] sm:$0xf]
  %v165 = vld [vmem:[%s1 + $0x1c] sm:$0xf]
  %v166 = vld [vmem:[%s2] sm:$0x1]
  %v168 = vperm.slane %v166, 0
  %v234 = vunpack.c.l.b16 %v94
  %v235 = vunpack.c.l.b16 %v95
  %v236 = vunpack.c.l.b16 %v96
  %v237 = vunpack.c.l.b16 %v97
  %v238 = vunpack.c.l.b16 %v98
  %v239 = vunpack.c.l.b16 %v99
  %v240 = vunpack.c.l.b16 %v100
  %v241 = vunpack.c.l.b16 %v101
  %v242 = vunpack.c.l.b16 %v102
  %v243 = vunpack.c.l.b16 %v103
  %v244 = vunpack.c.l.b16 %v104
  %v245 = vunpack.c.l.b16 %v105
  %v246 = vunpack.c.l.b16 %v106
  %v247 = vunpack.c.l.b16 %v107
  %v248 = vunpack.c.l.b16 %v108
  %v249 = vunpack.c.l.b16 %v109
  %v250 = vunpack.c.l.b16 %v110
  %v251 = vunpack.c.l.b16 %v111
  %v252 = vunpack.c.l.b16 %v112
  %v253 = vunpack.c.l.b16 %v113
  %v254 = vunpack.c.l.b16 %v114
  %v255 = vunpack.c.l.b16 %v115
  %v256 = vunpack.c.l.b16 %v116
  %v257 = vunpack.c.l.b16 %v117
  %v258 = vunpack.c.l.b16 %v118
  %v259 = vunpack.c.l.b16 %v119
  %v260 = vunpack.c.l.b16 %v120
  %v261 = vunpack.c.l.b16 %v121
  %v262 = vunpack.c.l.b16 %v122
  %v263 = vunpack.c.l.b16 %v123
  %v264 = vunpack.c.l.b16 %v124
  %v265 = vunpack.c.l.b16 %v125
  %v266 = vunpack.c.l.b16 %v126
  %v267 = vunpack.c.l.b16 %v127
  %v268 = vunpack.c.l.b16 %v128
  %v269 = vunpack.c.l.b16 %v129
  %v270 = vunpack.c.l.b16 %v130
  %v271 = vunpack.c.l.b16 %v131
  %v272 = vunpack.c.l.b16 %v132
  %v273 = vunpack.c.l.b16 %v133
  %v274 = vunpack.c.l.b16 %v134
  %v275 = vunpack.c.l.b16 %v135
  %v276 = vunpack.c.l.b16 %v136
  %v277 = vunpack.c.l.b16 %v137
  %v278 = vunpack.c.l.b16 %v138
  %v279 = vunpack.c.l.b16 %v139
  %v280 = vunpack.c.l.b16 %v140
  %v281 = vunpack.c.l.b16 %v141
  %v282 = vunpack.c.l.b16 %v142
  %v283 = vunpack.c.l.b16 %v143
  %v284 = vunpack.c.l.b16 %v144
  %v285 = vunpack.c.l.b16 %v145
  %v286 = vunpack.c.l.b16 %v146
  %v287 = vunpack.c.l.b16 %v147
  %v288 = vunpack.c.l.b16 %v148
  %v289 = vunpack.c.l.b16 %v149
  %v290 = vunpack.c.l.b16 %v150
  %v291 = vunpack.c.l.b16 %v151
  %v292 = vunpack.c.l.b16 %v152
  %v293 = vunpack.c.l.b16 %v153
  %v294 = vunpack.c.l.b16 %v154
  %v295 = vunpack.c.l.b16 %v155
  %v296 = vunpack.c.l.b16 %v156
  %v297 = vunpack.c.l.b16 %v157
  %v298 = vpack.c.b16 %v235, %v234
  %v299 = vpack.c.b16 %v237, %v236
  %v300 = vpack.c.b16 %v239, %v238
  %v301 = vpack.c.b16 %v241, %v240
  %v302 = vpack.c.b16 %v243, %v242
  %v303 = vpack.c.b16 %v245, %v244
  %v304 = vpack.c.b16 %v247, %v246
  %v305 = vpack.c.b16 %v249, %v248
  %v306 = vpack.c.b16 %v251, %v250
  %v307 = vpack.c.b16 %v253, %v252
  %v308 = vpack.c.b16 %v255, %v254
  %v309 = vpack.c.b16 %v257, %v256
  %v310 = vpack.c.b16 %v259, %v258
  %v311 = vpack.c.b16 %v261, %v260
  %v312 = vpack.c.b16 %v263, %v262
  %v313 = vpack.c.b16 %v265, %v264
  %v314 = vpack.c.b16 %v267, %v266
  %v315 = vpack.c.b16 %v269, %v268
  %v316 = vpack.c.b16 %v271, %v270
  %v317 = vpack.c.b16 %v273, %v272
  %v318 = vpack.c.b16 %v275, %v274
  %v319 = vpack.c.b16 %v277, %v276
  %v320 = vpack.c.b16 %v279, %v278
  %v321 = vpack.c.b16 %v281, %v280
  %v322 = vpack.c.b16 %v283, %v282
  %v323 = vpack.c.b16 %v285, %v284
  %v324 = vpack.c.b16 %v287, %v286
  %v325 = vpack.c.b16 %v289, %v288
  %v326 = vpack.c.b16 %v291, %v290
  %v327 = vpack.c.b16 %v293, %v292
  %v328 = vpack.c.b16 %v295, %v294
  %v329 = vpack.c.b16 %v297, %v296
  %v338 = vunpack.c.l.b16 %v158
  %v339 = vunpack.c.l.b16 %v159
  %v340 = vunpack.c.l.b16 %v160
  %v341 = vunpack.c.l.b16 %v161
  %v342 = vunpack.c.l.b16 %v162
  %v343 = vunpack.c.l.b16 %v163
  %v344 = vunpack.c.l.b16 %v164
  %v345 = vunpack.c.l.b16 %v165
  %v346 = vpack.c.b16 %v339, %v338
  %v347 = vpack.c.b16 %v341, %v340
  %v348 = vpack.c.b16 %v343, %v342
  %v349 = vpack.c.b16 %v345, %v344
  %v355 = vsel %vm46, %v298, 0
  %v358 = vsel %vm46, %v299, 0
  %v361 = vsel %vm46, %v300, 0
  %v364 = vsel %vm46, %v301, 0
  %v367 = vsel %vm46, %v302, 0
  %v370 = vsel %vm46, %v303, 0
  %v373 = vsel %vm46, %v304, 0
  %v376 = vsel %vm46, %v305, 0
  %v379 = vsel %vm46, %v306, 0
  %v382 = vsel %vm46, %v307, 0
  %v385 = vsel %vm46, %v308, 0
  %v388 = vsel %vm46, %v309, 0
  %v391 = vsel %vm46, %v310, 0
  %v394 = vsel %vm46, %v311, 0
  %v397 = vsel %vm46, %v312, 0
  %v400 = vsel %vm46, %v313, 0
  %v403 = vsel %vm46, %v314, 0
  %v406 = vsel %vm46, %v315, 0
  %v409 = vsel %vm46, %v316, 0
  %v412 = vsel %vm46, %v317, 0
  %v415 = vsel %vm46, %v318, 0
  %v418 = vsel %vm46, %v319, 0
  %v421 = vsel %vm46, %v320, 0
  %v424 = vsel %vm46, %v321, 0
  %v427 = vsel %vm46, %v322, 0
  %v430 = vsel %vm46, %v323, 0
  %v433 = vsel %vm46, %v324, 0
  %v436 = vsel %vm46, %v325, 0
  %v439 = vsel %vm46, %v326, 0
  %v442 = vsel %vm46, %v327, 0
  %v445 = vsel %vm46, %v328, 0
  %v448 = vsel %vm46, %v329, 0
  %450 = vmatpush.bf16.msra.mxu0 0
  %451 = vmatpush.bf16.msra.mxu0 0
  %452 = vmatpush.bf16.msra.mxu0 0
  %453 = vmatpush.bf16.msra.mxu0 0
  %454 = vmatpush.bf16.msra.mxu0 %v349
  %455 = vmatpush.bf16.msra.mxu0 %v348
  %456 = vmatpush.bf16.msra.mxu0 %v347
  %457 = vmatpush.bf16.msra.mxu0 %v346
  %458 = vmatmul.bf16.gmra.mxu0 %v355
  %v459 = vpop.f32.mrf.mxu0
  %v460 = vadd.f32 %v168, %v459
  %v461 = vpop.f32.mrf.mxu0
  %v462 = vadd.f32 %v168, %v461
  %463 = vmatmul.bf16.gmra.mxu0 %v358
  %v464 = vpop.f32.mrf.mxu0
  %v465 = vadd.f32 %v168, %v464
  %v466 = vpop.f32.mrf.mxu0
  %v467 = vadd.f32 %v168, %v466
  %468 = vmatmul.bf16.gmra.mxu0 %v361
  %v469 = vpop.f32.mrf.mxu0
  %v470 = vadd.f32 %v168, %v469
  %v471 = vpop.f32.mrf.mxu0
  %v472 = vadd.f32 %v168, %v471
  %473 = vmatmul.bf16.gmra.mxu0 %v364
  %v474 = vpop.f32.mrf.mxu0
  %v475 = vadd.f32 %v168, %v474
  %v476 = vpop.f32.mrf.mxu0
  %v477 = vadd.f32 %v168, %v476
  %478 = vmatmul.bf16.gmra.mxu0 %v367
  %v479 = vpop.f32.mrf.mxu0
  %v480 = vadd.f32 %v168, %v479
  %v481 = vpop.f32.mrf.mxu0
  %v482 = vadd.f32 %v168, %v481
  %483 = vmatmul.bf16.gmra.mxu0 %v370
  %v484 = vpop.f32.mrf.mxu0
  %v485 = vadd.f32 %v168, %v484
  %v486 = vpop.f32.mrf.mxu0
  %v487 = vadd.f32 %v168, %v486
  %488 = vmatmul.bf16.gmra.mxu0 %v373
  %v489 = vpop.f32.mrf.mxu0
  %v490 = vadd.f32 %v168, %v489
  %v491 = vpop.f32.mrf.mxu0
  %v492 = vadd.f32 %v168, %v491
  %493 = vmatmul.bf16.gmra.mxu0 %v376
  %v494 = vpop.f32.mrf.mxu0
  %v495 = vadd.f32 %v168, %v494
  %v496 = vpop.f32.mrf.mxu0
  %v497 = vadd.f32 %v168, %v496
  %498 = vmatmul.bf16.gmra.mxu0 %v379
  %v499 = vpop.f32.mrf.mxu0
  %v500 = vadd.f32 %v168, %v499
  %v501 = vpop.f32.mrf.mxu0
  %v502 = vadd.f32 %v168, %v501
  %503 = vmatmul.bf16.gmra.mxu0 %v382
  %v504 = vpop.f32.mrf.mxu0
  %v505 = vadd.f32 %v168, %v504
  %v506 = vpop.f32.mrf.mxu0
  %v507 = vadd.f32 %v168, %v506
  %508 = vmatmul.bf16.gmra.mxu0 %v385
  %v509 = vpop.f32.mrf.mxu0
  %v510 = vadd.f32 %v168, %v509
  %v511 = vpop.f32.mrf.mxu0
  %v512 = vadd.f32 %v168, %v511
  %513 = vmatmul.bf16.gmra.mxu0 %v388
  %v514 = vpop.f32.mrf.mxu0
  %v515 = vadd.f32 %v168, %v514
  %v516 = vpop.f32.mrf.mxu0
  %v517 = vadd.f32 %v168, %v516
  %518 = vmatmul.bf16.gmra.mxu0 %v391
  %v519 = vpop.f32.mrf.mxu0
  %v520 = vadd.f32 %v168, %v519
  %v521 = vpop.f32.mrf.mxu0
  %v522 = vadd.f32 %v168, %v521
  %523 = vmatmul.bf16.gmra.mxu0 %v394
  %v524 = vpop.f32.mrf.mxu0
  %v525 = vadd.f32 %v168, %v524
  %v526 = vpop.f32.mrf.mxu0
  %v527 = vadd.f32 %v168, %v526
  %528 = vmatmul.bf16.gmra.mxu0 %v397
  %v529 = vpop.f32.mrf.mxu0
  %v530 = vadd.f32 %v168, %v529
  %v531 = vpop.f32.mrf.mxu0
  %v532 = vadd.f32 %v168, %v531
  %533 = vmatmul.bf16.gmra.mxu0 %v400
  %v534 = vpop.f32.mrf.mxu0
  %v535 = vadd.f32 %v168, %v534
  %v536 = vpop.f32.mrf.mxu0
  %v537 = vadd.f32 %v168, %v536
  %538 = vmatmul.bf16.gmra.mxu0 %v403
  %v539 = vpop.f32.mrf.mxu0
  %v540 = vadd.f32 %v168, %v539
  %v541 = vpop.f32.mrf.mxu0
  %v542 = vadd.f32 %v168, %v541
  %543 = vmatmul.bf16.gmra.mxu0 %v406
  %v544 = vpop.f32.mrf.mxu0
  %v545 = vadd.f32 %v168, %v544
  %v546 = vpop.f32.mrf.mxu0
  %v547 = vadd.f32 %v168, %v546
  %548 = vmatmul.bf16.gmra.mxu0 %v409
  %v549 = vpop.f32.mrf.mxu0
  %v550 = vadd.f32 %v168, %v549
  %v551 = vpop.f32.mrf.mxu0
  %v552 = vadd.f32 %v168, %v551
  %553 = vmatmul.bf16.gmra.mxu0 %v412
  %v554 = vpop.f32.mrf.mxu0
  %v555 = vadd.f32 %v168, %v554
  %v556 = vpop.f32.mrf.mxu0
  %v557 = vadd.f32 %v168, %v556
  %558 = vmatmul.bf16.gmra.mxu0 %v415
  %v559 = vpop.f32.mrf.mxu0
  %v560 = vadd.f32 %v168, %v559
  %v561 = vpop.f32.mrf.mxu0
  %v562 = vadd.f32 %v168, %v561
  %563 = vmatmul.bf16.gmra.mxu0 %v418
  %v564 = vpop.f32.mrf.mxu0
  %v565 = vadd.f32 %v168, %v564
  %v566 = vpop.f32.mrf.mxu0
  %v567 = vadd.f32 %v168, %v566
  %568 = vmatmul.bf16.gmra.mxu0 %v421
  %v569 = vpop.f32.mrf.mxu0
  %v570 = vadd.f32 %v168, %v569
  %v571 = vpop.f32.mrf.mxu0
  %v572 = vadd.f32 %v168, %v571
  %573 = vmatmul.bf16.gmra.mxu0 %v424
  %v574 = vpop.f32.mrf.mxu0
  %v575 = vadd.f32 %v168, %v574
  %v576 = vpop.f32.mrf.mxu0
  %v577 = vadd.f32 %v168, %v576
  %578 = vmatmul.bf16.gmra.mxu0 %v427
  %v579 = vpop.f32.mrf.mxu0
  %v580 = vadd.f32 %v168, %v579
  %v581 = vpop.f32.mrf.mxu0
  %v582 = vadd.f32 %v168, %v581
  %583 = vmatmul.bf16.gmra.mxu0 %v430
  %v584 = vpop.f32.mrf.mxu0
  %v585 = vadd.f32 %v168, %v584
  %v586 = vpop.f32.mrf.mxu0
  %v587 = vadd.f32 %v168, %v586
  %588 = vmatmul.bf16.gmra.mxu0 %v433
  %v589 = vpop.f32.mrf.mxu0
  %v590 = vadd.f32 %v168, %v589
  %v591 = vpop.f32.mrf.mxu0
  %v592 = vadd.f32 %v168, %v591
  %593 = vmatmul.bf16.gmra.mxu0 %v436
  %v594 = vpop.f32.mrf.mxu0
  %v595 = vadd.f32 %v168, %v594
  %v596 = vpop.f32.mrf.mxu0
  %v597 = vadd.f32 %v168, %v596
  %598 = vmatmul.bf16.gmra.mxu0 %v439
  %v599 = vpop.f32.mrf.mxu0
  %v600 = vadd.f32 %v168, %v599
  %v601 = vpop.f32.mrf.mxu0
  %v602 = vadd.f32 %v168, %v601
  %603 = vmatmul.bf16.gmra.mxu0 %v442
  %v604 = vpop.f32.mrf.mxu0
  %v605 = vadd.f32 %v168, %v604
  %v606 = vpop.f32.mrf.mxu0
  %v607 = vadd.f32 %v168, %v606
  %608 = vmatmul.bf16.gmra.mxu0 %v445
  %v609 = vpop.f32.mrf.mxu0
  %v610 = vadd.f32 %v168, %v609
  %v611 = vpop.f32.mrf.mxu0
  %v612 = vadd.f32 %v168, %v611
  %613 = vmatmul.bf16.gmra.mxu0 %v448
  %v614 = vpop.f32.mrf.mxu0
  %v615 = vadd.f32 %v168, %v614
  %v616 = vpop.f32.mrf.mxu0
  %v617 = vadd.f32 %v168, %v616
  %618 = vdwg.mxu0
  %vm619 = vcmp.ge.f32.partialorder %v460, 0.0
  %vm620 = vcmp.ge.f32.partialorder %v462, 0.0
  %vm621 = vcmp.ge.f32.partialorder %v465, 0.0
  %vm622 = vcmp.ge.f32.partialorder %v467, 0.0
  %vm623 = vcmp.ge.f32.partialorder %v470, 0.0
  %vm624 = vcmp.ge.f32.partialorder %v472, 0.0
  %vm625 = vcmp.ge.f32.partialorder %v475, 0.0
  %vm626 = vcmp.ge.f32.partialorder %v477, 0.0
  %vm627 = vcmp.ge.f32.partialorder %v480, 0.0
  %vm628 = vcmp.ge.f32.partialorder %v482, 0.0
  %vm629 = vcmp.ge.f32.partialorder %v485, 0.0
  %vm630 = vcmp.ge.f32.partialorder %v487, 0.0
  %vm631 = vcmp.ge.f32.partialorder %v490, 0.0
  %vm632 = vcmp.ge.f32.partialorder %v492, 0.0
  %vm633 = vcmp.ge.f32.partialorder %v495, 0.0
  %vm634 = vcmp.ge.f32.partialorder %v497, 0.0
  %vm635 = vcmp.ge.f32.partialorder %v500, 0.0
  %vm636 = vcmp.ge.f32.partialorder %v502, 0.0
  %vm637 = vcmp.ge.f32.partialorder %v505, 0.0
  %vm638 = vcmp.ge.f32.partialorder %v507, 0.0
  %vm639 = vcmp.ge.f32.partialorder %v510, 0.0
  %vm640 = vcmp.ge.f32.partialorder %v512, 0.0
  %vm641 = vcmp.ge.f32.partialorder %v515, 0.0
  %vm642 = vcmp.ge.f32.partialorder %v517, 0.0
  %vm643 = vcmp.ge.f32.partialorder %v520, 0.0
  %vm644 = vcmp.ge.f32.partialorder %v522, 0.0
  %vm645 = vcmp.ge.f32.partialorder %v525, 0.0
  %vm646 = vcmp.ge.f32.partialorder %v527, 0.0
  %vm647 = vcmp.ge.f32.partialorder %v530, 0.0
  %vm648 = vcmp.ge.f32.partialorder %v532, 0.0
  %vm649 = vcmp.ge.f32.partialorder %v535, 0.0
  %vm650 = vcmp.ge.f32.partialorder %v537, 0.0
  %vm651 = vcmp.ge.f32.partialorder %v540, 0.0
  %vm652 = vcmp.ge.f32.partialorder %v542, 0.0
  %vm653 = vcmp.ge.f32.partialorder %v545, 0.0
  %vm654 = vcmp.ge.f32.partialorder %v547, 0.0
  %vm655 = vcmp.ge.f32.partialorder %v550, 0.0
  %vm656 = vcmp.ge.f32.partialorder %v552, 0.0
  %vm657 = vcmp.ge.f32.partialorder %v555, 0.0
  %vm658 = vcmp.ge.f32.partialorder %v557, 0.0
  %vm659 = vcmp.ge.f32.partialorder %v560, 0.0
  %vm660 = vcmp.ge.f32.partialorder %v562, 0.0
  %vm661 = vcmp.ge.f32.partialorder %v565, 0.0
  %vm662 = vcmp.ge.f32.partialorder %v567, 0.0
  %vm663 = vcmp.ge.f32.partialorder %v570, 0.0
  %vm664 = vcmp.ge.f32.partialorder %v572, 0.0
  %vm665 = vcmp.ge.f32.partialorder %v575, 0.0
  %vm666 = vcmp.ge.f32.partialorder %v577, 0.0
  %vm667 = vcmp.ge.f32.partialorder %v580, 0.0
  %vm668 = vcmp.ge.f32.partialorder %v582, 0.0
  %vm669 = vcmp.ge.f32.partialorder %v585, 0.0
  %vm670 = vcmp.ge.f32.partialorder %v587, 0.0
  %vm671 = vcmp.ge.f32.partialorder %v590, 0.0
  %vm672 = vcmp.ge.f32.partialorder %v592, 0.0
  %vm673 = vcmp.ge.f32.partialorder %v595, 0.0
  %vm674 = vcmp.ge.f32.partialorder %v597, 0.0
  %vm675 = vcmp.ge.f32.partialorder %v600, 0.0
  %vm676 = vcmp.ge.f32.partialorder %v602, 0.0
  %vm677 = vcmp.ge.f32.partialorder %v605, 0.0
  %vm678 = vcmp.ge.f32.partialorder %v607, 0.0
  %vm679 = vcmp.ge.f32.partialorder %v610, 0.0
  %vm680 = vcmp.ge.f32.partialorder %v612, 0.0
  %vm681 = vcmp.ge.f32.partialorder %v615, 0.0
  %vm682 = vcmp.ge.f32.partialorder %v617, 0.0
  %v683 = vmul.f32 %v460, 0.01
  %v684 = vmul.f32 %v462, 0.01
  %v685 = vmul.f32 %v465, 0.01
  %v686 = vmul.f32 %v467, 0.01
  %v687 = vmul.f32 %v470, 0.01
  %v688 = vmul.f32 %v472, 0.01
  %v689 = vmul.f32 %v475, 0.01
  %v690 = vmul.f32 %v477, 0.01
  %v691 = vmul.f32 %v480, 0.01
  %v692 = vmul.f32 %v482, 0.01
  %v693 = vmul.f32 %v485, 0.01
  %v694 = vmul.f32 %v487, 0.01
  %v695 = vmul.f32 %v490, 0.01
  %v696 = vmul.f32 %v492, 0.01
  %v697 = vmul.f32 %v495, 0.01
  %v698 = vmul.f32 %v497, 0.01
  %v699 = vmul.f32 %v500, 0.01
  %v700 = vmul.f32 %v502, 0.01
  %v701 = vmul.f32 %v505, 0.01
  %v702 = vmul.f32 %v507, 0.01
  %v703 = vmul.f32 %v510, 0.01
  %v704 = vmul.f32 %v512, 0.01
  %v705 = vmul.f32 %v515, 0.01
  %v706 = vmul.f32 %v517, 0.01
  %v707 = vmul.f32 %v520, 0.01
  %v708 = vmul.f32 %v522, 0.01
  %v709 = vmul.f32 %v525, 0.01
  %v710 = vmul.f32 %v527, 0.01
  %v711 = vmul.f32 %v530, 0.01
  %v712 = vmul.f32 %v532, 0.01
  %v713 = vmul.f32 %v535, 0.01
  %v714 = vmul.f32 %v537, 0.01
  %v715 = vmul.f32 %v540, 0.01
  %v716 = vmul.f32 %v542, 0.01
  %v717 = vmul.f32 %v545, 0.01
  %v718 = vmul.f32 %v547, 0.01
  %v719 = vmul.f32 %v550, 0.01
  %v720 = vmul.f32 %v552, 0.01
  %v721 = vmul.f32 %v555, 0.01
  %v722 = vmul.f32 %v557, 0.01
  %v723 = vmul.f32 %v560, 0.01
  %v724 = vmul.f32 %v562, 0.01
  %v725 = vmul.f32 %v565, 0.01
  %v726 = vmul.f32 %v567, 0.01
  %v727 = vmul.f32 %v570, 0.01
  %v728 = vmul.f32 %v572, 0.01
  %v729 = vmul.f32 %v575, 0.01
  %v730 = vmul.f32 %v577, 0.01
  %v731 = vmul.f32 %v580, 0.01
  %v732 = vmul.f32 %v582, 0.01
  %v733 = vmul.f32 %v585, 0.01
  %v734 = vmul.f32 %v587, 0.01
  %v735 = vmul.f32 %v590, 0.01
  %v736 = vmul.f32 %v592, 0.01
  %v737 = vmul.f32 %v595, 0.01
  %v738 = vmul.f32 %v597, 0.01
  %v739 = vmul.f32 %v600, 0.01
  %v740 = vmul.f32 %v602, 0.01
  %v741 = vmul.f32 %v605, 0.01
  %v742 = vmul.f32 %v607, 0.01
  %v743 = vmul.f32 %v610, 0.01
  %v744 = vmul.f32 %v612, 0.01
  %v745 = vmul.f32 %v615, 0.01
  %v746 = vmul.f32 %v617, 0.01
  %v747 = vsel %vm619, %v460, %v683
  %v748 = vsel %vm620, %v462, %v684
  %v749 = vsel %vm621, %v465, %v685
  %v750 = vsel %vm622, %v467, %v686
  %v751 = vsel %vm623, %v470, %v687
  %v752 = vsel %vm624, %v472, %v688
  %v753 = vsel %vm625, %v475, %v689
  %v754 = vsel %vm626, %v477, %v690
  %v755 = vsel %vm627, %v480, %v691
  %v756 = vsel %vm628, %v482, %v692
  %v757 = vsel %vm629, %v485, %v693
  %v758 = vsel %vm630, %v487, %v694
  %v759 = vsel %vm631, %v490, %v695
  %v760 = vsel %vm632, %v492, %v696
  %v761 = vsel %vm633, %v495, %v697
  %v762 = vsel %vm634, %v497, %v698
  %v763 = vsel %vm635, %v500, %v699
  %v764 = vsel %vm636, %v502, %v700
  %v765 = vsel %vm637, %v505, %v701
  %v766 = vsel %vm638, %v507, %v702
  %v767 = vsel %vm639, %v510, %v703
  %v768 = vsel %vm640, %v512, %v704
  %v769 = vsel %vm641, %v515, %v705
  %v770 = vsel %vm642, %v517, %v706
  %v771 = vsel %vm643, %v520, %v707
  %v772 = vsel %vm644, %v522, %v708
  %v773 = vsel %vm645, %v525, %v709
  %v774 = vsel %vm646, %v527, %v710
  %v775 = vsel %vm647, %v530, %v711
  %v776 = vsel %vm648, %v532, %v712
  %v777 = vsel %vm649, %v535, %v713
  %v778 = vsel %vm650, %v537, %v714
  %v779 = vsel %vm651, %v540, %v715
  %v780 = vsel %vm652, %v542, %v716
  %v781 = vsel %vm653, %v545, %v717
  %v782 = vsel %vm654, %v547, %v718
  %v783 = vsel %vm655, %v550, %v719
  %v784 = vsel %vm656, %v552, %v720
  %v785 = vsel %vm657, %v555, %v721
  %v786 = vsel %vm658, %v557, %v722
  %v787 = vsel %vm659, %v560, %v723
  %v788 = vsel %vm660, %v562, %v724
  %v789 = vsel %vm661, %v565, %v725
  %v790 = vsel %vm662, %v567, %v726
  %v791 = vsel %vm663, %v570, %v727
  %v792 = vsel %vm664, %v572, %v728
  %v793 = vsel %vm665, %v575, %v729
  %v794 = vsel %vm666, %v577, %v730
  %v795 = vsel %vm667, %v580, %v731
  %v796 = vsel %vm668, %v582, %v732
  %v797 = vsel %vm669, %v585, %v733
  %v798 = vsel %vm670, %v587, %v734
  %v799 = vsel %vm671, %v590, %v735
  %v800 = vsel %vm672, %v592, %v736
  %v801 = vsel %vm673, %v595, %v737
  %v802 = vsel %vm674, %v597, %v738
  %v803 = vsel %vm675, %v600, %v739
  %v804 = vsel %vm676, %v602, %v740
  %v805 = vsel %vm677, %v605, %v741
  %v806 = vsel %vm678, %v607, %v742
  %v807 = vsel %vm679, %v610, %v743
  %v808 = vsel %vm680, %v612, %v744
  %v809 = vsel %vm681, %v615, %v745
  %v810 = vsel %vm682, %v617, %v746
  %811 = vst.msk [vmem:[#allocation2] sm:$0xff] %vm46, %v747
  %812 = vst.msk [vmem:[#allocation2 + $0x10] sm:$0xff] %vm46, %v748
  %813 = vst.msk [vmem:[#allocation2 + $0x20] sm:$0xff] %vm46, %v749
  %814 = vst.msk [vmem:[#allocation2 + $0x30] sm:$0xff] %vm46, %v750
  %815 = vst.msk [vmem:[#allocation2 + $0x40] sm:$0xff] %vm46, %v751
  %816 = vst.msk [vmem:[#allocation2 + $0x50] sm:$0xff] %vm46, %v752
  %817 = vst.msk [vmem:[#allocation2 + $0x60] sm:$0xff] %vm46, %v753
  %818 = vst.msk [vmem:[#allocation2 + $0x70] sm:$0xff] %vm46, %v754
  %819 = vst.msk [vmem:[#allocation2 + $0x90] sm:$0xff] %vm46, %v779
  %820 = vst.msk [vmem:[#allocation2 + $0xa0] sm:$0xff] %vm46, %v780
  %821 = vst.msk [vmem:[#allocation2 + $0xb0] sm:$0xff] %vm46, %v781
  %822 = vst.msk [vmem:[#allocation2 + $0xc0] sm:$0xff] %vm46, %v782
  %823 = vst.msk [vmem:[#allocation2 + $0xd0] sm:$0xff] %vm46, %v783
  %824 = vst.msk [vmem:[#allocation2 + $0xe0] sm:$0xff] %vm46, %v784
  %825 = vst.msk [vmem:[#allocation2 + $0xf0] sm:$0xff] %vm46, %v785
  %826 = vst.msk [vmem:[#allocation2 + $0x100] sm:$0xff] %vm46, %v786
  %827 = vst.msk [vmem:[%s56 + $0x8] sm:$0xff] %vm46, %v755
  %828 = vst.msk [vmem:[%s56 + $0x18] sm:$0xff] %vm46, %v756
  %829 = vst.msk [vmem:[%s56 + $0x28] sm:$0xff] %vm46, %v757
  %830 = vst.msk [vmem:[%s56 + $0x38] sm:$0xff] %vm46, %v758
  %831 = vst.msk [vmem:[%s56 + $0x48] sm:$0xff] %vm46, %v759
  %832 = vst.msk [vmem:[%s56 + $0x58] sm:$0xff] %vm46, %v760
  %833 = vst.msk [vmem:[%s56 + $0x68] sm:$0xff] %vm46, %v761
  %834 = vst.msk [vmem:[%s56 + $0x78] sm:$0xff] %vm46, %v762
  %835 = vst.msk [vmem:[%s56 + $0x98] sm:$0xff] %vm46, %v787
  %836 = vst.msk [vmem:[%s56 + $0xa8] sm:$0xff] %vm46, %v788
  %837 = vst.msk [vmem:[%s56 + $0xb8] sm:$0xff] %vm46, %v789
  %838 = vst.msk [vmem:[%s56 + $0xc8] sm:$0xff] %vm46, %v790
  %839 = vst.msk [vmem:[%s56 + $0xd8] sm:$0xff] %vm46, %v791
  %840 = vst.msk [vmem:[%s56 + $0xe8] sm:$0xff] %vm46, %v792
  %841 = vst.msk [vmem:[%s56 + $0xf8] sm:$0xff] %vm46, %v793
  %842 = vst.msk [vmem:[%s56 + $0x108] sm:$0xff] %vm46, %v794
  %s843 = scalar_lea.vmem [#allocation2], 592
  %844 = vst.msk [vmem:[%s843] sm:$0xff] %vm46, %v763
  %845 = vst.msk [vmem:[%s843 + $0x10] sm:$0xff] %vm46, %v764
  %846 = vst.msk [vmem:[%s843 + $0x20] sm:$0xff] %vm46, %v765
  %847 = vst.msk [vmem:[%s843 + $0x30] sm:$0xff] %vm46, %v766
  %848 = vst.msk [vmem:[%s843 + $0x40] sm:$0xff] %vm46, %v767
  %849 = vst.msk [vmem:[%s843 + $0x50] sm:$0xff] %vm46, %v768
  %850 = vst.msk [vmem:[%s843 + $0x60] sm:$0xff] %vm46, %v769
  %851 = vst.msk [vmem:[%s843 + $0x70] sm:$0xff] %vm46, %v770
  %852 = vst.msk [vmem:[%s843 + $0x90] sm:$0xff] %vm46, %v795
  %853 = vst.msk [vmem:[%s843 + $0xa0] sm:$0xff] %vm46, %v796
  %854 = vst.msk [vmem:[%s843 + $0xb0] sm:$0xff] %vm46, %v797
  %855 = vst.msk [vmem:[%s843 + $0xc0] sm:$0xff] %vm46, %v798
  %856 = vst.msk [vmem:[%s843 + $0xd0] sm:$0xff] %vm46, %v799
  %857 = vst.msk [vmem:[%s843 + $0xe0] sm:$0xff] %vm46, %v800
  %858 = vst.msk [vmem:[%s843 + $0xf0] sm:$0xff] %vm46, %v801
  %859 = vst.msk [vmem:[%s843 + $0x100] sm:$0xff] %vm46, %v802
  %s860 = scalar_lea.vmem [#allocation2], 880
  %861 = vst.msk [vmem:[%s860 + $0x8] sm:$0xff] %vm46, %v771
  %862 = vst.msk [vmem:[%s860 + $0x18] sm:$0xff] %vm46, %v772
  %863 = vst.msk [vmem:[%s860 + $0x28] sm:$0xff] %vm46, %v773
  %864 = vst.msk [vmem:[%s860 + $0x38] sm:$0xff] %vm46, %v774
  %865 = vst.msk [vmem:[%s860 + $0x48] sm:$0xff] %vm46, %v775
  %866 = vst.msk [vmem:[%s860 + $0x58] sm:$0xff] %vm46, %v776
  %867 = vst.msk [vmem:[%s860 + $0x68] sm:$0xff] %vm46, %v777
  %868 = vst.msk [vmem:[%s860 + $0x78] sm:$0xff] %vm46, %v778
  %869 = vst.msk [vmem:[%s860 + $0x98] sm:$0xff] %vm46, %v803
  %870 = vst.msk [vmem:[%s860 + $0xa8] sm:$0xff] %vm46, %v804
  %871 = vst.msk [vmem:[%s860 + $0xb8] sm:$0xff] %vm46, %v805
  %872 = vst.msk [vmem:[%s860 + $0xc8] sm:$0xff] %vm46, %v806
  %873 = vst.msk [vmem:[%s860 + $0xd8] sm:$0xff] %vm46, %v807
  %874 = vst.msk [vmem:[%s860 + $0xe8] sm:$0xff] %vm46, %v808
  %875 = vst.msk [vmem:[%s860 + $0xf8] sm:$0xff] %vm46, %v809
  %876 = vst.msk [vmem:[%s860 + $0x108] sm:$0xff] %vm46, %v810
  %v877 = vld [vmem:[%s51 + $0x7] sm:$0xff]
  %v878 = vld [vmem:[%s51 + $0x17] sm:$0xff]
  %v879 = vld [vmem:[%s51 + $0x27] sm:$0xff]
  %v880 = vld [vmem:[%s51 + $0x37] sm:$0xff]
  %v881 = vld [vmem:[%s51 + $0x47] sm:$0xff]
  %v882 = vld [vmem:[%s51 + $0x57] sm:$0xff]
  %v883 = vld [vmem:[%s51 + $0x67] sm:$0xff]
  %v884 = vld [vmem:[%s51 + $0x77] sm:$0xff]
  %v885 = vld [vmem:[%s51 + $0x97] sm:$0xff]
  %v886 = vld [vmem:[%s51 + $0xa7] sm:$0xff]
  %v887 = vld [vmem:[%s51 + $0xb7] sm:$0xff]
  %v888 = vld [vmem:[%s51 + $0xc7] sm:$0xff]
  %v889 = vld [vmem:[%s51 + $0xd7] sm:$0xff]
  %v890 = vld [vmem:[%s51 + $0xe7] sm:$0xff]
  %v891 = vld [vmem:[%s51 + $0xf7] sm:$0xff]
  %v892 = vld [vmem:[%s51 + $0x107] sm:$0xff]
  %v893 = vpack.c.bf16 %v877, %v877
  %v894 = vpack.c.bf16 %v878, %v878
  %v895 = vpack.c.bf16 %v879, %v879
  %v896 = vpack.c.bf16 %v880, %v880
  %v897 = vpack.c.bf16 %v881, %v881
  %v898 = vpack.c.bf16 %v882, %v882
  %v899 = vpack.c.bf16 %v883, %v883
  %v900 = vpack.c.bf16 %v884, %v884
  %v901 = vpack.c.bf16 %v885, %v885
  %v902 = vpack.c.bf16 %v886, %v886
  %v903 = vpack.c.bf16 %v887, %v887
  %v904 = vpack.c.bf16 %v888, %v888
  %v905 = vpack.c.bf16 %v889, %v889
  %v906 = vpack.c.bf16 %v890, %v890
  %v907 = vpack.c.bf16 %v891, %v891
  %v908 = vpack.c.bf16 %v892, %v892
  %v909 = vld [vmem:[%s3] sm:$0xf]
  %v910 = vld [vmem:[%s3 + $0x4] sm:$0xf]
  %v911 = vld [vmem:[%s3 + $0x8] sm:$0xf]
  %v912 = vld [vmem:[%s3 + $0xc] sm:$0xf]
  %v913 = vld [vmem:[%s3 + $0x10] sm:$0xf]
  %v914 = vld [vmem:[%s3 + $0x14] sm:$0xf]
  %v915 = vld [vmem:[%s3 + $0x18] sm:$0xf]
  %v916 = vld [vmem:[%s3 + $0x1c] sm:$0xf]
  %v917 = vld [vmem:[%s45] sm:$0xff]
  %v918 = vld [vmem:[%s45 + $0x10] sm:$0xff]
  %v919 = vld [vmem:[%s45 + $0x20] sm:$0xff]
  %v920 = vld [vmem:[%s45 + $0x30] sm:$0xff]
  %v921 = vld [vmem:[%s45 + $0x40] sm:$0xff]
  %v922 = vld [vmem:[%s45 + $0x50] sm:$0xff]
  %v923 = vld [vmem:[%s45 + $0x60] sm:$0xff]
  %v924 = vld [vmem:[%s45 + $0x70] sm:$0xff]
  %v925 = vld [vmem:[%s45 + $0x90] sm:$0xff]
  %v926 = vld [vmem:[%s45 + $0xa0] sm:$0xff]
  %v927 = vld [vmem:[%s45 + $0xb0] sm:$0xff]
  %v928 = vld [vmem:[%s45 + $0xc0] sm:$0xff]
  %v929 = vld [vmem:[%s45 + $0xd0] sm:$0xff]
  %v930 = vld [vmem:[%s45 + $0xe0] sm:$0xff]
  %v931 = vld [vmem:[%s45 + $0xf0] sm:$0xff]
  %v932 = vld [vmem:[%s45 + $0x100] sm:$0xff]
  %v933 = vpack.c.bf16 %v917, %v917
  %v934 = vpack.c.bf16 %v918, %v918
  %v935 = vpack.c.bf16 %v919, %v919
  %v936 = vpack.c.bf16 %v920, %v920
  %v937 = vpack.c.bf16 %v921, %v921
  %v938 = vpack.c.bf16 %v922, %v922
  %v939 = vpack.c.bf16 %v923, %v923
  %v940 = vpack.c.bf16 %v924, %v924
  %v941 = vpack.c.bf16 %v925, %v925
  %v942 = vpack.c.bf16 %v926, %v926
  %v943 = vpack.c.bf16 %v927, %v927
  %v944 = vpack.c.bf16 %v928, %v928
  %v945 = vpack.c.bf16 %v929, %v929
  %v946 = vpack.c.bf16 %v930, %v930
  %v947 = vpack.c.bf16 %v931, %v931
  %v948 = vpack.c.bf16 %v932, %v932
  %v949 = vld [vmem:[%s3 + $0x20] sm:$0xf]
  %v950 = vld [vmem:[%s3 + $0x24] sm:$0xf]
  %v951 = vld [vmem:[%s3 + $0x28] sm:$0xf]
  %v952 = vld [vmem:[%s3 + $0x2c] sm:$0xf]
  %v953 = vld [vmem:[%s3 + $0x30] sm:$0xf]
  %v954 = vld [vmem:[%s3 + $0x34] sm:$0xf]
  %v955 = vld [vmem:[%s3 + $0x38] sm:$0xf]
  %v956 = vld [vmem:[%s3 + $0x3c] sm:$0xf]
  %v973 = vunpack.c.l.b16 %v933
  %v974 = vunpack.c.l.b16 %v934
  %v975 = vunpack.c.l.b16 %v935
  %v976 = vunpack.c.l.b16 %v936
  %v977 = vunpack.c.l.b16 %v937
  %v978 = vunpack.c.l.b16 %v938
  %v979 = vunpack.c.l.b16 %v939
  %v980 = vunpack.c.l.b16 %v940
  %v981 = vunpack.c.l.b16 %v941
  %v982 = vunpack.c.l.b16 %v942
  %v983 = vunpack.c.l.b16 %v943
  %v984 = vunpack.c.l.b16 %v944
  %v985 = vunpack.c.l.b16 %v945
  %v986 = vunpack.c.l.b16 %v946
  %v987 = vunpack.c.l.b16 %v947
  %v988 = vunpack.c.l.b16 %v948
  %v989 = vpack.c.b16 %v974, %v973
  %v990 = vpack.c.b16 %v976, %v975
  %v991 = vpack.c.b16 %v978, %v977
  %v992 = vpack.c.b16 %v980, %v979
  %v993 = vpack.c.b16 %v982, %v981
  %v994 = vpack.c.b16 %v984, %v983
  %v995 = vpack.c.b16 %v986, %v985
  %v996 = vpack.c.b16 %v988, %v987
  %v1005 = vunpack.c.l.b16 %v949
  %v1006 = vunpack.c.l.b16 %v950
  %v1007 = vunpack.c.l.b16 %v951
  %v1008 = vunpack.c.l.b16 %v952
  %v1009 = vunpack.c.l.b16 %v953
  %v1010 = vunpack.c.l.b16 %v954
  %v1011 = vunpack.c.l.b16 %v955
  %v1012 = vunpack.c.l.b16 %v956
  %v1013 = vpack.c.b16 %v1006, %v1005
  %v1014 = vpack.c.b16 %v1008, %v1007
  %v1015 = vpack.c.b16 %v1010, %v1009
  %v1016 = vpack.c.b16 %v1012, %v1011
  %v1022 = vsel %vm46, %v989, 0
  %v1025 = vsel %vm46, %v990, 0
  %v1028 = vsel %vm46, %v991, 0
  %v1031 = vsel %vm46, %v992, 0
  %v1034 = vsel %vm46, %v993, 0
  %v1037 = vsel %vm46, %v994, 0
  %v1040 = vsel %vm46, %v995, 0
  %v1043 = vsel %vm46, %v996, 0
  %1045 = vmatpush.bf16.msra.mxu0 0
  %1046 = vmatpush.bf16.msra.mxu0 0
  %1047 = vmatpush.bf16.msra.mxu0 0
  %1048 = vmatpush.bf16.msra.mxu0 0
  %1049 = vmatpush.bf16.msra.mxu0 %v1016
  %1050 = vmatpush.bf16.msra.mxu0 %v1015
  %1051 = vmatpush.bf16.msra.mxu0 %v1014
  %1052 = vmatpush.bf16.msra.mxu0 %v1013
  %1053 = vmatmul.bf16.gmra.mxu0 %v1022
  %v1054 = vpop.f32.mrf.mxu0
  %v1055 = vadd.f32 0.0, %v1054
  %v1056 = vpop.f32.mrf.mxu0
  %v1057 = vadd.f32 0.0, %v1056
  %1058 = vmatmul.bf16.gmra.mxu0 %v1025
  %v1059 = vpop.f32.mrf.mxu0
  %v1060 = vadd.f32 0.0, %v1059
  %v1061 = vpop.f32.mrf.mxu0
  %v1062 = vadd.f32 0.0, %v1061
  %1063 = vmatmul.bf16.gmra.mxu0 %v1028
  %v1064 = vpop.f32.mrf.mxu0
  %v1065 = vadd.f32 0.0, %v1064
  %v1066 = vpop.f32.mrf.mxu0
  %v1067 = vadd.f32 0.0, %v1066
  %1068 = vmatmul.bf16.gmra.mxu0 %v1031
  %v1069 = vpop.f32.mrf.mxu0
  %v1070 = vadd.f32 0.0, %v1069
  %v1071 = vpop.f32.mrf.mxu0
  %v1072 = vadd.f32 0.0, %v1071
  %1073 = vmatmul.bf16.gmra.mxu0 %v1034
  %v1074 = vpop.f32.mrf.mxu0
  %v1075 = vadd.f32 0.0, %v1074
  %v1076 = vpop.f32.mrf.mxu0
  %v1077 = vadd.f32 0.0, %v1076
  %1078 = vmatmul.bf16.gmra.mxu0 %v1037
  %v1079 = vpop.f32.mrf.mxu0
  %v1080 = vadd.f32 0.0, %v1079
  %v1081 = vpop.f32.mrf.mxu0
  %v1082 = vadd.f32 0.0, %v1081
  %1083 = vmatmul.bf16.gmra.mxu0 %v1040
  %v1084 = vpop.f32.mrf.mxu0
  %v1085 = vadd.f32 0.0, %v1084
  %v1086 = vpop.f32.mrf.mxu0
  %v1087 = vadd.f32 0.0, %v1086
  %1088 = vmatmul.bf16.gmra.mxu0 %v1043
  %v1089 = vpop.f32.mrf.mxu0
  %v1090 = vadd.f32 0.0, %v1089
  %v1091 = vpop.f32.mrf.mxu0
  %v1092 = vadd.f32 0.0, %v1091
  %1093 = vdwg.mxu0
  %v1110 = vunpack.c.l.b16 %v893
  %v1111 = vunpack.c.l.b16 %v894
  %v1112 = vunpack.c.l.b16 %v895
  %v1113 = vunpack.c.l.b16 %v896
  %v1114 = vunpack.c.l.b16 %v897
  %v1115 = vunpack.c.l.b16 %v898
  %v1116 = vunpack.c.l.b16 %v899
  %v1117 = vunpack.c.l.b16 %v900
  %v1118 = vunpack.c.l.b16 %v901
  %v1119 = vunpack.c.l.b16 %v902
  %v1120 = vunpack.c.l.b16 %v903
  %v1121 = vunpack.c.l.b16 %v904
  %v1122 = vunpack.c.l.b16 %v905
  %v1123 = vunpack.c.l.b16 %v906
  %v1124 = vunpack.c.l.b16 %v907
  %v1125 = vunpack.c.l.b16 %v908
  %v1126 = vpack.c.b16 %v1111, %v1110
  %v1127 = vpack.c.b16 %v1113, %v1112
  %v1128 = vpack.c.b16 %v1115, %v1114
  %v1129 = vpack.c.b16 %v1117, %v1116
  %v1130 = vpack.c.b16 %v1119, %v1118
  %v1131 = vpack.c.b16 %v1121, %v1120
  %v1132 = vpack.c.b16 %v1123, %v1122
  %v1133 = vpack.c.b16 %v1125, %v1124
  %v1142 = vunpack.c.l.b16 %v909
  %v1143 = vunpack.c.l.b16 %v910
  %v1144 = vunpack.c.l.b16 %v911
  %v1145 = vunpack.c.l.b16 %v912
  %v1146 = vunpack.c.l.b16 %v913
  %v1147 = vunpack.c.l.b16 %v914
  %v1148 = vunpack.c.l.b16 %v915
  %v1149 = vunpack.c.l.b16 %v916
  %v1150 = vpack.c.b16 %v1143, %v1142
  %v1151 = vpack.c.b16 %v1145, %v1144
  %v1152 = vpack.c.b16 %v1147, %v1146
  %v1153 = vpack.c.b16 %v1149, %v1148
  %v1159 = vsel %vm46, %v1126, 0
  %v1162 = vsel %vm46, %v1127, 0
  %v1165 = vsel %vm46, %v1128, 0
  %v1168 = vsel %vm46, %v1129, 0
  %v1171 = vsel %vm46, %v1130, 0
  %v1174 = vsel %vm46, %v1131, 0
  %v1177 = vsel %vm46, %v1132, 0
  %v1180 = vsel %vm46, %v1133, 0
  %1182 = vmatpush.bf16.msra.mxu0 0
  %1183 = vmatpush.bf16.msra.mxu0 0
  %1184 = vmatpush.bf16.msra.mxu0 0
  %1185 = vmatpush.bf16.msra.mxu0 0
  %1186 = vmatpush.bf16.msra.mxu0 %v1153
  %1187 = vmatpush.bf16.msra.mxu0 %v1152
  %1188 = vmatpush.bf16.msra.mxu0 %v1151
  %1189 = vmatpush.bf16.msra.mxu0 %v1150
  %1190 = vmatmul.bf16.gmra.mxu0 %v1159
  %v1191 = vpop.f32.mrf.mxu0
  %v1192 = vadd.f32 %v1055, %v1191
  %v1193 = vpop.f32.mrf.mxu0
  %v1194 = vadd.f32 %v1057, %v1193
  %1195 = vmatmul.bf16.gmra.mxu0 %v1162
  %v1196 = vpop.f32.mrf.mxu0
  %v1197 = vadd.f32 %v1060, %v1196
  %v1198 = vpop.f32.mrf.mxu0
  %v1199 = vadd.f32 %v1062, %v1198
  %1200 = vmatmul.bf16.gmra.mxu0 %v1165
  %v1201 = vpop.f32.mrf.mxu0
  %v1202 = vadd.f32 %v1065, %v1201
  %v1203 = vpop.f32.mrf.mxu0
  %v1204 = vadd.f32 %v1067, %v1203
  %1205 = vmatmul.bf16.gmra.mxu0 %v1168
  %v1206 = vpop.f32.mrf.mxu0
  %v1207 = vadd.f32 %v1070, %v1206
  %v1208 = vpop.f32.mrf.mxu0
  %v1209 = vadd.f32 %v1072, %v1208
  %1210 = vmatmul.bf16.gmra.mxu0 %v1171
  %v1211 = vpop.f32.mrf.mxu0
  %v1212 = vadd.f32 %v1075, %v1211
  %v1213 = vpop.f32.mrf.mxu0
  %v1214 = vadd.f32 %v1077, %v1213
  %1215 = vmatmul.bf16.gmra.mxu0 %v1174
  %v1216 = vpop.f32.mrf.mxu0
  %v1217 = vadd.f32 %v1080, %v1216
  %v1218 = vpop.f32.mrf.mxu0
  %v1219 = vadd.f32 %v1082, %v1218
  %1220 = vmatmul.bf16.gmra.mxu0 %v1177
  %v1221 = vpop.f32.mrf.mxu0
  %v1222 = vadd.f32 %v1085, %v1221
  %v1223 = vpop.f32.mrf.mxu0
  %v1224 = vadd.f32 %v1087, %v1223
  %1225 = vmatmul.bf16.gmra.mxu0 %v1180
  %v1226 = vpop.f32.mrf.mxu0
  %v1227 = vadd.f32 %v1090, %v1226
  %v1228 = vpop.f32.mrf.mxu0
  %v1229 = vadd.f32 %v1092, %v1228
  %1230 = vdwg.mxu0
  %v1231 = vld [vmem:[%s51 + $0x8] sm:$0xff]
  %v1232 = vld [vmem:[%s51 + $0x18] sm:$0xff]
  %v1233 = vld [vmem:[%s51 + $0x28] sm:$0xff]
  %v1234 = vld [vmem:[%s51 + $0x38] sm:$0xff]
  %v1235 = vld [vmem:[%s51 + $0x48] sm:$0xff]
  %v1236 = vld [vmem:[%s51 + $0x58] sm:$0xff]
  %v1237 = vld [vmem:[%s51 + $0x68] sm:$0xff]
  %v1238 = vld [vmem:[%s51 + $0x78] sm:$0xff]
  %v1239 = vld [vmem:[%s51 + $0x98] sm:$0xff]
  %v1240 = vld [vmem:[%s51 + $0xa8] sm:$0xff]
  %v1241 = vld [vmem:[%s51 + $0xb8] sm:$0xff]
  %v1242 = vld [vmem:[%s51 + $0xc8] sm:$0xff]
  %v1243 = vld [vmem:[%s51 + $0xd8] sm:$0xff]
  %v1244 = vld [vmem:[%s51 + $0xe8] sm:$0xff]
  %v1245 = vld [vmem:[%s51 + $0xf8] sm:$0xff]
  %v1246 = vld [vmem:[%s51 + $0x108] sm:$0xff]
  %v1247 = vpack.c.bf16 %v1231, %v1231
  %v1248 = vpack.c.bf16 %v1232, %v1232
  %v1249 = vpack.c.bf16 %v1233, %v1233
  %v1250 = vpack.c.bf16 %v1234, %v1234
  %v1251 = vpack.c.bf16 %v1235, %v1235
  %v1252 = vpack.c.bf16 %v1236, %v1236
  %v1253 = vpack.c.bf16 %v1237, %v1237
  %v1254 = vpack.c.bf16 %v1238, %v1238
  %v1255 = vpack.c.bf16 %v1239, %v1239
  %v1256 = vpack.c.bf16 %v1240, %v1240
  %v1257 = vpack.c.bf16 %v1241, %v1241
  %v1258 = vpack.c.bf16 %v1242, %v1242
  %v1259 = vpack.c.bf16 %v1243, %v1243
  %v1260 = vpack.c.bf16 %v1244, %v1244
  %v1261 = vpack.c.bf16 %v1245, %v1245
  %v1262 = vpack.c.bf16 %v1246, %v1246
  %v1263 = vld [vmem:[%s3 + $0x40] sm:$0xf]
  %v1264 = vld [vmem:[%s3 + $0x44] sm:$0xf]
  %v1265 = vld [vmem:[%s3 + $0x48] sm:$0xf]
  %v1266 = vld [vmem:[%s3 + $0x4c] sm:$0xf]
  %v1267 = vld [vmem:[%s3 + $0x50] sm:$0xf]
  %v1268 = vld [vmem:[%s3 + $0x54] sm:$0xf]
  %v1269 = vld [vmem:[%s3 + $0x58] sm:$0xf]
  %v1270 = vld [vmem:[%s3 + $0x5c] sm:$0xf]
  %v1287 = vunpack.c.l.b16 %v1247
  %v1288 = vunpack.c.l.b16 %v1248
  %v1289 = vunpack.c.l.b16 %v1249
  %v1290 = vunpack.c.l.b16 %v1250
  %v1291 = vunpack.c.l.b16 %v1251
  %v1292 = vunpack.c.l.b16 %v1252
  %v1293 = vunpack.c.l.b16 %v1253
  %v1294 = vunpack.c.l.b16 %v1254
  %v1295 = vunpack.c.l.b16 %v1255
  %v1296 = vunpack.c.l.b16 %v1256
  %v1297 = vunpack.c.l.b16 %v1257
  %v1298 = vunpack.c.l.b16 %v1258
  %v1299 = vunpack.c.l.b16 %v1259
  %v1300 = vunpack.c.l.b16 %v1260
  %v1301 = vunpack.c.l.b16 %v1261
  %v1302 = vunpack.c.l.b16 %v1262
  %v1303 = vpack.c.b16 %v1288, %v1287
  %v1304 = vpack.c.b16 %v1290, %v1289
  %v1305 = vpack.c.b16 %v1292, %v1291
  %v1306 = vpack.c.b16 %v1294, %v1293
  %v1307 = vpack.c.b16 %v1296, %v1295
  %v1308 = vpack.c.b16 %v1298, %v1297
  %v1309 = vpack.c.b16 %v1300, %v1299
  %v1310 = vpack.c.b16 %v1302, %v1301
  %v1319 = vunpack.c.l.b16 %v1263
  %v1320 = vunpack.c.l.b16 %v1264
  %v1321 = vunpack.c.l.b16 %v1265
  %v1322 = vunpack.c.l.b16 %v1266
  %v1323 = vunpack.c.l.b16 %v1267
  %v1324 = vunpack.c.l.b16 %v1268
  %v1325 = vunpack.c.l.b16 %v1269
  %v1326 = vunpack.c.l.b16 %v1270
  %v1327 = vpack.c.b16 %v1320, %v1319
  %v1328 = vpack.c.b16 %v1322, %v1321
  %v1329 = vpack.c.b16 %v1324, %v1323
  %v1330 = vpack.c.b16 %v1326, %v1325
  %v1336 = vsel %vm46, %v1303, 0
  %v1339 = vsel %vm46, %v1304, 0
  %v1342 = vsel %vm46, %v1305, 0
  %v1345 = vsel %vm46, %v1306, 0
  %v1348 = vsel %vm46, %v1307, 0
  %v1351 = vsel %vm46, %v1308, 0
  %v1354 = vsel %vm46, %v1309, 0
  %v1357 = vsel %vm46, %v1310, 0
  %1359 = vmatpush.bf16.msra.mxu0 0
  %1360 = vmatpush.bf16.msra.mxu0 0
  %1361 = vmatpush.bf16.msra.mxu0 0
  %1362 = vmatpush.bf16.msra.mxu0 0
  %1363 = vmatpush.bf16.msra.mxu0 %v1330
  %1364 = vmatpush.bf16.msra.mxu0 %v1329
  %1365 = vmatpush.bf16.msra.mxu0 %v1328
  %1366 = vmatpush.bf16.msra.mxu0 %v1327
  %1367 = vmatmul.bf16.gmra.mxu0 %v1336
  %v1368 = vpop.f32.mrf.mxu0
  %v1369 = vadd.f32 0.0, %v1368
  %v1370 = vpop.f32.mrf.mxu0
  %v1371 = vadd.f32 0.0, %v1370
  %1372 = vmatmul.bf16.gmra.mxu0 %v1339
  %v1373 = vpop.f32.mrf.mxu0
  %v1374 = vadd.f32 0.0, %v1373
  %v1375 = vpop.f32.mrf.mxu0
  %v1376 = vadd.f32 0.0, %v1375
  %1377 = vmatmul.bf16.gmra.mxu0 %v1342
  %v1378 = vpop.f32.mrf.mxu0
  %v1379 = vadd.f32 0.0, %v1378
  %v1380 = vpop.f32.mrf.mxu0
  %v1381 = vadd.f32 0.0, %v1380
  %1382 = vmatmul.bf16.gmra.mxu0 %v1345
  %v1383 = vpop.f32.mrf.mxu0
  %v1384 = vadd.f32 0.0, %v1383
  %v1385 = vpop.f32.mrf.mxu0
  %v1386 = vadd.f32 0.0, %v1385
  %1387 = vmatmul.bf16.gmra.mxu0 %v1348
  %v1388 = vpop.f32.mrf.mxu0
  %v1389 = vadd.f32 0.0, %v1388
  %v1390 = vpop.f32.mrf.mxu0
  %v1391 = vadd.f32 0.0, %v1390
  %1392 = vmatmul.bf16.gmra.mxu0 %v1351
  %v1393 = vpop.f32.mrf.mxu0
  %v1394 = vadd.f32 0.0, %v1393
  %v1395 = vpop.f32.mrf.mxu0
  %v1396 = vadd.f32 0.0, %v1395
  %1397 = vmatmul.bf16.gmra.mxu0 %v1354
  %v1398 = vpop.f32.mrf.mxu0
  %v1399 = vadd.f32 0.0, %v1398
  %v1400 = vpop.f32.mrf.mxu0
  %v1401 = vadd.f32 0.0, %v1400
  %1402 = vmatmul.bf16.gmra.mxu0 %v1357
  %v1403 = vpop.f32.mrf.mxu0
  %v1404 = vadd.f32 0.0, %v1403
  %v1405 = vpop.f32.mrf.mxu0
  %v1406 = vadd.f32 0.0, %v1405
  %1407 = vdwg.mxu0
  %v1408 = vadd.f32 %v1192, %v1369
  %v1409 = vadd.f32 %v1194, %v1371
  %v1410 = vadd.f32 %v1197, %v1374
  %v1411 = vadd.f32 %v1199, %v1376
  %v1412 = vadd.f32 %v1202, %v1379
  %v1413 = vadd.f32 %v1204, %v1381
  %v1414 = vadd.f32 %v1207, %v1384
  %v1415 = vadd.f32 %v1209, %v1386
  %v1416 = vadd.f32 %v1212, %v1389
  %v1417 = vadd.f32 %v1214, %v1391
  %v1418 = vadd.f32 %v1217, %v1394
  %v1419 = vadd.f32 %v1219, %v1396
  %v1420 = vadd.f32 %v1222, %v1399
  %v1421 = vadd.f32 %v1224, %v1401
  %v1422 = vadd.f32 %v1227, %v1404
  %v1423 = vadd.f32 %v1229, %v1406
  %v1424 = vld [vmem:[%s56 + $0x7] sm:$0xff]
  %v1425 = vld [vmem:[%s56 + $0x17] sm:$0xff]
  %v1426 = vld [vmem:[%s56 + $0x27] sm:$0xff]
  %v1427 = vld [vmem:[%s56 + $0x37] sm:$0xff]
  %v1428 = vld [vmem:[%s56 + $0x47] sm:$0xff]
  %v1429 = vld [vmem:[%s56 + $0x57] sm:$0xff]
  %v1430 = vld [vmem:[%s56 + $0x67] sm:$0xff]
  %v1431 = vld [vmem:[%s56 + $0x77] sm:$0xff]
  %v1432 = vld [vmem:[%s56 + $0x97] sm:$0xff]
  %v1433 = vld [vmem:[%s56 + $0xa7] sm:$0xff]
  %v1434 = vld [vmem:[%s56 + $0xb7] sm:$0xff]
  %v1435 = vld [vmem:[%s56 + $0xc7] sm:$0xff]
  %v1436 = vld [vmem:[%s56 + $0xd7] sm:$0xff]
  %v1437 = vld [vmem:[%s56 + $0xe7] sm:$0xff]
  %v1438 = vld [vmem:[%s56 + $0xf7] sm:$0xff]
  %v1439 = vld [vmem:[%s56 + $0x107] sm:$0xff]
  %v1440 = vpack.c.bf16 %v1424, %v1424
  %v1441 = vpack.c.bf16 %v1425, %v1425
  %v1442 = vpack.c.bf16 %v1426, %v1426
  %v1443 = vpack.c.bf16 %v1427, %v1427
  %v1444 = vpack.c.bf16 %v1428, %v1428
  %v1445 = vpack.c.bf16 %v1429, %v1429
  %v1446 = vpack.c.bf16 %v1430, %v1430
  %v1447 = vpack.c.bf16 %v1431, %v1431
  %v1448 = vpack.c.bf16 %v1432, %v1432
  %v1449 = vpack.c.bf16 %v1433, %v1433
  %v1450 = vpack.c.bf16 %v1434, %v1434
  %v1451 = vpack.c.bf16 %v1435, %v1435
  %v1452 = vpack.c.bf16 %v1436, %v1436
  %v1453 = vpack.c.bf16 %v1437, %v1437
  %v1454 = vpack.c.bf16 %v1438, %v1438
  %v1455 = vpack.c.bf16 %v1439, %v1439
  %v1456 = vld [vmem:[%s3 + $0x60] sm:$0xf]
  %v1457 = vld [vmem:[%s3 + $0x64] sm:$0xf]
  %v1458 = vld [vmem:[%s3 + $0x68] sm:$0xf]
  %v1459 = vld [vmem:[%s3 + $0x6c] sm:$0xf]
  %v1460 = vld [vmem:[%s3 + $0x70] sm:$0xf]
  %v1461 = vld [vmem:[%s3 + $0x74] sm:$0xf]
  %v1462 = vld [vmem:[%s3 + $0x78] sm:$0xf]
  %v1463 = vld [vmem:[%s3 + $0x7c] sm:$0xf]
  %v1480 = vunpack.c.l.b16 %v1440
  %v1481 = vunpack.c.l.b16 %v1441
  %v1482 = vunpack.c.l.b16 %v1442
  %v1483 = vunpack.c.l.b16 %v1443
  %v1484 = vunpack.c.l.b16 %v1444
  %v1485 = vunpack.c.l.b16 %v1445
  %v1486 = vunpack.c.l.b16 %v1446
  %v1487 = vunpack.c.l.b16 %v1447
  %v1488 = vunpack.c.l.b16 %v1448
  %v1489 = vunpack.c.l.b16 %v1449
  %v1490 = vunpack.c.l.b16 %v1450
  %v1491 = vunpack.c.l.b16 %v1451
  %v1492 = vunpack.c.l.b16 %v1452
  %v1493 = vunpack.c.l.b16 %v1453
  %v1494 = vunpack.c.l.b16 %v1454
  %v1495 = vunpack.c.l.b16 %v1455
  %v1496 = vpack.c.b16 %v1481, %v1480
  %v1497 = vpack.c.b16 %v1483, %v1482
  %v1498 = vpack.c.b16 %v1485, %v1484
  %v1499 = vpack.c.b16 %v1487, %v1486
  %v1500 = vpack.c.b16 %v1489, %v1488
  %v1501 = vpack.c.b16 %v1491, %v1490
  %v1502 = vpack.c.b16 %v1493, %v1492
  %v1503 = vpack.c.b16 %v1495, %v1494
  %v1512 = vunpack.c.l.b16 %v1456
  %v1513 = vunpack.c.l.b16 %v1457
  %v1514 = vunpack.c.l.b16 %v1458
  %v1515 = vunpack.c.l.b16 %v1459
  %v1516 = vunpack.c.l.b16 %v1460
  %v1517 = vunpack.c.l.b16 %v1461
  %v1518 = vunpack.c.l.b16 %v1462
  %v1519 = vunpack.c.l.b16 %v1463
  %v1520 = vpack.c.b16 %v1513, %v1512
  %v1521 = vpack.c.b16 %v1515, %v1514
  %v1522 = vpack.c.b16 %v1517, %v1516
  %v1523 = vpack.c.b16 %v1519, %v1518
  %v1529 = vsel %vm46, %v1496, 0
  %v1532 = vsel %vm46, %v1497, 0
  %v1535 = vsel %vm46, %v1498, 0
  %v1538 = vsel %vm46, %v1499, 0
  %v1541 = vsel %vm46, %v1500, 0
  %v1544 = vsel %vm46, %v1501, 0
  %v1547 = vsel %vm46, %v1502, 0
  %v1550 = vsel %vm46, %v1503, 0
  %1552 = vmatpush.bf16.msra.mxu0 0
  %1553 = vmatpush.bf16.msra.mxu0 0
  %1554 = vmatpush.bf16.msra.mxu0 0
  %1555 = vmatpush.bf16.msra.mxu0 0
  %1556 = vmatpush.bf16.msra.mxu0 %v1523
  %1557 = vmatpush.bf16.msra.mxu0 %v1522
  %1558 = vmatpush.bf16.msra.mxu0 %v1521
  %1559 = vmatpush.bf16.msra.mxu0 %v1520
  %1560 = vmatmul.bf16.gmra.mxu0 %v1529
  %v1561 = vpop.f32.mrf.mxu0
  %v1562 = vadd.f32 0.0, %v1561
  %v1563 = vpop.f32.mrf.mxu0
  %v1564 = vadd.f32 0.0, %v1563
  %1565 = vmatmul.bf16.gmra.mxu0 %v1532
  %v1566 = vpop.f32.mrf.mxu0
  %v1567 = vadd.f32 0.0, %v1566
  %v1568 = vpop.f32.mrf.mxu0
  %v1569 = vadd.f32 0.0, %v1568
  %1570 = vmatmul.bf16.gmra.mxu0 %v1535
  %v1571 = vpop.f32.mrf.mxu0
  %v1572 = vadd.f32 0.0, %v1571
  %v1573 = vpop.f32.mrf.mxu0
  %v1574 = vadd.f32 0.0, %v1573
  %1575 = vmatmul.bf16.gmra.mxu0 %v1538
  %v1576 = vpop.f32.mrf.mxu0
  %v1577 = vadd.f32 0.0, %v1576
  %v1578 = vpop.f32.mrf.mxu0
  %v1579 = vadd.f32 0.0, %v1578
  %1580 = vmatmul.bf16.gmra.mxu0 %v1541
  %v1581 = vpop.f32.mrf.mxu0
  %v1582 = vadd.f32 0.0, %v1581
  %v1583 = vpop.f32.mrf.mxu0
  %v1584 = vadd.f32 0.0, %v1583
  %1585 = vmatmul.bf16.gmra.mxu0 %v1544
  %v1586 = vpop.f32.mrf.mxu0
  %v1587 = vadd.f32 0.0, %v1586
  %v1588 = vpop.f32.mrf.mxu0
  %v1589 = vadd.f32 0.0, %v1588
  %1590 = vmatmul.bf16.gmra.mxu0 %v1547
  %v1591 = vpop.f32.mrf.mxu0
  %v1592 = vadd.f32 0.0, %v1591
  %v1593 = vpop.f32.mrf.mxu0
  %v1594 = vadd.f32 0.0, %v1593
  %1595 = vmatmul.bf16.gmra.mxu0 %v1550
  %v1596 = vpop.f32.mrf.mxu0
  %v1597 = vadd.f32 0.0, %v1596
  %v1598 = vpop.f32.mrf.mxu0
  %v1599 = vadd.f32 0.0, %v1598
  %1600 = vdwg.mxu0
  %v1601 = vadd.f32 %v1408, %v1562
  %v1602 = vadd.f32 %v1409, %v1564
  %v1603 = vadd.f32 %v1410, %v1567
  %v1604 = vadd.f32 %v1411, %v1569
  %v1605 = vadd.f32 %v1412, %v1572
  %v1606 = vadd.f32 %v1413, %v1574
  %v1607 = vadd.f32 %v1414, %v1577
  %v1608 = vadd.f32 %v1415, %v1579
  %v1609 = vadd.f32 %v1416, %v1582
  %v1610 = vadd.f32 %v1417, %v1584
  %v1611 = vadd.f32 %v1418, %v1587
  %v1612 = vadd.f32 %v1419, %v1589
  %v1613 = vadd.f32 %v1420, %v1592
  %v1614 = vadd.f32 %v1421, %v1594
  %v1615 = vadd.f32 %v1422, %v1597
  %v1616 = vadd.f32 %v1423, %v1599
  %v1617 = vld [vmem:[#allocation2] sm:$0xff]
  %v1618 = vld [vmem:[#allocation2 + $0x10] sm:$0xff]
  %v1619 = vld [vmem:[#allocation2 + $0x20] sm:$0xff]
  %v1620 = vld [vmem:[#allocation2 + $0x30] sm:$0xff]
  %v1621 = vld [vmem:[#allocation2 + $0x40] sm:$0xff]
  %v1622 = vld [vmem:[#allocation2 + $0x50] sm:$0xff]
  %v1623 = vld [vmem:[#allocation2 + $0x60] sm:$0xff]
  %v1624 = vld [vmem:[#allocation2 + $0x70] sm:$0xff]
  %v1625 = vld [vmem:[#allocation2 + $0x90] sm:$0xff]
  %v1626 = vld [vmem:[#allocation2 + $0xa0] sm:$0xff]
  %v1627 = vld [vmem:[#allocation2 + $0xb0] sm:$0xff]
  %v1628 = vld [vmem:[#allocation2 + $0xc0] sm:$0xff]
  %v1629 = vld [vmem:[#allocation2 + $0xd0] sm:$0xff]
  %v1630 = vld [vmem:[#allocation2 + $0xe0] sm:$0xff]
  %v1631 = vld [vmem:[#allocation2 + $0xf0] sm:$0xff]
  %v1632 = vld [vmem:[#allocation2 + $0x100] sm:$0xff]
  %v1633 = vpack.c.bf16 %v1617, %v1617
  %v1634 = vpack.c.bf16 %v1618, %v1618
  %v1635 = vpack.c.bf16 %v1619, %v1619
  %v1636 = vpack.c.bf16 %v1620, %v1620
  %v1637 = vpack.c.bf16 %v1621, %v1621
  %v1638 = vpack.c.bf16 %v1622, %v1622
  %v1639 = vpack.c.bf16 %v1623, %v1623
  %v1640 = vpack.c.bf16 %v1624, %v1624
  %v1641 = vpack.c.bf16 %v1625, %v1625
  %v1642 = vpack.c.bf16 %v1626, %v1626
  %v1643 = vpack.c.bf16 %v1627, %v1627
  %v1644 = vpack.c.bf16 %v1628, %v1628
  %v1645 = vpack.c.bf16 %v1629, %v1629
  %v1646 = vpack.c.bf16 %v1630, %v1630
  %v1647 = vpack.c.bf16 %v1631, %v1631
  %v1648 = vpack.c.bf16 %v1632, %v1632
  %v1649 = vld [vmem:[%s3 + $0x80] sm:$0xf]
  %v1650 = vld [vmem:[%s3 + $0x84] sm:$0xf]
  %v1651 = vld [vmem:[%s3 + $0x88] sm:$0xf]
  %v1652 = vld [vmem:[%s3 + $0x8c] sm:$0xf]
  %v1653 = vld [vmem:[%s3 + $0x90] sm:$0xf]
  %v1654 = vld [vmem:[%s3 + $0x94] sm:$0xf]
  %v1655 = vld [vmem:[%s3 + $0x98] sm:$0xf]
  %v1656 = vld [vmem:[%s3 + $0x9c] sm:$0xf]
  %v1673 = vunpack.c.l.b16 %v1633
  %v1674 = vunpack.c.l.b16 %v1634
  %v1675 = vunpack.c.l.b16 %v1635
  %v1676 = vunpack.c.l.b16 %v1636
  %v1677 = vunpack.c.l.b16 %v1637
  %v1678 = vunpack.c.l.b16 %v1638
  %v1679 = vunpack.c.l.b16 %v1639
  %v1680 = vunpack.c.l.b16 %v1640
  %v1681 = vunpack.c.l.b16 %v1641
  %v1682 = vunpack.c.l.b16 %v1642
  %v1683 = vunpack.c.l.b16 %v1643
  %v1684 = vunpack.c.l.b16 %v1644
  %v1685 = vunpack.c.l.b16 %v1645
  %v1686 = vunpack.c.l.b16 %v1646
  %v1687 = vunpack.c.l.b16 %v1647
  %v1688 = vunpack.c.l.b16 %v1648
  %v1689 = vpack.c.b16 %v1674, %v1673
  %v1690 = vpack.c.b16 %v1676, %v1675
  %v1691 = vpack.c.b16 %v1678, %v1677
  %v1692 = vpack.c.b16 %v1680, %v1679
  %v1693 = vpack.c.b16 %v1682, %v1681
  %v1694 = vpack.c.b16 %v1684, %v1683
  %v1695 = vpack.c.b16 %v1686, %v1685
  %v1696 = vpack.c.b16 %v1688, %v1687
  %v1705 = vunpack.c.l.b16 %v1649
  %v1706 = vunpack.c.l.b16 %v1650
  %v1707 = vunpack.c.l.b16 %v1651
  %v1708 = vunpack.c.l.b16 %v1652
  %v1709 = vunpack.c.l.b16 %v1653
  %v1710 = vunpack.c.l.b16 %v1654
  %v1711 = vunpack.c.l.b16 %v1655
  %v1712 = vunpack.c.l.b16 %v1656
  %v1713 = vpack.c.b16 %v1706, %v1705
  %v1714 = vpack.c.b16 %v1708, %v1707
  %v1715 = vpack.c.b16 %v1710, %v1709
  %v1716 = vpack.c.b16 %v1712, %v1711
  %v1722 = vsel %vm46, %v1689, 0
  %v1725 = vsel %vm46, %v1690, 0
  %v1728 = vsel %vm46, %v1691, 0
  %v1731 = vsel %vm46, %v1692, 0
  %v1734 = vsel %vm46, %v1693, 0
  %v1737 = vsel %vm46, %v1694, 0
  %v1740 = vsel %vm46, %v1695, 0
  %v1743 = vsel %vm46, %v1696, 0
  %1745 = vmatpush.bf16.msra.mxu0 0
  %1746 = vmatpush.bf16.msra.mxu0 0
  %1747 = vmatpush.bf16.msra.mxu0 0
  %1748 = vmatpush.bf16.msra.mxu0 0
  %1749 = vmatpush.bf16.msra.mxu0 %v1716
  %1750 = vmatpush.bf16.msra.mxu0 %v1715
  %1751 = vmatpush.bf16.msra.mxu0 %v1714
  %1752 = vmatpush.bf16.msra.mxu0 %v1713
  %1753 = vmatmul.bf16.gmra.mxu0 %v1722
  %v1754 = vpop.f32.mrf.mxu0
  %v1755 = vadd.f32 0.0, %v1754
  %v1756 = vpop.f32.mrf.mxu0
  %v1757 = vadd.f32 0.0, %v1756
  %1758 = vmatmul.bf16.gmra.mxu0 %v1725
  %v1759 = vpop.f32.mrf.mxu0
  %v1760 = vadd.f32 0.0, %v1759
  %v1761 = vpop.f32.mrf.mxu0
  %v1762 = vadd.f32 0.0, %v1761
  %1763 = vmatmul.bf16.gmra.mxu0 %v1728
  %v1764 = vpop.f32.mrf.mxu0
  %v1765 = vadd.f32 0.0, %v1764
  %v1766 = vpop.f32.mrf.mxu0
  %v1767 = vadd.f32 0.0, %v1766
  %1768 = vmatmul.bf16.gmra.mxu0 %v1731
  %v1769 = vpop.f32.mrf.mxu0
  %v1770 = vadd.f32 0.0, %v1769
  %v1771 = vpop.f32.mrf.mxu0
  %v1772 = vadd.f32 0.0, %v1771
  %1773 = vmatmul.bf16.gmra.mxu0 %v1734
  %v1774 = vpop.f32.mrf.mxu0
  %v1775 = vadd.f32 0.0, %v1774
  %v1776 = vpop.f32.mrf.mxu0
  %v1777 = vadd.f32 0.0, %v1776
  %1778 = vmatmul.bf16.gmra.mxu0 %v1737
  %v1779 = vpop.f32.mrf.mxu0
  %v1780 = vadd.f32 0.0, %v1779
  %v1781 = vpop.f32.mrf.mxu0
  %v1782 = vadd.f32 0.0, %v1781
  %1783 = vmatmul.bf16.gmra.mxu0 %v1740
  %v1784 = vpop.f32.mrf.mxu0
  %v1785 = vadd.f32 0.0, %v1784
  %v1786 = vpop.f32.mrf.mxu0
  %v1787 = vadd.f32 0.0, %v1786
  %1788 = vmatmul.bf16.gmra.mxu0 %v1743
  %v1789 = vpop.f32.mrf.mxu0
  %v1790 = vadd.f32 0.0, %v1789
  %v1791 = vpop.f32.mrf.mxu0
  %v1792 = vadd.f32 0.0, %v1791
  %1793 = vdwg.mxu0
  %v1794 = vadd.f32 %v1601, %v1755
  %v1795 = vadd.f32 %v1602, %v1757
  %v1796 = vadd.f32 %v1603, %v1760
  %v1797 = vadd.f32 %v1604, %v1762
  %v1798 = vadd.f32 %v1605, %v1765
  %v1799 = vadd.f32 %v1606, %v1767
  %v1800 = vadd.f32 %v1607, %v1770
  %v1801 = vadd.f32 %v1608, %v1772
  %v1802 = vadd.f32 %v1609, %v1775
  %v1803 = vadd.f32 %v1610, %v1777
  %v1804 = vadd.f32 %v1611, %v1780
  %v1805 = vadd.f32 %v1612, %v1782
  %v1806 = vadd.f32 %v1613, %v1785
  %v1807 = vadd.f32 %v1614, %v1787
  %v1808 = vadd.f32 %v1615, %v1790
  %v1809 = vadd.f32 %v1616, %v1792
  %v1810 = vld [vmem:[%s56 + $0x8] sm:$0xff]
  %v1811 = vld [vmem:[%s56 + $0x18] sm:$0xff]
  %v1812 = vld [vmem:[%s56 + $0x28] sm:$0xff]
  %v1813 = vld [vmem:[%s56 + $0x38] sm:$0xff]
  %v1814 = vld [vmem:[%s56 + $0x48] sm:$0xff]
  %v1815 = vld [vmem:[%s56 + $0x58] sm:$0xff]
  %v1816 = vld [vmem:[%s56 + $0x68] sm:$0xff]
  %v1817 = vld [vmem:[%s56 + $0x78] sm:$0xff]
  %v1818 = vld [vmem:[%s56 + $0x98] sm:$0xff]
  %v1819 = vld [vmem:[%s56 + $0xa8] sm:$0xff]
  %v1820 = vld [vmem:[%s56 + $0xb8] sm:$0xff]
  %v1821 = vld [vmem:[%s56 + $0xc8] sm:$0xff]
  %v1822 = vld [vmem:[%s56 + $0xd8] sm:$0xff]
  %v1823 = vld [vmem:[%s56 + $0xe8] sm:$0xff]
  %v1824 = vld [vmem:[%s56 + $0xf8] sm:$0xff]
  %v1825 = vld [vmem:[%s56 + $0x108] sm:$0xff]
  %v1826 = vpack.c.bf16 %v1810, %v1810
  %v1827 = vpack.c.bf16 %v1811, %v1811
  %v1828 = vpack.c.bf16 %v1812, %v1812
  %v1829 = vpack.c.bf16 %v1813, %v1813
  %v1830 = vpack.c.bf16 %v1814, %v1814
  %v1831 = vpack.c.bf16 %v1815, %v1815
  %v1832 = vpack.c.bf16 %v1816, %v1816
  %v1833 = vpack.c.bf16 %v1817, %v1817
  %v1834 = vpack.c.bf16 %v1818, %v1818
  %v1835 = vpack.c.bf16 %v1819, %v1819
  %v1836 = vpack.c.bf16 %v1820, %v1820
  %v1837 = vpack.c.bf16 %v1821, %v1821
  %v1838 = vpack.c.bf16 %v1822, %v1822
  %v1839 = vpack.c.bf16 %v1823, %v1823
  %v1840 = vpack.c.bf16 %v1824, %v1824
  %v1841 = vpack.c.bf16 %v1825, %v1825
  %v1842 = vld [vmem:[%s3 + $0xa0] sm:$0xf]
  %v1843 = vld [vmem:[%s3 + $0xa4] sm:$0xf]
  %v1844 = vld [vmem:[%s3 + $0xa8] sm:$0xf]
  %v1845 = vld [vmem:[%s3 + $0xac] sm:$0xf]
  %v1846 = vld [vmem:[%s3 + $0xb0] sm:$0xf]
  %v1847 = vld [vmem:[%s3 + $0xb4] sm:$0xf]
  %v1848 = vld [vmem:[%s3 + $0xb8] sm:$0xf]
  %v1849 = vld [vmem:[%s3 + $0xbc] sm:$0xf]
  %v1866 = vunpack.c.l.b16 %v1826
  %v1867 = vunpack.c.l.b16 %v1827
  %v1868 = vunpack.c.l.b16 %v1828
  %v1869 = vunpack.c.l.b16 %v1829
  %v1870 = vunpack.c.l.b16 %v1830
  %v1871 = vunpack.c.l.b16 %v1831
  %v1872 = vunpack.c.l.b16 %v1832
  %v1873 = vunpack.c.l.b16 %v1833
  %v1874 = vunpack.c.l.b16 %v1834
  %v1875 = vunpack.c.l.b16 %v1835
  %v1876 = vunpack.c.l.b16 %v1836
  %v1877 = vunpack.c.l.b16 %v1837
  %v1878 = vunpack.c.l.b16 %v1838
  %v1879 = vunpack.c.l.b16 %v1839
  %v1880 = vunpack.c.l.b16 %v1840
  %v1881 = vunpack.c.l.b16 %v1841
  %v1882 = vpack.c.b16 %v1867, %v1866
  %v1883 = vpack.c.b16 %v1869, %v1868
  %v1884 = vpack.c.b16 %v1871, %v1870
  %v1885 = vpack.c.b16 %v1873, %v1872
  %v1886 = vpack.c.b16 %v1875, %v1874
  %v1887 = vpack.c.b16 %v1877, %v1876
  %v1888 = vpack.c.b16 %v1879, %v1878
  %v1889 = vpack.c.b16 %v1881, %v1880
  %v1898 = vunpack.c.l.b16 %v1842
  %v1899 = vunpack.c.l.b16 %v1843
  %v1900 = vunpack.c.l.b16 %v1844
  %v1901 = vunpack.c.l.b16 %v1845
  %v1902 = vunpack.c.l.b16 %v1846
  %v1903 = vunpack.c.l.b16 %v1847
  %v1904 = vunpack.c.l.b16 %v1848
  %v1905 = vunpack.c.l.b16 %v1849
  %v1906 = vpack.c.b16 %v1899, %v1898
  %v1907 = vpack.c.b16 %v1901, %v1900
  %v1908 = vpack.c.b16 %v1903, %v1902
  %v1909 = vpack.c.b16 %v1905, %v1904
  %v1915 = vsel %vm46, %v1882, 0
  %v1918 = vsel %vm46, %v1883, 0
  %v1921 = vsel %vm46, %v1884, 0
  %v1924 = vsel %vm46, %v1885, 0
  %v1927 = vsel %vm46, %v1886, 0
  %v1930 = vsel %vm46, %v1887, 0
  %v1933 = vsel %vm46, %v1888, 0
  %v1936 = vsel %vm46, %v1889, 0
  %1938 = vmatpush.bf16.msra.mxu0 0
  %1939 = vmatpush.bf16.msra.mxu0 0
  %1940 = vmatpush.bf16.msra.mxu0 0
  %1941 = vmatpush.bf16.msra.mxu0 0
  %1942 = vmatpush.bf16.msra.mxu0 %v1909
  %1943 = vmatpush.bf16.msra.mxu0 %v1908
  %1944 = vmatpush.bf16.msra.mxu0 %v1907
  %1945 = vmatpush.bf16.msra.mxu0 %v1906
  %1946 = vmatmul.bf16.gmra.mxu0 %v1915
  %v1947 = vpop.f32.mrf.mxu0
  %v1948 = vadd.f32 0.0, %v1947
  %v1949 = vpop.f32.mrf.mxu0
  %v1950 = vadd.f32 0.0, %v1949
  %1951 = vmatmul.bf16.gmra.mxu0 %v1918
  %v1952 = vpop.f32.mrf.mxu0
  %v1953 = vadd.f32 0.0, %v1952
  %v1954 = vpop.f32.mrf.mxu0
  %v1955 = vadd.f32 0.0, %v1954
  %1956 = vmatmul.bf16.gmra.mxu0 %v1921
  %v1957 = vpop.f32.mrf.mxu0
  %v1958 = vadd.f32 0.0, %v1957
  %v1959 = vpop.f32.mrf.mxu0
  %v1960 = vadd.f32 0.0, %v1959
  %1961 = vmatmul.bf16.gmra.mxu0 %v1924
  %v1962 = vpop.f32.mrf.mxu0
  %v1963 = vadd.f32 0.0, %v1962
  %v1964 = vpop.f32.mrf.mxu0
  %v1965 = vadd.f32 0.0, %v1964
  %1966 = vmatmul.bf16.gmra.mxu0 %v1927
  %v1967 = vpop.f32.mrf.mxu0
  %v1968 = vadd.f32 0.0, %v1967
  %v1969 = vpop.f32.mrf.mxu0
  %v1970 = vadd.f32 0.0, %v1969
  %1971 = vmatmul.bf16.gmra.mxu0 %v1930
  %v1972 = vpop.f32.mrf.mxu0
  %v1973 = vadd.f32 0.0, %v1972
  %v1974 = vpop.f32.mrf.mxu0
  %v1975 = vadd.f32 0.0, %v1974
  %1976 = vmatmul.bf16.gmra.mxu0 %v1933
  %v1977 = vpop.f32.mrf.mxu0
  %v1978 = vadd.f32 0.0, %v1977
  %v1979 = vpop.f32.mrf.mxu0
  %v1980 = vadd.f32 0.0, %v1979
  %1981 = vmatmul.bf16.gmra.mxu0 %v1936
  %v1982 = vpop.f32.mrf.mxu0
  %v1983 = vadd.f32 0.0, %v1982
  %v1984 = vpop.f32.mrf.mxu0
  %v1985 = vadd.f32 0.0, %v1984
  %1986 = vdwg.mxu0
  %v1987 = vadd.f32 %v1794, %v1948
  %v1988 = vadd.f32 %v1795, %v1950
  %v1989 = vadd.f32 %v1796, %v1953
  %v1990 = vadd.f32 %v1797, %v1955
  %v1991 = vadd.f32 %v1798, %v1958
  %v1992 = vadd.f32 %v1799, %v1960
  %v1993 = vadd.f32 %v1800, %v1963
  %v1994 = vadd.f32 %v1801, %v1965
  %v1995 = vadd.f32 %v1802, %v1968
  %v1996 = vadd.f32 %v1803, %v1970
  %v1997 = vadd.f32 %v1804, %v1973
  %v1998 = vadd.f32 %v1805, %v1975
  %v1999 = vadd.f32 %v1806, %v1978
  %v2000 = vadd.f32 %v1807, %v1980
  %v2001 = vadd.f32 %v1808, %v1983
  %v2002 = vadd.f32 %v1809, %v1985
  %v2003 = vld [vmem:[%s860 + $0x7] sm:$0xff]
  %v2004 = vld [vmem:[%s860 + $0x17] sm:$0xff]
  %v2005 = vld [vmem:[%s860 + $0x27] sm:$0xff]
  %v2006 = vld [vmem:[%s860 + $0x37] sm:$0xff]
  %v2007 = vld [vmem:[%s860 + $0x47] sm:$0xff]
  %v2008 = vld [vmem:[%s860 + $0x57] sm:$0xff]
  %v2009 = vld [vmem:[%s860 + $0x67] sm:$0xff]
  %v2010 = vld [vmem:[%s860 + $0x77] sm:$0xff]
  %v2011 = vld [vmem:[%s860 + $0x97] sm:$0xff]
  %v2012 = vld [vmem:[%s860 + $0xa7] sm:$0xff]
  %v2013 = vld [vmem:[%s860 + $0xb7] sm:$0xff]
  %v2014 = vld [vmem:[%s860 + $0xc7] sm:$0xff]
  %v2015 = vld [vmem:[%s860 + $0xd7] sm:$0xff]
  %v2016 = vld [vmem:[%s860 + $0xe7] sm:$0xff]
  %v2017 = vld [vmem:[%s860 + $0xf7] sm:$0xff]
  %v2018 = vld [vmem:[%s860 + $0x107] sm:$0xff]
  %v2019 = vpack.c.bf16 %v2003, %v2003
  %v2020 = vpack.c.bf16 %v2004, %v2004
  %v2021 = vpack.c.bf16 %v2005, %v2005
  %v2022 = vpack.c.bf16 %v2006, %v2006
  %v2023 = vpack.c.bf16 %v2007, %v2007
  %v2024 = vpack.c.bf16 %v2008, %v2008
  %v2025 = vpack.c.bf16 %v2009, %v2009
  %v2026 = vpack.c.bf16 %v2010, %v2010
  %v2027 = vpack.c.bf16 %v2011, %v2011
  %v2028 = vpack.c.bf16 %v2012, %v2012
  %v2029 = vpack.c.bf16 %v2013, %v2013
  %v2030 = vpack.c.bf16 %v2014, %v2014
  %v2031 = vpack.c.bf16 %v2015, %v2015
  %v2032 = vpack.c.bf16 %v2016, %v2016
  %v2033 = vpack.c.bf16 %v2017, %v2017
  %v2034 = vpack.c.bf16 %v2018, %v2018
  %v2035 = vld [vmem:[%s3 + $0xc0] sm:$0xf]
  %v2036 = vld [vmem:[%s3 + $0xc4] sm:$0xf]
  %v2037 = vld [vmem:[%s3 + $0xc8] sm:$0xf]
  %v2038 = vld [vmem:[%s3 + $0xcc] sm:$0xf]
  %v2039 = vld [vmem:[%s3 + $0xd0] sm:$0xf]
  %v2040 = vld [vmem:[%s3 + $0xd4] sm:$0xf]
  %v2041 = vld [vmem:[%s3 + $0xd8] sm:$0xf]
  %v2042 = vld [vmem:[%s3 + $0xdc] sm:$0xf]
  %v2059 = vunpack.c.l.b16 %v2019
  %v2060 = vunpack.c.l.b16 %v2020
  %v2061 = vunpack.c.l.b16 %v2021
  %v2062 = vunpack.c.l.b16 %v2022
  %v2063 = vunpack.c.l.b16 %v2023
  %v2064 = vunpack.c.l.b16 %v2024
  %v2065 = vunpack.c.l.b16 %v2025
  %v2066 = vunpack.c.l.b16 %v2026
  %v2067 = vunpack.c.l.b16 %v2027
  %v2068 = vunpack.c.l.b16 %v2028
  %v2069 = vunpack.c.l.b16 %v2029
  %v2070 = vunpack.c.l.b16 %v2030
  %v2071 = vunpack.c.l.b16 %v2031
  %v2072 = vunpack.c.l.b16 %v2032
  %v2073 = vunpack.c.l.b16 %v2033
  %v2074 = vunpack.c.l.b16 %v2034
  %v2075 = vpack.c.b16 %v2060, %v2059
  %v2076 = vpack.c.b16 %v2062, %v2061
  %v2077 = vpack.c.b16 %v2064, %v2063
  %v2078 = vpack.c.b16 %v2066, %v2065
  %v2079 = vpack.c.b16 %v2068, %v2067
  %v2080 = vpack.c.b16 %v2070, %v2069
  %v2081 = vpack.c.b16 %v2072, %v2071
  %v2082 = vpack.c.b16 %v2074, %v2073
  %v2091 = vunpack.c.l.b16 %v2035
  %v2092 = vunpack.c.l.b16 %v2036
  %v2093 = vunpack.c.l.b16 %v2037
  %v2094 = vunpack.c.l.b16 %v2038
  %v2095 = vunpack.c.l.b16 %v2039
  %v2096 = vunpack.c.l.b16 %v2040
  %v2097 = vunpack.c.l.b16 %v2041
  %v2098 = vunpack.c.l.b16 %v2042
  %v2099 = vpack.c.b16 %v2092, %v2091
  %v2100 = vpack.c.b16 %v2094, %v2093
  %v2101 = vpack.c.b16 %v2096, %v2095
  %v2102 = vpack.c.b16 %v2098, %v2097
  %v2108 = vsel %vm46, %v2075, 0
  %v2111 = vsel %vm46, %v2076, 0
  %v2114 = vsel %vm46, %v2077, 0
  %v2117 = vsel %vm46, %v2078, 0
  %v2120 = vsel %vm46, %v2079, 0
  %v2123 = vsel %vm46, %v2080, 0
  %v2126 = vsel %vm46, %v2081, 0
  %v2129 = vsel %vm46, %v2082, 0
  %2131 = vmatpush.bf16.msra.mxu0 0
  %2132 = vmatpush.bf16.msra.mxu0 0
  %2133 = vmatpush.bf16.msra.mxu0 0
  %2134 = vmatpush.bf16.msra.mxu0 0
  %2135 = vmatpush.bf16.msra.mxu0 %v2102
  %2136 = vmatpush.bf16.msra.mxu0 %v2101
  %2137 = vmatpush.bf16.msra.mxu0 %v2100
  %2138 = vmatpush.bf16.msra.mxu0 %v2099
  %2139 = vmatmul.bf16.gmra.mxu0 %v2108
  %v2140 = vpop.f32.mrf.mxu0
  %v2141 = vadd.f32 0.0, %v2140
  %v2142 = vpop.f32.mrf.mxu0
  %v2143 = vadd.f32 0.0, %v2142
  %2144 = vmatmul.bf16.gmra.mxu0 %v2111
  %v2145 = vpop.f32.mrf.mxu0
  %v2146 = vadd.f32 0.0, %v2145
  %v2147 = vpop.f32.mrf.mxu0
  %v2148 = vadd.f32 0.0, %v2147
  %2149 = vmatmul.bf16.gmra.mxu0 %v2114
  %v2150 = vpop.f32.mrf.mxu0
  %v2151 = vadd.f32 0.0, %v2150
  %v2152 = vpop.f32.mrf.mxu0
  %v2153 = vadd.f32 0.0, %v2152
  %2154 = vmatmul.bf16.gmra.mxu0 %v2117
  %v2155 = vpop.f32.mrf.mxu0
  %v2156 = vadd.f32 0.0, %v2155
  %v2157 = vpop.f32.mrf.mxu0
  %v2158 = vadd.f32 0.0, %v2157
  %2159 = vmatmul.bf16.gmra.mxu0 %v2120
  %v2160 = vpop.f32.mrf.mxu0
  %v2161 = vadd.f32 0.0, %v2160
  %v2162 = vpop.f32.mrf.mxu0
  %v2163 = vadd.f32 0.0, %v2162
  %2164 = vmatmul.bf16.gmra.mxu0 %v2123
  %v2165 = vpop.f32.mrf.mxu0
  %v2166 = vadd.f32 0.0, %v2165
  %v2167 = vpop.f32.mrf.mxu0
  %v2168 = vadd.f32 0.0, %v2167
  %2169 = vmatmul.bf16.gmra.mxu0 %v2126
  %v2170 = vpop.f32.mrf.mxu0
  %v2171 = vadd.f32 0.0, %v2170
  %v2172 = vpop.f32.mrf.mxu0
  %v2173 = vadd.f32 0.0, %v2172
  %2174 = vmatmul.bf16.gmra.mxu0 %v2129
  %v2175 = vpop.f32.mrf.mxu0
  %v2176 = vadd.f32 0.0, %v2175
  %v2177 = vpop.f32.mrf.mxu0
  %v2178 = vadd.f32 0.0, %v2177
  %2179 = vdwg.mxu0
  %v2180 = vadd.f32 %v1987, %v2141
  %v2181 = vadd.f32 %v1988, %v2143
  %v2182 = vadd.f32 %v1989, %v2146
  %v2183 = vadd.f32 %v1990, %v2148
  %v2184 = vadd.f32 %v1991, %v2151
  %v2185 = vadd.f32 %v1992, %v2153
  %v2186 = vadd.f32 %v1993, %v2156
  %v2187 = vadd.f32 %v1994, %v2158
  %v2188 = vadd.f32 %v1995, %v2161
  %v2189 = vadd.f32 %v1996, %v2163
  %v2190 = vadd.f32 %v1997, %v2166
  %v2191 = vadd.f32 %v1998, %v2168
  %v2192 = vadd.f32 %v1999, %v2171
  %v2193 = vadd.f32 %v2000, %v2173
  %v2194 = vadd.f32 %v2001, %v2176
  %v2195 = vadd.f32 %v2002, %v2178
  %v2196 = vld [vmem:[%s843] sm:$0xff]
  %v2197 = vld [vmem:[%s843 + $0x10] sm:$0xff]
  %v2198 = vld [vmem:[%s843 + $0x20] sm:$0xff]
  %v2199 = vld [vmem:[%s843 + $0x30] sm:$0xff]
  %v2200 = vld [vmem:[%s843 + $0x40] sm:$0xff]
  %v2201 = vld [vmem:[%s843 + $0x50] sm:$0xff]
  %v2202 = vld [vmem:[%s843 + $0x60] sm:$0xff]
  %v2203 = vld [vmem:[%s843 + $0x70] sm:$0xff]
  %v2204 = vld [vmem:[%s843 + $0x90] sm:$0xff]
  %v2205 = vld [vmem:[%s843 + $0xa0] sm:$0xff]
  %v2206 = vld [vmem:[%s843 + $0xb0] sm:$0xff]
  %v2207 = vld [vmem:[%s843 + $0xc0] sm:$0xff]
  %v2208 = vld [vmem:[%s843 + $0xd0] sm:$0xff]
  %v2209 = vld [vmem:[%s843 + $0xe0] sm:$0xff]
  %v2210 = vld [vmem:[%s843 + $0xf0] sm:$0xff]
  %v2211 = vld [vmem:[%s843 + $0x100] sm:$0xff]
  %v2212 = vpack.c.bf16 %v2196, %v2196
  %v2213 = vpack.c.bf16 %v2197, %v2197
  %v2214 = vpack.c.bf16 %v2198, %v2198
  %v2215 = vpack.c.bf16 %v2199, %v2199
  %v2216 = vpack.c.bf16 %v2200, %v2200
  %v2217 = vpack.c.bf16 %v2201, %v2201
  %v2218 = vpack.c.bf16 %v2202, %v2202
  %v2219 = vpack.c.bf16 %v2203, %v2203
  %v2220 = vpack.c.bf16 %v2204, %v2204
  %v2221 = vpack.c.bf16 %v2205, %v2205
  %v2222 = vpack.c.bf16 %v2206, %v2206
  %v2223 = vpack.c.bf16 %v2207, %v2207
  %v2224 = vpack.c.bf16 %v2208, %v2208
  %v2225 = vpack.c.bf16 %v2209, %v2209
  %v2226 = vpack.c.bf16 %v2210, %v2210
  %v2227 = vpack.c.bf16 %v2211, %v2211
  %v2228 = vld [vmem:[%s3 + $0xe0] sm:$0xf]
  %v2229 = vld [vmem:[%s3 + $0xe4] sm:$0xf]
  %v2230 = vld [vmem:[%s3 + $0xe8] sm:$0xf]
  %v2231 = vld [vmem:[%s3 + $0xec] sm:$0xf]
  %v2232 = vld [vmem:[%s3 + $0xf0] sm:$0xf]
  %v2233 = vld [vmem:[%s3 + $0xf4] sm:$0xf]
  %v2234 = vld [vmem:[%s3 + $0xf8] sm:$0xf]
  %v2235 = vld [vmem:[%s3 + $0xfc] sm:$0xf]
  %v2252 = vunpack.c.l.b16 %v2212
  %v2253 = vunpack.c.l.b16 %v2213
  %v2254 = vunpack.c.l.b16 %v2214
  %v2255 = vunpack.c.l.b16 %v2215
  %v2256 = vunpack.c.l.b16 %v2216
  %v2257 = vunpack.c.l.b16 %v2217
  %v2258 = vunpack.c.l.b16 %v2218
  %v2259 = vunpack.c.l.b16 %v2219
  %v2260 = vunpack.c.l.b16 %v2220
  %v2261 = vunpack.c.l.b16 %v2221
  %v2262 = vunpack.c.l.b16 %v2222
  %v2263 = vunpack.c.l.b16 %v2223
  %v2264 = vunpack.c.l.b16 %v2224
  %v2265 = vunpack.c.l.b16 %v2225
  %v2266 = vunpack.c.l.b16 %v2226
  %v2267 = vunpack.c.l.b16 %v2227
  %v2268 = vpack.c.b16 %v2253, %v2252
  %v2269 = vpack.c.b16 %v2255, %v2254
  %v2270 = vpack.c.b16 %v2257, %v2256
  %v2271 = vpack.c.b16 %v2259, %v2258
  %v2272 = vpack.c.b16 %v2261, %v2260
  %v2273 = vpack.c.b16 %v2263, %v2262
  %v2274 = vpack.c.b16 %v2265, %v2264
  %v2275 = vpack.c.b16 %v2267, %v2266
  %v2284 = vunpack.c.l.b16 %v2228
  %v2285 = vunpack.c.l.b16 %v2229
  %v2286 = vunpack.c.l.b16 %v2230
  %v2287 = vunpack.c.l.b16 %v2231
  %v2288 = vunpack.c.l.b16 %v2232
  %v2289 = vunpack.c.l.b16 %v2233
  %v2290 = vunpack.c.l.b16 %v2234
  %v2291 = vunpack.c.l.b16 %v2235
  %v2292 = vpack.c.b16 %v2285, %v2284
  %v2293 = vpack.c.b16 %v2287, %v2286
  %v2294 = vpack.c.b16 %v2289, %v2288
  %v2295 = vpack.c.b16 %v2291, %v2290
  %v2301 = vsel %vm46, %v2268, 0
  %v2304 = vsel %vm46, %v2269, 0
  %v2307 = vsel %vm46, %v2270, 0
  %v2310 = vsel %vm46, %v2271, 0
  %v2313 = vsel %vm46, %v2272, 0
  %v2316 = vsel %vm46, %v2273, 0
  %v2319 = vsel %vm46, %v2274, 0
  %v2322 = vsel %vm46, %v2275, 0
  %2324 = vmatpush.bf16.msra.mxu0 0
  %2325 = vmatpush.bf16.msra.mxu0 0
  %2326 = vmatpush.bf16.msra.mxu0 0
  %2327 = vmatpush.bf16.msra.mxu0 0
  %2328 = vmatpush.bf16.msra.mxu0 %v2295
  %2329 = vmatpush.bf16.msra.mxu0 %v2294
  %2330 = vmatpush.bf16.msra.mxu0 %v2293
  %2331 = vmatpush.bf16.msra.mxu0 %v2292
  %2332 = vmatmul.bf16.gmra.mxu0 %v2301
  %v2333 = vpop.f32.mrf.mxu0
  %v2334 = vadd.f32 0.0, %v2333
  %v2335 = vpop.f32.mrf.mxu0
  %v2336 = vadd.f32 0.0, %v2335
  %2337 = vmatmul.bf16.gmra.mxu0 %v2304
  %v2338 = vpop.f32.mrf.mxu0
  %v2339 = vadd.f32 0.0, %v2338
  %v2340 = vpop.f32.mrf.mxu0
  %v2341 = vadd.f32 0.0, %v2340
  %2342 = vmatmul.bf16.gmra.mxu0 %v2307
  %v2343 = vpop.f32.mrf.mxu0
  %v2344 = vadd.f32 0.0, %v2343
  %v2345 = vpop.f32.mrf.mxu0
  %v2346 = vadd.f32 0.0, %v2345
  %2347 = vmatmul.bf16.gmra.mxu0 %v2310
  %v2348 = vpop.f32.mrf.mxu0
  %v2349 = vadd.f32 0.0, %v2348
  %v2350 = vpop.f32.mrf.mxu0
  %v2351 = vadd.f32 0.0, %v2350
  %2352 = vmatmul.bf16.gmra.mxu0 %v2313
  %v2353 = vpop.f32.mrf.mxu0
  %v2354 = vadd.f32 0.0, %v2353
  %v2355 = vpop.f32.mrf.mxu0
  %v2356 = vadd.f32 0.0, %v2355
  %2357 = vmatmul.bf16.gmra.mxu0 %v2316
  %v2358 = vpop.f32.mrf.mxu0
  %v2359 = vadd.f32 0.0, %v2358
  %v2360 = vpop.f32.mrf.mxu0
  %v2361 = vadd.f32 0.0, %v2360
  %2362 = vmatmul.bf16.gmra.mxu0 %v2319
  %v2363 = vpop.f32.mrf.mxu0
  %v2364 = vadd.f32 0.0, %v2363
  %v2365 = vpop.f32.mrf.mxu0
  %v2366 = vadd.f32 0.0, %v2365
  %2367 = vmatmul.bf16.gmra.mxu0 %v2322
  %v2368 = vpop.f32.mrf.mxu0
  %v2369 = vadd.f32 0.0, %v2368
  %v2370 = vpop.f32.mrf.mxu0
  %v2371 = vadd.f32 0.0, %v2370
  %2372 = vdwg.mxu0
  %v2373 = vadd.f32 %v2180, %v2334
  %v2374 = vadd.f32 %v2181, %v2336
  %v2375 = vadd.f32 %v2182, %v2339
  %v2376 = vadd.f32 %v2183, %v2341
  %v2377 = vadd.f32 %v2184, %v2344
  %v2378 = vadd.f32 %v2185, %v2346
  %v2379 = vadd.f32 %v2186, %v2349
  %v2380 = vadd.f32 %v2187, %v2351
  %v2381 = vadd.f32 %v2188, %v2354
  %v2382 = vadd.f32 %v2189, %v2356
  %v2383 = vadd.f32 %v2190, %v2359
  %v2384 = vadd.f32 %v2191, %v2361
  %v2385 = vadd.f32 %v2192, %v2364
  %v2386 = vadd.f32 %v2193, %v2366
  %v2387 = vadd.f32 %v2194, %v2369
  %v2388 = vadd.f32 %v2195, %v2371
  %v2389 = vld [vmem:[%s860 + $0x8] sm:$0xff]
  %v2390 = vld [vmem:[%s860 + $0x18] sm:$0xff]
  %v2391 = vld [vmem:[%s860 + $0x28] sm:$0xff]
  %v2392 = vld [vmem:[%s860 + $0x38] sm:$0xff]
  %v2393 = vld [vmem:[%s860 + $0x48] sm:$0xff]
  %v2394 = vld [vmem:[%s860 + $0x58] sm:$0xff]
  %v2395 = vld [vmem:[%s860 + $0x68] sm:$0xff]
  %v2396 = vld [vmem:[%s860 + $0x78] sm:$0xff]
  %v2397 = vld [vmem:[%s860 + $0x98] sm:$0xff]
  %v2398 = vld [vmem:[%s860 + $0xa8] sm:$0xff]
  %v2399 = vld [vmem:[%s860 + $0xb8] sm:$0xff]
  %v2400 = vld [vmem:[%s860 + $0xc8] sm:$0xff]
  %v2401 = vld [vmem:[%s860 + $0xd8] sm:$0xff]
  %v2402 = vld [vmem:[%s860 + $0xe8] sm:$0xff]
  %v2403 = vld [vmem:[%s860 + $0xf8] sm:$0xff]
  %v2404 = vld [vmem:[%s860 + $0x108] sm:$0xff]
  %v2405 = vpack.c.bf16 %v2389, %v2389
  %v2406 = vpack.c.bf16 %v2390, %v2390
  %v2407 = vpack.c.bf16 %v2391, %v2391
  %v2408 = vpack.c.bf16 %v2392, %v2392
  %v2409 = vpack.c.bf16 %v2393, %v2393
  %v2410 = vpack.c.bf16 %v2394, %v2394
  %v2411 = vpack.c.bf16 %v2395, %v2395
  %v2412 = vpack.c.bf16 %v2396, %v2396
  %v2413 = vpack.c.bf16 %v2397, %v2397
  %v2414 = vpack.c.bf16 %v2398, %v2398
  %v2415 = vpack.c.bf16 %v2399, %v2399
  %v2416 = vpack.c.bf16 %v2400, %v2400
  %v2417 = vpack.c.bf16 %v2401, %v2401
  %v2418 = vpack.c.bf16 %v2402, %v2402
  %v2419 = vpack.c.bf16 %v2403, %v2403
  %v2420 = vpack.c.bf16 %v2404, %v2404
  %v2421 = vld [vmem:[%s3 + $0x100] sm:$0xf]
  %v2422 = vld [vmem:[%s3 + $0x104] sm:$0xf]
  %v2423 = vld [vmem:[%s3 + $0x108] sm:$0xf]
  %v2424 = vld [vmem:[%s3 + $0x10c] sm:$0xf]
  %v2425 = vld [vmem:[%s3 + $0x110] sm:$0xf]
  %v2426 = vld [vmem:[%s3 + $0x114] sm:$0xf]
  %v2427 = vld [vmem:[%s3 + $0x118] sm:$0xf]
  %v2428 = vld [vmem:[%s3 + $0x11c] sm:$0xf]
  %v2445 = vunpack.c.l.b16 %v2405
  %v2446 = vunpack.c.l.b16 %v2406
  %v2447 = vunpack.c.l.b16 %v2407
  %v2448 = vunpack.c.l.b16 %v2408
  %v2449 = vunpack.c.l.b16 %v2409
  %v2450 = vunpack.c.l.b16 %v2410
  %v2451 = vunpack.c.l.b16 %v2411
  %v2452 = vunpack.c.l.b16 %v2412
  %v2453 = vunpack.c.l.b16 %v2413
  %v2454 = vunpack.c.l.b16 %v2414
  %v2455 = vunpack.c.l.b16 %v2415
  %v2456 = vunpack.c.l.b16 %v2416
  %v2457 = vunpack.c.l.b16 %v2417
  %v2458 = vunpack.c.l.b16 %v2418
  %v2459 = vunpack.c.l.b16 %v2419
  %v2460 = vunpack.c.l.b16 %v2420
  %v2461 = vpack.c.b16 %v2446, %v2445
  %v2462 = vpack.c.b16 %v2448, %v2447
  %v2463 = vpack.c.b16 %v2450, %v2449
  %v2464 = vpack.c.b16 %v2452, %v2451
  %v2465 = vpack.c.b16 %v2454, %v2453
  %v2466 = vpack.c.b16 %v2456, %v2455
  %v2467 = vpack.c.b16 %v2458, %v2457
  %v2468 = vpack.c.b16 %v2460, %v2459
  %v2477 = vunpack.c.l.b16 %v2421
  %v2478 = vunpack.c.l.b16 %v2422
  %v2479 = vunpack.c.l.b16 %v2423
  %v2480 = vunpack.c.l.b16 %v2424
  %v2481 = vunpack.c.l.b16 %v2425
  %v2482 = vunpack.c.l.b16 %v2426
  %v2483 = vunpack.c.l.b16 %v2427
  %v2484 = vunpack.c.l.b16 %v2428
  %v2485 = vpack.c.b16 %v2478, %v2477
  %v2486 = vpack.c.b16 %v2480, %v2479
  %v2487 = vpack.c.b16 %v2482, %v2481
  %v2488 = vpack.c.b16 %v2484, %v2483
  %v2494 = vsel %vm46, %v2461, 0
  %v2497 = vsel %vm46, %v2462, 0
  %v2500 = vsel %vm46, %v2463, 0
  %v2503 = vsel %vm46, %v2464, 0
  %v2506 = vsel %vm46, %v2465, 0
  %v2509 = vsel %vm46, %v2466, 0
  %v2512 = vsel %vm46, %v2467, 0
  %v2515 = vsel %vm46, %v2468, 0
  %2517 = vmatpush.bf16.msra.mxu0 0
  %2518 = vmatpush.bf16.msra.mxu0 0
  %2519 = vmatpush.bf16.msra.mxu0 0
  %2520 = vmatpush.bf16.msra.mxu0 0
  %2521 = vmatpush.bf16.msra.mxu0 %v2488
  %2522 = vmatpush.bf16.msra.mxu0 %v2487
  %2523 = vmatpush.bf16.msra.mxu0 %v2486
  %2524 = vmatpush.bf16.msra.mxu0 %v2485
  %2525 = vmatmul.bf16.gmra.mxu0 %v2494
  %v2526 = vpop.f32.mrf.mxu0
  %v2527 = vadd.f32 0.0, %v2526
  %v2528 = vpop.f32.mrf.mxu0
  %v2529 = vadd.f32 0.0, %v2528
  %2530 = vmatmul.bf16.gmra.mxu0 %v2497
  %v2531 = vpop.f32.mrf.mxu0
  %v2532 = vadd.f32 0.0, %v2531
  %v2533 = vpop.f32.mrf.mxu0
  %v2534 = vadd.f32 0.0, %v2533
  %2535 = vmatmul.bf16.gmra.mxu0 %v2500
  %v2536 = vpop.f32.mrf.mxu0
  %v2537 = vadd.f32 0.0, %v2536
  %v2538 = vpop.f32.mrf.mxu0
  %v2539 = vadd.f32 0.0, %v2538
  %2540 = vmatmul.bf16.gmra.mxu0 %v2503
  %v2541 = vpop.f32.mrf.mxu0
  %v2542 = vadd.f32 0.0, %v2541
  %v2543 = vpop.f32.mrf.mxu0
  %v2544 = vadd.f32 0.0, %v2543
  %2545 = vmatmul.bf16.gmra.mxu0 %v2506
  %v2546 = vpop.f32.mrf.mxu0
  %v2547 = vadd.f32 0.0, %v2546
  %v2548 = vpop.f32.mrf.mxu0
  %v2549 = vadd.f32 0.0, %v2548
  %2550 = vmatmul.bf16.gmra.mxu0 %v2509
  %v2551 = vpop.f32.mrf.mxu0
  %v2552 = vadd.f32 0.0, %v2551
  %v2553 = vpop.f32.mrf.mxu0
  %v2554 = vadd.f32 0.0, %v2553
  %2555 = vmatmul.bf16.gmra.mxu0 %v2512
  %v2556 = vpop.f32.mrf.mxu0
  %v2557 = vadd.f32 0.0, %v2556
  %v2558 = vpop.f32.mrf.mxu0
  %v2559 = vadd.f32 0.0, %v2558
  %2560 = vmatmul.bf16.gmra.mxu0 %v2515
  %v2561 = vpop.f32.mrf.mxu0
  %v2562 = vadd.f32 0.0, %v2561
  %v2563 = vpop.f32.mrf.mxu0
  %v2564 = vadd.f32 0.0, %v2563
  %2565 = vdwg.mxu0
  %v2566 = vadd.f32 %v2373, %v2527
  %v2567 = vadd.f32 %v2374, %v2529
  %v2568 = vadd.f32 %v2375, %v2532
  %v2569 = vadd.f32 %v2376, %v2534
  %v2570 = vadd.f32 %v2377, %v2537
  %v2571 = vadd.f32 %v2378, %v2539
  %v2572 = vadd.f32 %v2379, %v2542
  %v2573 = vadd.f32 %v2380, %v2544
  %v2574 = vadd.f32 %v2381, %v2547
  %v2575 = vadd.f32 %v2382, %v2549
  %v2576 = vadd.f32 %v2383, %v2552
  %v2577 = vadd.f32 %v2384, %v2554
  %v2578 = vadd.f32 %v2385, %v2557
  %v2579 = vadd.f32 %v2386, %v2559
  %v2580 = vadd.f32 %v2387, %v2562
  %v2581 = vadd.f32 %v2388, %v2564
  %v2582 = vld [vmem:[%s4] sm:$0x1]
  %v2584 = vperm.slane %v2582, 0
  %v2586 = vadd.f32 %v2566, %v2584
  %v2587 = vadd.f32 %v2567, %v2584
  %v2588 = vadd.f32 %v2568, %v2584
  %v2589 = vadd.f32 %v2569, %v2584
  %v2590 = vadd.f32 %v2570, %v2584
  %v2591 = vadd.f32 %v2571, %v2584
  %v2592 = vadd.f32 %v2572, %v2584
  %v2593 = vadd.f32 %v2573, %v2584
  %v2594 = vadd.f32 %v2574, %v2584
  %v2595 = vadd.f32 %v2575, %v2584
  %v2596 = vadd.f32 %v2576, %v2584
  %v2597 = vadd.f32 %v2577, %v2584
  %v2598 = vadd.f32 %v2578, %v2584
  %v2599 = vadd.f32 %v2579, %v2584
  %v2600 = vadd.f32 %v2580, %v2584
  %v2601 = vadd.f32 %v2581, %v2584
  %vm2602 = vcmp.ge.f32.partialorder %v2586, 0.0
  %vm2603 = vcmp.ge.f32.partialorder %v2587, 0.0
  %vm2604 = vcmp.ge.f32.partialorder %v2588, 0.0
  %vm2605 = vcmp.ge.f32.partialorder %v2589, 0.0
  %vm2606 = vcmp.ge.f32.partialorder %v2590, 0.0
  %vm2607 = vcmp.ge.f32.partialorder %v2591, 0.0
  %vm2608 = vcmp.ge.f32.partialorder %v2592, 0.0
  %vm2609 = vcmp.ge.f32.partialorder %v2593, 0.0
  %vm2610 = vcmp.ge.f32.partialorder %v2594, 0.0
  %vm2611 = vcmp.ge.f32.partialorder %v2595, 0.0
  %vm2612 = vcmp.ge.f32.partialorder %v2596, 0.0
  %vm2613 = vcmp.ge.f32.partialorder %v2597, 0.0
  %vm2614 = vcmp.ge.f32.partialorder %v2598, 0.0
  %vm2615 = vcmp.ge.f32.partialorder %v2599, 0.0
  %vm2616 = vcmp.ge.f32.partialorder %v2600, 0.0
  %vm2617 = vcmp.ge.f32.partialorder %v2601, 0.0
  %v2618 = vmul.f32 %v2586, 0.01
  %v2619 = vmul.f32 %v2587, 0.01
  %v2620 = vmul.f32 %v2588, 0.01
  %v2621 = vmul.f32 %v2589, 0.01
  %v2622 = vmul.f32 %v2590, 0.01
  %v2623 = vmul.f32 %v2591, 0.01
  %v2624 = vmul.f32 %v2592, 0.01
  %v2625 = vmul.f32 %v2593, 0.01
  %v2626 = vmul.f32 %v2594, 0.01
  %v2627 = vmul.f32 %v2595, 0.01
  %v2628 = vmul.f32 %v2596, 0.01
  %v2629 = vmul.f32 %v2597, 0.01
  %v2630 = vmul.f32 %v2598, 0.01
  %v2631 = vmul.f32 %v2599, 0.01
  %v2632 = vmul.f32 %v2600, 0.01
  %v2633 = vmul.f32 %v2601, 0.01
  %v2634 = vsel %vm2602, %v2586, %v2618
  %v2635 = vsel %vm2603, %v2587, %v2619
  %v2636 = vsel %vm2604, %v2588, %v2620
  %v2637 = vsel %vm2605, %v2589, %v2621
  %v2638 = vsel %vm2606, %v2590, %v2622
  %v2639 = vsel %vm2607, %v2591, %v2623
  %v2640 = vsel %vm2608, %v2592, %v2624
  %v2641 = vsel %vm2609, %v2593, %v2625
  %v2642 = vsel %vm2610, %v2594, %v2626
  %v2643 = vsel %vm2611, %v2595, %v2627
  %v2644 = vsel %vm2612, %v2596, %v2628
  %v2645 = vsel %vm2613, %v2597, %v2629
  %v2646 = vsel %vm2614, %v2598, %v2630
  %v2647 = vsel %vm2615, %v2599, %v2631
  %v2648 = vsel %vm2616, %v2600, %v2632
  %v2649 = vsel %vm2617, %v2601, %v2633
  %v2650 = vld [vmem:[%s5] sm:$0x1]
  %v2652 = vperm.slane %v2650, 0
  %v2654 = vmul.f32 %v2634, %v2652
  %v2655 = vmul.f32 %v2635, %v2652
  %v2656 = vmul.f32 %v2636, %v2652
  %v2657 = vmul.f32 %v2637, %v2652
  %v2658 = vmul.f32 %v2638, %v2652
  %v2659 = vmul.f32 %v2639, %v2652
  %v2660 = vmul.f32 %v2640, %v2652
  %v2661 = vmul.f32 %v2641, %v2652
  %v2662 = vmul.f32 %v2642, %v2652
  %v2663 = vmul.f32 %v2643, %v2652
  %v2664 = vmul.f32 %v2644, %v2652
  %v2665 = vmul.f32 %v2645, %v2652
  %v2666 = vmul.f32 %v2646, %v2652
  %v2667 = vmul.f32 %v2647, %v2652
  %v2668 = vmul.f32 %v2648, %v2652
  %v2669 = vmul.f32 %v2649, %v2652
  %v2670 = vld [vmem:[%s6] sm:$0x1]
  %v2672 = vperm.slane %v2670, 0
  %v2674 = vadd.f32 %v2654, %v2672
  %v2675 = vadd.f32 %v2655, %v2672
  %v2676 = vadd.f32 %v2656, %v2672
  %v2677 = vadd.f32 %v2657, %v2672
  %v2678 = vadd.f32 %v2658, %v2672
  %v2679 = vadd.f32 %v2659, %v2672
  %v2680 = vadd.f32 %v2660, %v2672
  %v2681 = vadd.f32 %v2661, %v2672
  %v2682 = vadd.f32 %v2662, %v2672
  %v2683 = vadd.f32 %v2663, %v2672
  %v2684 = vadd.f32 %v2664, %v2672
  %v2685 = vadd.f32 %v2665, %v2672
  %v2686 = vadd.f32 %v2666, %v2672
  %v2687 = vadd.f32 %v2667, %v2672
  %v2688 = vadd.f32 %v2668, %v2672
  %v2689 = vadd.f32 %v2669, %v2672
  %v2690 = vpack.c.bf16 %v2674, %v2674
  %v2691 = vpack.c.bf16 %v2675, %v2675
  %v2692 = vpack.c.bf16 %v2676, %v2676
  %v2693 = vpack.c.bf16 %v2677, %v2677
  %v2694 = vpack.c.bf16 %v2678, %v2678
  %v2695 = vpack.c.bf16 %v2679, %v2679
  %v2696 = vpack.c.bf16 %v2680, %v2680
  %v2697 = vpack.c.bf16 %v2681, %v2681
  %v2698 = vpack.c.bf16 %v2682, %v2682
  %v2699 = vpack.c.bf16 %v2683, %v2683
  %v2700 = vpack.c.bf16 %v2684, %v2684
  %v2701 = vpack.c.bf16 %v2685, %v2685
  %v2702 = vpack.c.bf16 %v2686, %v2686
  %v2703 = vpack.c.bf16 %v2687, %v2687
  %v2704 = vpack.c.bf16 %v2688, %v2688
  %v2705 = vpack.c.bf16 %v2689, %v2689
  %2706 = vst [vmem:[#allocation3] sm:$0xf] %v2690
  %2707 = vst [vmem:[#allocation3 + $0xc] sm:$0xf] %v2691
  %2708 = vst [vmem:[#allocation3 + $0x18] sm:$0xf] %v2692
  %2709 = vst [vmem:[#allocation3 + $0x24] sm:$0xf] %v2693
  %2710 = vst [vmem:[#allocation3 + $0x30] sm:$0xf] %v2694
  %2711 = vst [vmem:[#allocation3 + $0x3c] sm:$0xf] %v2695
  %2712 = vst [vmem:[#allocation3 + $0x48] sm:$0xf] %v2696
  %2713 = vst [vmem:[#allocation3 + $0x54] sm:$0xf] %v2697
  %2714 = vst [vmem:[#allocation3 + $0x78] sm:$0xf] %v2698
  %2715 = vst [vmem:[#allocation3 + $0x84] sm:$0xf] %v2699
  %2716 = vst [vmem:[#allocation3 + $0x90] sm:$0xf] %v2700
  %2717 = vst [vmem:[#allocation3 + $0x9c] sm:$0xf] %v2701
  %2718 = vst [vmem:[#allocation3 + $0xa8] sm:$0xf] %v2702
  %2719 = vst [vmem:[#allocation3 + $0xb4] sm:$0xf] %v2703
  %2720 = vst [vmem:[#allocation3 + $0xc0] sm:$0xf] %v2704
  %2721 = vst [vmem:[#allocation3 + $0xcc] sm:$0xf] %v2705
  %v2723 = vshrl.u32 %v2690, 16
  %v2725 = vrot.slane %v2723, 4
  %v2726 = vshll.u32 %v2690, 16
  %v2728 = vrot.slane %v2726, 5
  %v2729 = vor.u32 %v2725, %v2728
  %v2730 = vrot.slane %v2729, 4
  %v2732 = vshrl.u32 %v2691, 16
  %v2734 = vrot.slane %v2732, 4
  %v2735 = vshll.u32 %v2691, 16
  %v2737 = vrot.slane %v2735, 5
  %v2738 = vor.u32 %v2734, %v2737
  %v2739 = vrot.slane %v2738, 4
  %v2741 = vshrl.u32 %v2692, 16
  %v2743 = vrot.slane %v2741, 4
  %v2744 = vshll.u32 %v2692, 16
  %v2746 = vrot.slane %v2744, 5
  %v2747 = vor.u32 %v2743, %v2746
  %v2748 = vrot.slane %v2747, 4
  %v2750 = vshrl.u32 %v2693, 16
  %v2752 = vrot.slane %v2750, 4
  %v2753 = vshll.u32 %v2693, 16
  %v2755 = vrot.slane %v2753, 5
  %v2756 = vor.u32 %v2752, %v2755
  %v2757 = vrot.slane %v2756, 4
  %v2759 = vshrl.u32 %v2694, 16
  %v2761 = vrot.slane %v2759, 4
  %v2762 = vshll.u32 %v2694, 16
  %v2764 = vrot.slane %v2762, 5
  %v2765 = vor.u32 %v2761, %v2764
  %v2766 = vrot.slane %v2765, 4
  %v2768 = vshrl.u32 %v2695, 16
  %v2770 = vrot.slane %v2768, 4
  %v2771 = vshll.u32 %v2695, 16
  %v2773 = vrot.slane %v2771, 5
  %v2774 = vor.u32 %v2770, %v2773
  %v2775 = vrot.slane %v2774, 4
  %v2777 = vshrl.u32 %v2696, 16
  %v2779 = vrot.slane %v2777, 4
  %v2780 = vshll.u32 %v2696, 16
  %v2782 = vrot.slane %v2780, 5
  %v2783 = vor.u32 %v2779, %v2782
  %v2784 = vrot.slane %v2783, 4
  %v2786 = vshrl.u32 %v2697, 16
  %v2788 = vrot.slane %v2786, 4
  %v2789 = vshll.u32 %v2697, 16
  %v2791 = vrot.slane %v2789, 5
  %v2792 = vor.u32 %v2788, %v2791
  %v2793 = vrot.slane %v2792, 4
  %v2795 = vshrl.u32 %v2698, 16
  %v2797 = vrot.slane %v2795, 4
  %v2798 = vshll.u32 %v2698, 16
  %v2800 = vrot.slane %v2798, 5
  %v2801 = vor.u32 %v2797, %v2800
  %v2802 = vrot.slane %v2801, 4
  %v2804 = vshrl.u32 %v2699, 16
  %v2806 = vrot.slane %v2804, 4
  %v2807 = vshll.u32 %v2699, 16
  %v2809 = vrot.slane %v2807, 5
  %v2810 = vor.u32 %v2806, %v2809
  %v2811 = vrot.slane %v2810, 4
  %v2813 = vshrl.u32 %v2700, 16
  %v2815 = vrot.slane %v2813, 4
  %v2816 = vshll.u32 %v2700, 16
  %v2818 = vrot.slane %v2816, 5
  %v2819 = vor.u32 %v2815, %v2818
  %v2820 = vrot.slane %v2819, 4
  %v2822 = vshrl.u32 %v2701, 16
  %v2824 = vrot.slane %v2822, 4
  %v2825 = vshll.u32 %v2701, 16
  %v2827 = vrot.slane %v2825, 5
  %v2828 = vor.u32 %v2824, %v2827
  %v2829 = vrot.slane %v2828, 4
  %v2831 = vshrl.u32 %v2702, 16
  %v2833 = vrot.slane %v2831, 4
  %v2834 = vshll.u32 %v2702, 16
  %v2836 = vrot.slane %v2834, 5
  %v2837 = vor.u32 %v2833, %v2836
  %v2838 = vrot.slane %v2837, 4
  %v2840 = vshrl.u32 %v2703, 16
  %v2842 = vrot.slane %v2840, 4
  %v2843 = vshll.u32 %v2703, 16
  %v2845 = vrot.slane %v2843, 5
  %v2846 = vor.u32 %v2842, %v2845
  %v2847 = vrot.slane %v2846, 4
  %v2849 = vshrl.u32 %v2704, 16
  %v2851 = vrot.slane %v2849, 4
  %v2852 = vshll.u32 %v2704, 16
  %v2854 = vrot.slane %v2852, 5
  %v2855 = vor.u32 %v2851, %v2854
  %v2856 = vrot.slane %v2855, 4
  %v2858 = vshrl.u32 %v2705, 16
  %v2860 = vrot.slane %v2858, 4
  %v2861 = vshll.u32 %v2705, 16
  %v2863 = vrot.slane %v2861, 5
  %v2864 = vor.u32 %v2860, %v2863
  %v2865 = vrot.slane %v2864, 4
  %vm2882 = vcmask 1043456
  %vm2883 = vsmask.f32 3328
  %vm2884 = vmand %vm2882, %vm2883
  %v2885 = vld [vmem:[#allocation3 + $0x4] sm:$0xf]
  %v2886 = vsel %vm2884, %v2730, %v2885
  %2887 = vst [vmem:[#allocation3 + $0x4] sm:$0xf] %v2886
  %v2888 = vld [vmem:[#allocation3 + $0x10] sm:$0xf]
  %v2889 = vsel %vm2884, %v2739, %v2888
  %2890 = vst [vmem:[#allocation3 + $0x10] sm:$0xf] %v2889
  %v2891 = vld [vmem:[#allocation3 + $0x1c] sm:$0xf]
  %v2892 = vsel %vm2884, %v2748, %v2891
  %2893 = vst [vmem:[#allocation3 + $0x1c] sm:$0xf] %v2892
  %v2894 = vld [vmem:[#allocation3 + $0x28] sm:$0xf]
  %v2895 = vsel %vm2884, %v2757, %v2894
  %2896 = vst [vmem:[#allocation3 + $0x28] sm:$0xf] %v2895
  %v2897 = vld [vmem:[#allocation3 + $0x34] sm:$0xf]
  %v2898 = vsel %vm2884, %v2766, %v2897
  %2899 = vst [vmem:[#allocation3 + $0x34] sm:$0xf] %v2898
  %v2900 = vld [vmem:[#allocation3 + $0x40] sm:$0xf]
  %v2901 = vsel %vm2884, %v2775, %v2900
  %2902 = vst [vmem:[#allocation3 + $0x40] sm:$0xf] %v2901
  %v2903 = vld [vmem:[#allocation3 + $0x4c] sm:$0xf]
  %v2904 = vsel %vm2884, %v2784, %v2903
  %2905 = vst [vmem:[#allocation3 + $0x4c] sm:$0xf] %v2904
  %v2906 = vld [vmem:[#allocation3 + $0x58] sm:$0xf]
  %v2907 = vsel %vm2884, %v2793, %v2906
  %2908 = vst [vmem:[#allocation3 + $0x58] sm:$0xf] %v2907
  %v2909 = vld [vmem:[#allocation3 + $0x7c] sm:$0xf]
  %v2910 = vsel %vm2884, %v2802, %v2909
  %2911 = vst [vmem:[#allocation3 + $0x7c] sm:$0xf] %v2910
  %v2912 = vld [vmem:[#allocation3 + $0x88] sm:$0xf]
  %v2913 = vsel %vm2884, %v2811, %v2912
  %2914 = vst [vmem:[#allocation3 + $0x88] sm:$0xf] %v2913
  %v2915 = vld [vmem:[#allocation3 + $0x94] sm:$0xf]
  %v2916 = vsel %vm2884, %v2820, %v2915
  %2917 = vst [vmem:[#allocation3 + $0x94] sm:$0xf] %v2916
  %v2918 = vld [vmem:[#allocation3 + $0xa0] sm:$0xf]
  %v2919 = vsel %vm2884, %v2829, %v2918
  %2920 = vst [vmem:[#allocation3 + $0xa0] sm:$0xf] %v2919
  %v2921 = vld [vmem:[#allocation3 + $0xac] sm:$0xf]
  %v2922 = vsel %vm2884, %v2838, %v2921
  %2923 = vst [vmem:[#allocation3 + $0xac] sm:$0xf] %v2922
  %v2924 = vld [vmem:[#allocation3 + $0xb8] sm:$0xf]
  %v2925 = vsel %vm2884, %v2847, %v2924
  %2926 = vst [vmem:[#allocation3 + $0xb8] sm:$0xf] %v2925
  %v2927 = vld [vmem:[#allocation3 + $0xc4] sm:$0xf]
  %v2928 = vsel %vm2884, %v2856, %v2927
  %2929 = vst [vmem:[#allocation3 + $0xc4] sm:$0xf] %v2928
  %v2930 = vld [vmem:[#allocation3 + $0xd0] sm:$0xf]
  %v2931 = vsel %vm2884, %v2865, %v2930
  %2932 = vst [vmem:[#allocation3 + $0xd0] sm:$0xf] %v2931
  %v2949 = vrot.slane %v2690, 5
  %v2950 = vrot.slane %v2949, 4
  %v2951 = vrot.slane %v2691, 5
  %v2952 = vrot.slane %v2951, 4
  %v2953 = vrot.slane %v2692, 5
  %v2954 = vrot.slane %v2953, 4
  %v2955 = vrot.slane %v2693, 5
  %v2956 = vrot.slane %v2955, 4
  %v2957 = vrot.slane %v2694, 5
  %v2958 = vrot.slane %v2957, 4
  %v2959 = vrot.slane %v2695, 5
  %v2960 = vrot.slane %v2959, 4
  %v2961 = vrot.slane %v2696, 5
  %v2962 = vrot.slane %v2961, 4
  %v2963 = vrot.slane %v2697, 5
  %v2964 = vrot.slane %v2963, 4
  %v2965 = vrot.slane %v2698, 5
  %v2966 = vrot.slane %v2965, 4
  %v2967 = vrot.slane %v2699, 5
  %v2968 = vrot.slane %v2967, 4
  %v2969 = vrot.slane %v2700, 5
  %v2970 = vrot.slane %v2969, 4
  %v2971 = vrot.slane %v2701, 5
  %v2972 = vrot.slane %v2971, 4
  %v2973 = vrot.slane %v2702, 5
  %v2974 = vrot.slane %v2973, 4
  %v2975 = vrot.slane %v2703, 5
  %v2976 = vrot.slane %v2975, 4
  %v2977 = vrot.slane %v2704, 5
  %v2978 = vrot.slane %v2977, 4
  %v2979 = vrot.slane %v2705, 5
  %v2980 = vrot.slane %v2979, 4
  %2997 = vst [vmem:[#allocation3 + $0x8] sm:$0x7] %v2950
  %2998 = vst [vmem:[#allocation3 + $0x14] sm:$0x7] %v2952
  %2999 = vst [vmem:[#allocation3 + $0x20] sm:$0x7] %v2954
  %3000 = vst [vmem:[#allocation3 + $0x2c] sm:$0x7] %v2956
  %3001 = vst [vmem:[#allocation3 + $0x38] sm:$0x7] %v2958
  %3002 = vst [vmem:[#allocation3 + $0x44] sm:$0x7] %v2960
  %3003 = vst [vmem:[#allocation3 + $0x50] sm:$0x7] %v2962
  %3004 = vst [vmem:[#allocation3 + $0x5c] sm:$0x7] %v2964
  %3005 = vst [vmem:[#allocation3 + $0x80] sm:$0x7] %v2966
  %3006 = vst [vmem:[#allocation3 + $0x8c] sm:$0x7] %v2968
  %3007 = vst [vmem:[#allocation3 + $0x98] sm:$0x7] %v2970
  %3008 = vst [vmem:[#allocation3 + $0xa4] sm:$0x7] %v2972
  %3009 = vst [vmem:[#allocation3 + $0xb0] sm:$0x7] %v2974
  %3010 = vst [vmem:[#allocation3 + $0xbc] sm:$0x7] %v2976
  %3011 = vst [vmem:[#allocation3 + $0xc8] sm:$0x7] %v2978
  %3012 = vst [vmem:[#allocation3 + $0xd4] sm:$0x7] %v2980
  %v3013 = vld [vmem:[#allocation3] sm:$0xff]
  %v3014 = vld [vmem:[#allocation3 + $0x8] sm:$0xf]
  %v3015 = vld [vmem:[#allocation3 + $0xc] sm:$0xff]
  %v3016 = vld [vmem:[#allocation3 + $0x14] sm:$0xf]
  %v3017 = vld [vmem:[#allocation3 + $0x18] sm:$0xff]
  %v3018 = vld [vmem:[#allocation3 + $0x20] sm:$0xf]
  %v3019 = vld [vmem:[#allocation3 + $0x24] sm:$0xff]
  %v3020 = vld [vmem:[#allocation3 + $0x2c] sm:$0xf]
  %v3021 = vld [vmem:[#allocation3 + $0x30] sm:$0xff]
  %v3022 = vld [vmem:[#allocation3 + $0x38] sm:$0xf]
  %v3023 = vld [vmem:[#allocation3 + $0x3c] sm:$0xff]
  %v3024 = vld [vmem:[#allocation3 + $0x44] sm:$0xf]
  %v3025 = vld [vmem:[#allocation3 + $0x48] sm:$0xff]
  %v3026 = vld [vmem:[#allocation3 + $0x50] sm:$0xf]
  %v3027 = vld [vmem:[#allocation3 + $0x54] sm:$0xff]
  %v3028 = vld [vmem:[#allocation3 + $0x5c] sm:$0xf]
  %v3029 = vld [vmem:[#allocation3 + $0x78] sm:$0xff]
  %v3030 = vld [vmem:[#allocation3 + $0x80] sm:$0xf]
  %v3031 = vld [vmem:[#allocation3 + $0x84] sm:$0xff]
  %v3032 = vld [vmem:[#allocation3 + $0x8c] sm:$0xf]
  %v3033 = vld [vmem:[#allocation3 + $0x90] sm:$0xff]
  %v3034 = vld [vmem:[#allocation3 + $0x98] sm:$0xf]
  %v3035 = vld [vmem:[#allocation3 + $0x9c] sm:$0xff]
  %v3036 = vld [vmem:[#allocation3 + $0xa4] sm:$0xf]
  %v3037 = vld [vmem:[#allocation3 + $0xa8] sm:$0xff]
  %v3038 = vld [vmem:[#allocation3 + $0xb0] sm:$0xf]
  %v3039 = vld [vmem:[#allocation3 + $0xb4] sm:$0xff]
  %v3040 = vld [vmem:[#allocation3 + $0xbc] sm:$0xf]
  %v3041 = vld [vmem:[#allocation3 + $0xc0] sm:$0xff]
  %v3042 = vld [vmem:[#allocation3 + $0xc8] sm:$0xf]
  %v3043 = vld [vmem:[#allocation3 + $0xcc] sm:$0xff]
  %v3044 = vld [vmem:[#allocation3 + $0xd4] sm:$0xf]
  %v3045 = vld [vmem:[%s7] sm:$0xff]
  %v3046 = vld [vmem:[%s7 + $0x8] sm:$0xff]
  %v3047 = vld [vmem:[%s7 + $0x10] sm:$0xff]
  %v3048 = vld [vmem:[%s7 + $0x18] sm:$0xff]
  %v3049 = vld [vmem:[%s7 + $0x20] sm:$0xff]
  %v3050 = vld [vmem:[%s7 + $0x28] sm:$0xff]
  %v3051 = vld [vmem:[%s7 + $0x30] sm:$0xff]
  %v3052 = vld [vmem:[%s7 + $0x38] sm:$0xff]
  %v3053 = vld [vmem:[%s7 + $0x40] sm:$0xff]
  %v3054 = vld [vmem:[%s7 + $0x48] sm:$0xff]
  %v3055 = vld [vmem:[%s7 + $0x50] sm:$0xff]
  %v3056 = vld [vmem:[%s7 + $0x58] sm:$0xff]
  %v3057 = vld [vmem:[%s7 + $0x60] sm:$0xff]
  %v3058 = vld [vmem:[%s7 + $0x68] sm:$0xff]
  %v3059 = vld [vmem:[%s7 + $0x70] sm:$0xff]
  %v3060 = vld [vmem:[%s7 + $0x78] sm:$0xff]
  %v3061 = vld [vmem:[%s7 + $0x80] sm:$0xff]
  %v3062 = vld [vmem:[%s7 + $0x88] sm:$0xff]
  %v3063 = vld [vmem:[%s7 + $0x90] sm:$0xff]
  %v3064 = vld [vmem:[%s7 + $0x98] sm:$0xff]
  %v3065 = vld [vmem:[%s7 + $0xa0] sm:$0xff]
  %v3066 = vld [vmem:[%s7 + $0xa8] sm:$0xff]
  %v3067 = vld [vmem:[%s7 + $0xb0] sm:$0xff]
  %v3068 = vld [vmem:[%s7 + $0xb8] sm:$0xff]
  %v3069 = vld [vmem:[%s7 + $0xc0] sm:$0xff]
  %v3070 = vld [vmem:[%s7 + $0xc8] sm:$0xff]
  %v3071 = vld [vmem:[%s7 + $0xd0] sm:$0xff]
  %v3072 = vld [vmem:[%s7 + $0xd8] sm:$0xff]
  %v3073 = vld [vmem:[%s7 + $0xe0] sm:$0xff]
  %v3074 = vld [vmem:[%s7 + $0xe8] sm:$0xff]
  %v3075 = vld [vmem:[%s7 + $0xf0] sm:$0xff]
  %v3076 = vld [vmem:[%s7 + $0xf8] sm:$0xff]
  %v3077 = vld [vmem:[%s7 + $0x100] sm:$0xff]
  %v3078 = vld [vmem:[%s7 + $0x108] sm:$0xff]
  %v3079 = vld [vmem:[%s7 + $0x110] sm:$0xff]
  %v3080 = vld [vmem:[%s7 + $0x118] sm:$0xff]
  %v3081 = vld [vmem:[%s7 + $0x120] sm:$0xff]
  %v3082 = vld [vmem:[%s7 + $0x128] sm:$0xff]
  %v3083 = vld [vmem:[%s7 + $0x130] sm:$0xff]
  %v3084 = vld [vmem:[%s7 + $0x138] sm:$0xff]
  %v3085 = vld [vmem:[%s7 + $0x140] sm:$0xff]
  %v3086 = vld [vmem:[%s7 + $0x148] sm:$0xff]
  %v3087 = vld [vmem:[%s7 + $0x150] sm:$0xff]
  %v3088 = vld [vmem:[%s7 + $0x158] sm:$0xff]
  %v3089 = vld [vmem:[%s7 + $0x160] sm:$0xff]
  %v3090 = vld [vmem:[%s7 + $0x168] sm:$0xff]
  %v3091 = vld [vmem:[%s7 + $0x170] sm:$0xff]
  %v3092 = vld [vmem:[%s7 + $0x178] sm:$0xff]
  %s3093 = scalar_lea.vmem [#allocation3], 12
  %v3094 = vld [vmem:[%s3093] sm:$0xff]
  %v3095 = vld [vmem:[%s3093 + $0x8] sm:$0xf]
  %v3096 = vld [vmem:[%s3093 + $0xc] sm:$0xff]
  %v3097 = vld [vmem:[%s3093 + $0x14] sm:$0xf]
  %v3098 = vld [vmem:[%s3093 + $0x18] sm:$0xff]
  %v3099 = vld [vmem:[%s3093 + $0x20] sm:$0xf]
  %v3100 = vld [vmem:[%s3093 + $0x24] sm:$0xff]
  %v3101 = vld [vmem:[%s3093 + $0x2c] sm:$0xf]
  %v3102 = vld [vmem:[%s3093 + $0x30] sm:$0xff]
  %v3103 = vld [vmem:[%s3093 + $0x38] sm:$0xf]
  %v3104 = vld [vmem:[%s3093 + $0x3c] sm:$0xff]
  %v3105 = vld [vmem:[%s3093 + $0x44] sm:$0xf]
  %v3106 = vld [vmem:[%s3093 + $0x48] sm:$0xff]
  %v3107 = vld [vmem:[%s3093 + $0x50] sm:$0xf]
  %v3108 = vld [vmem:[%s3093 + $0x54] sm:$0xff]
  %v3109 = vld [vmem:[%s3093 + $0x5c] sm:$0xf]
  %v3110 = vld [vmem:[%s3093 + $0x78] sm:$0xff]
  %v3111 = vld [vmem:[%s3093 + $0x80] sm:$0xf]
  %v3112 = vld [vmem:[%s3093 + $0x84] sm:$0xff]
  %v3113 = vld [vmem:[%s3093 + $0x8c] sm:$0xf]
  %v3114 = vld [vmem:[%s3093 + $0x90] sm:$0xff]
  %v3115 = vld [vmem:[%s3093 + $0x98] sm:$0xf]
  %v3116 = vld [vmem:[%s3093 + $0x9c] sm:$0xff]
  %v3117 = vld [vmem:[%s3093 + $0xa4] sm:$0xf]
  %v3118 = vld [vmem:[%s3093 + $0xa8] sm:$0xff]
  %v3119 = vld [vmem:[%s3093 + $0xb0] sm:$0xf]
  %v3120 = vld [vmem:[%s3093 + $0xb4] sm:$0xff]
  %v3121 = vld [vmem:[%s3093 + $0xbc] sm:$0xf]
  %v3122 = vld [vmem:[%s3093 + $0xc0] sm:$0xff]
  %v3123 = vld [vmem:[%s3093 + $0xc8] sm:$0xf]
  %v3124 = vld [vmem:[%s3093 + $0xcc] sm:$0xff]
  %v3125 = vld [vmem:[%s3093 + $0xd4] sm:$0xf]
  %v3126 = vld [vmem:[%s7 + $0x180] sm:$0xff]
  %v3127 = vld [vmem:[%s7 + $0x188] sm:$0xff]
  %v3128 = vld [vmem:[%s7 + $0x190] sm:$0xff]
  %v3129 = vld [vmem:[%s7 + $0x198] sm:$0xff]
  %v3130 = vld [vmem:[%s7 + $0x1a0] sm:$0xff]
  %v3131 = vld [vmem:[%s7 + $0x1a8] sm:$0xff]
  %v3132 = vld [vmem:[%s7 + $0x1b0] sm:$0xff]
  %v3133 = vld [vmem:[%s7 + $0x1b8] sm:$0xff]
  %v3134 = vld [vmem:[%s7 + $0x1c0] sm:$0xff]
  %v3135 = vld [vmem:[%s7 + $0x1c8] sm:$0xff]
  %v3136 = vld [vmem:[%s7 + $0x1d0] sm:$0xff]
  %v3137 = vld [vmem:[%s7 + $0x1d8] sm:$0xff]
  %v3138 = vld [vmem:[%s7 + $0x1e0] sm:$0xff]
  %v3139 = vld [vmem:[%s7 + $0x1e8] sm:$0xff]
  %v3140 = vld [vmem:[%s7 + $0x1f0] sm:$0xff]
  %v3141 = vld [vmem:[%s7 + $0x1f8] sm:$0xff]
  %v3142 = vld [vmem:[%s7 + $0x200] sm:$0xff]
  %v3143 = vld [vmem:[%s7 + $0x208] sm:$0xff]
  %v3144 = vld [vmem:[%s7 + $0x210] sm:$0xff]
  %v3145 = vld [vmem:[%s7 + $0x218] sm:$0xff]
  %v3146 = vld [vmem:[%s7 + $0x220] sm:$0xff]
  %v3147 = vld [vmem:[%s7 + $0x228] sm:$0xff]
  %v3148 = vld [vmem:[%s7 + $0x230] sm:$0xff]
  %v3149 = vld [vmem:[%s7 + $0x238] sm:$0xff]
  %v3150 = vld [vmem:[%s7 + $0x240] sm:$0xff]
  %v3151 = vld [vmem:[%s7 + $0x248] sm:$0xff]
  %v3152 = vld [vmem:[%s7 + $0x250] sm:$0xff]
  %v3153 = vld [vmem:[%s7 + $0x258] sm:$0xff]
  %v3154 = vld [vmem:[%s7 + $0x260] sm:$0xff]
  %v3155 = vld [vmem:[%s7 + $0x268] sm:$0xff]
  %v3156 = vld [vmem:[%s7 + $0x270] sm:$0xff]
  %v3157 = vld [vmem:[%s7 + $0x278] sm:$0xff]
  %v3158 = vld [vmem:[%s7 + $0x280] sm:$0xff]
  %v3159 = vld [vmem:[%s7 + $0x288] sm:$0xff]
  %v3160 = vld [vmem:[%s7 + $0x290] sm:$0xff]
  %v3161 = vld [vmem:[%s7 + $0x298] sm:$0xff]
  %v3162 = vld [vmem:[%s7 + $0x2a0] sm:$0xff]
  %v3163 = vld [vmem:[%s7 + $0x2a8] sm:$0xff]
  %v3164 = vld [vmem:[%s7 + $0x2b0] sm:$0xff]
  %v3165 = vld [vmem:[%s7 + $0x2b8] sm:$0xff]
  %v3166 = vld [vmem:[%s7 + $0x2c0] sm:$0xff]
  %v3167 = vld [vmem:[%s7 + $0x2c8] sm:$0xff]
  %v3168 = vld [vmem:[%s7 + $0x2d0] sm:$0xff]
  %v3169 = vld [vmem:[%s7 + $0x2d8] sm:$0xff]
  %v3170 = vld [vmem:[%s7 + $0x2e0] sm:$0xff]
  %v3171 = vld [vmem:[%s7 + $0x2e8] sm:$0xff]
  %v3172 = vld [vmem:[%s7 + $0x2f0] sm:$0xff]
  %v3173 = vld [vmem:[%s7 + $0x2f8] sm:$0xff]
  %v3206 = vunpack.c.l.b16 %v3094
  %v3207 = vunpack.c.h.b16 %v3094
  %v3208 = vunpack.c.l.b16 %v3095
  %v3209 = vunpack.c.l.b16 %v3096
  %v3210 = vunpack.c.h.b16 %v3096
  %v3211 = vunpack.c.l.b16 %v3097
  %v3212 = vunpack.c.l.b16 %v3098
  %v3213 = vunpack.c.h.b16 %v3098
  %v3214 = vunpack.c.l.b16 %v3099
  %v3215 = vunpack.c.l.b16 %v3100
  %v3216 = vunpack.c.h.b16 %v3100
  %v3217 = vunpack.c.l.b16 %v3101
  %v3218 = vunpack.c.l.b16 %v3102
  %v3219 = vunpack.c.h.b16 %v3102
  %v3220 = vunpack.c.l.b16 %v3103
  %v3221 = vunpack.c.l.b16 %v3104
  %v3222 = vunpack.c.h.b16 %v3104
  %v3223 = vunpack.c.l.b16 %v3105
  %v3224 = vunpack.c.l.b16 %v3106
  %v3225 = vunpack.c.h.b16 %v3106
  %v3226 = vunpack.c.l.b16 %v3107
  %v3227 = vunpack.c.l.b16 %v3108
  %v3228 = vunpack.c.h.b16 %v3108
  %v3229 = vunpack.c.l.b16 %v3109
  %v3230 = vunpack.c.l.b16 %v3110
  %v3231 = vunpack.c.h.b16 %v3110
  %v3232 = vunpack.c.l.b16 %v3111
  %v3233 = vunpack.c.l.b16 %v3112
  %v3234 = vunpack.c.h.b16 %v3112
  %v3235 = vunpack.c.l.b16 %v3113
  %v3236 = vunpack.c.l.b16 %v3114
  %v3237 = vunpack.c.h.b16 %v3114
  %v3238 = vunpack.c.l.b16 %v3115
  %v3239 = vunpack.c.l.b16 %v3116
  %v3240 = vunpack.c.h.b16 %v3116
  %v3241 = vunpack.c.l.b16 %v3117
  %v3242 = vunpack.c.l.b16 %v3118
  %v3243 = vunpack.c.h.b16 %v3118
  %v3244 = vunpack.c.l.b16 %v3119
  %v3245 = vunpack.c.l.b16 %v3120
  %v3246 = vunpack.c.h.b16 %v3120
  %v3247 = vunpack.c.l.b16 %v3121
  %v3248 = vunpack.c.l.b16 %v3122
  %v3249 = vunpack.c.h.b16 %v3122
  %v3250 = vunpack.c.l.b16 %v3123
  %v3251 = vunpack.c.l.b16 %v3124
  %v3252 = vunpack.c.h.b16 %v3124
  %v3253 = vunpack.c.l.b16 %v3125
  %v3254 = vpack.c.b16 %v3209, %v3206
  %v3255 = vpack.c.b16 %v3210, %v3207
  %v3256 = vpack.c.b16 %v3211, %v3208
  %v3257 = vpack.c.b16 %v3215, %v3212
  %v3258 = vpack.c.b16 %v3216, %v3213
  %v3259 = vpack.c.b16 %v3217, %v3214
  %v3260 = vpack.c.b16 %v3221, %v3218
  %v3261 = vpack.c.b16 %v3222, %v3219
  %v3262 = vpack.c.b16 %v3223, %v3220
  %v3263 = vpack.c.b16 %v3227, %v3224
  %v3264 = vpack.c.b16 %v3228, %v3225
  %v3265 = vpack.c.b16 %v3229, %v3226
  %v3266 = vpack.c.b16 %v3233, %v3230
  %v3267 = vpack.c.b16 %v3234, %v3231
  %v3268 = vpack.c.b16 %v3235, %v3232
  %v3269 = vpack.c.b16 %v3239, %v3236
  %v3270 = vpack.c.b16 %v3240, %v3237
  %v3271 = vpack.c.b16 %v3241, %v3238
  %v3272 = vpack.c.b16 %v3245, %v3242
  %v3273 = vpack.c.b16 %v3246, %v3243
  %v3274 = vpack.c.b16 %v3247, %v3244
  %v3275 = vpack.c.b16 %v3251, %v3248
  %v3276 = vpack.c.b16 %v3252, %v3249
  %v3277 = vpack.c.b16 %v3253, %v3250
  %v3350 = vunpack.c.l.b16 %v3126
  %v3351 = vunpack.c.h.b16 %v3126
  %v3352 = vunpack.c.l.b16 %v3127
  %v3353 = vunpack.c.h.b16 %v3127
  %v3354 = vunpack.c.l.b16 %v3128
  %v3355 = vunpack.c.h.b16 %v3128
  %v3356 = vunpack.c.l.b16 %v3129
  %v3357 = vunpack.c.h.b16 %v3129
  %v3358 = vunpack.c.l.b16 %v3130
  %v3359 = vunpack.c.h.b16 %v3130
  %v3360 = vunpack.c.l.b16 %v3131
  %v3361 = vunpack.c.h.b16 %v3131
  %v3362 = vunpack.c.l.b16 %v3132
  %v3363 = vunpack.c.h.b16 %v3132
  %v3364 = vunpack.c.l.b16 %v3133
  %v3365 = vunpack.c.h.b16 %v3133
  %v3366 = vunpack.c.l.b16 %v3134
  %v3367 = vunpack.c.h.b16 %v3134
  %v3368 = vunpack.c.l.b16 %v3135
  %v3369 = vunpack.c.h.b16 %v3135
  %v3370 = vunpack.c.l.b16 %v3136
  %v3371 = vunpack.c.h.b16 %v3136
  %v3372 = vunpack.c.l.b16 %v3137
  %v3373 = vunpack.c.h.b16 %v3137
  %v3374 = vunpack.c.l.b16 %v3138
  %v3375 = vunpack.c.h.b16 %v3138
  %v3376 = vunpack.c.l.b16 %v3139
  %v3377 = vunpack.c.h.b16 %v3139
  %v3378 = vunpack.c.l.b16 %v3140
  %v3379 = vunpack.c.h.b16 %v3140
  %v3380 = vunpack.c.l.b16 %v3141
  %v3381 = vunpack.c.h.b16 %v3141
  %v3382 = vunpack.c.l.b16 %v3142
  %v3383 = vunpack.c.h.b16 %v3142
  %v3384 = vunpack.c.l.b16 %v3143
  %v3385 = vunpack.c.h.b16 %v3143
  %v3386 = vunpack.c.l.b16 %v3144
  %v3387 = vunpack.c.h.b16 %v3144
  %v3388 = vunpack.c.l.b16 %v3145
  %v3389 = vunpack.c.h.b16 %v3145
  %v3390 = vunpack.c.l.b16 %v3146
  %v3391 = vunpack.c.h.b16 %v3146
  %v3392 = vunpack.c.l.b16 %v3147
  %v3393 = vunpack.c.h.b16 %v3147
  %v3394 = vunpack.c.l.b16 %v3148
  %v3395 = vunpack.c.h.b16 %v3148
  %v3396 = vunpack.c.l.b16 %v3149
  %v3397 = vunpack.c.h.b16 %v3149
  %v3398 = vunpack.c.l.b16 %v3150
  %v3399 = vunpack.c.h.b16 %v3150
  %v3400 = vunpack.c.l.b16 %v3151
  %v3401 = vunpack.c.h.b16 %v3151
  %v3402 = vunpack.c.l.b16 %v3152
  %v3403 = vunpack.c.h.b16 %v3152
  %v3404 = vunpack.c.l.b16 %v3153
  %v3405 = vunpack.c.h.b16 %v3153
  %v3406 = vunpack.c.l.b16 %v3154
  %v3407 = vunpack.c.h.b16 %v3154
  %v3408 = vunpack.c.l.b16 %v3155
  %v3409 = vunpack.c.h.b16 %v3155
  %v3410 = vunpack.c.l.b16 %v3156
  %v3411 = vunpack.c.h.b16 %v3156
  %v3412 = vunpack.c.l.b16 %v3157
  %v3413 = vunpack.c.h.b16 %v3157
  %v3414 = vunpack.c.l.b16 %v3158
  %v3415 = vunpack.c.h.b16 %v3158
  %v3416 = vunpack.c.l.b16 %v3159
  %v3417 = vunpack.c.h.b16 %v3159
  %v3418 = vunpack.c.l.b16 %v3160
  %v3419 = vunpack.c.h.b16 %v3160
  %v3420 = vunpack.c.l.b16 %v3161
  %v3421 = vunpack.c.h.b16 %v3161
  %v3422 = vunpack.c.l.b16 %v3162
  %v3423 = vunpack.c.h.b16 %v3162
  %v3424 = vunpack.c.l.b16 %v3163
  %v3425 = vunpack.c.h.b16 %v3163
  %v3426 = vunpack.c.l.b16 %v3164
  %v3427 = vunpack.c.h.b16 %v3164
  %v3428 = vunpack.c.l.b16 %v3165
  %v3429 = vunpack.c.h.b16 %v3165
  %v3430 = vunpack.c.l.b16 %v3166
  %v3431 = vunpack.c.h.b16 %v3166
  %v3432 = vunpack.c.l.b16 %v3167
  %v3433 = vunpack.c.h.b16 %v3167
  %v3434 = vunpack.c.l.b16 %v3168
  %v3435 = vunpack.c.h.b16 %v3168
  %v3436 = vunpack.c.l.b16 %v3169
  %v3437 = vunpack.c.h.b16 %v3169
  %v3438 = vunpack.c.l.b16 %v3170
  %v3439 = vunpack.c.h.b16 %v3170
  %v3440 = vunpack.c.l.b16 %v3171
  %v3441 = vunpack.c.h.b16 %v3171
  %v3442 = vunpack.c.l.b16 %v3172
  %v3443 = vunpack.c.h.b16 %v3172
  %v3444 = vunpack.c.l.b16 %v3173
  %v3445 = vunpack.c.h.b16 %v3173
  %v3446 = vpack.c.b16 %v3352, %v3350
  %v3447 = vpack.c.b16 %v3353, %v3351
  %v3448 = vpack.c.b16 %v3356, %v3354
  %v3449 = vpack.c.b16 %v3357, %v3355
  %v3450 = vpack.c.b16 %v3360, %v3358
  %v3451 = vpack.c.b16 %v3361, %v3359
  %v3452 = vpack.c.b16 %v3364, %v3362
  %v3453 = vpack.c.b16 %v3365, %v3363
  %v3454 = vpack.c.b16 %v3368, %v3366
  %v3455 = vpack.c.b16 %v3369, %v3367
  %v3456 = vpack.c.b16 %v3372, %v3370
  %v3457 = vpack.c.b16 %v3373, %v3371
  %v3458 = vpack.c.b16 %v3376, %v3374
  %v3459 = vpack.c.b16 %v3377, %v3375
  %v3460 = vpack.c.b16 %v3380, %v3378
  %v3461 = vpack.c.b16 %v3381, %v3379
  %v3462 = vpack.c.b16 %v3384, %v3382
  %v3463 = vpack.c.b16 %v3385, %v3383
  %v3464 = vpack.c.b16 %v3388, %v3386
  %v3465 = vpack.c.b16 %v3389, %v3387
  %v3466 = vpack.c.b16 %v3392, %v3390
  %v3467 = vpack.c.b16 %v3393, %v3391
  %v3468 = vpack.c.b16 %v3396, %v3394
  %v3469 = vpack.c.b16 %v3397, %v3395
  %v3470 = vpack.c.b16 %v3400, %v3398
  %v3471 = vpack.c.b16 %v3401, %v3399
  %v3472 = vpack.c.b16 %v3404, %v3402
  %v3473 = vpack.c.b16 %v3405, %v3403
  %v3474 = vpack.c.b16 %v3408, %v3406
  %v3475 = vpack.c.b16 %v3409, %v3407
  %v3476 = vpack.c.b16 %v3412, %v3410
  %v3477 = vpack.c.b16 %v3413, %v3411
  %v3478 = vpack.c.b16 %v3416, %v3414
  %v3479 = vpack.c.b16 %v3417, %v3415
  %v3480 = vpack.c.b16 %v3420, %v3418
  %v3481 = vpack.c.b16 %v3421, %v3419
  %v3482 = vpack.c.b16 %v3424, %v3422
  %v3483 = vpack.c.b16 %v3425, %v3423
  %v3484 = vpack.c.b16 %v3428, %v3426
  %v3485 = vpack.c.b16 %v3429, %v3427
  %v3486 = vpack.c.b16 %v3432, %v3430
  %v3487 = vpack.c.b16 %v3433, %v3431
  %v3488 = vpack.c.b16 %v3436, %v3434
  %v3489 = vpack.c.b16 %v3437, %v3435
  %v3490 = vpack.c.b16 %v3440, %v3438
  %v3491 = vpack.c.b16 %v3441, %v3439
  %v3492 = vpack.c.b16 %v3444, %v3442
  %v3493 = vpack.c.b16 %v3445, %v3443
  %3542 = vmatpush.bf16.msra.mxu0 %v3460
  %3543 = vmatpush.bf16.msra.mxu0 %v3458
  %3544 = vmatpush.bf16.msra.mxu0 %v3456
  %3545 = vmatpush.bf16.msra.mxu0 %v3454
  %3546 = vmatpush.bf16.msra.mxu0 %v3452
  %3547 = vmatpush.bf16.msra.mxu0 %v3450
  %3548 = vmatpush.bf16.msra.mxu0 %v3448
  %3549 = vmatpush.bf16.msra.mxu0 %v3446
  %3550 = vmatmul.bf16.gmra.mxu0 %v3254
  %v3551 = vpop.f32.mrf.mxu0
  %v3552 = vadd.f32 0.0, %v3551
  %v3553 = vpop.f32.mrf.mxu0
  %v3554 = vadd.f32 0.0, %v3553
  %3555 = vmatmul.bf16.gmra.mxu0 %v3257
  %v3556 = vpop.f32.mrf.mxu0
  %v3557 = vadd.f32 0.0, %v3556
  %v3558 = vpop.f32.mrf.mxu0
  %v3559 = vadd.f32 0.0, %v3558
  %3560 = vmatmul.bf16.gmra.mxu0 %v3260
  %v3561 = vpop.f32.mrf.mxu0
  %v3562 = vadd.f32 0.0, %v3561
  %v3563 = vpop.f32.mrf.mxu0
  %v3564 = vadd.f32 0.0, %v3563
  %3565 = vmatmul.bf16.gmra.mxu0 %v3263
  %v3566 = vpop.f32.mrf.mxu0
  %v3567 = vadd.f32 0.0, %v3566
  %v3568 = vpop.f32.mrf.mxu0
  %v3569 = vadd.f32 0.0, %v3568
  %3570 = vmatmul.bf16.gmra.mxu0 %v3266
  %v3571 = vpop.f32.mrf.mxu0
  %v3572 = vadd.f32 0.0, %v3571
  %v3573 = vpop.f32.mrf.mxu0
  %v3574 = vadd.f32 0.0, %v3573
  %3575 = vmatmul.bf16.gmra.mxu0 %v3269
  %v3576 = vpop.f32.mrf.mxu0
  %v3577 = vadd.f32 0.0, %v3576
  %v3578 = vpop.f32.mrf.mxu0
  %v3579 = vadd.f32 0.0, %v3578
  %3580 = vmatmul.bf16.gmra.mxu0 %v3272
  %v3581 = vpop.f32.mrf.mxu0
  %v3582 = vadd.f32 0.0, %v3581
  %v3583 = vpop.f32.mrf.mxu0
  %v3584 = vadd.f32 0.0, %v3583
  %3585 = vmatmul.bf16.gmra.mxu0 %v3275
  %v3586 = vpop.f32.mrf.mxu0
  %v3587 = vadd.f32 0.0, %v3586
  %v3588 = vpop.f32.mrf.mxu0
  %v3589 = vadd.f32 0.0, %v3588
  %3590 = vdwg.mxu0
  %3591 = vmatpush.bf16.msra.mxu0 %v3476
  %3592 = vmatpush.bf16.msra.mxu0 %v3474
  %3593 = vmatpush.bf16.msra.mxu0 %v3472
  %3594 = vmatpush.bf16.msra.mxu0 %v3470
  %3595 = vmatpush.bf16.msra.mxu0 %v3468
  %3596 = vmatpush.bf16.msra.mxu0 %v3466
  %3597 = vmatpush.bf16.msra.mxu0 %v3464
  %3598 = vmatpush.bf16.msra.mxu0 %v3462
  %3599 = vmatmul.bf16.gmra.mxu0 %v3255
  %v3600 = vpop.f32.mrf.mxu0
  %v3601 = vadd.f32 %v3552, %v3600
  %v3602 = vpop.f32.mrf.mxu0
  %v3603 = vadd.f32 %v3554, %v3602
  %3604 = vmatmul.bf16.gmra.mxu0 %v3258
  %v3605 = vpop.f32.mrf.mxu0
  %v3606 = vadd.f32 %v3557, %v3605
  %v3607 = vpop.f32.mrf.mxu0
  %v3608 = vadd.f32 %v3559, %v3607
  %3609 = vmatmul.bf16.gmra.mxu0 %v3261
  %v3610 = vpop.f32.mrf.mxu0
  %v3611 = vadd.f32 %v3562, %v3610
  %v3612 = vpop.f32.mrf.mxu0
  %v3613 = vadd.f32 %v3564, %v3612
  %3614 = vmatmul.bf16.gmra.mxu0 %v3264
  %v3615 = vpop.f32.mrf.mxu0
  %v3616 = vadd.f32 %v3567, %v3615
  %v3617 = vpop.f32.mrf.mxu0
  %v3618 = vadd.f32 %v3569, %v3617
  %3619 = vmatmul.bf16.gmra.mxu0 %v3267
  %v3620 = vpop.f32.mrf.mxu0
  %v3621 = vadd.f32 %v3572, %v3620
  %v3622 = vpop.f32.mrf.mxu0
  %v3623 = vadd.f32 %v3574, %v3622
  %3624 = vmatmul.bf16.gmra.mxu0 %v3270
  %v3625 = vpop.f32.mrf.mxu0
  %v3626 = vadd.f32 %v3577, %v3625
  %v3627 = vpop.f32.mrf.mxu0
  %v3628 = vadd.f32 %v3579, %v3627
  %3629 = vmatmul.bf16.gmra.mxu0 %v3273
  %v3630 = vpop.f32.mrf.mxu0
  %v3631 = vadd.f32 %v3582, %v3630
  %v3632 = vpop.f32.mrf.mxu0
  %v3633 = vadd.f32 %v3584, %v3632
  %3634 = vmatmul.bf16.gmra.mxu0 %v3276
  %v3635 = vpop.f32.mrf.mxu0
  %v3636 = vadd.f32 %v3587, %v3635
  %v3637 = vpop.f32.mrf.mxu0
  %v3638 = vadd.f32 %v3589, %v3637
  %3639 = vdwg.mxu0
  %3640 = vmatpush.bf16.msra.mxu0 %v3492
  %3641 = vmatpush.bf16.msra.mxu0 %v3490
  %3642 = vmatpush.bf16.msra.mxu0 %v3488
  %3643 = vmatpush.bf16.msra.mxu0 %v3486
  %3644 = vmatpush.bf16.msra.mxu0 %v3484
  %3645 = vmatpush.bf16.msra.mxu0 %v3482
  %3646 = vmatpush.bf16.msra.mxu0 %v3480
  %3647 = vmatpush.bf16.msra.mxu0 %v3478
  %3648 = vmatmul.bf16.gmra.mxu0 %v3256
  %v3649 = vpop.f32.mrf.mxu0
  %v3650 = vadd.f32 %v3601, %v3649
  %v3651 = vpop.f32.mrf.mxu0
  %v3652 = vadd.f32 %v3603, %v3651
  %3653 = vmatmul.bf16.gmra.mxu0 %v3259
  %v3654 = vpop.f32.mrf.mxu0
  %v3655 = vadd.f32 %v3606, %v3654
  %v3656 = vpop.f32.mrf.mxu0
  %v3657 = vadd.f32 %v3608, %v3656
  %3658 = vmatmul.bf16.gmra.mxu0 %v3262
  %v3659 = vpop.f32.mrf.mxu0
  %v3660 = vadd.f32 %v3611, %v3659
  %v3661 = vpop.f32.mrf.mxu0
  %v3662 = vadd.f32 %v3613, %v3661
  %3663 = vmatmul.bf16.gmra.mxu0 %v3265
  %v3664 = vpop.f32.mrf.mxu0
  %v3665 = vadd.f32 %v3616, %v3664
  %v3666 = vpop.f32.mrf.mxu0
  %v3667 = vadd.f32 %v3618, %v3666
  %3668 = vmatmul.bf16.gmra.mxu0 %v3268
  %v3669 = vpop.f32.mrf.mxu0
  %v3670 = vadd.f32 %v3621, %v3669
  %v3671 = vpop.f32.mrf.mxu0
  %v3672 = vadd.f32 %v3623, %v3671
  %3673 = vmatmul.bf16.gmra.mxu0 %v3271
  %v3674 = vpop.f32.mrf.mxu0
  %v3675 = vadd.f32 %v3626, %v3674
  %v3676 = vpop.f32.mrf.mxu0
  %v3677 = vadd.f32 %v3628, %v3676
  %3678 = vmatmul.bf16.gmra.mxu0 %v3274
  %v3679 = vpop.f32.mrf.mxu0
  %v3680 = vadd.f32 %v3631, %v3679
  %v3681 = vpop.f32.mrf.mxu0
  %v3682 = vadd.f32 %v3633, %v3681
  %3683 = vmatmul.bf16.gmra.mxu0 %v3277
  %v3684 = vpop.f32.mrf.mxu0
  %v3685 = vadd.f32 %v3636, %v3684
  %v3686 = vpop.f32.mrf.mxu0
  %v3687 = vadd.f32 %v3638, %v3686
  %3688 = vdwg.mxu0
  %3689 = vmatpush.bf16.msra.mxu0 %v3461
  %3690 = vmatpush.bf16.msra.mxu0 %v3459
  %3691 = vmatpush.bf16.msra.mxu0 %v3457
  %3692 = vmatpush.bf16.msra.mxu0 %v3455
  %3693 = vmatpush.bf16.msra.mxu0 %v3453
  %3694 = vmatpush.bf16.msra.mxu0 %v3451
  %3695 = vmatpush.bf16.msra.mxu0 %v3449
  %3696 = vmatpush.bf16.msra.mxu0 %v3447
  %3697 = vmatmul.bf16.gmra.mxu0 %v3254
  %v3698 = vpop.f32.mrf.mxu0
  %v3699 = vadd.f32 0.0, %v3698
  %v3700 = vpop.f32.mrf.mxu0
  %v3701 = vadd.f32 0.0, %v3700
  %3702 = vmatmul.bf16.gmra.mxu0 %v3257
  %v3703 = vpop.f32.mrf.mxu0
  %v3704 = vadd.f32 0.0, %v3703
  %v3705 = vpop.f32.mrf.mxu0
  %v3706 = vadd.f32 0.0, %v3705
  %3707 = vmatmul.bf16.gmra.mxu0 %v3260
  %v3708 = vpop.f32.mrf.mxu0
  %v3709 = vadd.f32 0.0, %v3708
  %v3710 = vpop.f32.mrf.mxu0
  %v3711 = vadd.f32 0.0, %v3710
  %3712 = vmatmul.bf16.gmra.mxu0 %v3263
  %v3713 = vpop.f32.mrf.mxu0
  %v3714 = vadd.f32 0.0, %v3713
  %v3715 = vpop.f32.mrf.mxu0
  %v3716 = vadd.f32 0.0, %v3715
  %3717 = vmatmul.bf16.gmra.mxu0 %v3266
  %v3718 = vpop.f32.mrf.mxu0
  %v3719 = vadd.f32 0.0, %v3718
  %v3720 = vpop.f32.mrf.mxu0
  %v3721 = vadd.f32 0.0, %v3720
  %3722 = vmatmul.bf16.gmra.mxu0 %v3269
  %v3723 = vpop.f32.mrf.mxu0
  %v3724 = vadd.f32 0.0, %v3723
  %v3725 = vpop.f32.mrf.mxu0
  %v3726 = vadd.f32 0.0, %v3725
  %3727 = vmatmul.bf16.gmra.mxu0 %v3272
  %v3728 = vpop.f32.mrf.mxu0
  %v3729 = vadd.f32 0.0, %v3728
  %v3730 = vpop.f32.mrf.mxu0
  %v3731 = vadd.f32 0.0, %v3730
  %3732 = vmatmul.bf16.gmra.mxu0 %v3275
  %v3733 = vpop.f32.mrf.mxu0
  %v3734 = vadd.f32 0.0, %v3733
  %v3735 = vpop.f32.mrf.mxu0
  %v3736 = vadd.f32 0.0, %v3735
  %3737 = vdwg.mxu0
  %3738 = vmatpush.bf16.msra.mxu0 %v3477
  %3739 = vmatpush.bf16.msra.mxu0 %v3475
  %3740 = vmatpush.bf16.msra.mxu0 %v3473
  %3741 = vmatpush.bf16.msra.mxu0 %v3471
  %3742 = vmatpush.bf16.msra.mxu0 %v3469
  %3743 = vmatpush.bf16.msra.mxu0 %v3467
  %3744 = vmatpush.bf16.msra.mxu0 %v3465
  %3745 = vmatpush.bf16.msra.mxu0 %v3463
  %3746 = vmatmul.bf16.gmra.mxu0 %v3255
  %v3747 = vpop.f32.mrf.mxu0
  %v3748 = vadd.f32 %v3699, %v3747
  %v3749 = vpop.f32.mrf.mxu0
  %v3750 = vadd.f32 %v3701, %v3749
  %3751 = vmatmul.bf16.gmra.mxu0 %v3258
  %v3752 = vpop.f32.mrf.mxu0
  %v3753 = vadd.f32 %v3704, %v3752
  %v3754 = vpop.f32.mrf.mxu0
  %v3755 = vadd.f32 %v3706, %v3754
  %3756 = vmatmul.bf16.gmra.mxu0 %v3261
  %v3757 = vpop.f32.mrf.mxu0
  %v3758 = vadd.f32 %v3709, %v3757
  %v3759 = vpop.f32.mrf.mxu0
  %v3760 = vadd.f32 %v3711, %v3759
  %3761 = vmatmul.bf16.gmra.mxu0 %v3264
  %v3762 = vpop.f32.mrf.mxu0
  %v3763 = vadd.f32 %v3714, %v3762
  %v3764 = vpop.f32.mrf.mxu0
  %v3765 = vadd.f32 %v3716, %v3764
  %3766 = vmatmul.bf16.gmra.mxu0 %v3267
  %v3767 = vpop.f32.mrf.mxu0
  %v3768 = vadd.f32 %v3719, %v3767
  %v3769 = vpop.f32.mrf.mxu0
  %v3770 = vadd.f32 %v3721, %v3769
  %3771 = vmatmul.bf16.gmra.mxu0 %v3270
  %v3772 = vpop.f32.mrf.mxu0
  %v3773 = vadd.f32 %v3724, %v3772
  %v3774 = vpop.f32.mrf.mxu0
  %v3775 = vadd.f32 %v3726, %v3774
  %3776 = vmatmul.bf16.gmra.mxu0 %v3273
  %v3777 = vpop.f32.mrf.mxu0
  %v3778 = vadd.f32 %v3729, %v3777
  %v3779 = vpop.f32.mrf.mxu0
  %v3780 = vadd.f32 %v3731, %v3779
  %3781 = vmatmul.bf16.gmra.mxu0 %v3276
  %v3782 = vpop.f32.mrf.mxu0
  %v3783 = vadd.f32 %v3734, %v3782
  %v3784 = vpop.f32.mrf.mxu0
  %v3785 = vadd.f32 %v3736, %v3784
  %3786 = vdwg.mxu0
  %3787 = vmatpush.bf16.msra.mxu0 %v3493
  %3788 = vmatpush.bf16.msra.mxu0 %v3491
  %3789 = vmatpush.bf16.msra.mxu0 %v3489
  %3790 = vmatpush.bf16.msra.mxu0 %v3487
  %3791 = vmatpush.bf16.msra.mxu0 %v3485
  %3792 = vmatpush.bf16.msra.mxu0 %v3483
  %3793 = vmatpush.bf16.msra.mxu0 %v3481
  %3794 = vmatpush.bf16.msra.mxu0 %v3479
  %3795 = vmatmul.bf16.gmra.mxu0 %v3256
  %v3796 = vpop.f32.mrf.mxu0
  %v3797 = vadd.f32 %v3748, %v3796
  %v3798 = vpop.f32.mrf.mxu0
  %v3799 = vadd.f32 %v3750, %v3798
  %3800 = vmatmul.bf16.gmra.mxu0 %v3259
  %v3801 = vpop.f32.mrf.mxu0
  %v3802 = vadd.f32 %v3753, %v3801
  %v3803 = vpop.f32.mrf.mxu0
  %v3804 = vadd.f32 %v3755, %v3803
  %3805 = vmatmul.bf16.gmra.mxu0 %v3262
  %v3806 = vpop.f32.mrf.mxu0
  %v3807 = vadd.f32 %v3758, %v3806
  %v3808 = vpop.f32.mrf.mxu0
  %v3809 = vadd.f32 %v3760, %v3808
  %3810 = vmatmul.bf16.gmra.mxu0 %v3265
  %v3811 = vpop.f32.mrf.mxu0
  %v3812 = vadd.f32 %v3763, %v3811
  %v3813 = vpop.f32.mrf.mxu0
  %v3814 = vadd.f32 %v3765, %v3813
  %3815 = vmatmul.bf16.gmra.mxu0 %v3268
  %v3816 = vpop.f32.mrf.mxu0
  %v3817 = vadd.f32 %v3768, %v3816
  %v3818 = vpop.f32.mrf.mxu0
  %v3819 = vadd.f32 %v3770, %v3818
  %3820 = vmatmul.bf16.gmra.mxu0 %v3271
  %v3821 = vpop.f32.mrf.mxu0
  %v3822 = vadd.f32 %v3773, %v3821
  %v3823 = vpop.f32.mrf.mxu0
  %v3824 = vadd.f32 %v3775, %v3823
  %3825 = vmatmul.bf16.gmra.mxu0 %v3274
  %v3826 = vpop.f32.mrf.mxu0
  %v3827 = vadd.f32 %v3778, %v3826
  %v3828 = vpop.f32.mrf.mxu0
  %v3829 = vadd.f32 %v3780, %v3828
  %3830 = vmatmul.bf16.gmra.mxu0 %v3277
  %v3831 = vpop.f32.mrf.mxu0
  %v3832 = vadd.f32 %v3783, %v3831
  %v3833 = vpop.f32.mrf.mxu0
  %v3834 = vadd.f32 %v3785, %v3833
  %3835 = vdwg.mxu0
  %v3868 = vunpack.c.l.b16 %v3013
  %v3869 = vunpack.c.h.b16 %v3013
  %v3870 = vunpack.c.l.b16 %v3014
  %v3871 = vunpack.c.l.b16 %v3015
  %v3872 = vunpack.c.h.b16 %v3015
  %v3873 = vunpack.c.l.b16 %v3016
  %v3874 = vunpack.c.l.b16 %v3017
  %v3875 = vunpack.c.h.b16 %v3017
  %v3876 = vunpack.c.l.b16 %v3018
  %v3877 = vunpack.c.l.b16 %v3019
  %v3878 = vunpack.c.h.b16 %v3019
  %v3879 = vunpack.c.l.b16 %v3020
  %v3880 = vunpack.c.l.b16 %v3021
  %v3881 = vunpack.c.h.b16 %v3021
  %v3882 = vunpack.c.l.b16 %v3022
  %v3883 = vunpack.c.l.b16 %v3023
  %v3884 = vunpack.c.h.b16 %v3023
  %v3885 = vunpack.c.l.b16 %v3024
  %v3886 = vunpack.c.l.b16 %v3025
  %v3887 = vunpack.c.h.b16 %v3025
  %v3888 = vunpack.c.l.b16 %v3026
  %v3889 = vunpack.c.l.b16 %v3027
  %v3890 = vunpack.c.h.b16 %v3027
  %v3891 = vunpack.c.l.b16 %v3028
  %v3892 = vunpack.c.l.b16 %v3029
  %v3893 = vunpack.c.h.b16 %v3029
  %v3894 = vunpack.c.l.b16 %v3030
  %v3895 = vunpack.c.l.b16 %v3031
  %v3896 = vunpack.c.h.b16 %v3031
  %v3897 = vunpack.c.l.b16 %v3032
  %v3898 = vunpack.c.l.b16 %v3033
  %v3899 = vunpack.c.h.b16 %v3033
  %v3900 = vunpack.c.l.b16 %v3034
  %v3901 = vunpack.c.l.b16 %v3035
  %v3902 = vunpack.c.h.b16 %v3035
  %v3903 = vunpack.c.l.b16 %v3036
  %v3904 = vunpack.c.l.b16 %v3037
  %v3905 = vunpack.c.h.b16 %v3037
  %v3906 = vunpack.c.l.b16 %v3038
  %v3907 = vunpack.c.l.b16 %v3039
  %v3908 = vunpack.c.h.b16 %v3039
  %v3909 = vunpack.c.l.b16 %v3040
  %v3910 = vunpack.c.l.b16 %v3041
  %v3911 = vunpack.c.h.b16 %v3041
  %v3912 = vunpack.c.l.b16 %v3042
  %v3913 = vunpack.c.l.b16 %v3043
  %v3914 = vunpack.c.h.b16 %v3043
  %v3915 = vunpack.c.l.b16 %v3044
  %v3916 = vpack.c.b16 %v3871, %v3868
  %v3917 = vpack.c.b16 %v3872, %v3869
  %v3918 = vpack.c.b16 %v3873, %v3870
  %v3919 = vpack.c.b16 %v3877, %v3874
  %v3920 = vpack.c.b16 %v3878, %v3875
  %v3921 = vpack.c.b16 %v3879, %v3876
  %v3922 = vpack.c.b16 %v3883, %v3880
  %v3923 = vpack.c.b16 %v3884, %v3881
  %v3924 = vpack.c.b16 %v3885, %v3882
  %v3925 = vpack.c.b16 %v3889, %v3886
  %v3926 = vpack.c.b16 %v3890, %v3887
  %v3927 = vpack.c.b16 %v3891, %v3888
  %v3928 = vpack.c.b16 %v3895, %v3892
  %v3929 = vpack.c.b16 %v3896, %v3893
  %v3930 = vpack.c.b16 %v3897, %v3894
  %v3931 = vpack.c.b16 %v3901, %v3898
  %v3932 = vpack.c.b16 %v3902, %v3899
  %v3933 = vpack.c.b16 %v3903, %v3900
  %v3934 = vpack.c.b16 %v3907, %v3904
  %v3935 = vpack.c.b16 %v3908, %v3905
  %v3936 = vpack.c.b16 %v3909, %v3906
  %v3937 = vpack.c.b16 %v3913, %v3910
  %v3938 = vpack.c.b16 %v3914, %v3911
  %v3939 = vpack.c.b16 %v3915, %v3912
  %v4012 = vunpack.c.l.b16 %v3045
  %v4013 = vunpack.c.h.b16 %v3045
  %v4014 = vunpack.c.l.b16 %v3046
  %v4015 = vunpack.c.h.b16 %v3046
  %v4016 = vunpack.c.l.b16 %v3047
  %v4017 = vunpack.c.h.b16 %v3047
  %v4018 = vunpack.c.l.b16 %v3048
  %v4019 = vunpack.c.h.b16 %v3048
  %v4020 = vunpack.c.l.b16 %v3049
  %v4021 = vunpack.c.h.b16 %v3049
  %v4022 = vunpack.c.l.b16 %v3050
  %v4023 = vunpack.c.h.b16 %v3050
  %v4024 = vunpack.c.l.b16 %v3051
  %v4025 = vunpack.c.h.b16 %v3051
  %v4026 = vunpack.c.l.b16 %v3052
  %v4027 = vunpack.c.h.b16 %v3052
  %v4028 = vunpack.c.l.b16 %v3053
  %v4029 = vunpack.c.h.b16 %v3053
  %v4030 = vunpack.c.l.b16 %v3054
  %v4031 = vunpack.c.h.b16 %v3054
  %v4032 = vunpack.c.l.b16 %v3055
  %v4033 = vunpack.c.h.b16 %v3055
  %v4034 = vunpack.c.l.b16 %v3056
  %v4035 = vunpack.c.h.b16 %v3056
  %v4036 = vunpack.c.l.b16 %v3057
  %v4037 = vunpack.c.h.b16 %v3057
  %v4038 = vunpack.c.l.b16 %v3058
  %v4039 = vunpack.c.h.b16 %v3058
  %v4040 = vunpack.c.l.b16 %v3059
  %v4041 = vunpack.c.h.b16 %v3059
  %v4042 = vunpack.c.l.b16 %v3060
  %v4043 = vunpack.c.h.b16 %v3060
  %v4044 = vunpack.c.l.b16 %v3061
  %v4045 = vunpack.c.h.b16 %v3061
  %v4046 = vunpack.c.l.b16 %v3062
  %v4047 = vunpack.c.h.b16 %v3062
  %v4048 = vunpack.c.l.b16 %v3063
  %v4049 = vunpack.c.h.b16 %v3063
  %v4050 = vunpack.c.l.b16 %v3064
  %v4051 = vunpack.c.h.b16 %v3064
  %v4052 = vunpack.c.l.b16 %v3065
  %v4053 = vunpack.c.h.b16 %v3065
  %v4054 = vunpack.c.l.b16 %v3066
  %v4055 = vunpack.c.h.b16 %v3066
  %v4056 = vunpack.c.l.b16 %v3067
  %v4057 = vunpack.c.h.b16 %v3067
  %v4058 = vunpack.c.l.b16 %v3068
  %v4059 = vunpack.c.h.b16 %v3068
  %v4060 = vunpack.c.l.b16 %v3069
  %v4061 = vunpack.c.h.b16 %v3069
  %v4062 = vunpack.c.l.b16 %v3070
  %v4063 = vunpack.c.h.b16 %v3070
  %v4064 = vunpack.c.l.b16 %v3071
  %v4065 = vunpack.c.h.b16 %v3071
  %v4066 = vunpack.c.l.b16 %v3072
  %v4067 = vunpack.c.h.b16 %v3072
  %v4068 = vunpack.c.l.b16 %v3073
  %v4069 = vunpack.c.h.b16 %v3073
  %v4070 = vunpack.c.l.b16 %v3074
  %v4071 = vunpack.c.h.b16 %v3074
  %v4072 = vunpack.c.l.b16 %v3075
  %v4073 = vunpack.c.h.b16 %v3075
  %v4074 = vunpack.c.l.b16 %v3076
  %v4075 = vunpack.c.h.b16 %v3076
  %v4076 = vunpack.c.l.b16 %v3077
  %v4077 = vunpack.c.h.b16 %v3077
  %v4078 = vunpack.c.l.b16 %v3078
  %v4079 = vunpack.c.h.b16 %v3078
  %v4080 = vunpack.c.l.b16 %v3079
  %v4081 = vunpack.c.h.b16 %v3079
  %v4082 = vunpack.c.l.b16 %v3080
  %v4083 = vunpack.c.h.b16 %v3080
  %v4084 = vunpack.c.l.b16 %v3081
  %v4085 = vunpack.c.h.b16 %v3081
  %v4086 = vunpack.c.l.b16 %v3082
  %v4087 = vunpack.c.h.b16 %v3082
  %v4088 = vunpack.c.l.b16 %v3083
  %v4089 = vunpack.c.h.b16 %v3083
  %v4090 = vunpack.c.l.b16 %v3084
  %v4091 = vunpack.c.h.b16 %v3084
  %v4092 = vunpack.c.l.b16 %v3085
  %v4093 = vunpack.c.h.b16 %v3085
  %v4094 = vunpack.c.l.b16 %v3086
  %v4095 = vunpack.c.h.b16 %v3086
  %v4096 = vunpack.c.l.b16 %v3087
  %v4097 = vunpack.c.h.b16 %v3087
  %v4098 = vunpack.c.l.b16 %v3088
  %v4099 = vunpack.c.h.b16 %v3088
  %v4100 = vunpack.c.l.b16 %v3089
  %v4101 = vunpack.c.h.b16 %v3089
  %v4102 = vunpack.c.l.b16 %v3090
  %v4103 = vunpack.c.h.b16 %v3090
  %v4104 = vunpack.c.l.b16 %v3091
  %v4105 = vunpack.c.h.b16 %v3091
  %v4106 = vunpack.c.l.b16 %v3092
  %v4107 = vunpack.c.h.b16 %v3092
  %v4108 = vpack.c.b16 %v4014, %v4012
  %v4109 = vpack.c.b16 %v4015, %v4013
  %v4110 = vpack.c.b16 %v4018, %v4016
  %v4111 = vpack.c.b16 %v4019, %v4017
  %v4112 = vpack.c.b16 %v4022, %v4020
  %v4113 = vpack.c.b16 %v4023, %v4021
  %v4114 = vpack.c.b16 %v4026, %v4024
  %v4115 = vpack.c.b16 %v4027, %v4025
  %v4116 = vpack.c.b16 %v4030, %v4028
  %v4117 = vpack.c.b16 %v4031, %v4029
  %v4118 = vpack.c.b16 %v4034, %v4032
  %v4119 = vpack.c.b16 %v4035, %v4033
  %v4120 = vpack.c.b16 %v4038, %v4036
  %v4121 = vpack.c.b16 %v4039, %v4037
  %v4122 = vpack.c.b16 %v4042, %v4040
  %v4123 = vpack.c.b16 %v4043, %v4041
  %v4124 = vpack.c.b16 %v4046, %v4044
  %v4125 = vpack.c.b16 %v4047, %v4045
  %v4126 = vpack.c.b16 %v4050, %v4048
  %v4127 = vpack.c.b16 %v4051, %v4049
  %v4128 = vpack.c.b16 %v4054, %v4052
  %v4129 = vpack.c.b16 %v4055, %v4053
  %v4130 = vpack.c.b16 %v4058, %v4056
  %v4131 = vpack.c.b16 %v4059, %v4057
  %v4132 = vpack.c.b16 %v4062, %v4060
  %v4133 = vpack.c.b16 %v4063, %v4061
  %v4134 = vpack.c.b16 %v4066, %v4064
  %v4135 = vpack.c.b16 %v4067, %v4065
  %v4136 = vpack.c.b16 %v4070, %v4068
  %v4137 = vpack.c.b16 %v4071, %v4069
  %v4138 = vpack.c.b16 %v4074, %v4072
  %v4139 = vpack.c.b16 %v4075, %v4073
  %v4140 = vpack.c.b16 %v4078, %v4076
  %v4141 = vpack.c.b16 %v4079, %v4077
  %v4142 = vpack.c.b16 %v4082, %v4080
  %v4143 = vpack.c.b16 %v4083, %v4081
  %v4144 = vpack.c.b16 %v4086, %v4084
  %v4145 = vpack.c.b16 %v4087, %v4085
  %v4146 = vpack.c.b16 %v4090, %v4088
  %v4147 = vpack.c.b16 %v4091, %v4089
  %v4148 = vpack.c.b16 %v4094, %v4092
  %v4149 = vpack.c.b16 %v4095, %v4093
  %v4150 = vpack.c.b16 %v4098, %v4096
  %v4151 = vpack.c.b16 %v4099, %v4097
  %v4152 = vpack.c.b16 %v4102, %v4100
  %v4153 = vpack.c.b16 %v4103, %v4101
  %v4154 = vpack.c.b16 %v4106, %v4104
  %v4155 = vpack.c.b16 %v4107, %v4105
  %4204 = vmatpush.bf16.msra.mxu0 %v4122
  %4205 = vmatpush.bf16.msra.mxu0 %v4120
  %4206 = vmatpush.bf16.msra.mxu0 %v4118
  %4207 = vmatpush.bf16.msra.mxu0 %v4116
  %4208 = vmatpush.bf16.msra.mxu0 %v4114
  %4209 = vmatpush.bf16.msra.mxu0 %v4112
  %4210 = vmatpush.bf16.msra.mxu0 %v4110
  %4211 = vmatpush.bf16.msra.mxu0 %v4108
  %4212 = vmatmul.bf16.gmra.mxu0 %v3916
  %v4213 = vpop.f32.mrf.mxu0
  %v4214 = vadd.f32 %v3650, %v4213
  %v4215 = vpop.f32.mrf.mxu0
  %v4216 = vadd.f32 %v3652, %v4215
  %4217 = vmatmul.bf16.gmra.mxu0 %v3919
  %v4218 = vpop.f32.mrf.mxu0
  %v4219 = vadd.f32 %v3655, %v4218
  %v4220 = vpop.f32.mrf.mxu0
  %v4221 = vadd.f32 %v3657, %v4220
  %4222 = vmatmul.bf16.gmra.mxu0 %v3922
  %v4223 = vpop.f32.mrf.mxu0
  %v4224 = vadd.f32 %v3660, %v4223
  %v4225 = vpop.f32.mrf.mxu0
  %v4226 = vadd.f32 %v3662, %v4225
  %4227 = vmatmul.bf16.gmra.mxu0 %v3925
  %v4228 = vpop.f32.mrf.mxu0
  %v4229 = vadd.f32 %v3665, %v4228
  %v4230 = vpop.f32.mrf.mxu0
  %v4231 = vadd.f32 %v3667, %v4230
  %4232 = vmatmul.bf16.gmra.mxu0 %v3928
  %v4233 = vpop.f32.mrf.mxu0
  %v4234 = vadd.f32 %v3670, %v4233
  %v4235 = vpop.f32.mrf.mxu0
  %v4236 = vadd.f32 %v3672, %v4235
  %4237 = vmatmul.bf16.gmra.mxu0 %v3931
  %v4238 = vpop.f32.mrf.mxu0
  %v4239 = vadd.f32 %v3675, %v4238
  %v4240 = vpop.f32.mrf.mxu0
  %v4241 = vadd.f32 %v3677, %v4240
  %4242 = vmatmul.bf16.gmra.mxu0 %v3934
  %v4243 = vpop.f32.mrf.mxu0
  %v4244 = vadd.f32 %v3680, %v4243
  %v4245 = vpop.f32.mrf.mxu0
  %v4246 = vadd.f32 %v3682, %v4245
  %4247 = vmatmul.bf16.gmra.mxu0 %v3937
  %v4248 = vpop.f32.mrf.mxu0
  %v4249 = vadd.f32 %v3685, %v4248
  %v4250 = vpop.f32.mrf.mxu0
  %v4251 = vadd.f32 %v3687, %v4250
  %4252 = vdwg.mxu0
  %4253 = vmatpush.bf16.msra.mxu0 %v4138
  %4254 = vmatpush.bf16.msra.mxu0 %v4136
  %4255 = vmatpush.bf16.msra.mxu0 %v4134
  %4256 = vmatpush.bf16.msra.mxu0 %v4132
  %4257 = vmatpush.bf16.msra.mxu0 %v4130
  %4258 = vmatpush.bf16.msra.mxu0 %v4128
  %4259 = vmatpush.bf16.msra.mxu0 %v4126
  %4260 = vmatpush.bf16.msra.mxu0 %v4124
  %4261 = vmatmul.bf16.gmra.mxu0 %v3917
  %v4262 = vpop.f32.mrf.mxu0
  %v4263 = vadd.f32 %v4214, %v4262
  %v4264 = vpop.f32.mrf.mxu0
  %v4265 = vadd.f32 %v4216, %v4264
  %4266 = vmatmul.bf16.gmra.mxu0 %v3920
  %v4267 = vpop.f32.mrf.mxu0
  %v4268 = vadd.f32 %v4219, %v4267
  %v4269 = vpop.f32.mrf.mxu0
  %v4270 = vadd.f32 %v4221, %v4269
  %4271 = vmatmul.bf16.gmra.mxu0 %v3923
  %v4272 = vpop.f32.mrf.mxu0
  %v4273 = vadd.f32 %v4224, %v4272
  %v4274 = vpop.f32.mrf.mxu0
  %v4275 = vadd.f32 %v4226, %v4274
  %4276 = vmatmul.bf16.gmra.mxu0 %v3926
  %v4277 = vpop.f32.mrf.mxu0
  %v4278 = vadd.f32 %v4229, %v4277
  %v4279 = vpop.f32.mrf.mxu0
  %v4280 = vadd.f32 %v4231, %v4279
  %4281 = vmatmul.bf16.gmra.mxu0 %v3929
  %v4282 = vpop.f32.mrf.mxu0
  %v4283 = vadd.f32 %v4234, %v4282
  %v4284 = vpop.f32.mrf.mxu0
  %v4285 = vadd.f32 %v4236, %v4284
  %4286 = vmatmul.bf16.gmra.mxu0 %v3932
  %v4287 = vpop.f32.mrf.mxu0
  %v4288 = vadd.f32 %v4239, %v4287
  %v4289 = vpop.f32.mrf.mxu0
  %v4290 = vadd.f32 %v4241, %v4289
  %4291 = vmatmul.bf16.gmra.mxu0 %v3935
  %v4292 = vpop.f32.mrf.mxu0
  %v4293 = vadd.f32 %v4244, %v4292
  %v4294 = vpop.f32.mrf.mxu0
  %v4295 = vadd.f32 %v4246, %v4294
  %4296 = vmatmul.bf16.gmra.mxu0 %v3938
  %v4297 = vpop.f32.mrf.mxu0
  %v4298 = vadd.f32 %v4249, %v4297
  %v4299 = vpop.f32.mrf.mxu0
  %v4300 = vadd.f32 %v4251, %v4299
  %4301 = vdwg.mxu0
  %4302 = vmatpush.bf16.msra.mxu0 %v4154
  %4303 = vmatpush.bf16.msra.mxu0 %v4152
  %4304 = vmatpush.bf16.msra.mxu0 %v4150
  %4305 = vmatpush.bf16.msra.mxu0 %v4148
  %4306 = vmatpush.bf16.msra.mxu0 %v4146
  %4307 = vmatpush.bf16.msra.mxu0 %v4144
  %4308 = vmatpush.bf16.msra.mxu0 %v4142
  %4309 = vmatpush.bf16.msra.mxu0 %v4140
  %4310 = vmatmul.bf16.gmra.mxu0 %v3918
  %v4311 = vpop.f32.mrf.mxu0
  %v4312 = vadd.f32 %v4263, %v4311
  %v4313 = vpop.f32.mrf.mxu0
  %v4314 = vadd.f32 %v4265, %v4313
  %4315 = vmatmul.bf16.gmra.mxu0 %v3921
  %v4316 = vpop.f32.mrf.mxu0
  %v4317 = vadd.f32 %v4268, %v4316
  %v4318 = vpop.f32.mrf.mxu0
  %v4319 = vadd.f32 %v4270, %v4318
  %4320 = vmatmul.bf16.gmra.mxu0 %v3924
  %v4321 = vpop.f32.mrf.mxu0
  %v4322 = vadd.f32 %v4273, %v4321
  %v4323 = vpop.f32.mrf.mxu0
  %v4324 = vadd.f32 %v4275, %v4323
  %4325 = vmatmul.bf16.gmra.mxu0 %v3927
  %v4326 = vpop.f32.mrf.mxu0
  %v4327 = vadd.f32 %v4278, %v4326
  %v4328 = vpop.f32.mrf.mxu0
  %v4329 = vadd.f32 %v4280, %v4328
  %4330 = vmatmul.bf16.gmra.mxu0 %v3930
  %v4331 = vpop.f32.mrf.mxu0
  %v4332 = vadd.f32 %v4283, %v4331
  %v4333 = vpop.f32.mrf.mxu0
  %v4334 = vadd.f32 %v4285, %v4333
  %4335 = vmatmul.bf16.gmra.mxu0 %v3933
  %v4336 = vpop.f32.mrf.mxu0
  %v4337 = vadd.f32 %v4288, %v4336
  %v4338 = vpop.f32.mrf.mxu0
  %v4339 = vadd.f32 %v4290, %v4338
  %4340 = vmatmul.bf16.gmra.mxu0 %v3936
  %v4341 = vpop.f32.mrf.mxu0
  %v4342 = vadd.f32 %v4293, %v4341
  %v4343 = vpop.f32.mrf.mxu0
  %v4344 = vadd.f32 %v4295, %v4343
  %4345 = vmatmul.bf16.gmra.mxu0 %v3939
  %v4346 = vpop.f32.mrf.mxu0
  %v4347 = vadd.f32 %v4298, %v4346
  %v4348 = vpop.f32.mrf.mxu0
  %v4349 = vadd.f32 %v4300, %v4348
  %4350 = vdwg.mxu0
  %4351 = vmatpush.bf16.msra.mxu0 %v4123
  %4352 = vmatpush.bf16.msra.mxu0 %v4121
  %4353 = vmatpush.bf16.msra.mxu0 %v4119
  %4354 = vmatpush.bf16.msra.mxu0 %v4117
  %4355 = vmatpush.bf16.msra.mxu0 %v4115
  %4356 = vmatpush.bf16.msra.mxu0 %v4113
  %4357 = vmatpush.bf16.msra.mxu0 %v4111
  %4358 = vmatpush.bf16.msra.mxu0 %v4109
  %4359 = vmatmul.bf16.gmra.mxu0 %v3916
  %v4360 = vpop.f32.mrf.mxu0
  %v4361 = vadd.f32 %v3797, %v4360
  %v4362 = vpop.f32.mrf.mxu0
  %v4363 = vadd.f32 %v3799, %v4362
  %4364 = vmatmul.bf16.gmra.mxu0 %v3919
  %v4365 = vpop.f32.mrf.mxu0
  %v4366 = vadd.f32 %v3802, %v4365
  %v4367 = vpop.f32.mrf.mxu0
  %v4368 = vadd.f32 %v3804, %v4367
  %4369 = vmatmul.bf16.gmra.mxu0 %v3922
  %v4370 = vpop.f32.mrf.mxu0
  %v4371 = vadd.f32 %v3807, %v4370
  %v4372 = vpop.f32.mrf.mxu0
  %v4373 = vadd.f32 %v3809, %v4372
  %4374 = vmatmul.bf16.gmra.mxu0 %v3925
  %v4375 = vpop.f32.mrf.mxu0
  %v4376 = vadd.f32 %v3812, %v4375
  %v4377 = vpop.f32.mrf.mxu0
  %v4378 = vadd.f32 %v3814, %v4377
  %4379 = vmatmul.bf16.gmra.mxu0 %v3928
  %v4380 = vpop.f32.mrf.mxu0
  %v4381 = vadd.f32 %v3817, %v4380
  %v4382 = vpop.f32.mrf.mxu0
  %v4383 = vadd.f32 %v3819, %v4382
  %4384 = vmatmul.bf16.gmra.mxu0 %v3931
  %v4385 = vpop.f32.mrf.mxu0
  %v4386 = vadd.f32 %v3822, %v4385
  %v4387 = vpop.f32.mrf.mxu0
  %v4388 = vadd.f32 %v3824, %v4387
  %4389 = vmatmul.bf16.gmra.mxu0 %v3934
  %v4390 = vpop.f32.mrf.mxu0
  %v4391 = vadd.f32 %v3827, %v4390
  %v4392 = vpop.f32.mrf.mxu0
  %v4393 = vadd.f32 %v3829, %v4392
  %4394 = vmatmul.bf16.gmra.mxu0 %v3937
  %v4395 = vpop.f32.mrf.mxu0
  %v4396 = vadd.f32 %v3832, %v4395
  %v4397 = vpop.f32.mrf.mxu0
  %v4398 = vadd.f32 %v3834, %v4397
  %4399 = vdwg.mxu0
  %4400 = vmatpush.bf16.msra.mxu0 %v4139
  %4401 = vmatpush.bf16.msra.mxu0 %v4137
  %4402 = vmatpush.bf16.msra.mxu0 %v4135
  %4403 = vmatpush.bf16.msra.mxu0 %v4133
  %4404 = vmatpush.bf16.msra.mxu0 %v4131
  %4405 = vmatpush.bf16.msra.mxu0 %v4129
  %4406 = vmatpush.bf16.msra.mxu0 %v4127
  %4407 = vmatpush.bf16.msra.mxu0 %v4125
  %4408 = vmatmul.bf16.gmra.mxu0 %v3917
  %v4409 = vpop.f32.mrf.mxu0
  %v4410 = vadd.f32 %v4361, %v4409
  %v4411 = vpop.f32.mrf.mxu0
  %v4412 = vadd.f32 %v4363, %v4411
  %4413 = vmatmul.bf16.gmra.mxu0 %v3920
  %v4414 = vpop.f32.mrf.mxu0
  %v4415 = vadd.f32 %v4366, %v4414
  %v4416 = vpop.f32.mrf.mxu0
  %v4417 = vadd.f32 %v4368, %v4416
  %4418 = vmatmul.bf16.gmra.mxu0 %v3923
  %v4419 = vpop.f32.mrf.mxu0
  %v4420 = vadd.f32 %v4371, %v4419
  %v4421 = vpop.f32.mrf.mxu0
  %v4422 = vadd.f32 %v4373, %v4421
  %4423 = vmatmul.bf16.gmra.mxu0 %v3926
  %v4424 = vpop.f32.mrf.mxu0
  %v4425 = vadd.f32 %v4376, %v4424
  %v4426 = vpop.f32.mrf.mxu0
  %v4427 = vadd.f32 %v4378, %v4426
  %4428 = vmatmul.bf16.gmra.mxu0 %v3929
  %v4429 = vpop.f32.mrf.mxu0
  %v4430 = vadd.f32 %v4381, %v4429
  %v4431 = vpop.f32.mrf.mxu0
  %v4432 = vadd.f32 %v4383, %v4431
  %4433 = vmatmul.bf16.gmra.mxu0 %v3932
  %v4434 = vpop.f32.mrf.mxu0
  %v4435 = vadd.f32 %v4386, %v4434
  %v4436 = vpop.f32.mrf.mxu0
  %v4437 = vadd.f32 %v4388, %v4436
  %4438 = vmatmul.bf16.gmra.mxu0 %v3935
  %v4439 = vpop.f32.mrf.mxu0
  %v4440 = vadd.f32 %v4391, %v4439
  %v4441 = vpop.f32.mrf.mxu0
  %v4442 = vadd.f32 %v4393, %v4441
  %4443 = vmatmul.bf16.gmra.mxu0 %v3938
  %v4444 = vpop.f32.mrf.mxu0
  %v4445 = vadd.f32 %v4396, %v4444
  %v4446 = vpop.f32.mrf.mxu0
  %v4447 = vadd.f32 %v4398, %v4446
  %4448 = vdwg.mxu0
  %4449 = vmatpush.bf16.msra.mxu0 %v4155
  %4450 = vmatpush.bf16.msra.mxu0 %v4153
  %4451 = vmatpush.bf16.msra.mxu0 %v4151
  %4452 = vmatpush.bf16.msra.mxu0 %v4149
  %4453 = vmatpush.bf16.msra.mxu0 %v4147
  %4454 = vmatpush.bf16.msra.mxu0 %v4145
  %4455 = vmatpush.bf16.msra.mxu0 %v4143
  %4456 = vmatpush.bf16.msra.mxu0 %v4141
  %4457 = vmatmul.bf16.gmra.mxu0 %v3918
  %v4458 = vpop.f32.mrf.mxu0
  %v4459 = vadd.f32 %v4410, %v4458
  %v4460 = vpop.f32.mrf.mxu0
  %v4461 = vadd.f32 %v4412, %v4460
  %4462 = vmatmul.bf16.gmra.mxu0 %v3921
  %v4463 = vpop.f32.mrf.mxu0
  %v4464 = vadd.f32 %v4415, %v4463
  %v4465 = vpop.f32.mrf.mxu0
  %v4466 = vadd.f32 %v4417, %v4465
  %4467 = vmatmul.bf16.gmra.mxu0 %v3924
  %v4468 = vpop.f32.mrf.mxu0
  %v4469 = vadd.f32 %v4420, %v4468
  %v4470 = vpop.f32.mrf.mxu0
  %v4471 = vadd.f32 %v4422, %v4470
  %4472 = vmatmul.bf16.gmra.mxu0 %v3927
  %v4473 = vpop.f32.mrf.mxu0
  %v4474 = vadd.f32 %v4425, %v4473
  %v4475 = vpop.f32.mrf.mxu0
  %v4476 = vadd.f32 %v4427, %v4475
  %4477 = vmatmul.bf16.gmra.mxu0 %v3930
  %v4478 = vpop.f32.mrf.mxu0
  %v4479 = vadd.f32 %v4430, %v4478
  %v4480 = vpop.f32.mrf.mxu0
  %v4481 = vadd.f32 %v4432, %v4480
  %4482 = vmatmul.bf16.gmra.mxu0 %v3933
  %v4483 = vpop.f32.mrf.mxu0
  %v4484 = vadd.f32 %v4435, %v4483
  %v4485 = vpop.f32.mrf.mxu0
  %v4486 = vadd.f32 %v4437, %v4485
  %4487 = vmatmul.bf16.gmra.mxu0 %v3936
  %v4488 = vpop.f32.mrf.mxu0
  %v4489 = vadd.f32 %v4440, %v4488
  %v4490 = vpop.f32.mrf.mxu0
  %v4491 = vadd.f32 %v4442, %v4490
  %4492 = vmatmul.bf16.gmra.mxu0 %v3939
  %v4493 = vpop.f32.mrf.mxu0
  %v4494 = vadd.f32 %v4445, %v4493
  %v4495 = vpop.f32.mrf.mxu0
  %v4496 = vadd.f32 %v4447, %v4495
  %4497 = vdwg.mxu0
  %s4498 = scalar_lea.vmem [#allocation3], 24
  %v4499 = vld [vmem:[%s4498] sm:$0xff]
  %v4500 = vld [vmem:[%s4498 + $0x8] sm:$0xf]
  %v4501 = vld [vmem:[%s4498 + $0xc] sm:$0xff]
  %v4502 = vld [vmem:[%s4498 + $0x14] sm:$0xf]
  %v4503 = vld [vmem:[%s4498 + $0x18] sm:$0xff]
  %v4504 = vld [vmem:[%s4498 + $0x20] sm:$0xf]
  %v4505 = vld [vmem:[%s4498 + $0x24] sm:$0xff]
  %v4506 = vld [vmem:[%s4498 + $0x2c] sm:$0xf]
  %v4507 = vld [vmem:[%s4498 + $0x30] sm:$0xff]
  %v4508 = vld [vmem:[%s4498 + $0x38] sm:$0xf]
  %v4509 = vld [vmem:[%s4498 + $0x3c] sm:$0xff]
  %v4510 = vld [vmem:[%s4498 + $0x44] sm:$0xf]
  %v4511 = vld [vmem:[%s4498 + $0x48] sm:$0xff]
  %v4512 = vld [vmem:[%s4498 + $0x50] sm:$0xf]
  %v4513 = vld [vmem:[%s4498 + $0x54] sm:$0xff]
  %v4514 = vld [vmem:[%s4498 + $0x5c] sm:$0xf]
  %v4515 = vld [vmem:[%s4498 + $0x78] sm:$0xff]
  %v4516 = vld [vmem:[%s4498 + $0x80] sm:$0xf]
  %v4517 = vld [vmem:[%s4498 + $0x84] sm:$0xff]
  %v4518 = vld [vmem:[%s4498 + $0x8c] sm:$0xf]
  %v4519 = vld [vmem:[%s4498 + $0x90] sm:$0xff]
  %v4520 = vld [vmem:[%s4498 + $0x98] sm:$0xf]
  %v4521 = vld [vmem:[%s4498 + $0x9c] sm:$0xff]
  %v4522 = vld [vmem:[%s4498 + $0xa4] sm:$0xf]
  %v4523 = vld [vmem:[%s4498 + $0xa8] sm:$0xff]
  %v4524 = vld [vmem:[%s4498 + $0xb0] sm:$0xf]
  %v4525 = vld [vmem:[%s4498 + $0xb4] sm:$0xff]
  %v4526 = vld [vmem:[%s4498 + $0xbc] sm:$0xf]
  %v4527 = vld [vmem:[%s4498 + $0xc0] sm:$0xff]
  %v4528 = vld [vmem:[%s4498 + $0xc8] sm:$0xf]
  %v4529 = vld [vmem:[%s4498 + $0xcc] sm:$0xff]
  %v4530 = vld [vmem:[%s4498 + $0xd4] sm:$0xf]
  %v4531 = vld [vmem:[%s7 + $0x300] sm:$0xff]
  %v4532 = vld [vmem:[%s7 + $0x308] sm:$0xff]
  %v4533 = vld [vmem:[%s7 + $0x310] sm:$0xff]
  %v4534 = vld [vmem:[%s7 + $0x318] sm:$0xff]
  %v4535 = vld [vmem:[%s7 + $0x320] sm:$0xff]
  %v4536 = vld [vmem:[%s7 + $0x328] sm:$0xff]
  %v4537 = vld [vmem:[%s7 + $0x330] sm:$0xff]
  %v4538 = vld [vmem:[%s7 + $0x338] sm:$0xff]
  %v4539 = vld [vmem:[%s7 + $0x340] sm:$0xff]
  %v4540 = vld [vmem:[%s7 + $0x348] sm:$0xff]
  %v4541 = vld [vmem:[%s7 + $0x350] sm:$0xff]
  %v4542 = vld [vmem:[%s7 + $0x358] sm:$0xff]
  %v4543 = vld [vmem:[%s7 + $0x360] sm:$0xff]
  %v4544 = vld [vmem:[%s7 + $0x368] sm:$0xff]
  %v4545 = vld [vmem:[%s7 + $0x370] sm:$0xff]
  %v4546 = vld [vmem:[%s7 + $0x378] sm:$0xff]
  %v4547 = vld [vmem:[%s7 + $0x380] sm:$0xff]
  %v4548 = vld [vmem:[%s7 + $0x388] sm:$0xff]
  %v4549 = vld [vmem:[%s7 + $0x390] sm:$0xff]
  %v4550 = vld [vmem:[%s7 + $0x398] sm:$0xff]
  %v4551 = vld [vmem:[%s7 + $0x3a0] sm:$0xff]
  %v4552 = vld [vmem:[%s7 + $0x3a8] sm:$0xff]
  %v4553 = vld [vmem:[%s7 + $0x3b0] sm:$0xff]
  %v4554 = vld [vmem:[%s7 + $0x3b8] sm:$0xff]
  %v4555 = vld [vmem:[%s7 + $0x3c0] sm:$0xff]
  %v4556 = vld [vmem:[%s7 + $0x3c8] sm:$0xff]
  %v4557 = vld [vmem:[%s7 + $0x3d0] sm:$0xff]
  %v4558 = vld [vmem:[%s7 + $0x3d8] sm:$0xff]
  %v4559 = vld [vmem:[%s7 + $0x3e0] sm:$0xff]
  %v4560 = vld [vmem:[%s7 + $0x3e8] sm:$0xff]
  %v4561 = vld [vmem:[%s7 + $0x3f0] sm:$0xff]
  %v4562 = vld [vmem:[%s7 + $0x3f8] sm:$0xff]
  %v4563 = vld [vmem:[%s7 + $0x400] sm:$0xff]
  %v4564 = vld [vmem:[%s7 + $0x408] sm:$0xff]
  %v4565 = vld [vmem:[%s7 + $0x410] sm:$0xff]
  %v4566 = vld [vmem:[%s7 + $0x418] sm:$0xff]
  %v4567 = vld [vmem:[%s7 + $0x420] sm:$0xff]
  %v4568 = vld [vmem:[%s7 + $0x428] sm:$0xff]
  %v4569 = vld [vmem:[%s7 + $0x430] sm:$0xff]
  %v4570 = vld [vmem:[%s7 + $0x438] sm:$0xff]
  %v4571 = vld [vmem:[%s7 + $0x440] sm:$0xff]
  %v4572 = vld [vmem:[%s7 + $0x448] sm:$0xff]
  %v4573 = vld [vmem:[%s7 + $0x450] sm:$0xff]
  %v4574 = vld [vmem:[%s7 + $0x458] sm:$0xff]
  %v4575 = vld [vmem:[%s7 + $0x460] sm:$0xff]
  %v4576 = vld [vmem:[%s7 + $0x468] sm:$0xff]
  %v4577 = vld [vmem:[%s7 + $0x470] sm:$0xff]
  %v4578 = vld [vmem:[%s7 + $0x478] sm:$0xff]
  %v4611 = vunpack.c.l.b16 %v4499
  %v4612 = vunpack.c.h.b16 %v4499
  %v4613 = vunpack.c.l.b16 %v4500
  %v4614 = vunpack.c.l.b16 %v4501
  %v4615 = vunpack.c.h.b16 %v4501
  %v4616 = vunpack.c.l.b16 %v4502
  %v4617 = vunpack.c.l.b16 %v4503
  %v4618 = vunpack.c.h.b16 %v4503
  %v4619 = vunpack.c.l.b16 %v4504
  %v4620 = vunpack.c.l.b16 %v4505
  %v4621 = vunpack.c.h.b16 %v4505
  %v4622 = vunpack.c.l.b16 %v4506
  %v4623 = vunpack.c.l.b16 %v4507
  %v4624 = vunpack.c.h.b16 %v4507
  %v4625 = vunpack.c.l.b16 %v4508
  %v4626 = vunpack.c.l.b16 %v4509
  %v4627 = vunpack.c.h.b16 %v4509
  %v4628 = vunpack.c.l.b16 %v4510
  %v4629 = vunpack.c.l.b16 %v4511
  %v4630 = vunpack.c.h.b16 %v4511
  %v4631 = vunpack.c.l.b16 %v4512
  %v4632 = vunpack.c.l.b16 %v4513
  %v4633 = vunpack.c.h.b16 %v4513
  %v4634 = vunpack.c.l.b16 %v4514
  %v4635 = vunpack.c.l.b16 %v4515
  %v4636 = vunpack.c.h.b16 %v4515
  %v4637 = vunpack.c.l.b16 %v4516
  %v4638 = vunpack.c.l.b16 %v4517
  %v4639 = vunpack.c.h.b16 %v4517
  %v4640 = vunpack.c.l.b16 %v4518
  %v4641 = vunpack.c.l.b16 %v4519
  %v4642 = vunpack.c.h.b16 %v4519
  %v4643 = vunpack.c.l.b16 %v4520
  %v4644 = vunpack.c.l.b16 %v4521
  %v4645 = vunpack.c.h.b16 %v4521
  %v4646 = vunpack.c.l.b16 %v4522
  %v4647 = vunpack.c.l.b16 %v4523
  %v4648 = vunpack.c.h.b16 %v4523
  %v4649 = vunpack.c.l.b16 %v4524
  %v4650 = vunpack.c.l.b16 %v4525
  %v4651 = vunpack.c.h.b16 %v4525
  %v4652 = vunpack.c.l.b16 %v4526
  %v4653 = vunpack.c.l.b16 %v4527
  %v4654 = vunpack.c.h.b16 %v4527
  %v4655 = vunpack.c.l.b16 %v4528
  %v4656 = vunpack.c.l.b16 %v4529
  %v4657 = vunpack.c.h.b16 %v4529
  %v4658 = vunpack.c.l.b16 %v4530
  %v4659 = vpack.c.b16 %v4614, %v4611
  %v4660 = vpack.c.b16 %v4615, %v4612
  %v4661 = vpack.c.b16 %v4616, %v4613
  %v4662 = vpack.c.b16 %v4620, %v4617
  %v4663 = vpack.c.b16 %v4621, %v4618
  %v4664 = vpack.c.b16 %v4622, %v4619
  %v4665 = vpack.c.b16 %v4626, %v4623
  %v4666 = vpack.c.b16 %v4627, %v4624
  %v4667 = vpack.c.b16 %v4628, %v4625
  %v4668 = vpack.c.b16 %v4632, %v4629
  %v4669 = vpack.c.b16 %v4633, %v4630
  %v4670 = vpack.c.b16 %v4634, %v4631
  %v4671 = vpack.c.b16 %v4638, %v4635
  %v4672 = vpack.c.b16 %v4639, %v4636
  %v4673 = vpack.c.b16 %v4640, %v4637
  %v4674 = vpack.c.b16 %v4644, %v4641
  %v4675 = vpack.c.b16 %v4645, %v4642
  %v4676 = vpack.c.b16 %v4646, %v4643
  %v4677 = vpack.c.b16 %v4650, %v4647
  %v4678 = vpack.c.b16 %v4651, %v4648
  %v4679 = vpack.c.b16 %v4652, %v4649
  %v4680 = vpack.c.b16 %v4656, %v4653
  %v4681 = vpack.c.b16 %v4657, %v4654
  %v4682 = vpack.c.b16 %v4658, %v4655
  %v4755 = vunpack.c.l.b16 %v4531
  %v4756 = vunpack.c.h.b16 %v4531
  %v4757 = vunpack.c.l.b16 %v4532
  %v4758 = vunpack.c.h.b16 %v4532
  %v4759 = vunpack.c.l.b16 %v4533
  %v4760 = vunpack.c.h.b16 %v4533
  %v4761 = vunpack.c.l.b16 %v4534
  %v4762 = vunpack.c.h.b16 %v4534
  %v4763 = vunpack.c.l.b16 %v4535
  %v4764 = vunpack.c.h.b16 %v4535
  %v4765 = vunpack.c.l.b16 %v4536
  %v4766 = vunpack.c.h.b16 %v4536
  %v4767 = vunpack.c.l.b16 %v4537
  %v4768 = vunpack.c.h.b16 %v4537
  %v4769 = vunpack.c.l.b16 %v4538
  %v4770 = vunpack.c.h.b16 %v4538
  %v4771 = vunpack.c.l.b16 %v4539
  %v4772 = vunpack.c.h.b16 %v4539
  %v4773 = vunpack.c.l.b16 %v4540
  %v4774 = vunpack.c.h.b16 %v4540
  %v4775 = vunpack.c.l.b16 %v4541
  %v4776 = vunpack.c.h.b16 %v4541
  %v4777 = vunpack.c.l.b16 %v4542
  %v4778 = vunpack.c.h.b16 %v4542
  %v4779 = vunpack.c.l.b16 %v4543
  %v4780 = vunpack.c.h.b16 %v4543
  %v4781 = vunpack.c.l.b16 %v4544
  %v4782 = vunpack.c.h.b16 %v4544
  %v4783 = vunpack.c.l.b16 %v4545
  %v4784 = vunpack.c.h.b16 %v4545
  %v4785 = vunpack.c.l.b16 %v4546
  %v4786 = vunpack.c.h.b16 %v4546
  %v4787 = vunpack.c.l.b16 %v4547
  %v4788 = vunpack.c.h.b16 %v4547
  %v4789 = vunpack.c.l.b16 %v4548
  %v4790 = vunpack.c.h.b16 %v4548
  %v4791 = vunpack.c.l.b16 %v4549
  %v4792 = vunpack.c.h.b16 %v4549
  %v4793 = vunpack.c.l.b16 %v4550
  %v4794 = vunpack.c.h.b16 %v4550
  %v4795 = vunpack.c.l.b16 %v4551
  %v4796 = vunpack.c.h.b16 %v4551
  %v4797 = vunpack.c.l.b16 %v4552
  %v4798 = vunpack.c.h.b16 %v4552
  %v4799 = vunpack.c.l.b16 %v4553
  %v4800 = vunpack.c.h.b16 %v4553
  %v4801 = vunpack.c.l.b16 %v4554
  %v4802 = vunpack.c.h.b16 %v4554
  %v4803 = vunpack.c.l.b16 %v4555
  %v4804 = vunpack.c.h.b16 %v4555
  %v4805 = vunpack.c.l.b16 %v4556
  %v4806 = vunpack.c.h.b16 %v4556
  %v4807 = vunpack.c.l.b16 %v4557
  %v4808 = vunpack.c.h.b16 %v4557
  %v4809 = vunpack.c.l.b16 %v4558
  %v4810 = vunpack.c.h.b16 %v4558
  %v4811 = vunpack.c.l.b16 %v4559
  %v4812 = vunpack.c.h.b16 %v4559
  %v4813 = vunpack.c.l.b16 %v4560
  %v4814 = vunpack.c.h.b16 %v4560
  %v4815 = vunpack.c.l.b16 %v4561
  %v4816 = vunpack.c.h.b16 %v4561
  %v4817 = vunpack.c.l.b16 %v4562
  %v4818 = vunpack.c.h.b16 %v4562
  %v4819 = vunpack.c.l.b16 %v4563
  %v4820 = vunpack.c.h.b16 %v4563
  %v4821 = vunpack.c.l.b16 %v4564
  %v4822 = vunpack.c.h.b16 %v4564
  %v4823 = vunpack.c.l.b16 %v4565
  %v4824 = vunpack.c.h.b16 %v4565
  %v4825 = vunpack.c.l.b16 %v4566
  %v4826 = vunpack.c.h.b16 %v4566
  %v4827 = vunpack.c.l.b16 %v4567
  %v4828 = vunpack.c.h.b16 %v4567
  %v4829 = vunpack.c.l.b16 %v4568
  %v4830 = vunpack.c.h.b16 %v4568
  %v4831 = vunpack.c.l.b16 %v4569
  %v4832 = vunpack.c.h.b16 %v4569
  %v4833 = vunpack.c.l.b16 %v4570
  %v4834 = vunpack.c.h.b16 %v4570
  %v4835 = vunpack.c.l.b16 %v4571
  %v4836 = vunpack.c.h.b16 %v4571
  %v4837 = vunpack.c.l.b16 %v4572
  %v4838 = vunpack.c.h.b16 %v4572
  %v4839 = vunpack.c.l.b16 %v4573
  %v4840 = vunpack.c.h.b16 %v4573
  %v4841 = vunpack.c.l.b16 %v4574
  %v4842 = vunpack.c.h.b16 %v4574
  %v4843 = vunpack.c.l.b16 %v4575
  %v4844 = vunpack.c.h.b16 %v4575
  %v4845 = vunpack.c.l.b16 %v4576
  %v4846 = vunpack.c.h.b16 %v4576
  %v4847 = vunpack.c.l.b16 %v4577
  %v4848 = vunpack.c.h.b16 %v4577
  %v4849 = vunpack.c.l.b16 %v4578
  %v4850 = vunpack.c.h.b16 %v4578
  %v4851 = vpack.c.b16 %v4757, %v4755
  %v4852 = vpack.c.b16 %v4758, %v4756
  %v4853 = vpack.c.b16 %v4761, %v4759
  %v4854 = vpack.c.b16 %v4762, %v4760
  %v4855 = vpack.c.b16 %v4765, %v4763
  %v4856 = vpack.c.b16 %v4766, %v4764
  %v4857 = vpack.c.b16 %v4769, %v4767
  %v4858 = vpack.c.b16 %v4770, %v4768
  %v4859 = vpack.c.b16 %v4773, %v4771
  %v4860 = vpack.c.b16 %v4774, %v4772
  %v4861 = vpack.c.b16 %v4777, %v4775
  %v4862 = vpack.c.b16 %v4778, %v4776
  %v4863 = vpack.c.b16 %v4781, %v4779
  %v4864 = vpack.c.b16 %v4782, %v4780
  %v4865 = vpack.c.b16 %v4785, %v4783
  %v4866 = vpack.c.b16 %v4786, %v4784
  %v4867 = vpack.c.b16 %v4789, %v4787
  %v4868 = vpack.c.b16 %v4790, %v4788
  %v4869 = vpack.c.b16 %v4793, %v4791
  %v4870 = vpack.c.b16 %v4794, %v4792
  %v4871 = vpack.c.b16 %v4797, %v4795
  %v4872 = vpack.c.b16 %v4798, %v4796
  %v4873 = vpack.c.b16 %v4801, %v4799
  %v4874 = vpack.c.b16 %v4802, %v4800
  %v4875 = vpack.c.b16 %v4805, %v4803
  %v4876 = vpack.c.b16 %v4806, %v4804
  %v4877 = vpack.c.b16 %v4809, %v4807
  %v4878 = vpack.c.b16 %v4810, %v4808
  %v4879 = vpack.c.b16 %v4813, %v4811
  %v4880 = vpack.c.b16 %v4814, %v4812
  %v4881 = vpack.c.b16 %v4817, %v4815
  %v4882 = vpack.c.b16 %v4818, %v4816
  %v4883 = vpack.c.b16 %v4821, %v4819
  %v4884 = vpack.c.b16 %v4822, %v4820
  %v4885 = vpack.c.b16 %v4825, %v4823
  %v4886 = vpack.c.b16 %v4826, %v4824
  %v4887 = vpack.c.b16 %v4829, %v4827
  %v4888 = vpack.c.b16 %v4830, %v4828
  %v4889 = vpack.c.b16 %v4833, %v4831
  %v4890 = vpack.c.b16 %v4834, %v4832
  %v4891 = vpack.c.b16 %v4837, %v4835
  %v4892 = vpack.c.b16 %v4838, %v4836
  %v4893 = vpack.c.b16 %v4841, %v4839
  %v4894 = vpack.c.b16 %v4842, %v4840
  %v4895 = vpack.c.b16 %v4845, %v4843
  %v4896 = vpack.c.b16 %v4846, %v4844
  %v4897 = vpack.c.b16 %v4849, %v4847
  %v4898 = vpack.c.b16 %v4850, %v4848
  %4947 = vmatpush.bf16.msra.mxu0 %v4865
  %4948 = vmatpush.bf16.msra.mxu0 %v4863
  %4949 = vmatpush.bf16.msra.mxu0 %v4861
  %4950 = vmatpush.bf16.msra.mxu0 %v4859
  %4951 = vmatpush.bf16.msra.mxu0 %v4857
  %4952 = vmatpush.bf16.msra.mxu0 %v4855
  %4953 = vmatpush.bf16.msra.mxu0 %v4853
  %4954 = vmatpush.bf16.msra.mxu0 %v4851
  %4955 = vmatmul.bf16.gmra.mxu0 %v4659
  %v4956 = vpop.f32.mrf.mxu0
  %v4957 = vadd.f32 0.0, %v4956
  %v4958 = vpop.f32.mrf.mxu0
  %v4959 = vadd.f32 0.0, %v4958
  %4960 = vmatmul.bf16.gmra.mxu0 %v4662
  %v4961 = vpop.f32.mrf.mxu0
  %v4962 = vadd.f32 0.0, %v4961
  %v4963 = vpop.f32.mrf.mxu0
  %v4964 = vadd.f32 0.0, %v4963
  %4965 = vmatmul.bf16.gmra.mxu0 %v4665
  %v4966 = vpop.f32.mrf.mxu0
  %v4967 = vadd.f32 0.0, %v4966
  %v4968 = vpop.f32.mrf.mxu0
  %v4969 = vadd.f32 0.0, %v4968
  %4970 = vmatmul.bf16.gmra.mxu0 %v4668
  %v4971 = vpop.f32.mrf.mxu0
  %v4972 = vadd.f32 0.0, %v4971
  %v4973 = vpop.f32.mrf.mxu0
  %v4974 = vadd.f32 0.0, %v4973
  %4975 = vmatmul.bf16.gmra.mxu0 %v4671
  %v4976 = vpop.f32.mrf.mxu0
  %v4977 = vadd.f32 0.0, %v4976
  %v4978 = vpop.f32.mrf.mxu0
  %v4979 = vadd.f32 0.0, %v4978
  %4980 = vmatmul.bf16.gmra.mxu0 %v4674
  %v4981 = vpop.f32.mrf.mxu0
  %v4982 = vadd.f32 0.0, %v4981
  %v4983 = vpop.f32.mrf.mxu0
  %v4984 = vadd.f32 0.0, %v4983
  %4985 = vmatmul.bf16.gmra.mxu0 %v4677
  %v4986 = vpop.f32.mrf.mxu0
  %v4987 = vadd.f32 0.0, %v4986
  %v4988 = vpop.f32.mrf.mxu0
  %v4989 = vadd.f32 0.0, %v4988
  %4990 = vmatmul.bf16.gmra.mxu0 %v4680
  %v4991 = vpop.f32.mrf.mxu0
  %v4992 = vadd.f32 0.0, %v4991
  %v4993 = vpop.f32.mrf.mxu0
  %v4994 = vadd.f32 0.0, %v4993
  %4995 = vdwg.mxu0
  %4996 = vmatpush.bf16.msra.mxu0 %v4881
  %4997 = vmatpush.bf16.msra.mxu0 %v4879
  %4998 = vmatpush.bf16.msra.mxu0 %v4877
  %4999 = vmatpush.bf16.msra.mxu0 %v4875
  %5000 = vmatpush.bf16.msra.mxu0 %v4873
  %5001 = vmatpush.bf16.msra.mxu0 %v4871
  %5002 = vmatpush.bf16.msra.mxu0 %v4869
  %5003 = vmatpush.bf16.msra.mxu0 %v4867
  %5004 = vmatmul.bf16.gmra.mxu0 %v4660
  %v5005 = vpop.f32.mrf.mxu0
  %v5006 = vadd.f32 %v4957, %v5005
  %v5007 = vpop.f32.mrf.mxu0
  %v5008 = vadd.f32 %v4959, %v5007
  %5009 = vmatmul.bf16.gmra.mxu0 %v4663
  %v5010 = vpop.f32.mrf.mxu0
  %v5011 = vadd.f32 %v4962, %v5010
  %v5012 = vpop.f32.mrf.mxu0
  %v5013 = vadd.f32 %v4964, %v5012
  %5014 = vmatmul.bf16.gmra.mxu0 %v4666
  %v5015 = vpop.f32.mrf.mxu0
  %v5016 = vadd.f32 %v4967, %v5015
  %v5017 = vpop.f32.mrf.mxu0
  %v5018 = vadd.f32 %v4969, %v5017
  %5019 = vmatmul.bf16.gmra.mxu0 %v4669
  %v5020 = vpop.f32.mrf.mxu0
  %v5021 = vadd.f32 %v4972, %v5020
  %v5022 = vpop.f32.mrf.mxu0
  %v5023 = vadd.f32 %v4974, %v5022
  %5024 = vmatmul.bf16.gmra.mxu0 %v4672
  %v5025 = vpop.f32.mrf.mxu0
  %v5026 = vadd.f32 %v4977, %v5025
  %v5027 = vpop.f32.mrf.mxu0
  %v5028 = vadd.f32 %v4979, %v5027
  %5029 = vmatmul.bf16.gmra.mxu0 %v4675
  %v5030 = vpop.f32.mrf.mxu0
  %v5031 = vadd.f32 %v4982, %v5030
  %v5032 = vpop.f32.mrf.mxu0
  %v5033 = vadd.f32 %v4984, %v5032
  %5034 = vmatmul.bf16.gmra.mxu0 %v4678
  %v5035 = vpop.f32.mrf.mxu0
  %v5036 = vadd.f32 %v4987, %v5035
  %v5037 = vpop.f32.mrf.mxu0
  %v5038 = vadd.f32 %v4989, %v5037
  %5039 = vmatmul.bf16.gmra.mxu0 %v4681
  %v5040 = vpop.f32.mrf.mxu0
  %v5041 = vadd.f32 %v4992, %v5040
  %v5042 = vpop.f32.mrf.mxu0
  %v5043 = vadd.f32 %v4994, %v5042
  %5044 = vdwg.mxu0
  %5045 = vmatpush.bf16.msra.mxu0 %v4897
  %5046 = vmatpush.bf16.msra.mxu0 %v4895
  %5047 = vmatpush.bf16.msra.mxu0 %v4893
  %5048 = vmatpush.bf16.msra.mxu0 %v4891
  %5049 = vmatpush.bf16.msra.mxu0 %v4889
  %5050 = vmatpush.bf16.msra.mxu0 %v4887
  %5051 = vmatpush.bf16.msra.mxu0 %v4885
  %5052 = vmatpush.bf16.msra.mxu0 %v4883
  %5053 = vmatmul.bf16.gmra.mxu0 %v4661
  %v5054 = vpop.f32.mrf.mxu0
  %v5055 = vadd.f32 %v5006, %v5054
  %v5056 = vpop.f32.mrf.mxu0
  %v5057 = vadd.f32 %v5008, %v5056
  %5058 = vmatmul.bf16.gmra.mxu0 %v4664
  %v5059 = vpop.f32.mrf.mxu0
  %v5060 = vadd.f32 %v5011, %v5059
  %v5061 = vpop.f32.mrf.mxu0
  %v5062 = vadd.f32 %v5013, %v5061
  %5063 = vmatmul.bf16.gmra.mxu0 %v4667
  %v5064 = vpop.f32.mrf.mxu0
  %v5065 = vadd.f32 %v5016, %v5064
  %v5066 = vpop.f32.mrf.mxu0
  %v5067 = vadd.f32 %v5018, %v5066
  %5068 = vmatmul.bf16.gmra.mxu0 %v4670
  %v5069 = vpop.f32.mrf.mxu0
  %v5070 = vadd.f32 %v5021, %v5069
  %v5071 = vpop.f32.mrf.mxu0
  %v5072 = vadd.f32 %v5023, %v5071
  %5073 = vmatmul.bf16.gmra.mxu0 %v4673
  %v5074 = vpop.f32.mrf.mxu0
  %v5075 = vadd.f32 %v5026, %v5074
  %v5076 = vpop.f32.mrf.mxu0
  %v5077 = vadd.f32 %v5028, %v5076
  %5078 = vmatmul.bf16.gmra.mxu0 %v4676
  %v5079 = vpop.f32.mrf.mxu0
  %v5080 = vadd.f32 %v5031, %v5079
  %v5081 = vpop.f32.mrf.mxu0
  %v5082 = vadd.f32 %v5033, %v5081
  %5083 = vmatmul.bf16.gmra.mxu0 %v4679
  %v5084 = vpop.f32.mrf.mxu0
  %v5085 = vadd.f32 %v5036, %v5084
  %v5086 = vpop.f32.mrf.mxu0
  %v5087 = vadd.f32 %v5038, %v5086
  %5088 = vmatmul.bf16.gmra.mxu0 %v4682
  %v5089 = vpop.f32.mrf.mxu0
  %v5090 = vadd.f32 %v5041, %v5089
  %v5091 = vpop.f32.mrf.mxu0
  %v5092 = vadd.f32 %v5043, %v5091
  %5093 = vdwg.mxu0
  %5094 = vmatpush.bf16.msra.mxu0 %v4866
  %5095 = vmatpush.bf16.msra.mxu0 %v4864
  %5096 = vmatpush.bf16.msra.mxu0 %v4862
  %5097 = vmatpush.bf16.msra.mxu0 %v4860
  %5098 = vmatpush.bf16.msra.mxu0 %v4858
  %5099 = vmatpush.bf16.msra.mxu0 %v4856
  %5100 = vmatpush.bf16.msra.mxu0 %v4854
  %5101 = vmatpush.bf16.msra.mxu0 %v4852
  %5102 = vmatmul.bf16.gmra.mxu0 %v4659
  %v5103 = vpop.f32.mrf.mxu0
  %v5104 = vadd.f32 0.0, %v5103
  %v5105 = vpop.f32.mrf.mxu0
  %v5106 = vadd.f32 0.0, %v5105
  %5107 = vmatmul.bf16.gmra.mxu0 %v4662
  %v5108 = vpop.f32.mrf.mxu0
  %v5109 = vadd.f32 0.0, %v5108
  %v5110 = vpop.f32.mrf.mxu0
  %v5111 = vadd.f32 0.0, %v5110
  %5112 = vmatmul.bf16.gmra.mxu0 %v4665
  %v5113 = vpop.f32.mrf.mxu0
  %v5114 = vadd.f32 0.0, %v5113
  %v5115 = vpop.f32.mrf.mxu0
  %v5116 = vadd.f32 0.0, %v5115
  %5117 = vmatmul.bf16.gmra.mxu0 %v4668
  %v5118 = vpop.f32.mrf.mxu0
  %v5119 = vadd.f32 0.0, %v5118
  %v5120 = vpop.f32.mrf.mxu0
  %v5121 = vadd.f32 0.0, %v5120
  %5122 = vmatmul.bf16.gmra.mxu0 %v4671
  %v5123 = vpop.f32.mrf.mxu0
  %v5124 = vadd.f32 0.0, %v5123
  %v5125 = vpop.f32.mrf.mxu0
  %v5126 = vadd.f32 0.0, %v5125
  %5127 = vmatmul.bf16.gmra.mxu0 %v4674
  %v5128 = vpop.f32.mrf.mxu0
  %v5129 = vadd.f32 0.0, %v5128
  %v5130 = vpop.f32.mrf.mxu0
  %v5131 = vadd.f32 0.0, %v5130
  %5132 = vmatmul.bf16.gmra.mxu0 %v4677
  %v5133 = vpop.f32.mrf.mxu0
  %v5134 = vadd.f32 0.0, %v5133
  %v5135 = vpop.f32.mrf.mxu0
  %v5136 = vadd.f32 0.0, %v5135
  %5137 = vmatmul.bf16.gmra.mxu0 %v4680
  %v5138 = vpop.f32.mrf.mxu0
  %v5139 = vadd.f32 0.0, %v5138
  %v5140 = vpop.f32.mrf.mxu0
  %v5141 = vadd.f32 0.0, %v5140
  %5142 = vdwg.mxu0
  %5143 = vmatpush.bf16.msra.mxu0 %v4882
  %5144 = vmatpush.bf16.msra.mxu0 %v4880
  %5145 = vmatpush.bf16.msra.mxu0 %v4878
  %5146 = vmatpush.bf16.msra.mxu0 %v4876
  %5147 = vmatpush.bf16.msra.mxu0 %v4874
  %5148 = vmatpush.bf16.msra.mxu0 %v4872
  %5149 = vmatpush.bf16.msra.mxu0 %v4870
  %5150 = vmatpush.bf16.msra.mxu0 %v4868
  %5151 = vmatmul.bf16.gmra.mxu0 %v4660
  %v5152 = vpop.f32.mrf.mxu0
  %v5153 = vadd.f32 %v5104, %v5152
  %v5154 = vpop.f32.mrf.mxu0
  %v5155 = vadd.f32 %v5106, %v5154
  %5156 = vmatmul.bf16.gmra.mxu0 %v4663
  %v5157 = vpop.f32.mrf.mxu0
  %v5158 = vadd.f32 %v5109, %v5157
  %v5159 = vpop.f32.mrf.mxu0
  %v5160 = vadd.f32 %v5111, %v5159
  %5161 = vmatmul.bf16.gmra.mxu0 %v4666
  %v5162 = vpop.f32.mrf.mxu0
  %v5163 = vadd.f32 %v5114, %v5162
  %v5164 = vpop.f32.mrf.mxu0
  %v5165 = vadd.f32 %v5116, %v5164
  %5166 = vmatmul.bf16.gmra.mxu0 %v4669
  %v5167 = vpop.f32.mrf.mxu0
  %v5168 = vadd.f32 %v5119, %v5167
  %v5169 = vpop.f32.mrf.mxu0
  %v5170 = vadd.f32 %v5121, %v5169
  %5171 = vmatmul.bf16.gmra.mxu0 %v4672
  %v5172 = vpop.f32.mrf.mxu0
  %v5173 = vadd.f32 %v5124, %v5172
  %v5174 = vpop.f32.mrf.mxu0
  %v5175 = vadd.f32 %v5126, %v5174
  %5176 = vmatmul.bf16.gmra.mxu0 %v4675
  %v5177 = vpop.f32.mrf.mxu0
  %v5178 = vadd.f32 %v5129, %v5177
  %v5179 = vpop.f32.mrf.mxu0
  %v5180 = vadd.f32 %v5131, %v5179
  %5181 = vmatmul.bf16.gmra.mxu0 %v4678
  %v5182 = vpop.f32.mrf.mxu0
  %v5183 = vadd.f32 %v5134, %v5182
  %v5184 = vpop.f32.mrf.mxu0
  %v5185 = vadd.f32 %v5136, %v5184
  %5186 = vmatmul.bf16.gmra.mxu0 %v4681
  %v5187 = vpop.f32.mrf.mxu0
  %v5188 = vadd.f32 %v5139, %v5187
  %v5189 = vpop.f32.mrf.mxu0
  %v5190 = vadd.f32 %v5141, %v5189
  %5191 = vdwg.mxu0
  %5192 = vmatpush.bf16.msra.mxu0 %v4898
  %5193 = vmatpush.bf16.msra.mxu0 %v4896
  %5194 = vmatpush.bf16.msra.mxu0 %v4894
  %5195 = vmatpush.bf16.msra.mxu0 %v4892
  %5196 = vmatpush.bf16.msra.mxu0 %v4890
  %5197 = vmatpush.bf16.msra.mxu0 %v4888
  %5198 = vmatpush.bf16.msra.mxu0 %v4886
  %5199 = vmatpush.bf16.msra.mxu0 %v4884
  %5200 = vmatmul.bf16.gmra.mxu0 %v4661
  %v5201 = vpop.f32.mrf.mxu0
  %v5202 = vadd.f32 %v5153, %v5201
  %v5203 = vpop.f32.mrf.mxu0
  %v5204 = vadd.f32 %v5155, %v5203
  %5205 = vmatmul.bf16.gmra.mxu0 %v4664
  %v5206 = vpop.f32.mrf.mxu0
  %v5207 = vadd.f32 %v5158, %v5206
  %v5208 = vpop.f32.mrf.mxu0
  %v5209 = vadd.f32 %v5160, %v5208
  %5210 = vmatmul.bf16.gmra.mxu0 %v4667
  %v5211 = vpop.f32.mrf.mxu0
  %v5212 = vadd.f32 %v5163, %v5211
  %v5213 = vpop.f32.mrf.mxu0
  %v5214 = vadd.f32 %v5165, %v5213
  %5215 = vmatmul.bf16.gmra.mxu0 %v4670
  %v5216 = vpop.f32.mrf.mxu0
  %v5217 = vadd.f32 %v5168, %v5216
  %v5218 = vpop.f32.mrf.mxu0
  %v5219 = vadd.f32 %v5170, %v5218
  %5220 = vmatmul.bf16.gmra.mxu0 %v4673
  %v5221 = vpop.f32.mrf.mxu0
  %v5222 = vadd.f32 %v5173, %v5221
  %v5223 = vpop.f32.mrf.mxu0
  %v5224 = vadd.f32 %v5175, %v5223
  %5225 = vmatmul.bf16.gmra.mxu0 %v4676
  %v5226 = vpop.f32.mrf.mxu0
  %v5227 = vadd.f32 %v5178, %v5226
  %v5228 = vpop.f32.mrf.mxu0
  %v5229 = vadd.f32 %v5180, %v5228
  %5230 = vmatmul.bf16.gmra.mxu0 %v4679
  %v5231 = vpop.f32.mrf.mxu0
  %v5232 = vadd.f32 %v5183, %v5231
  %v5233 = vpop.f32.mrf.mxu0
  %v5234 = vadd.f32 %v5185, %v5233
  %5235 = vmatmul.bf16.gmra.mxu0 %v4682
  %v5236 = vpop.f32.mrf.mxu0
  %v5237 = vadd.f32 %v5188, %v5236
  %v5238 = vpop.f32.mrf.mxu0
  %v5239 = vadd.f32 %v5190, %v5238
  %5240 = vdwg.mxu0
  %v5241 = vadd.f32 %v4312, %v5055
  %v5242 = vadd.f32 %v4459, %v5202
  %v5243 = vadd.f32 %v4314, %v5057
  %v5244 = vadd.f32 %v4461, %v5204
  %v5245 = vadd.f32 %v4317, %v5060
  %v5246 = vadd.f32 %v4464, %v5207
  %v5247 = vadd.f32 %v4319, %v5062
  %v5248 = vadd.f32 %v4466, %v5209
  %v5249 = vadd.f32 %v4322, %v5065
  %v5250 = vadd.f32 %v4469, %v5212
  %v5251 = vadd.f32 %v4324, %v5067
  %v5252 = vadd.f32 %v4471, %v5214
  %v5253 = vadd.f32 %v4327, %v5070
  %v5254 = vadd.f32 %v4474, %v5217
  %v5255 = vadd.f32 %v4329, %v5072
  %v5256 = vadd.f32 %v4476, %v5219
  %v5257 = vadd.f32 %v4332, %v5075
  %v5258 = vadd.f32 %v4479, %v5222
  %v5259 = vadd.f32 %v4334, %v5077
  %v5260 = vadd.f32 %v4481, %v5224
  %v5261 = vadd.f32 %v4337, %v5080
  %v5262 = vadd.f32 %v4484, %v5227
  %v5263 = vadd.f32 %v4339, %v5082
  %v5264 = vadd.f32 %v4486, %v5229
  %v5265 = vadd.f32 %v4342, %v5085
  %v5266 = vadd.f32 %v4489, %v5232
  %v5267 = vadd.f32 %v4344, %v5087
  %v5268 = vadd.f32 %v4491, %v5234
  %v5269 = vadd.f32 %v4347, %v5090
  %v5270 = vadd.f32 %v4494, %v5237
  %v5271 = vadd.f32 %v4349, %v5092
  %v5272 = vadd.f32 %v4496, %v5239
  %v5273 = vld [vmem:[%s8] sm:$0x3]
  %v5275 = vperm.slane %v5273, 0
  %v5276 = vperm.slane %v5273, 1
  %v5279 = vadd.f32 %v5241, %v5275
  %v5280 = vadd.f32 %v5242, %v5276
  %v5281 = vadd.f32 %v5243, %v5275
  %v5282 = vadd.f32 %v5244, %v5276
  %v5283 = vadd.f32 %v5245, %v5275
  %v5284 = vadd.f32 %v5246, %v5276
  %v5285 = vadd.f32 %v5247, %v5275
  %v5286 = vadd.f32 %v5248, %v5276
  %v5287 = vadd.f32 %v5249, %v5275
  %v5288 = vadd.f32 %v5250, %v5276
  %v5289 = vadd.f32 %v5251, %v5275
  %v5290 = vadd.f32 %v5252, %v5276
  %v5291 = vadd.f32 %v5253, %v5275
  %v5292 = vadd.f32 %v5254, %v5276
  %v5293 = vadd.f32 %v5255, %v5275
  %v5294 = vadd.f32 %v5256, %v5276
  %v5295 = vadd.f32 %v5257, %v5275
  %v5296 = vadd.f32 %v5258, %v5276
  %v5297 = vadd.f32 %v5259, %v5275
  %v5298 = vadd.f32 %v5260, %v5276
  %v5299 = vadd.f32 %v5261, %v5275
  %v5300 = vadd.f32 %v5262, %v5276
  %v5301 = vadd.f32 %v5263, %v5275
  %v5302 = vadd.f32 %v5264, %v5276
  %v5303 = vadd.f32 %v5265, %v5275
  %v5304 = vadd.f32 %v5266, %v5276
  %v5305 = vadd.f32 %v5267, %v5275
  %v5306 = vadd.f32 %v5268, %v5276
  %v5307 = vadd.f32 %v5269, %v5275
  %v5308 = vadd.f32 %v5270, %v5276
  %v5309 = vadd.f32 %v5271, %v5275
  %v5310 = vadd.f32 %v5272, %v5276
  %vm5311 = vcmp.ge.f32.partialorder %v5279, 0.0
  %vm5312 = vcmp.ge.f32.partialorder %v5280, 0.0
  %vm5313 = vcmp.ge.f32.partialorder %v5281, 0.0
  %vm5314 = vcmp.ge.f32.partialorder %v5282, 0.0
  %vm5315 = vcmp.ge.f32.partialorder %v5283, 0.0
  %vm5316 = vcmp.ge.f32.partialorder %v5284, 0.0
  %vm5317 = vcmp.ge.f32.partialorder %v5285, 0.0
  %vm5318 = vcmp.ge.f32.partialorder %v5286, 0.0
  %vm5319 = vcmp.ge.f32.partialorder %v5287, 0.0
  %vm5320 = vcmp.ge.f32.partialorder %v5288, 0.0
  %vm5321 = vcmp.ge.f32.partialorder %v5289, 0.0
  %vm5322 = vcmp.ge.f32.partialorder %v5290, 0.0
  %vm5323 = vcmp.ge.f32.partialorder %v5291, 0.0
  %vm5324 = vcmp.ge.f32.partialorder %v5292, 0.0
  %vm5325 = vcmp.ge.f32.partialorder %v5293, 0.0
  %vm5326 = vcmp.ge.f32.partialorder %v5294, 0.0
  %vm5327 = vcmp.ge.f32.partialorder %v5295, 0.0
  %vm5328 = vcmp.ge.f32.partialorder %v5296, 0.0
  %vm5329 = vcmp.ge.f32.partialorder %v5297, 0.0
  %vm5330 = vcmp.ge.f32.partialorder %v5298, 0.0
  %vm5331 = vcmp.ge.f32.partialorder %v5299, 0.0
  %vm5332 = vcmp.ge.f32.partialorder %v5300, 0.0
  %vm5333 = vcmp.ge.f32.partialorder %v5301, 0.0
  %vm5334 = vcmp.ge.f32.partialorder %v5302, 0.0
  %vm5335 = vcmp.ge.f32.partialorder %v5303, 0.0
  %vm5336 = vcmp.ge.f32.partialorder %v5304, 0.0
  %vm5337 = vcmp.ge.f32.partialorder %v5305, 0.0
  %vm5338 = vcmp.ge.f32.partialorder %v5306, 0.0
  %vm5339 = vcmp.ge.f32.partialorder %v5307, 0.0
  %vm5340 = vcmp.ge.f32.partialorder %v5308, 0.0
  %vm5341 = vcmp.ge.f32.partialorder %v5309, 0.0
  %vm5342 = vcmp.ge.f32.partialorder %v5310, 0.0
  %v5343 = vmul.f32 %v5279, 0.01
  %v5344 = vmul.f32 %v5280, 0.01
  %v5345 = vmul.f32 %v5281, 0.01
  %v5346 = vmul.f32 %v5282, 0.01
  %v5347 = vmul.f32 %v5283, 0.01
  %v5348 = vmul.f32 %v5284, 0.01
  %v5349 = vmul.f32 %v5285, 0.01
  %v5350 = vmul.f32 %v5286, 0.01
  %v5351 = vmul.f32 %v5287, 0.01
  %v5352 = vmul.f32 %v5288, 0.01
  %v5353 = vmul.f32 %v5289, 0.01
  %v5354 = vmul.f32 %v5290, 0.01
  %v5355 = vmul.f32 %v5291, 0.01
  %v5356 = vmul.f32 %v5292, 0.01
  %v5357 = vmul.f32 %v5293, 0.01
  %v5358 = vmul.f32 %v5294, 0.01
  %v5359 = vmul.f32 %v5295, 0.01
  %v5360 = vmul.f32 %v5296, 0.01
  %v5361 = vmul.f32 %v5297, 0.01
  %v5362 = vmul.f32 %v5298, 0.01
  %v5363 = vmul.f32 %v5299, 0.01
  %v5364 = vmul.f32 %v5300, 0.01
  %v5365 = vmul.f32 %v5301, 0.01
  %v5366 = vmul.f32 %v5302, 0.01
  %v5367 = vmul.f32 %v5303, 0.01
  %v5368 = vmul.f32 %v5304, 0.01
  %v5369 = vmul.f32 %v5305, 0.01
  %v5370 = vmul.f32 %v5306, 0.01
  %v5371 = vmul.f32 %v5307, 0.01
  %v5372 = vmul.f32 %v5308, 0.01
  %v5373 = vmul.f32 %v5309, 0.01
  %v5374 = vmul.f32 %v5310, 0.01
  %v5375 = vsel %vm5311, %v5279, %v5343
  %v5376 = vsel %vm5312, %v5280, %v5344
  %v5377 = vsel %vm5313, %v5281, %v5345
  %v5378 = vsel %vm5314, %v5282, %v5346
  %v5379 = vsel %vm5315, %v5283, %v5347
  %v5380 = vsel %vm5316, %v5284, %v5348
  %v5381 = vsel %vm5317, %v5285, %v5349
  %v5382 = vsel %vm5318, %v5286, %v5350
  %v5383 = vsel %vm5319, %v5287, %v5351
  %v5384 = vsel %vm5320, %v5288, %v5352
  %v5385 = vsel %vm5321, %v5289, %v5353
  %v5386 = vsel %vm5322, %v5290, %v5354
  %v5387 = vsel %vm5323, %v5291, %v5355
  %v5388 = vsel %vm5324, %v5292, %v5356
  %v5389 = vsel %vm5325, %v5293, %v5357
  %v5390 = vsel %vm5326, %v5294, %v5358
  %v5391 = vsel %vm5327, %v5295, %v5359
  %v5392 = vsel %vm5328, %v5296, %v5360
  %v5393 = vsel %vm5329, %v5297, %v5361
  %v5394 = vsel %vm5330, %v5298, %v5362
  %v5395 = vsel %vm5331, %v5299, %v5363
  %v5396 = vsel %vm5332, %v5300, %v5364
  %v5397 = vsel %vm5333, %v5301, %v5365
  %v5398 = vsel %vm5334, %v5302, %v5366
  %v5399 = vsel %vm5335, %v5303, %v5367
  %v5400 = vsel %vm5336, %v5304, %v5368
  %v5401 = vsel %vm5337, %v5305, %v5369
  %v5402 = vsel %vm5338, %v5306, %v5370
  %v5403 = vsel %vm5339, %v5307, %v5371
  %v5404 = vsel %vm5340, %v5308, %v5372
  %v5405 = vsel %vm5341, %v5309, %v5373
  %v5406 = vsel %vm5342, %v5310, %v5374
  %v5407 = vld [vmem:[%s9] sm:$0x3]
  %v5409 = vperm.slane %v5407, 0
  %v5410 = vperm.slane %v5407, 1
  %v5413 = vmul.f32 %v5375, %v5409
  %v5414 = vmul.f32 %v5376, %v5410
  %v5415 = vmul.f32 %v5377, %v5409
  %v5416 = vmul.f32 %v5378, %v5410
  %v5417 = vmul.f32 %v5379, %v5409
  %v5418 = vmul.f32 %v5380, %v5410
  %v5419 = vmul.f32 %v5381, %v5409
  %v5420 = vmul.f32 %v5382, %v5410
  %v5421 = vmul.f32 %v5383, %v5409
  %v5422 = vmul.f32 %v5384, %v5410
  %v5423 = vmul.f32 %v5385, %v5409
  %v5424 = vmul.f32 %v5386, %v5410
  %v5425 = vmul.f32 %v5387, %v5409
  %v5426 = vmul.f32 %v5388, %v5410
  %v5427 = vmul.f32 %v5389, %v5409
  %v5428 = vmul.f32 %v5390, %v5410
  %v5429 = vmul.f32 %v5391, %v5409
  %v5430 = vmul.f32 %v5392, %v5410
  %v5431 = vmul.f32 %v5393, %v5409
  %v5432 = vmul.f32 %v5394, %v5410
  %v5433 = vmul.f32 %v5395, %v5409
  %v5434 = vmul.f32 %v5396, %v5410
  %v5435 = vmul.f32 %v5397, %v5409
  %v5436 = vmul.f32 %v5398, %v5410
  %v5437 = vmul.f32 %v5399, %v5409
  %v5438 = vmul.f32 %v5400, %v5410
  %v5439 = vmul.f32 %v5401, %v5409
  %v5440 = vmul.f32 %v5402, %v5410
  %v5441 = vmul.f32 %v5403, %v5409
  %v5442 = vmul.f32 %v5404, %v5410
  %v5443 = vmul.f32 %v5405, %v5409
  %v5444 = vmul.f32 %v5406, %v5410
  %v5445 = vld [vmem:[%s10] sm:$0x3]
  %v5447 = vperm.slane %v5445, 0
  %v5448 = vperm.slane %v5445, 1
  %v5451 = vadd.f32 %v5413, %v5447
  %v5452 = vadd.f32 %v5414, %v5448
  %v5453 = vadd.f32 %v5415, %v5447
  %v5454 = vadd.f32 %v5416, %v5448
  %v5455 = vadd.f32 %v5417, %v5447
  %v5456 = vadd.f32 %v5418, %v5448
  %v5457 = vadd.f32 %v5419, %v5447
  %v5458 = vadd.f32 %v5420, %v5448
  %v5459 = vadd.f32 %v5421, %v5447
  %v5460 = vadd.f32 %v5422, %v5448
  %v5461 = vadd.f32 %v5423, %v5447
  %v5462 = vadd.f32 %v5424, %v5448
  %v5463 = vadd.f32 %v5425, %v5447
  %v5464 = vadd.f32 %v5426, %v5448
  %v5465 = vadd.f32 %v5427, %v5447
  %v5466 = vadd.f32 %v5428, %v5448
  %v5467 = vadd.f32 %v5429, %v5447
  %v5468 = vadd.f32 %v5430, %v5448
  %v5469 = vadd.f32 %v5431, %v5447
  %v5470 = vadd.f32 %v5432, %v5448
  %v5471 = vadd.f32 %v5433, %v5447
  %v5472 = vadd.f32 %v5434, %v5448
  %v5473 = vadd.f32 %v5435, %v5447
  %v5474 = vadd.f32 %v5436, %v5448
  %v5475 = vadd.f32 %v5437, %v5447
  %v5476 = vadd.f32 %v5438, %v5448
  %v5477 = vadd.f32 %v5439, %v5447
  %v5478 = vadd.f32 %v5440, %v5448
  %v5479 = vadd.f32 %v5441, %v5447
  %v5480 = vadd.f32 %v5442, %v5448
  %v5481 = vadd.f32 %v5443, %v5447
  %v5482 = vadd.f32 %v5444, %v5448
  %v5483 = vpack.c.bf16 %v5452, %v5451
  %v5484 = vpack.c.bf16 %v5454, %v5453
  %v5485 = vpack.c.bf16 %v5456, %v5455
  %v5486 = vpack.c.bf16 %v5458, %v5457
  %v5487 = vpack.c.bf16 %v5460, %v5459
  %v5488 = vpack.c.bf16 %v5462, %v5461
  %v5489 = vpack.c.bf16 %v5464, %v5463
  %v5490 = vpack.c.bf16 %v5466, %v5465
  %v5491 = vpack.c.bf16 %v5468, %v5467
  %v5492 = vpack.c.bf16 %v5470, %v5469
  %v5493 = vpack.c.bf16 %v5472, %v5471
  %v5494 = vpack.c.bf16 %v5474, %v5473
  %v5495 = vpack.c.bf16 %v5476, %v5475
  %v5496 = vpack.c.bf16 %v5478, %v5477
  %v5497 = vpack.c.bf16 %v5480, %v5479
  %v5498 = vpack.c.bf16 %v5482, %v5481
  %5499 = vst [vmem:[#allocation4] sm:$0xff] %v5483
  %5500 = vst [vmem:[#allocation4 + $0x18] sm:$0xff] %v5484
  %5501 = vst [vmem:[#allocation4 + $0x30] sm:$0xff] %v5485
  %5502 = vst [vmem:[#allocation4 + $0x48] sm:$0xff] %v5486
  %5503 = vst [vmem:[#allocation4 + $0x60] sm:$0xff] %v5487
  %5504 = vst [vmem:[#allocation4 + $0x78] sm:$0xff] %v5488
  %5505 = vst [vmem:[#allocation4 + $0x90] sm:$0xff] %v5489
  %5506 = vst [vmem:[#allocation4 + $0xa8] sm:$0xff] %v5490
  %5507 = vst [vmem:[#allocation4 + $0xf0] sm:$0xff] %v5491
  %5508 = vst [vmem:[#allocation4 + $0x108] sm:$0xff] %v5492
  %5509 = vst [vmem:[#allocation4 + $0x120] sm:$0xff] %v5493
  %5510 = vst [vmem:[#allocation4 + $0x138] sm:$0xff] %v5494
  %5511 = vst [vmem:[#allocation4 + $0x150] sm:$0xff] %v5495
  %5512 = vst [vmem:[#allocation4 + $0x168] sm:$0xff] %v5496
  %5513 = vst [vmem:[#allocation4 + $0x180] sm:$0xff] %v5497
  %5514 = vst [vmem:[#allocation4 + $0x198] sm:$0xff] %v5498
  %v5516 = vshrl.u32 %v5483, 16
  %v5518 = vrot.slane %v5516, 4
  %v5519 = vshll.u32 %v5483, 16
  %v5521 = vrot.slane %v5519, 5
  %v5522 = vor.u32 %v5518, %v5521
  %v5523 = vrot.slane %v5522, 4
  %v5525 = vshrl.u32 %v5484, 16
  %v5527 = vrot.slane %v5525, 4
  %v5528 = vshll.u32 %v5484, 16
  %v5530 = vrot.slane %v5528, 5
  %v5531 = vor.u32 %v5527, %v5530
  %v5532 = vrot.slane %v5531, 4
  %v5534 = vshrl.u32 %v5485, 16
  %v5536 = vrot.slane %v5534, 4
  %v5537 = vshll.u32 %v5485, 16
  %v5539 = vrot.slane %v5537, 5
  %v5540 = vor.u32 %v5536, %v5539
  %v5541 = vrot.slane %v5540, 4
  %v5543 = vshrl.u32 %v5486, 16
  %v5545 = vrot.slane %v5543, 4
  %v5546 = vshll.u32 %v5486, 16
  %v5548 = vrot.slane %v5546, 5
  %v5549 = vor.u32 %v5545, %v5548
  %v5550 = vrot.slane %v5549, 4
  %v5552 = vshrl.u32 %v5487, 16
  %v5554 = vrot.slane %v5552, 4
  %v5555 = vshll.u32 %v5487, 16
  %v5557 = vrot.slane %v5555, 5
  %v5558 = vor.u32 %v5554, %v5557
  %v5559 = vrot.slane %v5558, 4
  %v5561 = vshrl.u32 %v5488, 16
  %v5563 = vrot.slane %v5561, 4
  %v5564 = vshll.u32 %v5488, 16
  %v5566 = vrot.slane %v5564, 5
  %v5567 = vor.u32 %v5563, %v5566
  %v5568 = vrot.slane %v5567, 4
  %v5570 = vshrl.u32 %v5489, 16
  %v5572 = vrot.slane %v5570, 4
  %v5573 = vshll.u32 %v5489, 16
  %v5575 = vrot.slane %v5573, 5
  %v5576 = vor.u32 %v5572, %v5575
  %v5577 = vrot.slane %v5576, 4
  %v5579 = vshrl.u32 %v5490, 16
  %v5581 = vrot.slane %v5579, 4
  %v5582 = vshll.u32 %v5490, 16
  %v5584 = vrot.slane %v5582, 5
  %v5585 = vor.u32 %v5581, %v5584
  %v5586 = vrot.slane %v5585, 4
  %v5588 = vshrl.u32 %v5491, 16
  %v5590 = vrot.slane %v5588, 4
  %v5591 = vshll.u32 %v5491, 16
  %v5593 = vrot.slane %v5591, 5
  %v5594 = vor.u32 %v5590, %v5593
  %v5595 = vrot.slane %v5594, 4
  %v5597 = vshrl.u32 %v5492, 16
  %v5599 = vrot.slane %v5597, 4
  %v5600 = vshll.u32 %v5492, 16
  %v5602 = vrot.slane %v5600, 5
  %v5603 = vor.u32 %v5599, %v5602
  %v5604 = vrot.slane %v5603, 4
  %v5606 = vshrl.u32 %v5493, 16
  %v5608 = vrot.slane %v5606, 4
  %v5609 = vshll.u32 %v5493, 16
  %v5611 = vrot.slane %v5609, 5
  %v5612 = vor.u32 %v5608, %v5611
  %v5613 = vrot.slane %v5612, 4
  %v5615 = vshrl.u32 %v5494, 16
  %v5617 = vrot.slane %v5615, 4
  %v5618 = vshll.u32 %v5494, 16
  %v5620 = vrot.slane %v5618, 5
  %v5621 = vor.u32 %v5617, %v5620
  %v5622 = vrot.slane %v5621, 4
  %v5624 = vshrl.u32 %v5495, 16
  %v5626 = vrot.slane %v5624, 4
  %v5627 = vshll.u32 %v5495, 16
  %v5629 = vrot.slane %v5627, 5
  %v5630 = vor.u32 %v5626, %v5629
  %v5631 = vrot.slane %v5630, 4
  %v5633 = vshrl.u32 %v5496, 16
  %v5635 = vrot.slane %v5633, 4
  %v5636 = vshll.u32 %v5496, 16
  %v5638 = vrot.slane %v5636, 5
  %v5639 = vor.u32 %v5635, %v5638
  %v5640 = vrot.slane %v5639, 4
  %v5642 = vshrl.u32 %v5497, 16
  %v5644 = vrot.slane %v5642, 4
  %v5645 = vshll.u32 %v5497, 16
  %v5647 = vrot.slane %v5645, 5
  %v5648 = vor.u32 %v5644, %v5647
  %v5649 = vrot.slane %v5648, 4
  %v5651 = vshrl.u32 %v5498, 16
  %v5653 = vrot.slane %v5651, 4
  %v5654 = vshll.u32 %v5498, 16
  %v5656 = vrot.slane %v5654, 5
  %v5657 = vor.u32 %v5653, %v5656
  %v5658 = vrot.slane %v5657, 4
  %vm5675 = vcmask 1047556
  %vm5676 = vsmask.f32 7424
  %vm5677 = vmand %vm5675, %vm5676
  %vm5678 = vmor %vm5677, %vm2884
  %v5679 = vld [vmem:[#allocation4 + $0x8] sm:$0xff]
  %v5680 = vsel %vm5678, %v5523, %v5679
  %5681 = vst [vmem:[#allocation4 + $0x8] sm:$0xff] %v5680
  %v5682 = vld [vmem:[#allocation4 + $0x20] sm:$0xff]
  %v5683 = vsel %vm5678, %v5532, %v5682
  %5684 = vst [vmem:[#allocation4 + $0x20] sm:$0xff] %v5683
  %v5685 = vld [vmem:[#allocation4 + $0x38] sm:$0xff]
  %v5686 = vsel %vm5678, %v5541, %v5685
  %5687 = vst [vmem:[#allocation4 + $0x38] sm:$0xff] %v5686
  %v5688 = vld [vmem:[#allocation4 + $0x50] sm:$0xff]
  %v5689 = vsel %vm5678, %v5550, %v5688
  %5690 = vst [vmem:[#allocation4 + $0x50] sm:$0xff] %v5689
  %v5691 = vld [vmem:[#allocation4 + $0x68] sm:$0xff]
  %v5692 = vsel %vm5678, %v5559, %v5691
  %5693 = vst [vmem:[#allocation4 + $0x68] sm:$0xff] %v5692
  %v5694 = vld [vmem:[#allocation4 + $0x80] sm:$0xff]
  %v5695 = vsel %vm5678, %v5568, %v5694
  %5696 = vst [vmem:[#allocation4 + $0x80] sm:$0xff] %v5695
  %v5697 = vld [vmem:[#allocation4 + $0x98] sm:$0xff]
  %v5698 = vsel %vm5678, %v5577, %v5697
  %5699 = vst [vmem:[#allocation4 + $0x98] sm:$0xff] %v5698
  %v5700 = vld [vmem:[#allocation4 + $0xb0] sm:$0xff]
  %v5701 = vsel %vm5678, %v5586, %v5700
  %5702 = vst [vmem:[#allocation4 + $0xb0] sm:$0xff] %v5701
  %v5703 = vld [vmem:[#allocation4 + $0xf8] sm:$0xff]
  %v5704 = vsel %vm5678, %v5595, %v5703
  %5705 = vst [vmem:[#allocation4 + $0xf8] sm:$0xff] %v5704
  %v5706 = vld [vmem:[#allocation4 + $0x110] sm:$0xff]
  %v5707 = vsel %vm5678, %v5604, %v5706
  %5708 = vst [vmem:[#allocation4 + $0x110] sm:$0xff] %v5707
  %v5709 = vld [vmem:[#allocation4 + $0x128] sm:$0xff]
  %v5710 = vsel %vm5678, %v5613, %v5709
  %5711 = vst [vmem:[#allocation4 + $0x128] sm:$0xff] %v5710
  %v5712 = vld [vmem:[#allocation4 + $0x140] sm:$0xff]
  %v5713 = vsel %vm5678, %v5622, %v5712
  %5714 = vst [vmem:[#allocation4 + $0x140] sm:$0xff] %v5713
  %v5715 = vld [vmem:[#allocation4 + $0x158] sm:$0xff]
  %v5716 = vsel %vm5678, %v5631, %v5715
  %5717 = vst [vmem:[#allocation4 + $0x158] sm:$0xff] %v5716
  %v5718 = vld [vmem:[#allocation4 + $0x170] sm:$0xff]
  %v5719 = vsel %vm5678, %v5640, %v5718
  %5720 = vst [vmem:[#allocation4 + $0x170] sm:$0xff] %v5719
  %v5721 = vld [vmem:[#allocation4 + $0x188] sm:$0xff]
  %v5722 = vsel %vm5678, %v5649, %v5721
  %5723 = vst [vmem:[#allocation4 + $0x188] sm:$0xff] %v5722
  %v5724 = vld [vmem:[#allocation4 + $0x1a0] sm:$0xff]
  %v5725 = vsel %vm5678, %v5658, %v5724
  %5726 = vst [vmem:[#allocation4 + $0x1a0] sm:$0xff] %v5725
  %v5743 = vrot.slane %v5483, 5
  %v5744 = vrot.slane %v5743, 4
  %v5745 = vrot.slane %v5484, 5
  %v5746 = vrot.slane %v5745, 4
  %v5747 = vrot.slane %v5485, 5
  %v5748 = vrot.slane %v5747, 4
  %v5749 = vrot.slane %v5486, 5
  %v5750 = vrot.slane %v5749, 4
  %v5751 = vrot.slane %v5487, 5
  %v5752 = vrot.slane %v5751, 4
  %v5753 = vrot.slane %v5488, 5
  %v5754 = vrot.slane %v5753, 4
  %v5755 = vrot.slane %v5489, 5
  %v5756 = vrot.slane %v5755, 4
  %v5757 = vrot.slane %v5490, 5
  %v5758 = vrot.slane %v5757, 4
  %v5759 = vrot.slane %v5491, 5
  %v5760 = vrot.slane %v5759, 4
  %v5761 = vrot.slane %v5492, 5
  %v5762 = vrot.slane %v5761, 4
  %v5763 = vrot.slane %v5493, 5
  %v5764 = vrot.slane %v5763, 4
  %v5765 = vrot.slane %v5494, 5
  %v5766 = vrot.slane %v5765, 4
  %v5767 = vrot.slane %v5495, 5
  %v5768 = vrot.slane %v5767, 4
  %v5769 = vrot.slane %v5496, 5
  %v5770 = vrot.slane %v5769, 4
  %v5771 = vrot.slane %v5497, 5
  %v5772 = vrot.slane %v5771, 4
  %v5773 = vrot.slane %v5498, 5
  %v5774 = vrot.slane %v5773, 4
  %5791 = vst [vmem:[#allocation4 + $0x10] sm:$0x77] %v5744
  %5792 = vst [vmem:[#allocation4 + $0x28] sm:$0x77] %v5746
  %5793 = vst [vmem:[#allocation4 + $0x40] sm:$0x77] %v5748
  %5794 = vst [vmem:[#allocation4 + $0x58] sm:$0x77] %v5750
  %5795 = vst [vmem:[#allocation4 + $0x70] sm:$0x77] %v5752
  %5796 = vst [vmem:[#allocation4 + $0x88] sm:$0x77] %v5754
  %5797 = vst [vmem:[#allocation4 + $0xa0] sm:$0x77] %v5756
  %5798 = vst [vmem:[#allocation4 + $0xb8] sm:$0x77] %v5758
  %5799 = vst [vmem:[#allocation4 + $0x100] sm:$0x77] %v5760
  %5800 = vst [vmem:[#allocation4 + $0x118] sm:$0x77] %v5762
  %5801 = vst [vmem:[#allocation4 + $0x130] sm:$0x77] %v5764
  %5802 = vst [vmem:[#allocation4 + $0x148] sm:$0x77] %v5766
  %5803 = vst [vmem:[#allocation4 + $0x160] sm:$0x77] %v5768
  %5804 = vst [vmem:[#allocation4 + $0x178] sm:$0x77] %v5770
  %5805 = vst [vmem:[#allocation4 + $0x190] sm:$0x77] %v5772
  %5806 = vst [vmem:[#allocation4 + $0x1a8] sm:$0x77] %v5774
  %v5807 = vld [vmem:[#allocation4] sm:$0xff]
  %v5808 = vld [vmem:[#allocation4 + $0x8] sm:$0xff]
  %v5809 = vld [vmem:[#allocation4 + $0x10] sm:$0xff]
  %v5810 = vld [vmem:[#allocation4 + $0x18] sm:$0xff]
  %v5811 = vld [vmem:[#allocation4 + $0x20] sm:$0xff]
  %v5812 = vld [vmem:[#allocation4 + $0x28] sm:$0xff]
  %v5813 = vld [vmem:[#allocation4 + $0x30] sm:$0xff]
  %v5814 = vld [vmem:[#allocation4 + $0x38] sm:$0xff]
  %v5815 = vld [vmem:[#allocation4 + $0x40] sm:$0xff]
  %v5816 = vld [vmem:[#allocation4 + $0x48] sm:$0xff]
  %v5817 = vld [vmem:[#allocation4 + $0x50] sm:$0xff]
  %v5818 = vld [vmem:[#allocation4 + $0x58] sm:$0xff]
  %v5819 = vld [vmem:[#allocation4 + $0x60] sm:$0xff]
  %v5820 = vld [vmem:[#allocation4 + $0x68] sm:$0xff]
  %v5821 = vld [vmem:[#allocation4 + $0x70] sm:$0xff]
  %v5822 = vld [vmem:[#allocation4 + $0x78] sm:$0xff]
  %v5823 = vld [vmem:[#allocation4 + $0x80] sm:$0xff]
  %v5824 = vld [vmem:[#allocation4 + $0x88] sm:$0xff]
  %v5825 = vld [vmem:[#allocation4 + $0x90] sm:$0xff]
  %v5826 = vld [vmem:[#allocation4 + $0x98] sm:$0xff]
  %v5827 = vld [vmem:[#allocation4 + $0xa0] sm:$0xff]
  %v5828 = vld [vmem:[#allocation4 + $0xa8] sm:$0xff]
  %v5829 = vld [vmem:[#allocation4 + $0xb0] sm:$0xff]
  %v5830 = vld [vmem:[#allocation4 + $0xb8] sm:$0xff]
  %v5831 = vld [vmem:[#allocation4 + $0xf0] sm:$0xff]
  %v5832 = vld [vmem:[#allocation4 + $0xf8] sm:$0xff]
  %v5833 = vld [vmem:[#allocation4 + $0x100] sm:$0xff]
  %v5834 = vld [vmem:[#allocation4 + $0x108] sm:$0xff]
  %v5835 = vld [vmem:[#allocation4 + $0x110] sm:$0xff]
  %v5836 = vld [vmem:[#allocation4 + $0x118] sm:$0xff]
  %v5837 = vld [vmem:[#allocation4 + $0x120] sm:$0xff]
  %v5838 = vld [vmem:[#allocation4 + $0x128] sm:$0xff]
  %v5839 = vld [vmem:[#allocation4 + $0x130] sm:$0xff]
  %v5840 = vld [vmem:[#allocation4 + $0x138] sm:$0xff]
  %v5841 = vld [vmem:[#allocation4 + $0x140] sm:$0xff]
  %v5842 = vld [vmem:[#allocation4 + $0x148] sm:$0xff]
  %v5843 = vld [vmem:[#allocation4 + $0x150] sm:$0xff]
  %v5844 = vld [vmem:[#allocation4 + $0x158] sm:$0xff]
  %v5845 = vld [vmem:[#allocation4 + $0x160] sm:$0xff]
  %v5846 = vld [vmem:[#allocation4 + $0x168] sm:$0xff]
  %v5847 = vld [vmem:[#allocation4 + $0x170] sm:$0xff]
  %v5848 = vld [vmem:[#allocation4 + $0x178] sm:$0xff]
  %v5849 = vld [vmem:[#allocation4 + $0x180] sm:$0xff]
  %v5850 = vld [vmem:[#allocation4 + $0x188] sm:$0xff]
  %v5851 = vld [vmem:[#allocation4 + $0x190] sm:$0xff]
  %v5852 = vld [vmem:[#allocation4 + $0x198] sm:$0xff]
  %v5853 = vld [vmem:[#allocation4 + $0x1a0] sm:$0xff]
  %v5854 = vld [vmem:[#allocation4 + $0x1a8] sm:$0xff]
  %v5855 = vld [vmem:[%s11] sm:$0xf]
  %v5856 = vld [vmem:[%s11 + $0x4] sm:$0xf]
  %v5857 = vld [vmem:[%s11 + $0x8] sm:$0xf]
  %v5858 = vld [vmem:[%s11 + $0xc] sm:$0xf]
  %v5859 = vld [vmem:[%s11 + $0x10] sm:$0xf]
  %v5860 = vld [vmem:[%s11 + $0x14] sm:$0xf]
  %v5861 = vld [vmem:[%s11 + $0x18] sm:$0xf]
  %v5862 = vld [vmem:[%s11 + $0x1c] sm:$0xf]
  %v5863 = vld [vmem:[%s11 + $0x20] sm:$0xf]
  %v5864 = vld [vmem:[%s11 + $0x24] sm:$0xf]
  %v5865 = vld [vmem:[%s11 + $0x28] sm:$0xf]
  %v5866 = vld [vmem:[%s11 + $0x2c] sm:$0xf]
  %v5867 = vld [vmem:[%s11 + $0x30] sm:$0xf]
  %v5868 = vld [vmem:[%s11 + $0x34] sm:$0xf]
  %v5869 = vld [vmem:[%s11 + $0x38] sm:$0xf]
  %v5870 = vld [vmem:[%s11 + $0x3c] sm:$0xf]
  %v5871 = vld [vmem:[%s11 + $0x40] sm:$0xf]
  %v5872 = vld [vmem:[%s11 + $0x44] sm:$0xf]
  %v5873 = vld [vmem:[%s11 + $0x48] sm:$0xf]
  %v5874 = vld [vmem:[%s11 + $0x4c] sm:$0xf]
  %v5875 = vld [vmem:[%s11 + $0x50] sm:$0xf]
  %v5876 = vld [vmem:[%s11 + $0x54] sm:$0xf]
  %v5877 = vld [vmem:[%s11 + $0x58] sm:$0xf]
  %v5878 = vld [vmem:[%s11 + $0x5c] sm:$0xf]
  %v5879 = vld [vmem:[%s11 + $0x60] sm:$0xf]
  %v5880 = vld [vmem:[%s11 + $0x64] sm:$0xf]
  %v5881 = vld [vmem:[%s11 + $0x68] sm:$0xf]
  %v5882 = vld [vmem:[%s11 + $0x6c] sm:$0xf]
  %v5883 = vld [vmem:[%s11 + $0x70] sm:$0xf]
  %v5884 = vld [vmem:[%s11 + $0x74] sm:$0xf]
  %v5885 = vld [vmem:[%s11 + $0x78] sm:$0xf]
  %v5886 = vld [vmem:[%s11 + $0x7c] sm:$0xf]
  %v5887 = vld [vmem:[%s11 + $0x80] sm:$0xf]
  %v5888 = vld [vmem:[%s11 + $0x84] sm:$0xf]
  %v5889 = vld [vmem:[%s11 + $0x88] sm:$0xf]
  %v5890 = vld [vmem:[%s11 + $0x8c] sm:$0xf]
  %v5891 = vld [vmem:[%s11 + $0x90] sm:$0xf]
  %v5892 = vld [vmem:[%s11 + $0x94] sm:$0xf]
  %v5893 = vld [vmem:[%s11 + $0x98] sm:$0xf]
  %v5894 = vld [vmem:[%s11 + $0x9c] sm:$0xf]
  %v5895 = vld [vmem:[%s11 + $0xa0] sm:$0xf]
  %v5896 = vld [vmem:[%s11 + $0xa4] sm:$0xf]
  %v5897 = vld [vmem:[%s11 + $0xa8] sm:$0xf]
  %v5898 = vld [vmem:[%s11 + $0xac] sm:$0xf]
  %v5899 = vld [vmem:[%s11 + $0xb0] sm:$0xf]
  %v5900 = vld [vmem:[%s11 + $0xb4] sm:$0xf]
  %v5901 = vld [vmem:[%s11 + $0xb8] sm:$0xf]
  %v5902 = vld [vmem:[%s11 + $0xbc] sm:$0xf]
  %v5903 = vld [vmem:[%s11 + $0xc0] sm:$0xf]
  %v5904 = vld [vmem:[%s11 + $0xc4] sm:$0xf]
  %v5905 = vld [vmem:[%s11 + $0xc8] sm:$0xf]
  %v5906 = vld [vmem:[%s11 + $0xcc] sm:$0xf]
  %v5907 = vld [vmem:[%s11 + $0xd0] sm:$0xf]
  %v5908 = vld [vmem:[%s11 + $0xd4] sm:$0xf]
  %v5909 = vld [vmem:[%s11 + $0xd8] sm:$0xf]
  %v5910 = vld [vmem:[%s11 + $0xdc] sm:$0xf]
  %v5911 = vld [vmem:[%s11 + $0xe0] sm:$0xf]
  %v5912 = vld [vmem:[%s11 + $0xe4] sm:$0xf]
  %v5913 = vld [vmem:[%s11 + $0xe8] sm:$0xf]
  %v5914 = vld [vmem:[%s11 + $0xec] sm:$0xf]
  %v5915 = vld [vmem:[%s11 + $0xf0] sm:$0xf]
  %v5916 = vld [vmem:[%s11 + $0xf4] sm:$0xf]
  %v5917 = vld [vmem:[%s11 + $0xf8] sm:$0xf]
  %v5918 = vld [vmem:[%s11 + $0xfc] sm:$0xf]
  %v5919 = vld [vmem:[%s11 + $0x100] sm:$0xf]
  %v5920 = vld [vmem:[%s11 + $0x104] sm:$0xf]
  %v5921 = vld [vmem:[%s11 + $0x108] sm:$0xf]
  %v5922 = vld [vmem:[%s11 + $0x10c] sm:$0xf]
  %v5923 = vld [vmem:[%s11 + $0x110] sm:$0xf]
  %v5924 = vld [vmem:[%s11 + $0x114] sm:$0xf]
  %v5925 = vld [vmem:[%s11 + $0x118] sm:$0xf]
  %v5926 = vld [vmem:[%s11 + $0x11c] sm:$0xf]
  %v5927 = vld [vmem:[%s11 + $0x120] sm:$0xf]
  %v5928 = vld [vmem:[%s11 + $0x124] sm:$0xf]
  %v5929 = vld [vmem:[%s11 + $0x128] sm:$0xf]
  %v5930 = vld [vmem:[%s11 + $0x12c] sm:$0xf]
  %v5931 = vld [vmem:[%s11 + $0x130] sm:$0xf]
  %v5932 = vld [vmem:[%s11 + $0x134] sm:$0xf]
  %v5933 = vld [vmem:[%s11 + $0x138] sm:$0xf]
  %v5934 = vld [vmem:[%s11 + $0x13c] sm:$0xf]
  %v5935 = vld [vmem:[%s11 + $0x140] sm:$0xf]
  %v5936 = vld [vmem:[%s11 + $0x144] sm:$0xf]
  %v5937 = vld [vmem:[%s11 + $0x148] sm:$0xf]
  %v5938 = vld [vmem:[%s11 + $0x14c] sm:$0xf]
  %v5939 = vld [vmem:[%s11 + $0x150] sm:$0xf]
  %v5940 = vld [vmem:[%s11 + $0x154] sm:$0xf]
  %v5941 = vld [vmem:[%s11 + $0x158] sm:$0xf]
  %v5942 = vld [vmem:[%s11 + $0x15c] sm:$0xf]
  %v5943 = vld [vmem:[%s11 + $0x160] sm:$0xf]
  %v5944 = vld [vmem:[%s11 + $0x164] sm:$0xf]
  %v5945 = vld [vmem:[%s11 + $0x168] sm:$0xf]
  %v5946 = vld [vmem:[%s11 + $0x16c] sm:$0xf]
  %v5947 = vld [vmem:[%s11 + $0x170] sm:$0xf]
  %v5948 = vld [vmem:[%s11 + $0x174] sm:$0xf]
  %v5949 = vld [vmem:[%s11 + $0x178] sm:$0xf]
  %v5950 = vld [vmem:[%s11 + $0x17c] sm:$0xf]
  %s5951 = scalar_lea.vmem [#allocation4], 24
  %v5952 = vld [vmem:[%s5951] sm:$0xff]
  %v5953 = vld [vmem:[%s5951 + $0x8] sm:$0xff]
  %v5954 = vld [vmem:[%s5951 + $0x10] sm:$0xff]
  %v5955 = vld [vmem:[%s5951 + $0x18] sm:$0xff]
  %v5956 = vld [vmem:[%s5951 + $0x20] sm:$0xff]
  %v5957 = vld [vmem:[%s5951 + $0x28] sm:$0xff]
  %v5958 = vld [vmem:[%s5951 + $0x30] sm:$0xff]
  %v5959 = vld [vmem:[%s5951 + $0x38] sm:$0xff]
  %v5960 = vld [vmem:[%s5951 + $0x40] sm:$0xff]
  %v5961 = vld [vmem:[%s5951 + $0x48] sm:$0xff]
  %v5962 = vld [vmem:[%s5951 + $0x50] sm:$0xff]
  %v5963 = vld [vmem:[%s5951 + $0x58] sm:$0xff]
  %v5964 = vld [vmem:[%s5951 + $0x60] sm:$0xff]
  %v5965 = vld [vmem:[%s5951 + $0x68] sm:$0xff]
  %v5966 = vld [vmem:[%s5951 + $0x70] sm:$0xff]
  %v5967 = vld [vmem:[%s5951 + $0x78] sm:$0xff]
  %v5968 = vld [vmem:[%s5951 + $0x80] sm:$0xff]
  %v5969 = vld [vmem:[%s5951 + $0x88] sm:$0xff]
  %v5970 = vld [vmem:[%s5951 + $0x90] sm:$0xff]
  %v5971 = vld [vmem:[%s5951 + $0x98] sm:$0xff]
  %v5972 = vld [vmem:[%s5951 + $0xa0] sm:$0xff]
  %v5973 = vld [vmem:[%s5951 + $0xa8] sm:$0xff]
  %v5974 = vld [vmem:[%s5951 + $0xb0] sm:$0xff]
  %v5975 = vld [vmem:[%s5951 + $0xb8] sm:$0xff]
  %v5976 = vld [vmem:[%s5951 + $0xf0] sm:$0xff]
  %v5977 = vld [vmem:[%s5951 + $0xf8] sm:$0xff]
  %v5978 = vld [vmem:[%s5951 + $0x100] sm:$0xff]
  %v5979 = vld [vmem:[%s5951 + $0x108] sm:$0xff]
  %v5980 = vld [vmem:[%s5951 + $0x110] sm:$0xff]
  %v5981 = vld [vmem:[%s5951 + $0x118] sm:$0xff]
  %v5982 = vld [vmem:[%s5951 + $0x120] sm:$0xff]
  %v5983 = vld [vmem:[%s5951 + $0x128] sm:$0xff]
  %v5984 = vld [vmem:[%s5951 + $0x130] sm:$0xff]
  %v5985 = vld [vmem:[%s5951 + $0x138] sm:$0xff]
  %v5986 = vld [vmem:[%s5951 + $0x140] sm:$0xff]
  %v5987 = vld [vmem:[%s5951 + $0x148] sm:$0xff]
  %v5988 = vld [vmem:[%s5951 + $0x150] sm:$0xff]
  %v5989 = vld [vmem:[%s5951 + $0x158] sm:$0xff]
  %v5990 = vld [vmem:[%s5951 + $0x160] sm:$0xff]
  %v5991 = vld [vmem:[%s5951 + $0x168] sm:$0xff]
  %v5992 = vld [vmem:[%s5951 + $0x170] sm:$0xff]
  %v5993 = vld [vmem:[%s5951 + $0x178] sm:$0xff]
  %v5994 = vld [vmem:[%s5951 + $0x180] sm:$0xff]
  %v5995 = vld [vmem:[%s5951 + $0x188] sm:$0xff]
  %v5996 = vld [vmem:[%s5951 + $0x190] sm:$0xff]
  %v5997 = vld [vmem:[%s5951 + $0x198] sm:$0xff]
  %v5998 = vld [vmem:[%s5951 + $0x1a0] sm:$0xff]
  %v5999 = vld [vmem:[%s5951 + $0x1a8] sm:$0xff]
  %v6000 = vld [vmem:[%s11 + $0x180] sm:$0xf]
  %v6001 = vld [vmem:[%s11 + $0x184] sm:$0xf]
  %v6002 = vld [vmem:[%s11 + $0x188] sm:$0xf]
  %v6003 = vld [vmem:[%s11 + $0x18c] sm:$0xf]
  %v6004 = vld [vmem:[%s11 + $0x190] sm:$0xf]
  %v6005 = vld [vmem:[%s11 + $0x194] sm:$0xf]
  %v6006 = vld [vmem:[%s11 + $0x198] sm:$0xf]
  %v6007 = vld [vmem:[%s11 + $0x19c] sm:$0xf]
  %v6008 = vld [vmem:[%s11 + $0x1a0] sm:$0xf]
  %v6009 = vld [vmem:[%s11 + $0x1a4] sm:$0xf]
  %v6010 = vld [vmem:[%s11 + $0x1a8] sm:$0xf]
  %v6011 = vld [vmem:[%s11 + $0x1ac] sm:$0xf]
  %v6012 = vld [vmem:[%s11 + $0x1b0] sm:$0xf]
  %v6013 = vld [vmem:[%s11 + $0x1b4] sm:$0xf]
  %v6014 = vld [vmem:[%s11 + $0x1b8] sm:$0xf]
  %v6015 = vld [vmem:[%s11 + $0x1bc] sm:$0xf]
  %v6016 = vld [vmem:[%s11 + $0x1c0] sm:$0xf]
  %v6017 = vld [vmem:[%s11 + $0x1c4] sm:$0xf]
  %v6018 = vld [vmem:[%s11 + $0x1c8] sm:$0xf]
  %v6019 = vld [vmem:[%s11 + $0x1cc] sm:$0xf]
  %v6020 = vld [vmem:[%s11 + $0x1d0] sm:$0xf]
  %v6021 = vld [vmem:[%s11 + $0x1d4] sm:$0xf]
  %v6022 = vld [vmem:[%s11 + $0x1d8] sm:$0xf]
  %v6023 = vld [vmem:[%s11 + $0x1dc] sm:$0xf]
  %v6024 = vld [vmem:[%s11 + $0x1e0] sm:$0xf]
  %v6025 = vld [vmem:[%s11 + $0x1e4] sm:$0xf]
  %v6026 = vld [vmem:[%s11 + $0x1e8] sm:$0xf]
  %v6027 = vld [vmem:[%s11 + $0x1ec] sm:$0xf]
  %v6028 = vld [vmem:[%s11 + $0x1f0] sm:$0xf]
  %v6029 = vld [vmem:[%s11 + $0x1f4] sm:$0xf]
  %v6030 = vld [vmem:[%s11 + $0x1f8] sm:$0xf]
  %v6031 = vld [vmem:[%s11 + $0x1fc] sm:$0xf]
  %v6032 = vld [vmem:[%s11 + $0x200] sm:$0xf]
  %v6033 = vld [vmem:[%s11 + $0x204] sm:$0xf]
  %v6034 = vld [vmem:[%s11 + $0x208] sm:$0xf]
  %v6035 = vld [vmem:[%s11 + $0x20c] sm:$0xf]
  %v6036 = vld [vmem:[%s11 + $0x210] sm:$0xf]
  %v6037 = vld [vmem:[%s11 + $0x214] sm:$0xf]
  %v6038 = vld [vmem:[%s11 + $0x218] sm:$0xf]
  %v6039 = vld [vmem:[%s11 + $0x21c] sm:$0xf]
  %v6040 = vld [vmem:[%s11 + $0x220] sm:$0xf]
  %v6041 = vld [vmem:[%s11 + $0x224] sm:$0xf]
  %v6042 = vld [vmem:[%s11 + $0x228] sm:$0xf]
  %v6043 = vld [vmem:[%s11 + $0x22c] sm:$0xf]
  %v6044 = vld [vmem:[%s11 + $0x230] sm:$0xf]
  %v6045 = vld [vmem:[%s11 + $0x234] sm:$0xf]
  %v6046 = vld [vmem:[%s11 + $0x238] sm:$0xf]
  %v6047 = vld [vmem:[%s11 + $0x23c] sm:$0xf]
  %v6048 = vld [vmem:[%s11 + $0x240] sm:$0xf]
  %v6049 = vld [vmem:[%s11 + $0x244] sm:$0xf]
  %v6050 = vld [vmem:[%s11 + $0x248] sm:$0xf]
  %v6051 = vld [vmem:[%s11 + $0x24c] sm:$0xf]
  %v6052 = vld [vmem:[%s11 + $0x250] sm:$0xf]
  %v6053 = vld [vmem:[%s11 + $0x254] sm:$0xf]
  %v6054 = vld [vmem:[%s11 + $0x258] sm:$0xf]
  %v6055 = vld [vmem:[%s11 + $0x25c] sm:$0xf]
  %v6056 = vld [vmem:[%s11 + $0x260] sm:$0xf]
  %v6057 = vld [vmem:[%s11 + $0x264] sm:$0xf]
  %v6058 = vld [vmem:[%s11 + $0x268] sm:$0xf]
  %v6059 = vld [vmem:[%s11 + $0x26c] sm:$0xf]
  %v6060 = vld [vmem:[%s11 + $0x270] sm:$0xf]
  %v6061 = vld [vmem:[%s11 + $0x274] sm:$0xf]
  %v6062 = vld [vmem:[%s11 + $0x278] sm:$0xf]
  %v6063 = vld [vmem:[%s11 + $0x27c] sm:$0xf]
  %v6064 = vld [vmem:[%s11 + $0x280] sm:$0xf]
  %v6065 = vld [vmem:[%s11 + $0x284] sm:$0xf]
  %v6066 = vld [vmem:[%s11 + $0x288] sm:$0xf]
  %v6067 = vld [vmem:[%s11 + $0x28c] sm:$0xf]
  %v6068 = vld [vmem:[%s11 + $0x290] sm:$0xf]
  %v6069 = vld [vmem:[%s11 + $0x294] sm:$0xf]
  %v6070 = vld [vmem:[%s11 + $0x298] sm:$0xf]
  %v6071 = vld [vmem:[%s11 + $0x29c] sm:$0xf]
  %v6072 = vld [vmem:[%s11 + $0x2a0] sm:$0xf]
  %v6073 = vld [vmem:[%s11 + $0x2a4] sm:$0xf]
  %v6074 = vld [vmem:[%s11 + $0x2a8] sm:$0xf]
  %v6075 = vld [vmem:[%s11 + $0x2ac] sm:$0xf]
  %v6076 = vld [vmem:[%s11 + $0x2b0] sm:$0xf]
  %v6077 = vld [vmem:[%s11 + $0x2b4] sm:$0xf]
  %v6078 = vld [vmem:[%s11 + $0x2b8] sm:$0xf]
  %v6079 = vld [vmem:[%s11 + $0x2bc] sm:$0xf]
  %v6080 = vld [vmem:[%s11 + $0x2c0] sm:$0xf]
  %v6081 = vld [vmem:[%s11 + $0x2c4] sm:$0xf]
  %v6082 = vld [vmem:[%s11 + $0x2c8] sm:$0xf]
  %v6083 = vld [vmem:[%s11 + $0x2cc] sm:$0xf]
  %v6084 = vld [vmem:[%s11 + $0x2d0] sm:$0xf]
  %v6085 = vld [vmem:[%s11 + $0x2d4] sm:$0xf]
  %v6086 = vld [vmem:[%s11 + $0x2d8] sm:$0xf]
  %v6087 = vld [vmem:[%s11 + $0x2dc] sm:$0xf]
  %v6088 = vld [vmem:[%s11 + $0x2e0] sm:$0xf]
  %v6089 = vld [vmem:[%s11 + $0x2e4] sm:$0xf]
  %v6090 = vld [vmem:[%s11 + $0x2e8] sm:$0xf]
  %v6091 = vld [vmem:[%s11 + $0x2ec] sm:$0xf]
  %v6092 = vld [vmem:[%s11 + $0x2f0] sm:$0xf]
  %v6093 = vld [vmem:[%s11 + $0x2f4] sm:$0xf]
  %v6094 = vld [vmem:[%s11 + $0x2f8] sm:$0xf]
  %v6095 = vld [vmem:[%s11 + $0x2fc] sm:$0xf]
  %v6144 = vunpack.c.l.b16 %v5952
  %v6145 = vunpack.c.h.b16 %v5952
  %v6146 = vunpack.c.l.b16 %v5953
  %v6147 = vunpack.c.h.b16 %v5953
  %v6148 = vunpack.c.l.b16 %v5954
  %v6149 = vunpack.c.h.b16 %v5954
  %v6150 = vunpack.c.l.b16 %v5955
  %v6151 = vunpack.c.h.b16 %v5955
  %v6152 = vunpack.c.l.b16 %v5956
  %v6153 = vunpack.c.h.b16 %v5956
  %v6154 = vunpack.c.l.b16 %v5957
  %v6155 = vunpack.c.h.b16 %v5957
  %v6156 = vunpack.c.l.b16 %v5958
  %v6157 = vunpack.c.h.b16 %v5958
  %v6158 = vunpack.c.l.b16 %v5959
  %v6159 = vunpack.c.h.b16 %v5959
  %v6160 = vunpack.c.l.b16 %v5960
  %v6161 = vunpack.c.h.b16 %v5960
  %v6162 = vunpack.c.l.b16 %v5961
  %v6163 = vunpack.c.h.b16 %v5961
  %v6164 = vunpack.c.l.b16 %v5962
  %v6165 = vunpack.c.h.b16 %v5962
  %v6166 = vunpack.c.l.b16 %v5963
  %v6167 = vunpack.c.h.b16 %v5963
  %v6168 = vunpack.c.l.b16 %v5964
  %v6169 = vunpack.c.h.b16 %v5964
  %v6170 = vunpack.c.l.b16 %v5965
  %v6171 = vunpack.c.h.b16 %v5965
  %v6172 = vunpack.c.l.b16 %v5966
  %v6173 = vunpack.c.h.b16 %v5966
  %v6174 = vunpack.c.l.b16 %v5967
  %v6175 = vunpack.c.h.b16 %v5967
  %v6176 = vunpack.c.l.b16 %v5968
  %v6177 = vunpack.c.h.b16 %v5968
  %v6178 = vunpack.c.l.b16 %v5969
  %v6179 = vunpack.c.h.b16 %v5969
  %v6180 = vunpack.c.l.b16 %v5970
  %v6181 = vunpack.c.h.b16 %v5970
  %v6182 = vunpack.c.l.b16 %v5971
  %v6183 = vunpack.c.h.b16 %v5971
  %v6184 = vunpack.c.l.b16 %v5972
  %v6185 = vunpack.c.h.b16 %v5972
  %v6186 = vunpack.c.l.b16 %v5973
  %v6187 = vunpack.c.h.b16 %v5973
  %v6188 = vunpack.c.l.b16 %v5974
  %v6189 = vunpack.c.h.b16 %v5974
  %v6190 = vunpack.c.l.b16 %v5975
  %v6191 = vunpack.c.h.b16 %v5975
  %v6192 = vunpack.c.l.b16 %v5976
  %v6193 = vunpack.c.h.b16 %v5976
  %v6194 = vunpack.c.l.b16 %v5977
  %v6195 = vunpack.c.h.b16 %v5977
  %v6196 = vunpack.c.l.b16 %v5978
  %v6197 = vunpack.c.h.b16 %v5978
  %v6198 = vunpack.c.l.b16 %v5979
  %v6199 = vunpack.c.h.b16 %v5979
  %v6200 = vunpack.c.l.b16 %v5980
  %v6201 = vunpack.c.h.b16 %v5980
  %v6202 = vunpack.c.l.b16 %v5981
  %v6203 = vunpack.c.h.b16 %v5981
  %v6204 = vunpack.c.l.b16 %v5982
  %v6205 = vunpack.c.h.b16 %v5982
  %v6206 = vunpack.c.l.b16 %v5983
  %v6207 = vunpack.c.h.b16 %v5983
  %v6208 = vunpack.c.l.b16 %v5984
  %v6209 = vunpack.c.h.b16 %v5984
  %v6210 = vunpack.c.l.b16 %v5985
  %v6211 = vunpack.c.h.b16 %v5985
  %v6212 = vunpack.c.l.b16 %v5986
  %v6213 = vunpack.c.h.b16 %v5986
  %v6214 = vunpack.c.l.b16 %v5987
  %v6215 = vunpack.c.h.b16 %v5987
  %v6216 = vunpack.c.l.b16 %v5988
  %v6217 = vunpack.c.h.b16 %v5988
  %v6218 = vunpack.c.l.b16 %v5989
  %v6219 = vunpack.c.h.b16 %v5989
  %v6220 = vunpack.c.l.b16 %v5990
  %v6221 = vunpack.c.h.b16 %v5990
  %v6222 = vunpack.c.l.b16 %v5991
  %v6223 = vunpack.c.h.b16 %v5991
  %v6224 = vunpack.c.l.b16 %v5992
  %v6225 = vunpack.c.h.b16 %v5992
  %v6226 = vunpack.c.l.b16 %v5993
  %v6227 = vunpack.c.h.b16 %v5993
  %v6228 = vunpack.c.l.b16 %v5994
  %v6229 = vunpack.c.h.b16 %v5994
  %v6230 = vunpack.c.l.b16 %v5995
  %v6231 = vunpack.c.h.b16 %v5995
  %v6232 = vunpack.c.l.b16 %v5996
  %v6233 = vunpack.c.h.b16 %v5996
  %v6234 = vunpack.c.l.b16 %v5997
  %v6235 = vunpack.c.h.b16 %v5997
  %v6236 = vunpack.c.l.b16 %v5998
  %v6237 = vunpack.c.h.b16 %v5998
  %v6238 = vunpack.c.l.b16 %v5999
  %v6239 = vunpack.c.h.b16 %v5999
  %v6240 = vpack.c.b16 %v6150, %v6144
  %v6241 = vpack.c.b16 %v6151, %v6145
  %v6242 = vpack.c.b16 %v6152, %v6146
  %v6243 = vpack.c.b16 %v6153, %v6147
  %v6244 = vpack.c.b16 %v6154, %v6148
  %v6245 = vpack.c.b16 %v6155, %v6149
  %v6246 = vpack.c.b16 %v6162, %v6156
  %v6247 = vpack.c.b16 %v6163, %v6157
  %v6248 = vpack.c.b16 %v6164, %v6158
  %v6249 = vpack.c.b16 %v6165, %v6159
  %v6250 = vpack.c.b16 %v6166, %v6160
  %v6251 = vpack.c.b16 %v6167, %v6161
  %v6252 = vpack.c.b16 %v6174, %v6168
  %v6253 = vpack.c.b16 %v6175, %v6169
  %v6254 = vpack.c.b16 %v6176, %v6170
  %v6255 = vpack.c.b16 %v6177, %v6171
  %v6256 = vpack.c.b16 %v6178, %v6172
  %v6257 = vpack.c.b16 %v6179, %v6173
  %v6258 = vpack.c.b16 %v6186, %v6180
  %v6259 = vpack.c.b16 %v6187, %v6181
  %v6260 = vpack.c.b16 %v6188, %v6182
  %v6261 = vpack.c.b16 %v6189, %v6183
  %v6262 = vpack.c.b16 %v6190, %v6184
  %v6263 = vpack.c.b16 %v6191, %v6185
  %v6264 = vpack.c.b16 %v6198, %v6192
  %v6265 = vpack.c.b16 %v6199, %v6193
  %v6266 = vpack.c.b16 %v6200, %v6194
  %v6267 = vpack.c.b16 %v6201, %v6195
  %v6268 = vpack.c.b16 %v6202, %v6196
  %v6269 = vpack.c.b16 %v6203, %v6197
  %v6270 = vpack.c.b16 %v6210, %v6204
  %v6271 = vpack.c.b16 %v6211, %v6205
  %v6272 = vpack.c.b16 %v6212, %v6206
  %v6273 = vpack.c.b16 %v6213, %v6207
  %v6274 = vpack.c.b16 %v6214, %v6208
  %v6275 = vpack.c.b16 %v6215, %v6209
  %v6276 = vpack.c.b16 %v6222, %v6216
  %v6277 = vpack.c.b16 %v6223, %v6217
  %v6278 = vpack.c.b16 %v6224, %v6218
  %v6279 = vpack.c.b16 %v6225, %v6219
  %v6280 = vpack.c.b16 %v6226, %v6220
  %v6281 = vpack.c.b16 %v6227, %v6221
  %v6282 = vpack.c.b16 %v6234, %v6228
  %v6283 = vpack.c.b16 %v6235, %v6229
  %v6284 = vpack.c.b16 %v6236, %v6230
  %v6285 = vpack.c.b16 %v6237, %v6231
  %v6286 = vpack.c.b16 %v6238, %v6232
  %v6287 = vpack.c.b16 %v6239, %v6233
  %v6432 = vunpack.c.l.b16 %v6000
  %v6433 = vunpack.c.l.b16 %v6001
  %v6434 = vunpack.c.l.b16 %v6002
  %v6435 = vunpack.c.l.b16 %v6003
  %v6436 = vunpack.c.l.b16 %v6004
  %v6437 = vunpack.c.l.b16 %v6005
  %v6438 = vunpack.c.l.b16 %v6006
  %v6439 = vunpack.c.l.b16 %v6007
  %v6440 = vunpack.c.l.b16 %v6008
  %v6441 = vunpack.c.l.b16 %v6009
  %v6442 = vunpack.c.l.b16 %v6010
  %v6443 = vunpack.c.l.b16 %v6011
  %v6444 = vunpack.c.l.b16 %v6012
  %v6445 = vunpack.c.l.b16 %v6013
  %v6446 = vunpack.c.l.b16 %v6014
  %v6447 = vunpack.c.l.b16 %v6015
  %v6448 = vunpack.c.l.b16 %v6016
  %v6449 = vunpack.c.l.b16 %v6017
  %v6450 = vunpack.c.l.b16 %v6018
  %v6451 = vunpack.c.l.b16 %v6019
  %v6452 = vunpack.c.l.b16 %v6020
  %v6453 = vunpack.c.l.b16 %v6021
  %v6454 = vunpack.c.l.b16 %v6022
  %v6455 = vunpack.c.l.b16 %v6023
  %v6456 = vunpack.c.l.b16 %v6024
  %v6457 = vunpack.c.l.b16 %v6025
  %v6458 = vunpack.c.l.b16 %v6026
  %v6459 = vunpack.c.l.b16 %v6027
  %v6460 = vunpack.c.l.b16 %v6028
  %v6461 = vunpack.c.l.b16 %v6029
  %v6462 = vunpack.c.l.b16 %v6030
  %v6463 = vunpack.c.l.b16 %v6031
  %v6464 = vunpack.c.l.b16 %v6032
  %v6465 = vunpack.c.l.b16 %v6033
  %v6466 = vunpack.c.l.b16 %v6034
  %v6467 = vunpack.c.l.b16 %v6035
  %v6468 = vunpack.c.l.b16 %v6036
  %v6469 = vunpack.c.l.b16 %v6037
  %v6470 = vunpack.c.l.b16 %v6038
  %v6471 = vunpack.c.l.b16 %v6039
  %v6472 = vunpack.c.l.b16 %v6040
  %v6473 = vunpack.c.l.b16 %v6041
  %v6474 = vunpack.c.l.b16 %v6042
  %v6475 = vunpack.c.l.b16 %v6043
  %v6476 = vunpack.c.l.b16 %v6044
  %v6477 = vunpack.c.l.b16 %v6045
  %v6478 = vunpack.c.l.b16 %v6046
  %v6479 = vunpack.c.l.b16 %v6047
  %v6480 = vunpack.c.l.b16 %v6048
  %v6481 = vunpack.c.l.b16 %v6049
  %v6482 = vunpack.c.l.b16 %v6050
  %v6483 = vunpack.c.l.b16 %v6051
  %v6484 = vunpack.c.l.b16 %v6052
  %v6485 = vunpack.c.l.b16 %v6053
  %v6486 = vunpack.c.l.b16 %v6054
  %v6487 = vunpack.c.l.b16 %v6055
  %v6488 = vunpack.c.l.b16 %v6056
  %v6489 = vunpack.c.l.b16 %v6057
  %v6490 = vunpack.c.l.b16 %v6058
  %v6491 = vunpack.c.l.b16 %v6059
  %v6492 = vunpack.c.l.b16 %v6060
  %v6493 = vunpack.c.l.b16 %v6061
  %v6494 = vunpack.c.l.b16 %v6062
  %v6495 = vunpack.c.l.b16 %v6063
  %v6496 = vunpack.c.l.b16 %v6064
  %v6497 = vunpack.c.l.b16 %v6065
  %v6498 = vunpack.c.l.b16 %v6066
  %v6499 = vunpack.c.l.b16 %v6067
  %v6500 = vunpack.c.l.b16 %v6068
  %v6501 = vunpack.c.l.b16 %v6069
  %v6502 = vunpack.c.l.b16 %v6070
  %v6503 = vunpack.c.l.b16 %v6071
  %v6504 = vunpack.c.l.b16 %v6072
  %v6505 = vunpack.c.l.b16 %v6073
  %v6506 = vunpack.c.l.b16 %v6074
  %v6507 = vunpack.c.l.b16 %v6075
  %v6508 = vunpack.c.l.b16 %v6076
  %v6509 = vunpack.c.l.b16 %v6077
  %v6510 = vunpack.c.l.b16 %v6078
  %v6511 = vunpack.c.l.b16 %v6079
  %v6512 = vunpack.c.l.b16 %v6080
  %v6513 = vunpack.c.l.b16 %v6081
  %v6514 = vunpack.c.l.b16 %v6082
  %v6515 = vunpack.c.l.b16 %v6083
  %v6516 = vunpack.c.l.b16 %v6084
  %v6517 = vunpack.c.l.b16 %v6085
  %v6518 = vunpack.c.l.b16 %v6086
  %v6519 = vunpack.c.l.b16 %v6087
  %v6520 = vunpack.c.l.b16 %v6088
  %v6521 = vunpack.c.l.b16 %v6089
  %v6522 = vunpack.c.l.b16 %v6090
  %v6523 = vunpack.c.l.b16 %v6091
  %v6524 = vunpack.c.l.b16 %v6092
  %v6525 = vunpack.c.l.b16 %v6093
  %v6526 = vunpack.c.l.b16 %v6094
  %v6527 = vunpack.c.l.b16 %v6095
  %v6528 = vpack.c.b16 %v6433, %v6432
  %v6529 = vpack.c.b16 %v6435, %v6434
  %v6530 = vpack.c.b16 %v6437, %v6436
  %v6531 = vpack.c.b16 %v6439, %v6438
  %v6532 = vpack.c.b16 %v6441, %v6440
  %v6533 = vpack.c.b16 %v6443, %v6442
  %v6534 = vpack.c.b16 %v6445, %v6444
  %v6535 = vpack.c.b16 %v6447, %v6446
  %v6536 = vpack.c.b16 %v6449, %v6448
  %v6537 = vpack.c.b16 %v6451, %v6450
  %v6538 = vpack.c.b16 %v6453, %v6452
  %v6539 = vpack.c.b16 %v6455, %v6454
  %v6540 = vpack.c.b16 %v6457, %v6456
  %v6541 = vpack.c.b16 %v6459, %v6458
  %v6542 = vpack.c.b16 %v6461, %v6460
  %v6543 = vpack.c.b16 %v6463, %v6462
  %v6544 = vpack.c.b16 %v6465, %v6464
  %v6545 = vpack.c.b16 %v6467, %v6466
  %v6546 = vpack.c.b16 %v6469, %v6468
  %v6547 = vpack.c.b16 %v6471, %v6470
  %v6548 = vpack.c.b16 %v6473, %v6472
  %v6549 = vpack.c.b16 %v6475, %v6474
  %v6550 = vpack.c.b16 %v6477, %v6476
  %v6551 = vpack.c.b16 %v6479, %v6478
  %v6552 = vpack.c.b16 %v6481, %v6480
  %v6553 = vpack.c.b16 %v6483, %v6482
  %v6554 = vpack.c.b16 %v6485, %v6484
  %v6555 = vpack.c.b16 %v6487, %v6486
  %v6556 = vpack.c.b16 %v6489, %v6488
  %v6557 = vpack.c.b16 %v6491, %v6490
  %v6558 = vpack.c.b16 %v6493, %v6492
  %v6559 = vpack.c.b16 %v6495, %v6494
  %v6560 = vpack.c.b16 %v6497, %v6496
  %v6561 = vpack.c.b16 %v6499, %v6498
  %v6562 = vpack.c.b16 %v6501, %v6500
  %v6563 = vpack.c.b16 %v6503, %v6502
  %v6564 = vpack.c.b16 %v6505, %v6504
  %v6565 = vpack.c.b16 %v6507, %v6506
  %v6566 = vpack.c.b16 %v6509, %v6508
  %v6567 = vpack.c.b16 %v6511, %v6510
  %v6568 = vpack.c.b16 %v6513, %v6512
  %v6569 = vpack.c.b16 %v6515, %v6514
  %v6570 = vpack.c.b16 %v6517, %v6516
  %v6571 = vpack.c.b16 %v6519, %v6518
  %v6572 = vpack.c.b16 %v6521, %v6520
  %v6573 = vpack.c.b16 %v6523, %v6522
  %v6574 = vpack.c.b16 %v6525, %v6524
  %v6575 = vpack.c.b16 %v6527, %v6526
  %6624 = vmatpush.bf16.msra.mxu0 %v6535
  %6625 = vmatpush.bf16.msra.mxu0 %v6534
  %6626 = vmatpush.bf16.msra.mxu0 %v6533
  %6627 = vmatpush.bf16.msra.mxu0 %v6532
  %6628 = vmatpush.bf16.msra.mxu0 %v6531
  %6629 = vmatpush.bf16.msra.mxu0 %v6530
  %6630 = vmatpush.bf16.msra.mxu0 %v6529
  %6631 = vmatpush.bf16.msra.mxu0 %v6528
  %6632 = vmatmul.bf16.gmra.mxu0 %v6240
  %v6633 = vpop.f32.mrf.mxu0
  %v6634 = vadd.f32 0.0, %v6633
  %v6635 = vpop.f32.mrf.mxu0
  %v6636 = vadd.f32 0.0, %v6635
  %6637 = vmatmul.bf16.gmra.mxu0 %v6246
  %v6638 = vpop.f32.mrf.mxu0
  %v6639 = vadd.f32 0.0, %v6638
  %v6640 = vpop.f32.mrf.mxu0
  %v6641 = vadd.f32 0.0, %v6640
  %6642 = vmatmul.bf16.gmra.mxu0 %v6252
  %v6643 = vpop.f32.mrf.mxu0
  %v6644 = vadd.f32 0.0, %v6643
  %v6645 = vpop.f32.mrf.mxu0
  %v6646 = vadd.f32 0.0, %v6645
  %6647 = vmatmul.bf16.gmra.mxu0 %v6258
  %v6648 = vpop.f32.mrf.mxu0
  %v6649 = vadd.f32 0.0, %v6648
  %v6650 = vpop.f32.mrf.mxu0
  %v6651 = vadd.f32 0.0, %v6650
  %6652 = vmatmul.bf16.gmra.mxu0 %v6264
  %v6653 = vpop.f32.mrf.mxu0
  %v6654 = vadd.f32 0.0, %v6653
  %v6655 = vpop.f32.mrf.mxu0
  %v6656 = vadd.f32 0.0, %v6655
  %6657 = vmatmul.bf16.gmra.mxu0 %v6270
  %v6658 = vpop.f32.mrf.mxu0
  %v6659 = vadd.f32 0.0, %v6658
  %v6660 = vpop.f32.mrf.mxu0
  %v6661 = vadd.f32 0.0, %v6660
  %6662 = vmatmul.bf16.gmra.mxu0 %v6276
  %v6663 = vpop.f32.mrf.mxu0
  %v6664 = vadd.f32 0.0, %v6663
  %v6665 = vpop.f32.mrf.mxu0
  %v6666 = vadd.f32 0.0, %v6665
  %6667 = vmatmul.bf16.gmra.mxu0 %v6282
  %v6668 = vpop.f32.mrf.mxu0
  %v6669 = vadd.f32 0.0, %v6668
  %v6670 = vpop.f32.mrf.mxu0
  %v6671 = vadd.f32 0.0, %v6670
  %6672 = vdwg.mxu0
  %6673 = vmatpush.bf16.msra.mxu0 %v6543
  %6674 = vmatpush.bf16.msra.mxu0 %v6542
  %6675 = vmatpush.bf16.msra.mxu0 %v6541
  %6676 = vmatpush.bf16.msra.mxu0 %v6540
  %6677 = vmatpush.bf16.msra.mxu0 %v6539
  %6678 = vmatpush.bf16.msra.mxu0 %v6538
  %6679 = vmatpush.bf16.msra.mxu0 %v6537
  %6680 = vmatpush.bf16.msra.mxu0 %v6536
  %6681 = vmatmul.bf16.gmra.mxu0 %v6241
  %v6682 = vpop.f32.mrf.mxu0
  %v6683 = vadd.f32 %v6634, %v6682
  %v6684 = vpop.f32.mrf.mxu0
  %v6685 = vadd.f32 %v6636, %v6684
  %6686 = vmatmul.bf16.gmra.mxu0 %v6247
  %v6687 = vpop.f32.mrf.mxu0
  %v6688 = vadd.f32 %v6639, %v6687
  %v6689 = vpop.f32.mrf.mxu0
  %v6690 = vadd.f32 %v6641, %v6689
  %6691 = vmatmul.bf16.gmra.mxu0 %v6253
  %v6692 = vpop.f32.mrf.mxu0
  %v6693 = vadd.f32 %v6644, %v6692
  %v6694 = vpop.f32.mrf.mxu0
  %v6695 = vadd.f32 %v6646, %v6694
  %6696 = vmatmul.bf16.gmra.mxu0 %v6259
  %v6697 = vpop.f32.mrf.mxu0
  %v6698 = vadd.f32 %v6649, %v6697
  %v6699 = vpop.f32.mrf.mxu0
  %v6700 = vadd.f32 %v6651, %v6699
  %6701 = vmatmul.bf16.gmra.mxu0 %v6265
  %v6702 = vpop.f32.mrf.mxu0
  %v6703 = vadd.f32 %v6654, %v6702
  %v6704 = vpop.f32.mrf.mxu0
  %v6705 = vadd.f32 %v6656, %v6704
  %6706 = vmatmul.bf16.gmra.mxu0 %v6271
  %v6707 = vpop.f32.mrf.mxu0
  %v6708 = vadd.f32 %v6659, %v6707
  %v6709 = vpop.f32.mrf.mxu0
  %v6710 = vadd.f32 %v6661, %v6709
  %6711 = vmatmul.bf16.gmra.mxu0 %v6277
  %v6712 = vpop.f32.mrf.mxu0
  %v6713 = vadd.f32 %v6664, %v6712
  %v6714 = vpop.f32.mrf.mxu0
  %v6715 = vadd.f32 %v6666, %v6714
  %6716 = vmatmul.bf16.gmra.mxu0 %v6283
  %v6717 = vpop.f32.mrf.mxu0
  %v6718 = vadd.f32 %v6669, %v6717
  %v6719 = vpop.f32.mrf.mxu0
  %v6720 = vadd.f32 %v6671, %v6719
  %6721 = vdwg.mxu0
  %6722 = vmatpush.bf16.msra.mxu0 %v6551
  %6723 = vmatpush.bf16.msra.mxu0 %v6550
  %6724 = vmatpush.bf16.msra.mxu0 %v6549
  %6725 = vmatpush.bf16.msra.mxu0 %v6548
  %6726 = vmatpush.bf16.msra.mxu0 %v6547
  %6727 = vmatpush.bf16.msra.mxu0 %v6546
  %6728 = vmatpush.bf16.msra.mxu0 %v6545
  %6729 = vmatpush.bf16.msra.mxu0 %v6544
  %6730 = vmatmul.bf16.gmra.mxu0 %v6242
  %v6731 = vpop.f32.mrf.mxu0
  %v6732 = vadd.f32 %v6683, %v6731
  %v6733 = vpop.f32.mrf.mxu0
  %v6734 = vadd.f32 %v6685, %v6733
  %6735 = vmatmul.bf16.gmra.mxu0 %v6248
  %v6736 = vpop.f32.mrf.mxu0
  %v6737 = vadd.f32 %v6688, %v6736
  %v6738 = vpop.f32.mrf.mxu0
  %v6739 = vadd.f32 %v6690, %v6738
  %6740 = vmatmul.bf16.gmra.mxu0 %v6254
  %v6741 = vpop.f32.mrf.mxu0
  %v6742 = vadd.f32 %v6693, %v6741
  %v6743 = vpop.f32.mrf.mxu0
  %v6744 = vadd.f32 %v6695, %v6743
  %6745 = vmatmul.bf16.gmra.mxu0 %v6260
  %v6746 = vpop.f32.mrf.mxu0
  %v6747 = vadd.f32 %v6698, %v6746
  %v6748 = vpop.f32.mrf.mxu0
  %v6749 = vadd.f32 %v6700, %v6748
  %6750 = vmatmul.bf16.gmra.mxu0 %v6266
  %v6751 = vpop.f32.mrf.mxu0
  %v6752 = vadd.f32 %v6703, %v6751
  %v6753 = vpop.f32.mrf.mxu0
  %v6754 = vadd.f32 %v6705, %v6753
  %6755 = vmatmul.bf16.gmra.mxu0 %v6272
  %v6756 = vpop.f32.mrf.mxu0
  %v6757 = vadd.f32 %v6708, %v6756
  %v6758 = vpop.f32.mrf.mxu0
  %v6759 = vadd.f32 %v6710, %v6758
  %6760 = vmatmul.bf16.gmra.mxu0 %v6278
  %v6761 = vpop.f32.mrf.mxu0
  %v6762 = vadd.f32 %v6713, %v6761
  %v6763 = vpop.f32.mrf.mxu0
  %v6764 = vadd.f32 %v6715, %v6763
  %6765 = vmatmul.bf16.gmra.mxu0 %v6284
  %v6766 = vpop.f32.mrf.mxu0
  %v6767 = vadd.f32 %v6718, %v6766
  %v6768 = vpop.f32.mrf.mxu0
  %v6769 = vadd.f32 %v6720, %v6768
  %6770 = vdwg.mxu0
  %6771 = vmatpush.bf16.msra.mxu0 %v6559
  %6772 = vmatpush.bf16.msra.mxu0 %v6558
  %6773 = vmatpush.bf16.msra.mxu0 %v6557
  %6774 = vmatpush.bf16.msra.mxu0 %v6556
  %6775 = vmatpush.bf16.msra.mxu0 %v6555
  %6776 = vmatpush.bf16.msra.mxu0 %v6554
  %6777 = vmatpush.bf16.msra.mxu0 %v6553
  %6778 = vmatpush.bf16.msra.mxu0 %v6552
  %6779 = vmatmul.bf16.gmra.mxu0 %v6243
  %v6780 = vpop.f32.mrf.mxu0
  %v6781 = vadd.f32 %v6732, %v6780
  %v6782 = vpop.f32.mrf.mxu0
  %v6783 = vadd.f32 %v6734, %v6782
  %6784 = vmatmul.bf16.gmra.mxu0 %v6249
  %v6785 = vpop.f32.mrf.mxu0
  %v6786 = vadd.f32 %v6737, %v6785
  %v6787 = vpop.f32.mrf.mxu0
  %v6788 = vadd.f32 %v6739, %v6787
  %6789 = vmatmul.bf16.gmra.mxu0 %v6255
  %v6790 = vpop.f32.mrf.mxu0
  %v6791 = vadd.f32 %v6742, %v6790
  %v6792 = vpop.f32.mrf.mxu0
  %v6793 = vadd.f32 %v6744, %v6792
  %6794 = vmatmul.bf16.gmra.mxu0 %v6261
  %v6795 = vpop.f32.mrf.mxu0
  %v6796 = vadd.f32 %v6747, %v6795
  %v6797 = vpop.f32.mrf.mxu0
  %v6798 = vadd.f32 %v6749, %v6797
  %6799 = vmatmul.bf16.gmra.mxu0 %v6267
  %v6800 = vpop.f32.mrf.mxu0
  %v6801 = vadd.f32 %v6752, %v6800
  %v6802 = vpop.f32.mrf.mxu0
  %v6803 = vadd.f32 %v6754, %v6802
  %6804 = vmatmul.bf16.gmra.mxu0 %v6273
  %v6805 = vpop.f32.mrf.mxu0
  %v6806 = vadd.f32 %v6757, %v6805
  %v6807 = vpop.f32.mrf.mxu0
  %v6808 = vadd.f32 %v6759, %v6807
  %6809 = vmatmul.bf16.gmra.mxu0 %v6279
  %v6810 = vpop.f32.mrf.mxu0
  %v6811 = vadd.f32 %v6762, %v6810
  %v6812 = vpop.f32.mrf.mxu0
  %v6813 = vadd.f32 %v6764, %v6812
  %6814 = vmatmul.bf16.gmra.mxu0 %v6285
  %v6815 = vpop.f32.mrf.mxu0
  %v6816 = vadd.f32 %v6767, %v6815
  %v6817 = vpop.f32.mrf.mxu0
  %v6818 = vadd.f32 %v6769, %v6817
  %6819 = vdwg.mxu0
  %6820 = vmatpush.bf16.msra.mxu0 %v6567
  %6821 = vmatpush.bf16.msra.mxu0 %v6566
  %6822 = vmatpush.bf16.msra.mxu0 %v6565
  %6823 = vmatpush.bf16.msra.mxu0 %v6564
  %6824 = vmatpush.bf16.msra.mxu0 %v6563
  %6825 = vmatpush.bf16.msra.mxu0 %v6562
  %6826 = vmatpush.bf16.msra.mxu0 %v6561
  %6827 = vmatpush.bf16.msra.mxu0 %v6560
  %6828 = vmatmul.bf16.gmra.mxu0 %v6244
  %v6829 = vpop.f32.mrf.mxu0
  %v6830 = vadd.f32 %v6781, %v6829
  %v6831 = vpop.f32.mrf.mxu0
  %v6832 = vadd.f32 %v6783, %v6831
  %6833 = vmatmul.bf16.gmra.mxu0 %v6250
  %v6834 = vpop.f32.mrf.mxu0
  %v6835 = vadd.f32 %v6786, %v6834
  %v6836 = vpop.f32.mrf.mxu0
  %v6837 = vadd.f32 %v6788, %v6836
  %6838 = vmatmul.bf16.gmra.mxu0 %v6256
  %v6839 = vpop.f32.mrf.mxu0
  %v6840 = vadd.f32 %v6791, %v6839
  %v6841 = vpop.f32.mrf.mxu0
  %v6842 = vadd.f32 %v6793, %v6841
  %6843 = vmatmul.bf16.gmra.mxu0 %v6262
  %v6844 = vpop.f32.mrf.mxu0
  %v6845 = vadd.f32 %v6796, %v6844
  %v6846 = vpop.f32.mrf.mxu0
  %v6847 = vadd.f32 %v6798, %v6846
  %6848 = vmatmul.bf16.gmra.mxu0 %v6268
  %v6849 = vpop.f32.mrf.mxu0
  %v6850 = vadd.f32 %v6801, %v6849
  %v6851 = vpop.f32.mrf.mxu0
  %v6852 = vadd.f32 %v6803, %v6851
  %6853 = vmatmul.bf16.gmra.mxu0 %v6274
  %v6854 = vpop.f32.mrf.mxu0
  %v6855 = vadd.f32 %v6806, %v6854
  %v6856 = vpop.f32.mrf.mxu0
  %v6857 = vadd.f32 %v6808, %v6856
  %6858 = vmatmul.bf16.gmra.mxu0 %v6280
  %v6859 = vpop.f32.mrf.mxu0
  %v6860 = vadd.f32 %v6811, %v6859
  %v6861 = vpop.f32.mrf.mxu0
  %v6862 = vadd.f32 %v6813, %v6861
  %6863 = vmatmul.bf16.gmra.mxu0 %v6286
  %v6864 = vpop.f32.mrf.mxu0
  %v6865 = vadd.f32 %v6816, %v6864
  %v6866 = vpop.f32.mrf.mxu0
  %v6867 = vadd.f32 %v6818, %v6866
  %6868 = vdwg.mxu0
  %6869 = vmatpush.bf16.msra.mxu0 %v6575
  %6870 = vmatpush.bf16.msra.mxu0 %v6574
  %6871 = vmatpush.bf16.msra.mxu0 %v6573
  %6872 = vmatpush.bf16.msra.mxu0 %v6572
  %6873 = vmatpush.bf16.msra.mxu0 %v6571
  %6874 = vmatpush.bf16.msra.mxu0 %v6570
  %6875 = vmatpush.bf16.msra.mxu0 %v6569
  %6876 = vmatpush.bf16.msra.mxu0 %v6568
  %6877 = vmatmul.bf16.gmra.mxu0 %v6245
  %v6878 = vpop.f32.mrf.mxu0
  %v6879 = vadd.f32 %v6830, %v6878
  %v6880 = vpop.f32.mrf.mxu0
  %v6881 = vadd.f32 %v6832, %v6880
  %6882 = vmatmul.bf16.gmra.mxu0 %v6251
  %v6883 = vpop.f32.mrf.mxu0
  %v6884 = vadd.f32 %v6835, %v6883
  %v6885 = vpop.f32.mrf.mxu0
  %v6886 = vadd.f32 %v6837, %v6885
  %6887 = vmatmul.bf16.gmra.mxu0 %v6257
  %v6888 = vpop.f32.mrf.mxu0
  %v6889 = vadd.f32 %v6840, %v6888
  %v6890 = vpop.f32.mrf.mxu0
  %v6891 = vadd.f32 %v6842, %v6890
  %6892 = vmatmul.bf16.gmra.mxu0 %v6263
  %v6893 = vpop.f32.mrf.mxu0
  %v6894 = vadd.f32 %v6845, %v6893
  %v6895 = vpop.f32.mrf.mxu0
  %v6896 = vadd.f32 %v6847, %v6895
  %6897 = vmatmul.bf16.gmra.mxu0 %v6269
  %v6898 = vpop.f32.mrf.mxu0
  %v6899 = vadd.f32 %v6850, %v6898
  %v6900 = vpop.f32.mrf.mxu0
  %v6901 = vadd.f32 %v6852, %v6900
  %6902 = vmatmul.bf16.gmra.mxu0 %v6275
  %v6903 = vpop.f32.mrf.mxu0
  %v6904 = vadd.f32 %v6855, %v6903
  %v6905 = vpop.f32.mrf.mxu0
  %v6906 = vadd.f32 %v6857, %v6905
  %6907 = vmatmul.bf16.gmra.mxu0 %v6281
  %v6908 = vpop.f32.mrf.mxu0
  %v6909 = vadd.f32 %v6860, %v6908
  %v6910 = vpop.f32.mrf.mxu0
  %v6911 = vadd.f32 %v6862, %v6910
  %6912 = vmatmul.bf16.gmra.mxu0 %v6287
  %v6913 = vpop.f32.mrf.mxu0
  %v6914 = vadd.f32 %v6865, %v6913
  %v6915 = vpop.f32.mrf.mxu0
  %v6916 = vadd.f32 %v6867, %v6915
  %6917 = vdwg.mxu0
  %v6966 = vunpack.c.l.b16 %v5807
  %v6967 = vunpack.c.h.b16 %v5807
  %v6968 = vunpack.c.l.b16 %v5808
  %v6969 = vunpack.c.h.b16 %v5808
  %v6970 = vunpack.c.l.b16 %v5809
  %v6971 = vunpack.c.h.b16 %v5809
  %v6972 = vunpack.c.l.b16 %v5810
  %v6973 = vunpack.c.h.b16 %v5810
  %v6974 = vunpack.c.l.b16 %v5811
  %v6975 = vunpack.c.h.b16 %v5811
  %v6976 = vunpack.c.l.b16 %v5812
  %v6977 = vunpack.c.h.b16 %v5812
  %v6978 = vunpack.c.l.b16 %v5813
  %v6979 = vunpack.c.h.b16 %v5813
  %v6980 = vunpack.c.l.b16 %v5814
  %v6981 = vunpack.c.h.b16 %v5814
  %v6982 = vunpack.c.l.b16 %v5815
  %v6983 = vunpack.c.h.b16 %v5815
  %v6984 = vunpack.c.l.b16 %v5816
  %v6985 = vunpack.c.h.b16 %v5816
  %v6986 = vunpack.c.l.b16 %v5817
  %v6987 = vunpack.c.h.b16 %v5817
  %v6988 = vunpack.c.l.b16 %v5818
  %v6989 = vunpack.c.h.b16 %v5818
  %v6990 = vunpack.c.l.b16 %v5819
  %v6991 = vunpack.c.h.b16 %v5819
  %v6992 = vunpack.c.l.b16 %v5820
  %v6993 = vunpack.c.h.b16 %v5820
  %v6994 = vunpack.c.l.b16 %v5821
  %v6995 = vunpack.c.h.b16 %v5821
  %v6996 = vunpack.c.l.b16 %v5822
  %v6997 = vunpack.c.h.b16 %v5822
  %v6998 = vunpack.c.l.b16 %v5823
  %v6999 = vunpack.c.h.b16 %v5823
  %v7000 = vunpack.c.l.b16 %v5824
  %v7001 = vunpack.c.h.b16 %v5824
  %v7002 = vunpack.c.l.b16 %v5825
  %v7003 = vunpack.c.h.b16 %v5825
  %v7004 = vunpack.c.l.b16 %v5826
  %v7005 = vunpack.c.h.b16 %v5826
  %v7006 = vunpack.c.l.b16 %v5827
  %v7007 = vunpack.c.h.b16 %v5827
  %v7008 = vunpack.c.l.b16 %v5828
  %v7009 = vunpack.c.h.b16 %v5828
  %v7010 = vunpack.c.l.b16 %v5829
  %v7011 = vunpack.c.h.b16 %v5829
  %v7012 = vunpack.c.l.b16 %v5830
  %v7013 = vunpack.c.h.b16 %v5830
  %v7014 = vunpack.c.l.b16 %v5831
  %v7015 = vunpack.c.h.b16 %v5831
  %v7016 = vunpack.c.l.b16 %v5832
  %v7017 = vunpack.c.h.b16 %v5832
  %v7018 = vunpack.c.l.b16 %v5833
  %v7019 = vunpack.c.h.b16 %v5833
  %v7020 = vunpack.c.l.b16 %v5834
  %v7021 = vunpack.c.h.b16 %v5834
  %v7022 = vunpack.c.l.b16 %v5835
  %v7023 = vunpack.c.h.b16 %v5835
  %v7024 = vunpack.c.l.b16 %v5836
  %v7025 = vunpack.c.h.b16 %v5836
  %v7026 = vunpack.c.l.b16 %v5837
  %v7027 = vunpack.c.h.b16 %v5837
  %v7028 = vunpack.c.l.b16 %v5838
  %v7029 = vunpack.c.h.b16 %v5838
  %v7030 = vunpack.c.l.b16 %v5839
  %v7031 = vunpack.c.h.b16 %v5839
  %v7032 = vunpack.c.l.b16 %v5840
  %v7033 = vunpack.c.h.b16 %v5840
  %v7034 = vunpack.c.l.b16 %v5841
  %v7035 = vunpack.c.h.b16 %v5841
  %v7036 = vunpack.c.l.b16 %v5842
  %v7037 = vunpack.c.h.b16 %v5842
  %v7038 = vunpack.c.l.b16 %v5843
  %v7039 = vunpack.c.h.b16 %v5843
  %v7040 = vunpack.c.l.b16 %v5844
  %v7041 = vunpack.c.h.b16 %v5844
  %v7042 = vunpack.c.l.b16 %v5845
  %v7043 = vunpack.c.h.b16 %v5845
  %v7044 = vunpack.c.l.b16 %v5846
  %v7045 = vunpack.c.h.b16 %v5846
  %v7046 = vunpack.c.l.b16 %v5847
  %v7047 = vunpack.c.h.b16 %v5847
  %v7048 = vunpack.c.l.b16 %v5848
  %v7049 = vunpack.c.h.b16 %v5848
  %v7050 = vunpack.c.l.b16 %v5849
  %v7051 = vunpack.c.h.b16 %v5849
  %v7052 = vunpack.c.l.b16 %v5850
  %v7053 = vunpack.c.h.b16 %v5850
  %v7054 = vunpack.c.l.b16 %v5851
  %v7055 = vunpack.c.h.b16 %v5851
  %v7056 = vunpack.c.l.b16 %v5852
  %v7057 = vunpack.c.h.b16 %v5852
  %v7058 = vunpack.c.l.b16 %v5853
  %v7059 = vunpack.c.h.b16 %v5853
  %v7060 = vunpack.c.l.b16 %v5854
  %v7061 = vunpack.c.h.b16 %v5854
  %v7062 = vpack.c.b16 %v6972, %v6966
  %v7063 = vpack.c.b16 %v6973, %v6967
  %v7064 = vpack.c.b16 %v6974, %v6968
  %v7065 = vpack.c.b16 %v6975, %v6969
  %v7066 = vpack.c.b16 %v6976, %v6970
  %v7067 = vpack.c.b16 %v6977, %v6971
  %v7068 = vpack.c.b16 %v6984, %v6978
  %v7069 = vpack.c.b16 %v6985, %v6979
  %v7070 = vpack.c.b16 %v6986, %v6980
  %v7071 = vpack.c.b16 %v6987, %v6981
  %v7072 = vpack.c.b16 %v6988, %v6982
  %v7073 = vpack.c.b16 %v6989, %v6983
  %v7074 = vpack.c.b16 %v6996, %v6990
  %v7075 = vpack.c.b16 %v6997, %v6991
  %v7076 = vpack.c.b16 %v6998, %v6992
  %v7077 = vpack.c.b16 %v6999, %v6993
  %v7078 = vpack.c.b16 %v7000, %v6994
  %v7079 = vpack.c.b16 %v7001, %v6995
  %v7080 = vpack.c.b16 %v7008, %v7002
  %v7081 = vpack.c.b16 %v7009, %v7003
  %v7082 = vpack.c.b16 %v7010, %v7004
  %v7083 = vpack.c.b16 %v7011, %v7005
  %v7084 = vpack.c.b16 %v7012, %v7006
  %v7085 = vpack.c.b16 %v7013, %v7007
  %v7086 = vpack.c.b16 %v7020, %v7014
  %v7087 = vpack.c.b16 %v7021, %v7015
  %v7088 = vpack.c.b16 %v7022, %v7016
  %v7089 = vpack.c.b16 %v7023, %v7017
  %v7090 = vpack.c.b16 %v7024, %v7018
  %v7091 = vpack.c.b16 %v7025, %v7019
  %v7092 = vpack.c.b16 %v7032, %v7026
  %v7093 = vpack.c.b16 %v7033, %v7027
  %v7094 = vpack.c.b16 %v7034, %v7028
  %v7095 = vpack.c.b16 %v7035, %v7029
  %v7096 = vpack.c.b16 %v7036, %v7030
  %v7097 = vpack.c.b16 %v7037, %v7031
  %v7098 = vpack.c.b16 %v7044, %v7038
  %v7099 = vpack.c.b16 %v7045, %v7039
  %v7100 = vpack.c.b16 %v7046, %v7040
  %v7101 = vpack.c.b16 %v7047, %v7041
  %v7102 = vpack.c.b16 %v7048, %v7042
  %v7103 = vpack.c.b16 %v7049, %v7043
  %v7104 = vpack.c.b16 %v7056, %v7050
  %v7105 = vpack.c.b16 %v7057, %v7051
  %v7106 = vpack.c.b16 %v7058, %v7052
  %v7107 = vpack.c.b16 %v7059, %v7053
  %v7108 = vpack.c.b16 %v7060, %v7054
  %v7109 = vpack.c.b16 %v7061, %v7055
  %v7254 = vunpack.c.l.b16 %v5855
  %v7255 = vunpack.c.l.b16 %v5856
  %v7256 = vunpack.c.l.b16 %v5857
  %v7257 = vunpack.c.l.b16 %v5858
  %v7258 = vunpack.c.l.b16 %v5859
  %v7259 = vunpack.c.l.b16 %v5860
  %v7260 = vunpack.c.l.b16 %v5861
  %v7261 = vunpack.c.l.b16 %v5862
  %v7262 = vunpack.c.l.b16 %v5863
  %v7263 = vunpack.c.l.b16 %v5864
  %v7264 = vunpack.c.l.b16 %v5865
  %v7265 = vunpack.c.l.b16 %v5866
  %v7266 = vunpack.c.l.b16 %v5867
  %v7267 = vunpack.c.l.b16 %v5868
  %v7268 = vunpack.c.l.b16 %v5869
  %v7269 = vunpack.c.l.b16 %v5870
  %v7270 = vunpack.c.l.b16 %v5871
  %v7271 = vunpack.c.l.b16 %v5872
  %v7272 = vunpack.c.l.b16 %v5873
  %v7273 = vunpack.c.l.b16 %v5874
  %v7274 = vunpack.c.l.b16 %v5875
  %v7275 = vunpack.c.l.b16 %v5876
  %v7276 = vunpack.c.l.b16 %v5877
  %v7277 = vunpack.c.l.b16 %v5878
  %v7278 = vunpack.c.l.b16 %v5879
  %v7279 = vunpack.c.l.b16 %v5880
  %v7280 = vunpack.c.l.b16 %v5881
  %v7281 = vunpack.c.l.b16 %v5882
  %v7282 = vunpack.c.l.b16 %v5883
  %v7283 = vunpack.c.l.b16 %v5884
  %v7284 = vunpack.c.l.b16 %v5885
  %v7285 = vunpack.c.l.b16 %v5886
  %v7286 = vunpack.c.l.b16 %v5887
  %v7287 = vunpack.c.l.b16 %v5888
  %v7288 = vunpack.c.l.b16 %v5889
  %v7289 = vunpack.c.l.b16 %v5890
  %v7290 = vunpack.c.l.b16 %v5891
  %v7291 = vunpack.c.l.b16 %v5892
  %v7292 = vunpack.c.l.b16 %v5893
  %v7293 = vunpack.c.l.b16 %v5894
  %v7294 = vunpack.c.l.b16 %v5895
  %v7295 = vunpack.c.l.b16 %v5896
  %v7296 = vunpack.c.l.b16 %v5897
  %v7297 = vunpack.c.l.b16 %v5898
  %v7298 = vunpack.c.l.b16 %v5899
  %v7299 = vunpack.c.l.b16 %v5900
  %v7300 = vunpack.c.l.b16 %v5901
  %v7301 = vunpack.c.l.b16 %v5902
  %v7302 = vunpack.c.l.b16 %v5903
  %v7303 = vunpack.c.l.b16 %v5904
  %v7304 = vunpack.c.l.b16 %v5905
  %v7305 = vunpack.c.l.b16 %v5906
  %v7306 = vunpack.c.l.b16 %v5907
  %v7307 = vunpack.c.l.b16 %v5908
  %v7308 = vunpack.c.l.b16 %v5909
  %v7309 = vunpack.c.l.b16 %v5910
  %v7310 = vunpack.c.l.b16 %v5911
  %v7311 = vunpack.c.l.b16 %v5912
  %v7312 = vunpack.c.l.b16 %v5913
  %v7313 = vunpack.c.l.b16 %v5914
  %v7314 = vunpack.c.l.b16 %v5915
  %v7315 = vunpack.c.l.b16 %v5916
  %v7316 = vunpack.c.l.b16 %v5917
  %v7317 = vunpack.c.l.b16 %v5918
  %v7318 = vunpack.c.l.b16 %v5919
  %v7319 = vunpack.c.l.b16 %v5920
  %v7320 = vunpack.c.l.b16 %v5921
  %v7321 = vunpack.c.l.b16 %v5922
  %v7322 = vunpack.c.l.b16 %v5923
  %v7323 = vunpack.c.l.b16 %v5924
  %v7324 = vunpack.c.l.b16 %v5925
  %v7325 = vunpack.c.l.b16 %v5926
  %v7326 = vunpack.c.l.b16 %v5927
  %v7327 = vunpack.c.l.b16 %v5928
  %v7328 = vunpack.c.l.b16 %v5929
  %v7329 = vunpack.c.l.b16 %v5930
  %v7330 = vunpack.c.l.b16 %v5931
  %v7331 = vunpack.c.l.b16 %v5932
  %v7332 = vunpack.c.l.b16 %v5933
  %v7333 = vunpack.c.l.b16 %v5934
  %v7334 = vunpack.c.l.b16 %v5935
  %v7335 = vunpack.c.l.b16 %v5936
  %v7336 = vunpack.c.l.b16 %v5937
  %v7337 = vunpack.c.l.b16 %v5938
  %v7338 = vunpack.c.l.b16 %v5939
  %v7339 = vunpack.c.l.b16 %v5940
  %v7340 = vunpack.c.l.b16 %v5941
  %v7341 = vunpack.c.l.b16 %v5942
  %v7342 = vunpack.c.l.b16 %v5943
  %v7343 = vunpack.c.l.b16 %v5944
  %v7344 = vunpack.c.l.b16 %v5945
  %v7345 = vunpack.c.l.b16 %v5946
  %v7346 = vunpack.c.l.b16 %v5947
  %v7347 = vunpack.c.l.b16 %v5948
  %v7348 = vunpack.c.l.b16 %v5949
  %v7349 = vunpack.c.l.b16 %v5950
  %v7350 = vpack.c.b16 %v7255, %v7254
  %v7351 = vpack.c.b16 %v7257, %v7256
  %v7352 = vpack.c.b16 %v7259, %v7258
  %v7353 = vpack.c.b16 %v7261, %v7260
  %v7354 = vpack.c.b16 %v7263, %v7262
  %v7355 = vpack.c.b16 %v7265, %v7264
  %v7356 = vpack.c.b16 %v7267, %v7266
  %v7357 = vpack.c.b16 %v7269, %v7268
  %v7358 = vpack.c.b16 %v7271, %v7270
  %v7359 = vpack.c.b16 %v7273, %v7272
  %v7360 = vpack.c.b16 %v7275, %v7274
  %v7361 = vpack.c.b16 %v7277, %v7276
  %v7362 = vpack.c.b16 %v7279, %v7278
  %v7363 = vpack.c.b16 %v7281, %v7280
  %v7364 = vpack.c.b16 %v7283, %v7282
  %v7365 = vpack.c.b16 %v7285, %v7284
  %v7366 = vpack.c.b16 %v7287, %v7286
  %v7367 = vpack.c.b16 %v7289, %v7288
  %v7368 = vpack.c.b16 %v7291, %v7290
  %v7369 = vpack.c.b16 %v7293, %v7292
  %v7370 = vpack.c.b16 %v7295, %v7294
  %v7371 = vpack.c.b16 %v7297, %v7296
  %v7372 = vpack.c.b16 %v7299, %v7298
  %v7373 = vpack.c.b16 %v7301, %v7300
  %v7374 = vpack.c.b16 %v7303, %v7302
  %v7375 = vpack.c.b16 %v7305, %v7304
  %v7376 = vpack.c.b16 %v7307, %v7306
  %v7377 = vpack.c.b16 %v7309, %v7308
  %v7378 = vpack.c.b16 %v7311, %v7310
  %v7379 = vpack.c.b16 %v7313, %v7312
  %v7380 = vpack.c.b16 %v7315, %v7314
  %v7381 = vpack.c.b16 %v7317, %v7316
  %v7382 = vpack.c.b16 %v7319, %v7318
  %v7383 = vpack.c.b16 %v7321, %v7320
  %v7384 = vpack.c.b16 %v7323, %v7322
  %v7385 = vpack.c.b16 %v7325, %v7324
  %v7386 = vpack.c.b16 %v7327, %v7326
  %v7387 = vpack.c.b16 %v7329, %v7328
  %v7388 = vpack.c.b16 %v7331, %v7330
  %v7389 = vpack.c.b16 %v7333, %v7332
  %v7390 = vpack.c.b16 %v7335, %v7334
  %v7391 = vpack.c.b16 %v7337, %v7336
  %v7392 = vpack.c.b16 %v7339, %v7338
  %v7393 = vpack.c.b16 %v7341, %v7340
  %v7394 = vpack.c.b16 %v7343, %v7342
  %v7395 = vpack.c.b16 %v7345, %v7344
  %v7396 = vpack.c.b16 %v7347, %v7346
  %v7397 = vpack.c.b16 %v7349, %v7348
  %7446 = vmatpush.bf16.msra.mxu0 %v7357
  %7447 = vmatpush.bf16.msra.mxu0 %v7356
  %7448 = vmatpush.bf16.msra.mxu0 %v7355
  %7449 = vmatpush.bf16.msra.mxu0 %v7354
  %7450 = vmatpush.bf16.msra.mxu0 %v7353
  %7451 = vmatpush.bf16.msra.mxu0 %v7352
  %7452 = vmatpush.bf16.msra.mxu0 %v7351
  %7453 = vmatpush.bf16.msra.mxu0 %v7350
  %7454 = vmatmul.bf16.gmra.mxu0 %v7062
  %v7455 = vpop.f32.mrf.mxu0
  %v7456 = vadd.f32 %v6879, %v7455
  %v7457 = vpop.f32.mrf.mxu0
  %v7458 = vadd.f32 %v6881, %v7457
  %7459 = vmatmul.bf16.gmra.mxu0 %v7068
  %v7460 = vpop.f32.mrf.mxu0
  %v7461 = vadd.f32 %v6884, %v7460
  %v7462 = vpop.f32.mrf.mxu0
  %v7463 = vadd.f32 %v6886, %v7462
  %7464 = vmatmul.bf16.gmra.mxu0 %v7074
  %v7465 = vpop.f32.mrf.mxu0
  %v7466 = vadd.f32 %v6889, %v7465
  %v7467 = vpop.f32.mrf.mxu0
  %v7468 = vadd.f32 %v6891, %v7467
  %7469 = vmatmul.bf16.gmra.mxu0 %v7080
  %v7470 = vpop.f32.mrf.mxu0
  %v7471 = vadd.f32 %v6894, %v7470
  %v7472 = vpop.f32.mrf.mxu0
  %v7473 = vadd.f32 %v6896, %v7472
  %7474 = vmatmul.bf16.gmra.mxu0 %v7086
  %v7475 = vpop.f32.mrf.mxu0
  %v7476 = vadd.f32 %v6899, %v7475
  %v7477 = vpop.f32.mrf.mxu0
  %v7478 = vadd.f32 %v6901, %v7477
  %7479 = vmatmul.bf16.gmra.mxu0 %v7092
  %v7480 = vpop.f32.mrf.mxu0
  %v7481 = vadd.f32 %v6904, %v7480
  %v7482 = vpop.f32.mrf.mxu0
  %v7483 = vadd.f32 %v6906, %v7482
  %7484 = vmatmul.bf16.gmra.mxu0 %v7098
  %v7485 = vpop.f32.mrf.mxu0
  %v7486 = vadd.f32 %v6909, %v7485
  %v7487 = vpop.f32.mrf.mxu0
  %v7488 = vadd.f32 %v6911, %v7487
  %7489 = vmatmul.bf16.gmra.mxu0 %v7104
  %v7490 = vpop.f32.mrf.mxu0
  %v7491 = vadd.f32 %v6914, %v7490
  %v7492 = vpop.f32.mrf.mxu0
  %v7493 = vadd.f32 %v6916, %v7492
  %7494 = vdwg.mxu0
  %7495 = vmatpush.bf16.msra.mxu0 %v7365
  %7496 = vmatpush.bf16.msra.mxu0 %v7364
  %7497 = vmatpush.bf16.msra.mxu0 %v7363
  %7498 = vmatpush.bf16.msra.mxu0 %v7362
  %7499 = vmatpush.bf16.msra.mxu0 %v7361
  %7500 = vmatpush.bf16.msra.mxu0 %v7360
  %7501 = vmatpush.bf16.msra.mxu0 %v7359
  %7502 = vmatpush.bf16.msra.mxu0 %v7358
  %7503 = vmatmul.bf16.gmra.mxu0 %v7063
  %v7504 = vpop.f32.mrf.mxu0
  %v7505 = vadd.f32 %v7456, %v7504
  %v7506 = vpop.f32.mrf.mxu0
  %v7507 = vadd.f32 %v7458, %v7506
  %7508 = vmatmul.bf16.gmra.mxu0 %v7069
  %v7509 = vpop.f32.mrf.mxu0
  %v7510 = vadd.f32 %v7461, %v7509
  %v7511 = vpop.f32.mrf.mxu0
  %v7512 = vadd.f32 %v7463, %v7511
  %7513 = vmatmul.bf16.gmra.mxu0 %v7075
  %v7514 = vpop.f32.mrf.mxu0
  %v7515 = vadd.f32 %v7466, %v7514
  %v7516 = vpop.f32.mrf.mxu0
  %v7517 = vadd.f32 %v7468, %v7516
  %7518 = vmatmul.bf16.gmra.mxu0 %v7081
  %v7519 = vpop.f32.mrf.mxu0
  %v7520 = vadd.f32 %v7471, %v7519
  %v7521 = vpop.f32.mrf.mxu0
  %v7522 = vadd.f32 %v7473, %v7521
  %7523 = vmatmul.bf16.gmra.mxu0 %v7087
  %v7524 = vpop.f32.mrf.mxu0
  %v7525 = vadd.f32 %v7476, %v7524
  %v7526 = vpop.f32.mrf.mxu0
  %v7527 = vadd.f32 %v7478, %v7526
  %7528 = vmatmul.bf16.gmra.mxu0 %v7093
  %v7529 = vpop.f32.mrf.mxu0
  %v7530 = vadd.f32 %v7481, %v7529
  %v7531 = vpop.f32.mrf.mxu0
  %v7532 = vadd.f32 %v7483, %v7531
  %7533 = vmatmul.bf16.gmra.mxu0 %v7099
  %v7534 = vpop.f32.mrf.mxu0
  %v7535 = vadd.f32 %v7486, %v7534
  %v7536 = vpop.f32.mrf.mxu0
  %v7537 = vadd.f32 %v7488, %v7536
  %7538 = vmatmul.bf16.gmra.mxu0 %v7105
  %v7539 = vpop.f32.mrf.mxu0
  %v7540 = vadd.f32 %v7491, %v7539
  %v7541 = vpop.f32.mrf.mxu0
  %v7542 = vadd.f32 %v7493, %v7541
  %7543 = vdwg.mxu0
  %7544 = vmatpush.bf16.msra.mxu0 %v7373
  %7545 = vmatpush.bf16.msra.mxu0 %v7372
  %7546 = vmatpush.bf16.msra.mxu0 %v7371
  %7547 = vmatpush.bf16.msra.mxu0 %v7370
  %7548 = vmatpush.bf16.msra.mxu0 %v7369
  %7549 = vmatpush.bf16.msra.mxu0 %v7368
  %7550 = vmatpush.bf16.msra.mxu0 %v7367
  %7551 = vmatpush.bf16.msra.mxu0 %v7366
  %7552 = vmatmul.bf16.gmra.mxu0 %v7064
  %v7553 = vpop.f32.mrf.mxu0
  %v7554 = vadd.f32 %v7505, %v7553
  %v7555 = vpop.f32.mrf.mxu0
  %v7556 = vadd.f32 %v7507, %v7555
  %7557 = vmatmul.bf16.gmra.mxu0 %v7070
  %v7558 = vpop.f32.mrf.mxu0
  %v7559 = vadd.f32 %v7510, %v7558
  %v7560 = vpop.f32.mrf.mxu0
  %v7561 = vadd.f32 %v7512, %v7560
  %7562 = vmatmul.bf16.gmra.mxu0 %v7076
  %v7563 = vpop.f32.mrf.mxu0
  %v7564 = vadd.f32 %v7515, %v7563
  %v7565 = vpop.f32.mrf.mxu0
  %v7566 = vadd.f32 %v7517, %v7565
  %7567 = vmatmul.bf16.gmra.mxu0 %v7082
  %v7568 = vpop.f32.mrf.mxu0
  %v7569 = vadd.f32 %v7520, %v7568
  %v7570 = vpop.f32.mrf.mxu0
  %v7571 = vadd.f32 %v7522, %v7570
  %7572 = vmatmul.bf16.gmra.mxu0 %v7088
  %v7573 = vpop.f32.mrf.mxu0
  %v7574 = vadd.f32 %v7525, %v7573
  %v7575 = vpop.f32.mrf.mxu0
  %v7576 = vadd.f32 %v7527, %v7575
  %7577 = vmatmul.bf16.gmra.mxu0 %v7094
  %v7578 = vpop.f32.mrf.mxu0
  %v7579 = vadd.f32 %v7530, %v7578
  %v7580 = vpop.f32.mrf.mxu0
  %v7581 = vadd.f32 %v7532, %v7580
  %7582 = vmatmul.bf16.gmra.mxu0 %v7100
  %v7583 = vpop.f32.mrf.mxu0
  %v7584 = vadd.f32 %v7535, %v7583
  %v7585 = vpop.f32.mrf.mxu0
  %v7586 = vadd.f32 %v7537, %v7585
  %7587 = vmatmul.bf16.gmra.mxu0 %v7106
  %v7588 = vpop.f32.mrf.mxu0
  %v7589 = vadd.f32 %v7540, %v7588
  %v7590 = vpop.f32.mrf.mxu0
  %v7591 = vadd.f32 %v7542, %v7590
  %7592 = vdwg.mxu0
  %7593 = vmatpush.bf16.msra.mxu0 %v7381
  %7594 = vmatpush.bf16.msra.mxu0 %v7380
  %7595 = vmatpush.bf16.msra.mxu0 %v7379
  %7596 = vmatpush.bf16.msra.mxu0 %v7378
  %7597 = vmatpush.bf16.msra.mxu0 %v7377
  %7598 = vmatpush.bf16.msra.mxu0 %v7376
  %7599 = vmatpush.bf16.msra.mxu0 %v7375
  %7600 = vmatpush.bf16.msra.mxu0 %v7374
  %7601 = vmatmul.bf16.gmra.mxu0 %v7065
  %v7602 = vpop.f32.mrf.mxu0
  %v7603 = vadd.f32 %v7554, %v7602
  %v7604 = vpop.f32.mrf.mxu0
  %v7605 = vadd.f32 %v7556, %v7604
  %7606 = vmatmul.bf16.gmra.mxu0 %v7071
  %v7607 = vpop.f32.mrf.mxu0
  %v7608 = vadd.f32 %v7559, %v7607
  %v7609 = vpop.f32.mrf.mxu0
  %v7610 = vadd.f32 %v7561, %v7609
  %7611 = vmatmul.bf16.gmra.mxu0 %v7077
  %v7612 = vpop.f32.mrf.mxu0
  %v7613 = vadd.f32 %v7564, %v7612
  %v7614 = vpop.f32.mrf.mxu0
  %v7615 = vadd.f32 %v7566, %v7614
  %7616 = vmatmul.bf16.gmra.mxu0 %v7083
  %v7617 = vpop.f32.mrf.mxu0
  %v7618 = vadd.f32 %v7569, %v7617
  %v7619 = vpop.f32.mrf.mxu0
  %v7620 = vadd.f32 %v7571, %v7619
  %7621 = vmatmul.bf16.gmra.mxu0 %v7089
  %v7622 = vpop.f32.mrf.mxu0
  %v7623 = vadd.f32 %v7574, %v7622
  %v7624 = vpop.f32.mrf.mxu0
  %v7625 = vadd.f32 %v7576, %v7624
  %7626 = vmatmul.bf16.gmra.mxu0 %v7095
  %v7627 = vpop.f32.mrf.mxu0
  %v7628 = vadd.f32 %v7579, %v7627
  %v7629 = vpop.f32.mrf.mxu0
  %v7630 = vadd.f32 %v7581, %v7629
  %7631 = vmatmul.bf16.gmra.mxu0 %v7101
  %v7632 = vpop.f32.mrf.mxu0
  %v7633 = vadd.f32 %v7584, %v7632
  %v7634 = vpop.f32.mrf.mxu0
  %v7635 = vadd.f32 %v7586, %v7634
  %7636 = vmatmul.bf16.gmra.mxu0 %v7107
  %v7637 = vpop.f32.mrf.mxu0
  %v7638 = vadd.f32 %v7589, %v7637
  %v7639 = vpop.f32.mrf.mxu0
  %v7640 = vadd.f32 %v7591, %v7639
  %7641 = vdwg.mxu0
  %7642 = vmatpush.bf16.msra.mxu0 %v7389
  %7643 = vmatpush.bf16.msra.mxu0 %v7388
  %7644 = vmatpush.bf16.msra.mxu0 %v7387
  %7645 = vmatpush.bf16.msra.mxu0 %v7386
  %7646 = vmatpush.bf16.msra.mxu0 %v7385
  %7647 = vmatpush.bf16.msra.mxu0 %v7384
  %7648 = vmatpush.bf16.msra.mxu0 %v7383
  %7649 = vmatpush.bf16.msra.mxu0 %v7382
  %7650 = vmatmul.bf16.gmra.mxu0 %v7066
  %v7651 = vpop.f32.mrf.mxu0
  %v7652 = vadd.f32 %v7603, %v7651
  %v7653 = vpop.f32.mrf.mxu0
  %v7654 = vadd.f32 %v7605, %v7653
  %7655 = vmatmul.bf16.gmra.mxu0 %v7072
  %v7656 = vpop.f32.mrf.mxu0
  %v7657 = vadd.f32 %v7608, %v7656
  %v7658 = vpop.f32.mrf.mxu0
  %v7659 = vadd.f32 %v7610, %v7658
  %7660 = vmatmul.bf16.gmra.mxu0 %v7078
  %v7661 = vpop.f32.mrf.mxu0
  %v7662 = vadd.f32 %v7613, %v7661
  %v7663 = vpop.f32.mrf.mxu0
  %v7664 = vadd.f32 %v7615, %v7663
  %7665 = vmatmul.bf16.gmra.mxu0 %v7084
  %v7666 = vpop.f32.mrf.mxu0
  %v7667 = vadd.f32 %v7618, %v7666
  %v7668 = vpop.f32.mrf.mxu0
  %v7669 = vadd.f32 %v7620, %v7668
  %7670 = vmatmul.bf16.gmra.mxu0 %v7090
  %v7671 = vpop.f32.mrf.mxu0
  %v7672 = vadd.f32 %v7623, %v7671
  %v7673 = vpop.f32.mrf.mxu0
  %v7674 = vadd.f32 %v7625, %v7673
  %7675 = vmatmul.bf16.gmra.mxu0 %v7096
  %v7676 = vpop.f32.mrf.mxu0
  %v7677 = vadd.f32 %v7628, %v7676
  %v7678 = vpop.f32.mrf.mxu0
  %v7679 = vadd.f32 %v7630, %v7678
  %7680 = vmatmul.bf16.gmra.mxu0 %v7102
  %v7681 = vpop.f32.mrf.mxu0
  %v7682 = vadd.f32 %v7633, %v7681
  %v7683 = vpop.f32.mrf.mxu0
  %v7684 = vadd.f32 %v7635, %v7683
  %7685 = vmatmul.bf16.gmra.mxu0 %v7108
  %v7686 = vpop.f32.mrf.mxu0
  %v7687 = vadd.f32 %v7638, %v7686
  %v7688 = vpop.f32.mrf.mxu0
  %v7689 = vadd.f32 %v7640, %v7688
  %7690 = vdwg.mxu0
  %7691 = vmatpush.bf16.msra.mxu0 %v7397
  %7692 = vmatpush.bf16.msra.mxu0 %v7396
  %7693 = vmatpush.bf16.msra.mxu0 %v7395
  %7694 = vmatpush.bf16.msra.mxu0 %v7394
  %7695 = vmatpush.bf16.msra.mxu0 %v7393
  %7696 = vmatpush.bf16.msra.mxu0 %v7392
  %7697 = vmatpush.bf16.msra.mxu0 %v7391
  %7698 = vmatpush.bf16.msra.mxu0 %v7390
  %7699 = vmatmul.bf16.gmra.mxu0 %v7067
  %v7700 = vpop.f32.mrf.mxu0
  %v7701 = vadd.f32 %v7652, %v7700
  %v7702 = vpop.f32.mrf.mxu0
  %v7703 = vadd.f32 %v7654, %v7702
  %7704 = vmatmul.bf16.gmra.mxu0 %v7073
  %v7705 = vpop.f32.mrf.mxu0
  %v7706 = vadd.f32 %v7657, %v7705
  %v7707 = vpop.f32.mrf.mxu0
  %v7708 = vadd.f32 %v7659, %v7707
  %7709 = vmatmul.bf16.gmra.mxu0 %v7079
  %v7710 = vpop.f32.mrf.mxu0
  %v7711 = vadd.f32 %v7662, %v7710
  %v7712 = vpop.f32.mrf.mxu0
  %v7713 = vadd.f32 %v7664, %v7712
  %7714 = vmatmul.bf16.gmra.mxu0 %v7085
  %v7715 = vpop.f32.mrf.mxu0
  %v7716 = vadd.f32 %v7667, %v7715
  %v7717 = vpop.f32.mrf.mxu0
  %v7718 = vadd.f32 %v7669, %v7717
  %7719 = vmatmul.bf16.gmra.mxu0 %v7091
  %v7720 = vpop.f32.mrf.mxu0
  %v7721 = vadd.f32 %v7672, %v7720
  %v7722 = vpop.f32.mrf.mxu0
  %v7723 = vadd.f32 %v7674, %v7722
  %7724 = vmatmul.bf16.gmra.mxu0 %v7097
  %v7725 = vpop.f32.mrf.mxu0
  %v7726 = vadd.f32 %v7677, %v7725
  %v7727 = vpop.f32.mrf.mxu0
  %v7728 = vadd.f32 %v7679, %v7727
  %7729 = vmatmul.bf16.gmra.mxu0 %v7103
  %v7730 = vpop.f32.mrf.mxu0
  %v7731 = vadd.f32 %v7682, %v7730
  %v7732 = vpop.f32.mrf.mxu0
  %v7733 = vadd.f32 %v7684, %v7732
  %7734 = vmatmul.bf16.gmra.mxu0 %v7109
  %v7735 = vpop.f32.mrf.mxu0
  %v7736 = vadd.f32 %v7687, %v7735
  %v7737 = vpop.f32.mrf.mxu0
  %v7738 = vadd.f32 %v7689, %v7737
  %7739 = vdwg.mxu0
  %s7740 = scalar_lea.vmem [#allocation4], 48
  %v7741 = vld [vmem:[%s7740] sm:$0xff]
  %v7742 = vld [vmem:[%s7740 + $0x8] sm:$0xff]
  %v7743 = vld [vmem:[%s7740 + $0x10] sm:$0xff]
  %v7744 = vld [vmem:[%s7740 + $0x18] sm:$0xff]
  %v7745 = vld [vmem:[%s7740 + $0x20] sm:$0xff]
  %v7746 = vld [vmem:[%s7740 + $0x28] sm:$0xff]
  %v7747 = vld [vmem:[%s7740 + $0x30] sm:$0xff]
  %v7748 = vld [vmem:[%s7740 + $0x38] sm:$0xff]
  %v7749 = vld [vmem:[%s7740 + $0x40] sm:$0xff]
  %v7750 = vld [vmem:[%s7740 + $0x48] sm:$0xff]
  %v7751 = vld [vmem:[%s7740 + $0x50] sm:$0xff]
  %v7752 = vld [vmem:[%s7740 + $0x58] sm:$0xff]
  %v7753 = vld [vmem:[%s7740 + $0x60] sm:$0xff]
  %v7754 = vld [vmem:[%s7740 + $0x68] sm:$0xff]
  %v7755 = vld [vmem:[%s7740 + $0x70] sm:$0xff]
  %v7756 = vld [vmem:[%s7740 + $0x78] sm:$0xff]
  %v7757 = vld [vmem:[%s7740 + $0x80] sm:$0xff]
  %v7758 = vld [vmem:[%s7740 + $0x88] sm:$0xff]
  %v7759 = vld [vmem:[%s7740 + $0x90] sm:$0xff]
  %v7760 = vld [vmem:[%s7740 + $0x98] sm:$0xff]
  %v7761 = vld [vmem:[%s7740 + $0xa0] sm:$0xff]
  %v7762 = vld [vmem:[%s7740 + $0xa8] sm:$0xff]
  %v7763 = vld [vmem:[%s7740 + $0xb0] sm:$0xff]
  %v7764 = vld [vmem:[%s7740 + $0xb8] sm:$0xff]
  %v7765 = vld [vmem:[%s7740 + $0xf0] sm:$0xff]
  %v7766 = vld [vmem:[%s7740 + $0xf8] sm:$0xff]
  %v7767 = vld [vmem:[%s7740 + $0x100] sm:$0xff]
  %v7768 = vld [vmem:[%s7740 + $0x108] sm:$0xff]
  %v7769 = vld [vmem:[%s7740 + $0x110] sm:$0xff]
  %v7770 = vld [vmem:[%s7740 + $0x118] sm:$0xff]
  %v7771 = vld [vmem:[%s7740 + $0x120] sm:$0xff]
  %v7772 = vld [vmem:[%s7740 + $0x128] sm:$0xff]
  %v7773 = vld [vmem:[%s7740 + $0x130] sm:$0xff]
  %v7774 = vld [vmem:[%s7740 + $0x138] sm:$0xff]
  %v7775 = vld [vmem:[%s7740 + $0x140] sm:$0xff]
  %v7776 = vld [vmem:[%s7740 + $0x148] sm:$0xff]
  %v7777 = vld [vmem:[%s7740 + $0x150] sm:$0xff]
  %v7778 = vld [vmem:[%s7740 + $0x158] sm:$0xff]
  %v7779 = vld [vmem:[%s7740 + $0x160] sm:$0xff]
  %v7780 = vld [vmem:[%s7740 + $0x168] sm:$0xff]
  %v7781 = vld [vmem:[%s7740 + $0x170] sm:$0xff]
  %v7782 = vld [vmem:[%s7740 + $0x178] sm:$0xff]
  %v7783 = vld [vmem:[%s7740 + $0x180] sm:$0xff]
  %v7784 = vld [vmem:[%s7740 + $0x188] sm:$0xff]
  %v7785 = vld [vmem:[%s7740 + $0x190] sm:$0xff]
  %v7786 = vld [vmem:[%s7740 + $0x198] sm:$0xff]
  %v7787 = vld [vmem:[%s7740 + $0x1a0] sm:$0xff]
  %v7788 = vld [vmem:[%s7740 + $0x1a8] sm:$0xff]
  %v7789 = vld [vmem:[%s11 + $0x300] sm:$0xf]
  %v7790 = vld [vmem:[%s11 + $0x304] sm:$0xf]
  %v7791 = vld [vmem:[%s11 + $0x308] sm:$0xf]
  %v7792 = vld [vmem:[%s11 + $0x30c] sm:$0xf]
  %v7793 = vld [vmem:[%s11 + $0x310] sm:$0xf]
  %v7794 = vld [vmem:[%s11 + $0x314] sm:$0xf]
  %v7795 = vld [vmem:[%s11 + $0x318] sm:$0xf]
  %v7796 = vld [vmem:[%s11 + $0x31c] sm:$0xf]
  %v7797 = vld [vmem:[%s11 + $0x320] sm:$0xf]
  %v7798 = vld [vmem:[%s11 + $0x324] sm:$0xf]
  %v7799 = vld [vmem:[%s11 + $0x328] sm:$0xf]
  %v7800 = vld [vmem:[%s11 + $0x32c] sm:$0xf]
  %v7801 = vld [vmem:[%s11 + $0x330] sm:$0xf]
  %v7802 = vld [vmem:[%s11 + $0x334] sm:$0xf]
  %v7803 = vld [vmem:[%s11 + $0x338] sm:$0xf]
  %v7804 = vld [vmem:[%s11 + $0x33c] sm:$0xf]
  %v7805 = vld [vmem:[%s11 + $0x340] sm:$0xf]
  %v7806 = vld [vmem:[%s11 + $0x344] sm:$0xf]
  %v7807 = vld [vmem:[%s11 + $0x348] sm:$0xf]
  %v7808 = vld [vmem:[%s11 + $0x34c] sm:$0xf]
  %v7809 = vld [vmem:[%s11 + $0x350] sm:$0xf]
  %v7810 = vld [vmem:[%s11 + $0x354] sm:$0xf]
  %v7811 = vld [vmem:[%s11 + $0x358] sm:$0xf]
  %v7812 = vld [vmem:[%s11 + $0x35c] sm:$0xf]
  %v7813 = vld [vmem:[%s11 + $0x360] sm:$0xf]
  %v7814 = vld [vmem:[%s11 + $0x364] sm:$0xf]
  %v7815 = vld [vmem:[%s11 + $0x368] sm:$0xf]
  %v7816 = vld [vmem:[%s11 + $0x36c] sm:$0xf]
  %v7817 = vld [vmem:[%s11 + $0x370] sm:$0xf]
  %v7818 = vld [vmem:[%s11 + $0x374] sm:$0xf]
  %v7819 = vld [vmem:[%s11 + $0x378] sm:$0xf]
  %v7820 = vld [vmem:[%s11 + $0x37c] sm:$0xf]
  %v7821 = vld [vmem:[%s11 + $0x380] sm:$0xf]
  %v7822 = vld [vmem:[%s11 + $0x384] sm:$0xf]
  %v7823 = vld [vmem:[%s11 + $0x388] sm:$0xf]
  %v7824 = vld [vmem:[%s11 + $0x38c] sm:$0xf]
  %v7825 = vld [vmem:[%s11 + $0x390] sm:$0xf]
  %v7826 = vld [vmem:[%s11 + $0x394] sm:$0xf]
  %v7827 = vld [vmem:[%s11 + $0x398] sm:$0xf]
  %v7828 = vld [vmem:[%s11 + $0x39c] sm:$0xf]
  %v7829 = vld [vmem:[%s11 + $0x3a0] sm:$0xf]
  %v7830 = vld [vmem:[%s11 + $0x3a4] sm:$0xf]
  %v7831 = vld [vmem:[%s11 + $0x3a8] sm:$0xf]
  %v7832 = vld [vmem:[%s11 + $0x3ac] sm:$0xf]
  %v7833 = vld [vmem:[%s11 + $0x3b0] sm:$0xf]
  %v7834 = vld [vmem:[%s11 + $0x3b4] sm:$0xf]
  %v7835 = vld [vmem:[%s11 + $0x3b8] sm:$0xf]
  %v7836 = vld [vmem:[%s11 + $0x3bc] sm:$0xf]
  %v7837 = vld [vmem:[%s11 + $0x3c0] sm:$0xf]
  %v7838 = vld [vmem:[%s11 + $0x3c4] sm:$0xf]
  %v7839 = vld [vmem:[%s11 + $0x3c8] sm:$0xf]
  %v7840 = vld [vmem:[%s11 + $0x3cc] sm:$0xf]
  %v7841 = vld [vmem:[%s11 + $0x3d0] sm:$0xf]
  %v7842 = vld [vmem:[%s11 + $0x3d4] sm:$0xf]
  %v7843 = vld [vmem:[%s11 + $0x3d8] sm:$0xf]
  %v7844 = vld [vmem:[%s11 + $0x3dc] sm:$0xf]
  %v7845 = vld [vmem:[%s11 + $0x3e0] sm:$0xf]
  %v7846 = vld [vmem:[%s11 + $0x3e4] sm:$0xf]
  %v7847 = vld [vmem:[%s11 + $0x3e8] sm:$0xf]
  %v7848 = vld [vmem:[%s11 + $0x3ec] sm:$0xf]
  %v7849 = vld [vmem:[%s11 + $0x3f0] sm:$0xf]
  %v7850 = vld [vmem:[%s11 + $0x3f4] sm:$0xf]
  %v7851 = vld [vmem:[%s11 + $0x3f8] sm:$0xf]
  %v7852 = vld [vmem:[%s11 + $0x3fc] sm:$0xf]
  %v7853 = vld [vmem:[%s11 + $0x400] sm:$0xf]
  %v7854 = vld [vmem:[%s11 + $0x404] sm:$0xf]
  %v7855 = vld [vmem:[%s11 + $0x408] sm:$0xf]
  %v7856 = vld [vmem:[%s11 + $0x40c] sm:$0xf]
  %v7857 = vld [vmem:[%s11 + $0x410] sm:$0xf]
  %v7858 = vld [vmem:[%s11 + $0x414] sm:$0xf]
  %v7859 = vld [vmem:[%s11 + $0x418] sm:$0xf]
  %v7860 = vld [vmem:[%s11 + $0x41c] sm:$0xf]
  %v7861 = vld [vmem:[%s11 + $0x420] sm:$0xf]
  %v7862 = vld [vmem:[%s11 + $0x424] sm:$0xf]
  %v7863 = vld [vmem:[%s11 + $0x428] sm:$0xf]
  %v7864 = vld [vmem:[%s11 + $0x42c] sm:$0xf]
  %v7865 = vld [vmem:[%s11 + $0x430] sm:$0xf]
  %v7866 = vld [vmem:[%s11 + $0x434] sm:$0xf]
  %v7867 = vld [vmem:[%s11 + $0x438] sm:$0xf]
  %v7868 = vld [vmem:[%s11 + $0x43c] sm:$0xf]
  %v7869 = vld [vmem:[%s11 + $0x440] sm:$0xf]
  %v7870 = vld [vmem:[%s11 + $0x444] sm:$0xf]
  %v7871 = vld [vmem:[%s11 + $0x448] sm:$0xf]
  %v7872 = vld [vmem:[%s11 + $0x44c] sm:$0xf]
  %v7873 = vld [vmem:[%s11 + $0x450] sm:$0xf]
  %v7874 = vld [vmem:[%s11 + $0x454] sm:$0xf]
  %v7875 = vld [vmem:[%s11 + $0x458] sm:$0xf]
  %v7876 = vld [vmem:[%s11 + $0x45c] sm:$0xf]
  %v7877 = vld [vmem:[%s11 + $0x460] sm:$0xf]
  %v7878 = vld [vmem:[%s11 + $0x464] sm:$0xf]
  %v7879 = vld [vmem:[%s11 + $0x468] sm:$0xf]
  %v7880 = vld [vmem:[%s11 + $0x46c] sm:$0xf]
  %v7881 = vld [vmem:[%s11 + $0x470] sm:$0xf]
  %v7882 = vld [vmem:[%s11 + $0x474] sm:$0xf]
  %v7883 = vld [vmem:[%s11 + $0x478] sm:$0xf]
  %v7884 = vld [vmem:[%s11 + $0x47c] sm:$0xf]
  %v7933 = vunpack.c.l.b16 %v7741
  %v7934 = vunpack.c.h.b16 %v7741
  %v7935 = vunpack.c.l.b16 %v7742
  %v7936 = vunpack.c.h.b16 %v7742
  %v7937 = vunpack.c.l.b16 %v7743
  %v7938 = vunpack.c.h.b16 %v7743
  %v7939 = vunpack.c.l.b16 %v7744
  %v7940 = vunpack.c.h.b16 %v7744
  %v7941 = vunpack.c.l.b16 %v7745
  %v7942 = vunpack.c.h.b16 %v7745
  %v7943 = vunpack.c.l.b16 %v7746
  %v7944 = vunpack.c.h.b16 %v7746
  %v7945 = vunpack.c.l.b16 %v7747
  %v7946 = vunpack.c.h.b16 %v7747
  %v7947 = vunpack.c.l.b16 %v7748
  %v7948 = vunpack.c.h.b16 %v7748
  %v7949 = vunpack.c.l.b16 %v7749
  %v7950 = vunpack.c.h.b16 %v7749
  %v7951 = vunpack.c.l.b16 %v7750
  %v7952 = vunpack.c.h.b16 %v7750
  %v7953 = vunpack.c.l.b16 %v7751
  %v7954 = vunpack.c.h.b16 %v7751
  %v7955 = vunpack.c.l.b16 %v7752
  %v7956 = vunpack.c.h.b16 %v7752
  %v7957 = vunpack.c.l.b16 %v7753
  %v7958 = vunpack.c.h.b16 %v7753
  %v7959 = vunpack.c.l.b16 %v7754
  %v7960 = vunpack.c.h.b16 %v7754
  %v7961 = vunpack.c.l.b16 %v7755
  %v7962 = vunpack.c.h.b16 %v7755
  %v7963 = vunpack.c.l.b16 %v7756
  %v7964 = vunpack.c.h.b16 %v7756
  %v7965 = vunpack.c.l.b16 %v7757
  %v7966 = vunpack.c.h.b16 %v7757
  %v7967 = vunpack.c.l.b16 %v7758
  %v7968 = vunpack.c.h.b16 %v7758
  %v7969 = vunpack.c.l.b16 %v7759
  %v7970 = vunpack.c.h.b16 %v7759
  %v7971 = vunpack.c.l.b16 %v7760
  %v7972 = vunpack.c.h.b16 %v7760
  %v7973 = vunpack.c.l.b16 %v7761
  %v7974 = vunpack.c.h.b16 %v7761
  %v7975 = vunpack.c.l.b16 %v7762
  %v7976 = vunpack.c.h.b16 %v7762
  %v7977 = vunpack.c.l.b16 %v7763
  %v7978 = vunpack.c.h.b16 %v7763
  %v7979 = vunpack.c.l.b16 %v7764
  %v7980 = vunpack.c.h.b16 %v7764
  %v7981 = vunpack.c.l.b16 %v7765
  %v7982 = vunpack.c.h.b16 %v7765
  %v7983 = vunpack.c.l.b16 %v7766
  %v7984 = vunpack.c.h.b16 %v7766
  %v7985 = vunpack.c.l.b16 %v7767
  %v7986 = vunpack.c.h.b16 %v7767
  %v7987 = vunpack.c.l.b16 %v7768
  %v7988 = vunpack.c.h.b16 %v7768
  %v7989 = vunpack.c.l.b16 %v7769
  %v7990 = vunpack.c.h.b16 %v7769
  %v7991 = vunpack.c.l.b16 %v7770
  %v7992 = vunpack.c.h.b16 %v7770
  %v7993 = vunpack.c.l.b16 %v7771
  %v7994 = vunpack.c.h.b16 %v7771
  %v7995 = vunpack.c.l.b16 %v7772
  %v7996 = vunpack.c.h.b16 %v7772
  %v7997 = vunpack.c.l.b16 %v7773
  %v7998 = vunpack.c.h.b16 %v7773
  %v7999 = vunpack.c.l.b16 %v7774
  %v8000 = vunpack.c.h.b16 %v7774
  %v8001 = vunpack.c.l.b16 %v7775
  %v8002 = vunpack.c.h.b16 %v7775
  %v8003 = vunpack.c.l.b16 %v7776
  %v8004 = vunpack.c.h.b16 %v7776
  %v8005 = vunpack.c.l.b16 %v7777
  %v8006 = vunpack.c.h.b16 %v7777
  %v8007 = vunpack.c.l.b16 %v7778
  %v8008 = vunpack.c.h.b16 %v7778
  %v8009 = vunpack.c.l.b16 %v7779
  %v8010 = vunpack.c.h.b16 %v7779
  %v8011 = vunpack.c.l.b16 %v7780
  %v8012 = vunpack.c.h.b16 %v7780
  %v8013 = vunpack.c.l.b16 %v7781
  %v8014 = vunpack.c.h.b16 %v7781
  %v8015 = vunpack.c.l.b16 %v7782
  %v8016 = vunpack.c.h.b16 %v7782
  %v8017 = vunpack.c.l.b16 %v7783
  %v8018 = vunpack.c.h.b16 %v7783
  %v8019 = vunpack.c.l.b16 %v7784
  %v8020 = vunpack.c.h.b16 %v7784
  %v8021 = vunpack.c.l.b16 %v7785
  %v8022 = vunpack.c.h.b16 %v7785
  %v8023 = vunpack.c.l.b16 %v7786
  %v8024 = vunpack.c.h.b16 %v7786
  %v8025 = vunpack.c.l.b16 %v7787
  %v8026 = vunpack.c.h.b16 %v7787
  %v8027 = vunpack.c.l.b16 %v7788
  %v8028 = vunpack.c.h.b16 %v7788
  %v8029 = vpack.c.b16 %v7939, %v7933
  %v8030 = vpack.c.b16 %v7940, %v7934
  %v8031 = vpack.c.b16 %v7941, %v7935
  %v8032 = vpack.c.b16 %v7942, %v7936
  %v8033 = vpack.c.b16 %v7943, %v7937
  %v8034 = vpack.c.b16 %v7944, %v7938
  %v8035 = vpack.c.b16 %v7951, %v7945
  %v8036 = vpack.c.b16 %v7952, %v7946
  %v8037 = vpack.c.b16 %v7953, %v7947
  %v8038 = vpack.c.b16 %v7954, %v7948
  %v8039 = vpack.c.b16 %v7955, %v7949
  %v8040 = vpack.c.b16 %v7956, %v7950
  %v8041 = vpack.c.b16 %v7963, %v7957
  %v8042 = vpack.c.b16 %v7964, %v7958
  %v8043 = vpack.c.b16 %v7965, %v7959
  %v8044 = vpack.c.b16 %v7966, %v7960
  %v8045 = vpack.c.b16 %v7967, %v7961
  %v8046 = vpack.c.b16 %v7968, %v7962
  %v8047 = vpack.c.b16 %v7975, %v7969
  %v8048 = vpack.c.b16 %v7976, %v7970
  %v8049 = vpack.c.b16 %v7977, %v7971
  %v8050 = vpack.c.b16 %v7978, %v7972
  %v8051 = vpack.c.b16 %v7979, %v7973
  %v8052 = vpack.c.b16 %v7980, %v7974
  %v8053 = vpack.c.b16 %v7987, %v7981
  %v8054 = vpack.c.b16 %v7988, %v7982
  %v8055 = vpack.c.b16 %v7989, %v7983
  %v8056 = vpack.c.b16 %v7990, %v7984
  %v8057 = vpack.c.b16 %v7991, %v7985
  %v8058 = vpack.c.b16 %v7992, %v7986
  %v8059 = vpack.c.b16 %v7999, %v7993
  %v8060 = vpack.c.b16 %v8000, %v7994
  %v8061 = vpack.c.b16 %v8001, %v7995
  %v8062 = vpack.c.b16 %v8002, %v7996
  %v8063 = vpack.c.b16 %v8003, %v7997
  %v8064 = vpack.c.b16 %v8004, %v7998
  %v8065 = vpack.c.b16 %v8011, %v8005
  %v8066 = vpack.c.b16 %v8012, %v8006
  %v8067 = vpack.c.b16 %v8013, %v8007
  %v8068 = vpack.c.b16 %v8014, %v8008
  %v8069 = vpack.c.b16 %v8015, %v8009
  %v8070 = vpack.c.b16 %v8016, %v8010
  %v8071 = vpack.c.b16 %v8023, %v8017
  %v8072 = vpack.c.b16 %v8024, %v8018
  %v8073 = vpack.c.b16 %v8025, %v8019
  %v8074 = vpack.c.b16 %v8026, %v8020
  %v8075 = vpack.c.b16 %v8027, %v8021
  %v8076 = vpack.c.b16 %v8028, %v8022
  %v8221 = vunpack.c.l.b16 %v7789
  %v8222 = vunpack.c.l.b16 %v7790
  %v8223 = vunpack.c.l.b16 %v7791
  %v8224 = vunpack.c.l.b16 %v7792
  %v8225 = vunpack.c.l.b16 %v7793
  %v8226 = vunpack.c.l.b16 %v7794
  %v8227 = vunpack.c.l.b16 %v7795
  %v8228 = vunpack.c.l.b16 %v7796
  %v8229 = vunpack.c.l.b16 %v7797
  %v8230 = vunpack.c.l.b16 %v7798
  %v8231 = vunpack.c.l.b16 %v7799
  %v8232 = vunpack.c.l.b16 %v7800
  %v8233 = vunpack.c.l.b16 %v7801
  %v8234 = vunpack.c.l.b16 %v7802
  %v8235 = vunpack.c.l.b16 %v7803
  %v8236 = vunpack.c.l.b16 %v7804
  %v8237 = vunpack.c.l.b16 %v7805
  %v8238 = vunpack.c.l.b16 %v7806
  %v8239 = vunpack.c.l.b16 %v7807
  %v8240 = vunpack.c.l.b16 %v7808
  %v8241 = vunpack.c.l.b16 %v7809
  %v8242 = vunpack.c.l.b16 %v7810
  %v8243 = vunpack.c.l.b16 %v7811
  %v8244 = vunpack.c.l.b16 %v7812
  %v8245 = vunpack.c.l.b16 %v7813
  %v8246 = vunpack.c.l.b16 %v7814
  %v8247 = vunpack.c.l.b16 %v7815
  %v8248 = vunpack.c.l.b16 %v7816
  %v8249 = vunpack.c.l.b16 %v7817
  %v8250 = vunpack.c.l.b16 %v7818
  %v8251 = vunpack.c.l.b16 %v7819
  %v8252 = vunpack.c.l.b16 %v7820
  %v8253 = vunpack.c.l.b16 %v7821
  %v8254 = vunpack.c.l.b16 %v7822
  %v8255 = vunpack.c.l.b16 %v7823
  %v8256 = vunpack.c.l.b16 %v7824
  %v8257 = vunpack.c.l.b16 %v7825
  %v8258 = vunpack.c.l.b16 %v7826
  %v8259 = vunpack.c.l.b16 %v7827
  %v8260 = vunpack.c.l.b16 %v7828
  %v8261 = vunpack.c.l.b16 %v7829
  %v8262 = vunpack.c.l.b16 %v7830
  %v8263 = vunpack.c.l.b16 %v7831
  %v8264 = vunpack.c.l.b16 %v7832
  %v8265 = vunpack.c.l.b16 %v7833
  %v8266 = vunpack.c.l.b16 %v7834
  %v8267 = vunpack.c.l.b16 %v7835
  %v8268 = vunpack.c.l.b16 %v7836
  %v8269 = vunpack.c.l.b16 %v7837
  %v8270 = vunpack.c.l.b16 %v7838
  %v8271 = vunpack.c.l.b16 %v7839
  %v8272 = vunpack.c.l.b16 %v7840
  %v8273 = vunpack.c.l.b16 %v7841
  %v8274 = vunpack.c.l.b16 %v7842
  %v8275 = vunpack.c.l.b16 %v7843
  %v8276 = vunpack.c.l.b16 %v7844
  %v8277 = vunpack.c.l.b16 %v7845
  %v8278 = vunpack.c.l.b16 %v7846
  %v8279 = vunpack.c.l.b16 %v7847
  %v8280 = vunpack.c.l.b16 %v7848
  %v8281 = vunpack.c.l.b16 %v7849
  %v8282 = vunpack.c.l.b16 %v7850
  %v8283 = vunpack.c.l.b16 %v7851
  %v8284 = vunpack.c.l.b16 %v7852
  %v8285 = vunpack.c.l.b16 %v7853
  %v8286 = vunpack.c.l.b16 %v7854
  %v8287 = vunpack.c.l.b16 %v7855
  %v8288 = vunpack.c.l.b16 %v7856
  %v8289 = vunpack.c.l.b16 %v7857
  %v8290 = vunpack.c.l.b16 %v7858
  %v8291 = vunpack.c.l.b16 %v7859
  %v8292 = vunpack.c.l.b16 %v7860
  %v8293 = vunpack.c.l.b16 %v7861
  %v8294 = vunpack.c.l.b16 %v7862
  %v8295 = vunpack.c.l.b16 %v7863
  %v8296 = vunpack.c.l.b16 %v7864
  %v8297 = vunpack.c.l.b16 %v7865
  %v8298 = vunpack.c.l.b16 %v7866
  %v8299 = vunpack.c.l.b16 %v7867
  %v8300 = vunpack.c.l.b16 %v7868
  %v8301 = vunpack.c.l.b16 %v7869
  %v8302 = vunpack.c.l.b16 %v7870
  %v8303 = vunpack.c.l.b16 %v7871
  %v8304 = vunpack.c.l.b16 %v7872
  %v8305 = vunpack.c.l.b16 %v7873
  %v8306 = vunpack.c.l.b16 %v7874
  %v8307 = vunpack.c.l.b16 %v7875
  %v8308 = vunpack.c.l.b16 %v7876
  %v8309 = vunpack.c.l.b16 %v7877
  %v8310 = vunpack.c.l.b16 %v7878
  %v8311 = vunpack.c.l.b16 %v7879
  %v8312 = vunpack.c.l.b16 %v7880
  %v8313 = vunpack.c.l.b16 %v7881
  %v8314 = vunpack.c.l.b16 %v7882
  %v8315 = vunpack.c.l.b16 %v7883
  %v8316 = vunpack.c.l.b16 %v7884
  %v8317 = vpack.c.b16 %v8222, %v8221
  %v8318 = vpack.c.b16 %v8224, %v8223
  %v8319 = vpack.c.b16 %v8226, %v8225
  %v8320 = vpack.c.b16 %v8228, %v8227
  %v8321 = vpack.c.b16 %v8230, %v8229
  %v8322 = vpack.c.b16 %v8232, %v8231
  %v8323 = vpack.c.b16 %v8234, %v8233
  %v8324 = vpack.c.b16 %v8236, %v8235
  %v8325 = vpack.c.b16 %v8238, %v8237
  %v8326 = vpack.c.b16 %v8240, %v8239
  %v8327 = vpack.c.b16 %v8242, %v8241
  %v8328 = vpack.c.b16 %v8244, %v8243
  %v8329 = vpack.c.b16 %v8246, %v8245
  %v8330 = vpack.c.b16 %v8248, %v8247
  %v8331 = vpack.c.b16 %v8250, %v8249
  %v8332 = vpack.c.b16 %v8252, %v8251
  %v8333 = vpack.c.b16 %v8254, %v8253
  %v8334 = vpack.c.b16 %v8256, %v8255
  %v8335 = vpack.c.b16 %v8258, %v8257
  %v8336 = vpack.c.b16 %v8260, %v8259
  %v8337 = vpack.c.b16 %v8262, %v8261
  %v8338 = vpack.c.b16 %v8264, %v8263
  %v8339 = vpack.c.b16 %v8266, %v8265
  %v8340 = vpack.c.b16 %v8268, %v8267
  %v8341 = vpack.c.b16 %v8270, %v8269
  %v8342 = vpack.c.b16 %v8272, %v8271
  %v8343 = vpack.c.b16 %v8274, %v8273
  %v8344 = vpack.c.b16 %v8276, %v8275
  %v8345 = vpack.c.b16 %v8278, %v8277
  %v8346 = vpack.c.b16 %v8280, %v8279
  %v8347 = vpack.c.b16 %v8282, %v8281
  %v8348 = vpack.c.b16 %v8284, %v8283
  %v8349 = vpack.c.b16 %v8286, %v8285
  %v8350 = vpack.c.b16 %v8288, %v8287
  %v8351 = vpack.c.b16 %v8290, %v8289
  %v8352 = vpack.c.b16 %v8292, %v8291
  %v8353 = vpack.c.b16 %v8294, %v8293
  %v8354 = vpack.c.b16 %v8296, %v8295
  %v8355 = vpack.c.b16 %v8298, %v8297
  %v8356 = vpack.c.b16 %v8300, %v8299
  %v8357 = vpack.c.b16 %v8302, %v8301
  %v8358 = vpack.c.b16 %v8304, %v8303
  %v8359 = vpack.c.b16 %v8306, %v8305
  %v8360 = vpack.c.b16 %v8308, %v8307
  %v8361 = vpack.c.b16 %v8310, %v8309
  %v8362 = vpack.c.b16 %v8312, %v8311
  %v8363 = vpack.c.b16 %v8314, %v8313
  %v8364 = vpack.c.b16 %v8316, %v8315
  %8413 = vmatpush.bf16.msra.mxu0 %v8324
  %8414 = vmatpush.bf16.msra.mxu0 %v8323
  %8415 = vmatpush.bf16.msra.mxu0 %v8322
  %8416 = vmatpush.bf16.msra.mxu0 %v8321
  %8417 = vmatpush.bf16.msra.mxu0 %v8320
  %8418 = vmatpush.bf16.msra.mxu0 %v8319
  %8419 = vmatpush.bf16.msra.mxu0 %v8318
  %8420 = vmatpush.bf16.msra.mxu0 %v8317
  %8421 = vmatmul.bf16.gmra.mxu0 %v8029
  %v8422 = vpop.f32.mrf.mxu0
  %v8423 = vadd.f32 0.0, %v8422
  %v8424 = vpop.f32.mrf.mxu0
  %v8425 = vadd.f32 0.0, %v8424
  %8426 = vmatmul.bf16.gmra.mxu0 %v8035
  %v8427 = vpop.f32.mrf.mxu0
  %v8428 = vadd.f32 0.0, %v8427
  %v8429 = vpop.f32.mrf.mxu0
  %v8430 = vadd.f32 0.0, %v8429
  %8431 = vmatmul.bf16.gmra.mxu0 %v8041
  %v8432 = vpop.f32.mrf.mxu0
  %v8433 = vadd.f32 0.0, %v8432
  %v8434 = vpop.f32.mrf.mxu0
  %v8435 = vadd.f32 0.0, %v8434
  %8436 = vmatmul.bf16.gmra.mxu0 %v8047
  %v8437 = vpop.f32.mrf.mxu0
  %v8438 = vadd.f32 0.0, %v8437
  %v8439 = vpop.f32.mrf.mxu0
  %v8440 = vadd.f32 0.0, %v8439
  %8441 = vmatmul.bf16.gmra.mxu0 %v8053
  %v8442 = vpop.f32.mrf.mxu0
  %v8443 = vadd.f32 0.0, %v8442
  %v8444 = vpop.f32.mrf.mxu0
  %v8445 = vadd.f32 0.0, %v8444
  %8446 = vmatmul.bf16.gmra.mxu0 %v8059
  %v8447 = vpop.f32.mrf.mxu0
  %v8448 = vadd.f32 0.0, %v8447
  %v8449 = vpop.f32.mrf.mxu0
  %v8450 = vadd.f32 0.0, %v8449
  %8451 = vmatmul.bf16.gmra.mxu0 %v8065
  %v8452 = vpop.f32.mrf.mxu0
  %v8453 = vadd.f32 0.0, %v8452
  %v8454 = vpop.f32.mrf.mxu0
  %v8455 = vadd.f32 0.0, %v8454
  %8456 = vmatmul.bf16.gmra.mxu0 %v8071
  %v8457 = vpop.f32.mrf.mxu0
  %v8458 = vadd.f32 0.0, %v8457
  %v8459 = vpop.f32.mrf.mxu0
  %v8460 = vadd.f32 0.0, %v8459
  %8461 = vdwg.mxu0
  %8462 = vmatpush.bf16.msra.mxu0 %v8332
  %8463 = vmatpush.bf16.msra.mxu0 %v8331
  %8464 = vmatpush.bf16.msra.mxu0 %v8330
  %8465 = vmatpush.bf16.msra.mxu0 %v8329
  %8466 = vmatpush.bf16.msra.mxu0 %v8328
  %8467 = vmatpush.bf16.msra.mxu0 %v8327
  %8468 = vmatpush.bf16.msra.mxu0 %v8326
  %8469 = vmatpush.bf16.msra.mxu0 %v8325
  %8470 = vmatmul.bf16.gmra.mxu0 %v8030
  %v8471 = vpop.f32.mrf.mxu0
  %v8472 = vadd.f32 %v8423, %v8471
  %v8473 = vpop.f32.mrf.mxu0
  %v8474 = vadd.f32 %v8425, %v8473
  %8475 = vmatmul.bf16.gmra.mxu0 %v8036
  %v8476 = vpop.f32.mrf.mxu0
  %v8477 = vadd.f32 %v8428, %v8476
  %v8478 = vpop.f32.mrf.mxu0
  %v8479 = vadd.f32 %v8430, %v8478
  %8480 = vmatmul.bf16.gmra.mxu0 %v8042
  %v8481 = vpop.f32.mrf.mxu0
  %v8482 = vadd.f32 %v8433, %v8481
  %v8483 = vpop.f32.mrf.mxu0
  %v8484 = vadd.f32 %v8435, %v8483
  %8485 = vmatmul.bf16.gmra.mxu0 %v8048
  %v8486 = vpop.f32.mrf.mxu0
  %v8487 = vadd.f32 %v8438, %v8486
  %v8488 = vpop.f32.mrf.mxu0
  %v8489 = vadd.f32 %v8440, %v8488
  %8490 = vmatmul.bf16.gmra.mxu0 %v8054
  %v8491 = vpop.f32.mrf.mxu0
  %v8492 = vadd.f32 %v8443, %v8491
  %v8493 = vpop.f32.mrf.mxu0
  %v8494 = vadd.f32 %v8445, %v8493
  %8495 = vmatmul.bf16.gmra.mxu0 %v8060
  %v8496 = vpop.f32.mrf.mxu0
  %v8497 = vadd.f32 %v8448, %v8496
  %v8498 = vpop.f32.mrf.mxu0
  %v8499 = vadd.f32 %v8450, %v8498
  %8500 = vmatmul.bf16.gmra.mxu0 %v8066
  %v8501 = vpop.f32.mrf.mxu0
  %v8502 = vadd.f32 %v8453, %v8501
  %v8503 = vpop.f32.mrf.mxu0
  %v8504 = vadd.f32 %v8455, %v8503
  %8505 = vmatmul.bf16.gmra.mxu0 %v8072
  %v8506 = vpop.f32.mrf.mxu0
  %v8507 = vadd.f32 %v8458, %v8506
  %v8508 = vpop.f32.mrf.mxu0
  %v8509 = vadd.f32 %v8460, %v8508
  %8510 = vdwg.mxu0
  %8511 = vmatpush.bf16.msra.mxu0 %v8340
  %8512 = vmatpush.bf16.msra.mxu0 %v8339
  %8513 = vmatpush.bf16.msra.mxu0 %v8338
  %8514 = vmatpush.bf16.msra.mxu0 %v8337
  %8515 = vmatpush.bf16.msra.mxu0 %v8336
  %8516 = vmatpush.bf16.msra.mxu0 %v8335
  %8517 = vmatpush.bf16.msra.mxu0 %v8334
  %8518 = vmatpush.bf16.msra.mxu0 %v8333
  %8519 = vmatmul.bf16.gmra.mxu0 %v8031
  %v8520 = vpop.f32.mrf.mxu0
  %v8521 = vadd.f32 %v8472, %v8520
  %v8522 = vpop.f32.mrf.mxu0
  %v8523 = vadd.f32 %v8474, %v8522
  %8524 = vmatmul.bf16.gmra.mxu0 %v8037
  %v8525 = vpop.f32.mrf.mxu0
  %v8526 = vadd.f32 %v8477, %v8525
  %v8527 = vpop.f32.mrf.mxu0
  %v8528 = vadd.f32 %v8479, %v8527
  %8529 = vmatmul.bf16.gmra.mxu0 %v8043
  %v8530 = vpop.f32.mrf.mxu0
  %v8531 = vadd.f32 %v8482, %v8530
  %v8532 = vpop.f32.mrf.mxu0
  %v8533 = vadd.f32 %v8484, %v8532
  %8534 = vmatmul.bf16.gmra.mxu0 %v8049
  %v8535 = vpop.f32.mrf.mxu0
  %v8536 = vadd.f32 %v8487, %v8535
  %v8537 = vpop.f32.mrf.mxu0
  %v8538 = vadd.f32 %v8489, %v8537
  %8539 = vmatmul.bf16.gmra.mxu0 %v8055
  %v8540 = vpop.f32.mrf.mxu0
  %v8541 = vadd.f32 %v8492, %v8540
  %v8542 = vpop.f32.mrf.mxu0
  %v8543 = vadd.f32 %v8494, %v8542
  %8544 = vmatmul.bf16.gmra.mxu0 %v8061
  %v8545 = vpop.f32.mrf.mxu0
  %v8546 = vadd.f32 %v8497, %v8545
  %v8547 = vpop.f32.mrf.mxu0
  %v8548 = vadd.f32 %v8499, %v8547
  %8549 = vmatmul.bf16.gmra.mxu0 %v8067
  %v8550 = vpop.f32.mrf.mxu0
  %v8551 = vadd.f32 %v8502, %v8550
  %v8552 = vpop.f32.mrf.mxu0
  %v8553 = vadd.f32 %v8504, %v8552
  %8554 = vmatmul.bf16.gmra.mxu0 %v8073
  %v8555 = vpop.f32.mrf.mxu0
  %v8556 = vadd.f32 %v8507, %v8555
  %v8557 = vpop.f32.mrf.mxu0
  %v8558 = vadd.f32 %v8509, %v8557
  %8559 = vdwg.mxu0
  %8560 = vmatpush.bf16.msra.mxu0 %v8348
  %8561 = vmatpush.bf16.msra.mxu0 %v8347
  %8562 = vmatpush.bf16.msra.mxu0 %v8346
  %8563 = vmatpush.bf16.msra.mxu0 %v8345
  %8564 = vmatpush.bf16.msra.mxu0 %v8344
  %8565 = vmatpush.bf16.msra.mxu0 %v8343
  %8566 = vmatpush.bf16.msra.mxu0 %v8342
  %8567 = vmatpush.bf16.msra.mxu0 %v8341
  %8568 = vmatmul.bf16.gmra.mxu0 %v8032
  %v8569 = vpop.f32.mrf.mxu0
  %v8570 = vadd.f32 %v8521, %v8569
  %v8571 = vpop.f32.mrf.mxu0
  %v8572 = vadd.f32 %v8523, %v8571
  %8573 = vmatmul.bf16.gmra.mxu0 %v8038
  %v8574 = vpop.f32.mrf.mxu0
  %v8575 = vadd.f32 %v8526, %v8574
  %v8576 = vpop.f32.mrf.mxu0
  %v8577 = vadd.f32 %v8528, %v8576
  %8578 = vmatmul.bf16.gmra.mxu0 %v8044
  %v8579 = vpop.f32.mrf.mxu0
  %v8580 = vadd.f32 %v8531, %v8579
  %v8581 = vpop.f32.mrf.mxu0
  %v8582 = vadd.f32 %v8533, %v8581
  %8583 = vmatmul.bf16.gmra.mxu0 %v8050
  %v8584 = vpop.f32.mrf.mxu0
  %v8585 = vadd.f32 %v8536, %v8584
  %v8586 = vpop.f32.mrf.mxu0
  %v8587 = vadd.f32 %v8538, %v8586
  %8588 = vmatmul.bf16.gmra.mxu0 %v8056
  %v8589 = vpop.f32.mrf.mxu0
  %v8590 = vadd.f32 %v8541, %v8589
  %v8591 = vpop.f32.mrf.mxu0
  %v8592 = vadd.f32 %v8543, %v8591
  %8593 = vmatmul.bf16.gmra.mxu0 %v8062
  %v8594 = vpop.f32.mrf.mxu0
  %v8595 = vadd.f32 %v8546, %v8594
  %v8596 = vpop.f32.mrf.mxu0
  %v8597 = vadd.f32 %v8548, %v8596
  %8598 = vmatmul.bf16.gmra.mxu0 %v8068
  %v8599 = vpop.f32.mrf.mxu0
  %v8600 = vadd.f32 %v8551, %v8599
  %v8601 = vpop.f32.mrf.mxu0
  %v8602 = vadd.f32 %v8553, %v8601
  %8603 = vmatmul.bf16.gmra.mxu0 %v8074
  %v8604 = vpop.f32.mrf.mxu0
  %v8605 = vadd.f32 %v8556, %v8604
  %v8606 = vpop.f32.mrf.mxu0
  %v8607 = vadd.f32 %v8558, %v8606
  %8608 = vdwg.mxu0
  %8609 = vmatpush.bf16.msra.mxu0 %v8356
  %8610 = vmatpush.bf16.msra.mxu0 %v8355
  %8611 = vmatpush.bf16.msra.mxu0 %v8354
  %8612 = vmatpush.bf16.msra.mxu0 %v8353
  %8613 = vmatpush.bf16.msra.mxu0 %v8352
  %8614 = vmatpush.bf16.msra.mxu0 %v8351
  %8615 = vmatpush.bf16.msra.mxu0 %v8350
  %8616 = vmatpush.bf16.msra.mxu0 %v8349
  %8617 = vmatmul.bf16.gmra.mxu0 %v8033
  %v8618 = vpop.f32.mrf.mxu0
  %v8619 = vadd.f32 %v8570, %v8618
  %v8620 = vpop.f32.mrf.mxu0
  %v8621 = vadd.f32 %v8572, %v8620
  %8622 = vmatmul.bf16.gmra.mxu0 %v8039
  %v8623 = vpop.f32.mrf.mxu0
  %v8624 = vadd.f32 %v8575, %v8623
  %v8625 = vpop.f32.mrf.mxu0
  %v8626 = vadd.f32 %v8577, %v8625
  %8627 = vmatmul.bf16.gmra.mxu0 %v8045
  %v8628 = vpop.f32.mrf.mxu0
  %v8629 = vadd.f32 %v8580, %v8628
  %v8630 = vpop.f32.mrf.mxu0
  %v8631 = vadd.f32 %v8582, %v8630
  %8632 = vmatmul.bf16.gmra.mxu0 %v8051
  %v8633 = vpop.f32.mrf.mxu0
  %v8634 = vadd.f32 %v8585, %v8633
  %v8635 = vpop.f32.mrf.mxu0
  %v8636 = vadd.f32 %v8587, %v8635
  %8637 = vmatmul.bf16.gmra.mxu0 %v8057
  %v8638 = vpop.f32.mrf.mxu0
  %v8639 = vadd.f32 %v8590, %v8638
  %v8640 = vpop.f32.mrf.mxu0
  %v8641 = vadd.f32 %v8592, %v8640
  %8642 = vmatmul.bf16.gmra.mxu0 %v8063
  %v8643 = vpop.f32.mrf.mxu0
  %v8644 = vadd.f32 %v8595, %v8643
  %v8645 = vpop.f32.mrf.mxu0
  %v8646 = vadd.f32 %v8597, %v8645
  %8647 = vmatmul.bf16.gmra.mxu0 %v8069
  %v8648 = vpop.f32.mrf.mxu0
  %v8649 = vadd.f32 %v8600, %v8648
  %v8650 = vpop.f32.mrf.mxu0
  %v8651 = vadd.f32 %v8602, %v8650
  %8652 = vmatmul.bf16.gmra.mxu0 %v8075
  %v8653 = vpop.f32.mrf.mxu0
  %v8654 = vadd.f32 %v8605, %v8653
  %v8655 = vpop.f32.mrf.mxu0
  %v8656 = vadd.f32 %v8607, %v8655
  %8657 = vdwg.mxu0
  %8658 = vmatpush.bf16.msra.mxu0 %v8364
  %8659 = vmatpush.bf16.msra.mxu0 %v8363
  %8660 = vmatpush.bf16.msra.mxu0 %v8362
  %8661 = vmatpush.bf16.msra.mxu0 %v8361
  %8662 = vmatpush.bf16.msra.mxu0 %v8360
  %8663 = vmatpush.bf16.msra.mxu0 %v8359
  %8664 = vmatpush.bf16.msra.mxu0 %v8358
  %8665 = vmatpush.bf16.msra.mxu0 %v8357
  %8666 = vmatmul.bf16.gmra.mxu0 %v8034
  %v8667 = vpop.f32.mrf.mxu0
  %v8668 = vadd.f32 %v8619, %v8667
  %v8669 = vpop.f32.mrf.mxu0
  %v8670 = vadd.f32 %v8621, %v8669
  %8671 = vmatmul.bf16.gmra.mxu0 %v8040
  %v8672 = vpop.f32.mrf.mxu0
  %v8673 = vadd.f32 %v8624, %v8672
  %v8674 = vpop.f32.mrf.mxu0
  %v8675 = vadd.f32 %v8626, %v8674
  %8676 = vmatmul.bf16.gmra.mxu0 %v8046
  %v8677 = vpop.f32.mrf.mxu0
  %v8678 = vadd.f32 %v8629, %v8677
  %v8679 = vpop.f32.mrf.mxu0
  %v8680 = vadd.f32 %v8631, %v8679
  %8681 = vmatmul.bf16.gmra.mxu0 %v8052
  %v8682 = vpop.f32.mrf.mxu0
  %v8683 = vadd.f32 %v8634, %v8682
  %v8684 = vpop.f32.mrf.mxu0
  %v8685 = vadd.f32 %v8636, %v8684
  %8686 = vmatmul.bf16.gmra.mxu0 %v8058
  %v8687 = vpop.f32.mrf.mxu0
  %v8688 = vadd.f32 %v8639, %v8687
  %v8689 = vpop.f32.mrf.mxu0
  %v8690 = vadd.f32 %v8641, %v8689
  %8691 = vmatmul.bf16.gmra.mxu0 %v8064
  %v8692 = vpop.f32.mrf.mxu0
  %v8693 = vadd.f32 %v8644, %v8692
  %v8694 = vpop.f32.mrf.mxu0
  %v8695 = vadd.f32 %v8646, %v8694
  %8696 = vmatmul.bf16.gmra.mxu0 %v8070
  %v8697 = vpop.f32.mrf.mxu0
  %v8698 = vadd.f32 %v8649, %v8697
  %v8699 = vpop.f32.mrf.mxu0
  %v8700 = vadd.f32 %v8651, %v8699
  %8701 = vmatmul.bf16.gmra.mxu0 %v8076
  %v8702 = vpop.f32.mrf.mxu0
  %v8703 = vadd.f32 %v8654, %v8702
  %v8704 = vpop.f32.mrf.mxu0
  %v8705 = vadd.f32 %v8656, %v8704
  %8706 = vdwg.mxu0
  %v8707 = vadd.f32 %v7701, %v8668
  %v8708 = vadd.f32 %v7703, %v8670
  %v8709 = vadd.f32 %v7706, %v8673
  %v8710 = vadd.f32 %v7708, %v8675
  %v8711 = vadd.f32 %v7711, %v8678
  %v8712 = vadd.f32 %v7713, %v8680
  %v8713 = vadd.f32 %v7716, %v8683
  %v8714 = vadd.f32 %v7718, %v8685
  %v8715 = vadd.f32 %v7721, %v8688
  %v8716 = vadd.f32 %v7723, %v8690
  %v8717 = vadd.f32 %v7726, %v8693
  %v8718 = vadd.f32 %v7728, %v8695
  %v8719 = vadd.f32 %v7731, %v8698
  %v8720 = vadd.f32 %v7733, %v8700
  %v8721 = vadd.f32 %v7736, %v8703
  %v8722 = vadd.f32 %v7738, %v8705
  %v8723 = vld [vmem:[%s12] sm:$0x1]
  %v8725 = vperm.slane %v8723, 0
  %v8727 = vadd.f32 %v8707, %v8725
  %v8728 = vadd.f32 %v8708, %v8725
  %v8729 = vadd.f32 %v8709, %v8725
  %v8730 = vadd.f32 %v8710, %v8725
  %v8731 = vadd.f32 %v8711, %v8725
  %v8732 = vadd.f32 %v8712, %v8725
  %v8733 = vadd.f32 %v8713, %v8725
  %v8734 = vadd.f32 %v8714, %v8725
  %v8735 = vadd.f32 %v8715, %v8725
  %v8736 = vadd.f32 %v8716, %v8725
  %v8737 = vadd.f32 %v8717, %v8725
  %v8738 = vadd.f32 %v8718, %v8725
  %v8739 = vadd.f32 %v8719, %v8725
  %v8740 = vadd.f32 %v8720, %v8725
  %v8741 = vadd.f32 %v8721, %v8725
  %v8742 = vadd.f32 %v8722, %v8725
  %v8743 = vxor.u32 %v8727, 2147483648
  %v8744 = vxor.u32 %v8728, 2147483648
  %v8745 = vxor.u32 %v8729, 2147483648
  %v8746 = vxor.u32 %v8730, 2147483648
  %v8747 = vxor.u32 %v8731, 2147483648
  %v8748 = vxor.u32 %v8732, 2147483648
  %v8749 = vxor.u32 %v8733, 2147483648
  %v8750 = vxor.u32 %v8734, 2147483648
  %v8751 = vxor.u32 %v8735, 2147483648
  %v8752 = vxor.u32 %v8736, 2147483648
  %v8753 = vxor.u32 %v8737, 2147483648
  %v8754 = vxor.u32 %v8738, 2147483648
  %v8755 = vxor.u32 %v8739, 2147483648
  %v8756 = vxor.u32 %v8740, 2147483648
  %v8757 = vxor.u32 %v8741, 2147483648
  %v8758 = vxor.u32 %v8742, 2147483648
  %v8759 = vmul.f32 %v8743, 1.442695
  %v8760 = vpow.pop %v8759
  %v8761 = vmul.f32 %v8744, 1.442695
  %v8762 = vpow.pop %v8761
  %v8763 = vmul.f32 %v8745, 1.442695
  %v8764 = vpow.pop %v8763
  %v8765 = vmul.f32 %v8746, 1.442695
  %v8766 = vpow.pop %v8765
  %v8767 = vmul.f32 %v8747, 1.442695
  %v8768 = vpow.pop %v8767
  %v8769 = vmul.f32 %v8748, 1.442695
  %v8770 = vpow.pop %v8769
  %v8771 = vmul.f32 %v8749, 1.442695
  %v8772 = vpow.pop %v8771
  %v8773 = vmul.f32 %v8750, 1.442695
  %v8774 = vpow.pop %v8773
  %v8775 = vmul.f32 %v8751, 1.442695
  %v8776 = vpow.pop %v8775
  %v8777 = vmul.f32 %v8752, 1.442695
  %v8778 = vpow.pop %v8777
  %v8779 = vmul.f32 %v8753, 1.442695
  %v8780 = vpow.pop %v8779
  %v8781 = vmul.f32 %v8754, 1.442695
  %v8782 = vpow.pop %v8781
  %v8783 = vmul.f32 %v8755, 1.442695
  %v8784 = vpow.pop %v8783
  %v8785 = vmul.f32 %v8756, 1.442695
  %v8786 = vpow.pop %v8785
  %v8787 = vmul.f32 %v8757, 1.442695
  %v8788 = vpow.pop %v8787
  %v8789 = vmul.f32 %v8758, 1.442695
  %v8790 = vpow.pop %v8789
  %v8791 = vadd.f32 %v8760, 1.0
  %v8792 = vadd.f32 %v8762, 1.0
  %v8793 = vadd.f32 %v8764, 1.0
  %v8794 = vadd.f32 %v8766, 1.0
  %v8795 = vadd.f32 %v8768, 1.0
  %v8796 = vadd.f32 %v8770, 1.0
  %v8797 = vadd.f32 %v8772, 1.0
  %v8798 = vadd.f32 %v8774, 1.0
  %v8799 = vadd.f32 %v8776, 1.0
  %v8800 = vadd.f32 %v8778, 1.0
  %v8801 = vadd.f32 %v8780, 1.0
  %v8802 = vadd.f32 %v8782, 1.0
  %v8803 = vadd.f32 %v8784, 1.0
  %v8804 = vadd.f32 %v8786, 1.0
  %v8805 = vadd.f32 %v8788, 1.0
  %v8806 = vadd.f32 %v8790, 1.0
  %v8807 = vrcp.pop %v8791
  %v8808 = vmul.f32 %v8791, %v8807
  %v8809 = vsub.f32 1.0, %v8808
  %v8810 = vmul.f32 %v8807, %v8809
  %v8811 = vadd.f32 %v8807, %v8810
  %vm8812 = vweird.f32 %v8791
  %vm8813 = vweird.f32 %v8807
  %vm8814 = vmor %vm8812, %vm8813
  %v8815 = vsel %vm8814, %v8807, %v8811
  %v8816 = vand.u32 2147483647, %v8791
  %vm8817 = vcmp.eq.f32.partialorder %v8816, 8.507059e+37
  %v8818 = vand.u32 %v8791, 2147483648
  %v8819 = vor.u32 1.1754944e-38, %v8818
  %v8820 = vsel %vm8817, %v8819, %v8815
  %v8821 = vmul.f32 1.0, %v8820
  %v8822 = vrcp.pop %v8792
  %v8823 = vmul.f32 %v8792, %v8822
  %v8824 = vsub.f32 1.0, %v8823
  %v8825 = vmul.f32 %v8822, %v8824
  %v8826 = vadd.f32 %v8822, %v8825
  %vm8827 = vweird.f32 %v8792
  %vm8828 = vweird.f32 %v8822
  %vm8829 = vmor %vm8827, %vm8828
  %v8830 = vsel %vm8829, %v8822, %v8826
  %v8831 = vand.u32 2147483647, %v8792
  %vm8832 = vcmp.eq.f32.partialorder %v8831, 8.507059e+37
  %v8833 = vand.u32 %v8792, 2147483648
  %v8834 = vor.u32 1.1754944e-38, %v8833
  %v8835 = vsel %vm8832, %v8834, %v8830
  %v8836 = vmul.f32 1.0, %v8835
  %v8837 = vrcp.pop %v8793
  %v8838 = vmul.f32 %v8793, %v8837
  %v8839 = vsub.f32 1.0, %v8838
  %v8840 = vmul.f32 %v8837, %v8839
  %v8841 = vadd.f32 %v8837, %v8840
  %vm8842 = vweird.f32 %v8793
  %vm8843 = vweird.f32 %v8837
  %vm8844 = vmor %vm8842, %vm8843
  %v8845 = vsel %vm8844, %v8837, %v8841
  %v8846 = vand.u32 2147483647, %v8793
  %vm8847 = vcmp.eq.f32.partialorder %v8846, 8.507059e+37
  %v8848 = vand.u32 %v8793, 2147483648
  %v8849 = vor.u32 1.1754944e-38, %v8848
  %v8850 = vsel %vm8847, %v8849, %v8845
  %v8851 = vmul.f32 1.0, %v8850
  %v8852 = vrcp.pop %v8794
  %v8853 = vmul.f32 %v8794, %v8852
  %v8854 = vsub.f32 1.0, %v8853
  %v8855 = vmul.f32 %v8852, %v8854
  %v8856 = vadd.f32 %v8852, %v8855
  %vm8857 = vweird.f32 %v8794
  %vm8858 = vweird.f32 %v8852
  %vm8859 = vmor %vm8857, %vm8858
  %v8860 = vsel %vm8859, %v8852, %v8856
  %v8861 = vand.u32 2147483647, %v8794
  %vm8862 = vcmp.eq.f32.partialorder %v8861, 8.507059e+37
  %v8863 = vand.u32 %v8794, 2147483648
  %v8864 = vor.u32 1.1754944e-38, %v8863
  %v8865 = vsel %vm8862, %v8864, %v8860
  %v8866 = vmul.f32 1.0, %v8865
  %v8867 = vrcp.pop %v8795
  %v8868 = vmul.f32 %v8795, %v8867
  %v8869 = vsub.f32 1.0, %v8868
  %v8870 = vmul.f32 %v8867, %v8869
  %v8871 = vadd.f32 %v8867, %v8870
  %vm8872 = vweird.f32 %v8795
  %vm8873 = vweird.f32 %v8867
  %vm8874 = vmor %vm8872, %vm8873
  %v8875 = vsel %vm8874, %v8867, %v8871
  %v8876 = vand.u32 2147483647, %v8795
  %vm8877 = vcmp.eq.f32.partialorder %v8876, 8.507059e+37
  %v8878 = vand.u32 %v8795, 2147483648
  %v8879 = vor.u32 1.1754944e-38, %v8878
  %v8880 = vsel %vm8877, %v8879, %v8875
  %v8881 = vmul.f32 1.0, %v8880
  %v8882 = vrcp.pop %v8796
  %v8883 = vmul.f32 %v8796, %v8882
  %v8884 = vsub.f32 1.0, %v8883
  %v8885 = vmul.f32 %v8882, %v8884
  %v8886 = vadd.f32 %v8882, %v8885
  %vm8887 = vweird.f32 %v8796
  %vm8888 = vweird.f32 %v8882
  %vm8889 = vmor %vm8887, %vm8888
  %v8890 = vsel %vm8889, %v8882, %v8886
  %v8891 = vand.u32 2147483647, %v8796
  %vm8892 = vcmp.eq.f32.partialorder %v8891, 8.507059e+37
  %v8893 = vand.u32 %v8796, 2147483648
  %v8894 = vor.u32 1.1754944e-38, %v8893
  %v8895 = vsel %vm8892, %v8894, %v8890
  %v8896 = vmul.f32 1.0, %v8895
  %v8897 = vrcp.pop %v8797
  %v8898 = vmul.f32 %v8797, %v8897
  %v8899 = vsub.f32 1.0, %v8898
  %v8900 = vmul.f32 %v8897, %v8899
  %v8901 = vadd.f32 %v8897, %v8900
  %vm8902 = vweird.f32 %v8797
  %vm8903 = vweird.f32 %v8897
  %vm8904 = vmor %vm8902, %vm8903
  %v8905 = vsel %vm8904, %v8897, %v8901
  %v8906 = vand.u32 2147483647, %v8797
  %vm8907 = vcmp.eq.f32.partialorder %v8906, 8.507059e+37
  %v8908 = vand.u32 %v8797, 2147483648
  %v8909 = vor.u32 1.1754944e-38, %v8908
  %v8910 = vsel %vm8907, %v8909, %v8905
  %v8911 = vmul.f32 1.0, %v8910
  %v8912 = vrcp.pop %v8798
  %v8913 = vmul.f32 %v8798, %v8912
  %v8914 = vsub.f32 1.0, %v8913
  %v8915 = vmul.f32 %v8912, %v8914
  %v8916 = vadd.f32 %v8912, %v8915
  %vm8917 = vweird.f32 %v8798
  %vm8918 = vweird.f32 %v8912
  %vm8919 = vmor %vm8917, %vm8918
  %v8920 = vsel %vm8919, %v8912, %v8916
  %v8921 = vand.u32 2147483647, %v8798
  %vm8922 = vcmp.eq.f32.partialorder %v8921, 8.507059e+37
  %v8923 = vand.u32 %v8798, 2147483648
  %v8924 = vor.u32 1.1754944e-38, %v8923
  %v8925 = vsel %vm8922, %v8924, %v8920
  %v8926 = vmul.f32 1.0, %v8925
  %v8927 = vrcp.pop %v8799
  %v8928 = vmul.f32 %v8799, %v8927
  %v8929 = vsub.f32 1.0, %v8928
  %v8930 = vmul.f32 %v8927, %v8929
  %v8931 = vadd.f32 %v8927, %v8930
  %vm8932 = vweird.f32 %v8799
  %vm8933 = vweird.f32 %v8927
  %vm8934 = vmor %vm8932, %vm8933
  %v8935 = vsel %vm8934, %v8927, %v8931
  %v8936 = vand.u32 2147483647, %v8799
  %vm8937 = vcmp.eq.f32.partialorder %v8936, 8.507059e+37
  %v8938 = vand.u32 %v8799, 2147483648
  %v8939 = vor.u32 1.1754944e-38, %v8938
  %v8940 = vsel %vm8937, %v8939, %v8935
  %v8941 = vmul.f32 1.0, %v8940
  %v8942 = vrcp.pop %v8800
  %v8943 = vmul.f32 %v8800, %v8942
  %v8944 = vsub.f32 1.0, %v8943
  %v8945 = vmul.f32 %v8942, %v8944
  %v8946 = vadd.f32 %v8942, %v8945
  %vm8947 = vweird.f32 %v8800
  %vm8948 = vweird.f32 %v8942
  %vm8949 = vmor %vm8947, %vm8948
  %v8950 = vsel %vm8949, %v8942, %v8946
  %v8951 = vand.u32 2147483647, %v8800
  %vm8952 = vcmp.eq.f32.partialorder %v8951, 8.507059e+37
  %v8953 = vand.u32 %v8800, 2147483648
  %v8954 = vor.u32 1.1754944e-38, %v8953
  %v8955 = vsel %vm8952, %v8954, %v8950
  %v8956 = vmul.f32 1.0, %v8955
  %v8957 = vrcp.pop %v8801
  %v8958 = vmul.f32 %v8801, %v8957
  %v8959 = vsub.f32 1.0, %v8958
  %v8960 = vmul.f32 %v8957, %v8959
  %v8961 = vadd.f32 %v8957, %v8960
  %vm8962 = vweird.f32 %v8801
  %vm8963 = vweird.f32 %v8957
  %vm8964 = vmor %vm8962, %vm8963
  %v8965 = vsel %vm8964, %v8957, %v8961
  %v8966 = vand.u32 2147483647, %v8801
  %vm8967 = vcmp.eq.f32.partialorder %v8966, 8.507059e+37
  %v8968 = vand.u32 %v8801, 2147483648
  %v8969 = vor.u32 1.1754944e-38, %v8968
  %v8970 = vsel %vm8967, %v8969, %v8965
  %v8971 = vmul.f32 1.0, %v8970
  %v8972 = vrcp.pop %v8802
  %v8973 = vmul.f32 %v8802, %v8972
  %v8974 = vsub.f32 1.0, %v8973
  %v8975 = vmul.f32 %v8972, %v8974
  %v8976 = vadd.f32 %v8972, %v8975
  %vm8977 = vweird.f32 %v8802
  %vm8978 = vweird.f32 %v8972
  %vm8979 = vmor %vm8977, %vm8978
  %v8980 = vsel %vm8979, %v8972, %v8976
  %v8981 = vand.u32 2147483647, %v8802
  %vm8982 = vcmp.eq.f32.partialorder %v8981, 8.507059e+37
  %v8983 = vand.u32 %v8802, 2147483648
  %v8984 = vor.u32 1.1754944e-38, %v8983
  %v8985 = vsel %vm8982, %v8984, %v8980
  %v8986 = vmul.f32 1.0, %v8985
  %v8987 = vrcp.pop %v8803
  %v8988 = vmul.f32 %v8803, %v8987
  %v8989 = vsub.f32 1.0, %v8988
  %v8990 = vmul.f32 %v8987, %v8989
  %v8991 = vadd.f32 %v8987, %v8990
  %vm8992 = vweird.f32 %v8803
  %vm8993 = vweird.f32 %v8987
  %vm8994 = vmor %vm8992, %vm8993
  %v8995 = vsel %vm8994, %v8987, %v8991
  %v8996 = vand.u32 2147483647, %v8803
  %vm8997 = vcmp.eq.f32.partialorder %v8996, 8.507059e+37
  %v8998 = vand.u32 %v8803, 2147483648
  %v8999 = vor.u32 1.1754944e-38, %v8998
  %v9000 = vsel %vm8997, %v8999, %v8995
  %v9001 = vmul.f32 1.0, %v9000
  %v9002 = vrcp.pop %v8804
  %v9003 = vmul.f32 %v8804, %v9002
  %v9004 = vsub.f32 1.0, %v9003
  %v9005 = vmul.f32 %v9002, %v9004
  %v9006 = vadd.f32 %v9002, %v9005
  %vm9007 = vweird.f32 %v8804
  %vm9008 = vweird.f32 %v9002
  %vm9009 = vmor %vm9007, %vm9008
  %v9010 = vsel %vm9009, %v9002, %v9006
  %v9011 = vand.u32 2147483647, %v8804
  %vm9012 = vcmp.eq.f32.partialorder %v9011, 8.507059e+37
  %v9013 = vand.u32 %v8804, 2147483648
  %v9014 = vor.u32 1.1754944e-38, %v9013
  %v9015 = vsel %vm9012, %v9014, %v9010
  %v9016 = vmul.f32 1.0, %v9015
  %v9017 = vrcp.pop %v8805
  %v9018 = vmul.f32 %v8805, %v9017
  %v9019 = vsub.f32 1.0, %v9018
  %v9020 = vmul.f32 %v9017, %v9019
  %v9021 = vadd.f32 %v9017, %v9020
  %vm9022 = vweird.f32 %v8805
  %vm9023 = vweird.f32 %v9017
  %vm9024 = vmor %vm9022, %vm9023
  %v9025 = vsel %vm9024, %v9017, %v9021
  %v9026 = vand.u32 2147483647, %v8805
  %vm9027 = vcmp.eq.f32.partialorder %v9026, 8.507059e+37
  %v9028 = vand.u32 %v8805, 2147483648
  %v9029 = vor.u32 1.1754944e-38, %v9028
  %v9030 = vsel %vm9027, %v9029, %v9025
  %v9031 = vmul.f32 1.0, %v9030
  %v9032 = vrcp.pop %v8806
  %v9033 = vmul.f32 %v8806, %v9032
  %v9034 = vsub.f32 1.0, %v9033
  %v9035 = vmul.f32 %v9032, %v9034
  %v9036 = vadd.f32 %v9032, %v9035
  %vm9037 = vweird.f32 %v8806
  %vm9038 = vweird.f32 %v9032
  %vm9039 = vmor %vm9037, %vm9038
  %v9040 = vsel %vm9039, %v9032, %v9036
  %v9041 = vand.u32 2147483647, %v8806
  %vm9042 = vcmp.eq.f32.partialorder %v9041, 8.507059e+37
  %v9043 = vand.u32 %v8806, 2147483648
  %v9044 = vor.u32 1.1754944e-38, %v9043
  %v9045 = vsel %vm9042, %v9044, %v9040
  %v9046 = vmul.f32 1.0, %v9045
  %9047 = vst [vmem:[%s13] sm:$0xff] %v8821
  %9048 = vst [vmem:[%s13 + $0x8] sm:$0xff] %v8836
  %9049 = vst [vmem:[%s13 + $0x10] sm:$0xff] %v8851
  %9050 = vst [vmem:[%s13 + $0x18] sm:$0xff] %v8866
  %9051 = vst [vmem:[%s13 + $0x20] sm:$0xff] %v8881
  %9052 = vst [vmem:[%s13 + $0x28] sm:$0xff] %v8896
  %9053 = vst [vmem:[%s13 + $0x30] sm:$0xff] %v8911
  %9054 = vst [vmem:[%s13 + $0x38] sm:$0xff] %v8926
  %9055 = vst [vmem:[%s13 + $0x40] sm:$0xff] %v8941
  %9056 = vst [vmem:[%s13 + $0x48] sm:$0xff] %v8956
  %9057 = vst [vmem:[%s13 + $0x50] sm:$0xff] %v8971
  %9058 = vst [vmem:[%s13 + $0x58] sm:$0xff] %v8986
  %9059 = vst [vmem:[%s13 + $0x60] sm:$0xff] %v9001
  %9060 = vst [vmem:[%s13 + $0x68] sm:$0xff] %v9016
  %9061 = vst [vmem:[%s13 + $0x70] sm:$0xff] %v9031
  %9062 = vst [vmem:[%s13 + $0x78] sm:$0xff] %v9046
  // Predicated region
  $region54: #{discriminator_forward.1} parent=0 // pred_check
    _
  $region55: #{discriminator_forward.1} parent=0 // pred_check_branch
    %9064 = sbr.rel (0) target = $region57
  $region56: #{discriminator_forward.1} parent=0 // pred_region
    _
  $region57: #{discriminator_forward.1} parent=0 // pred_fallthru
    _
  // Predicated region
  $region58: #{discriminator_forward.1} parent=0 // pred_check
    _
  $region59: #{discriminator_forward.1} parent=0 // pred_check_branch
    %9066 = sbr.rel (0) target = $region61
  $region60: #{discriminator_forward.1} parent=0 // pred_region
    _
  $region61: #{discriminator_forward.1} parent=0 // pred_fallthru
    _

</llo_original>
